<compile_context>
chip_gen: v7x
topology: tpu7x:2x2x1
jax: 0.10.0
libtpu: 0.0.40
codegen_flags: <defaults>
</compile_context>

<pallas_src>
import functools

import jax
import jax.numpy as jnp
from jax.experimental import pallas as pl
from jax.experimental.pallas import tpu as pltpu

NEG_SLOPE = 0.2


def _leaky(x):
    return jnp.where(x >= 0.0, x, NEG_SLOPE * x)


def _pick_tile(n, target):
    """Largest divisor of n that is <= target, preferring multiples of 8."""
    if n <= target:
        return n
    best = None
    for t in range(min(target, n), 0, -1):
        if n % t == 0:
            if t % 8 == 0:
                return t
            if best is None:
                best = t
    return best if best is not None else n


# ---------------------------------------------------------------------------
# Fused EdgeConv kernel: 3x (matmul + LeakyReLU + BN) chained in-register,
# then max over the k neighbors.  feat_ref is laid out (k, tile, Cin) so the
# per-neighbor slabs are plain leading-dim slices (no in-kernel reshapes).
# ---------------------------------------------------------------------------
def _edgeconv_kernel(feat_ref, w1_ref, w2_ref, w3_ref,
                     s1_ref, sh1_ref, s2_ref, sh2_ref, o_ref, *, k):
    acc = None
    for j in range(k):                                   # k is small & static
        xj = feat_ref[j].astype(jnp.bfloat16)            # (tg, Cin)
        h = jnp.dot(xj, w1_ref[...], preferred_element_type=jnp.float32)
        h = _leaky(h) * s1_ref[...] + sh1_ref[...]       # conv1 -> relu -> norm1
        h = jnp.dot(h.astype(jnp.bfloat16), w2_ref[...],
                    preferred_element_type=jnp.float32)
        h = _leaky(h) * s1_ref[...] + sh1_ref[...]       # conv2 -> relu -> norm1
        h = jnp.dot(h.astype(jnp.bfloat16), w3_ref[...],
                    preferred_element_type=jnp.float32)
        h = _leaky(h) * s2_ref[...] + sh2_ref[...]       # conv3 -> relu -> norm2
        acc = h if acc is None else jnp.maximum(acc, h)  # running max over k
    o_ref[...] = acc.astype(o_ref.dtype)


def knn_idx(x, k):
    """x: (B, N, C) -> (B, N, k) nearest-neighbor indices (self included)."""
    sq = jnp.sum(x * x, axis=-1)                         # (B, N)
    inner = jnp.einsum("bnc,bmc->bnm", x, x)             # (B, N, N)
    dist = sq[:, :, None] - 2.0 * inner + sq[:, None, :]
    _, idx = jax.lax.top_k(-dist, k)
    return idx


def edge_conv(x, p, k, tile=512):
    """x: (B, N, Cin) f32 -> (B, N, 64) f32 (fused EdgeConv)."""
    B, N, cin = x.shape
    M = B * N
    cout = p["w3"].shape[1]
    idx = knn_idx(x, k)                                  # (B, N, k)
    idx_t = jnp.transpose(idx, (2, 0, 1))                # (k, B, N)
    feat = x[jnp.arange(B)[None, :, None], idx_t, :]     # (k, B, N, Cin) gather
    feat = feat.reshape(k, M, cin)
    tg = _pick_tile(M, tile)

    out = pl.pallas_call(
        functools.partial(_edgeconv_kernel, k=k),
        out_shape=jax.ShapeDtypeStruct((M, cout), jnp.float32),
        grid=(M // tg,),
        in_specs=[
            pl.BlockSpec((k, tg, cin), lambda i: (0, i, 0)),
            pl.BlockSpec(p["w1"].shape, lambda i: (0, 0)),
            pl.BlockSpec(p["w2"].shape, lambda i: (0, 0)),
            pl.BlockSpec(p["w3"].shape, lambda i: (0, 0)),
            pl.BlockSpec(p["bn1_scale"].shape, lambda i: (0, 0)),
            pl.BlockSpec(p["bn1_shift"].shape, lambda i: (0, 0)),
            pl.BlockSpec(p["bn2_scale"].shape, lambda i: (0, 0)),
            pl.BlockSpec(p["bn2_shift"].shape, lambda i: (0, 0)),
        ],
        out_specs=pl.BlockSpec((tg, cout), lambda i: (i, 0)),
        compiler_params=pltpu.CompilerParams(dimension_semantics=("parallel",)),
    )(feat, p["w1"], p["w2"], p["w3"],
      p["bn1_scale"], p["bn1_shift"], p["bn2_scale"], p["bn2_shift"])
    return out.reshape(B, N, cout)


# ---------------------------------------------------------------------------
# Fused 64->1024 conv + LeakyReLU + BN + global max-pool.
# Grid: (B, N-chunks).  Running max kept in a (1, 1024) VMEM scratch; only the
# per-batch global feature is ever written to HBM (x4 is never materialized).
# ---------------------------------------------------------------------------
def _globalfeat_kernel(x_ref, w_ref, b_ref, s_ref, sh_ref, o_ref, acc_ref):
    h = jnp.dot(x_ref[...].astype(jnp.bfloat16), w_ref[...],
                preferred_element_type=jnp.float32)
    h = _leaky(h + b_ref[...]) * s_ref[...] + sh_ref[...]
    m = jnp.max(h, axis=0, keepdims=True)                # (1, 1024)

    j = pl.program_id(1)

    @pl.when(j == 0)
    def _():
        acc_ref[...] = m

    @pl.when(j > 0)
    def _():
        acc_ref[...] = jnp.maximum(acc_ref[...], m)

    @pl.when(j == pl.num_programs(1) - 1)
    def _():
        o_ref[...] = acc_ref[...]


def global_feature(x3, p, tile=256):
    """x3: (B, N, 64) -> (B, 1, 1024) global max-pooled feature."""
    B, N, cin = x3.shape
    C = p["conv_w"].shape[1]
    tgn = _pick_tile(N, tile)
    return pl.pallas_call(
        _globalfeat_kernel,
        out_shape=jax.ShapeDtypeStruct((B, 1, C), jnp.float32),
        grid=(B, N // tgn),
        in_specs=[
            pl.BlockSpec((None, tgn, cin), lambda b, j: (b, j, 0)),
            pl.BlockSpec((cin, C), lambda b, j: (0, 0)),
            pl.BlockSpec((1, C), lambda b, j: (0, 0)),
            pl.BlockSpec((1, C), lambda b, j: (0, 0)),
            pl.BlockSpec((1, C), lambda b, j: (0, 0)),
        ],
        out_specs=pl.BlockSpec((None, 1, C), lambda b, j: (b, 0, 0)),
        scratch_shapes=[pltpu.VMEM((1, C), jnp.float32)],
        compiler_params=pltpu.CompilerParams(
            dimension_semantics=("parallel", "arbitrary")),
    )(x3, p["conv_w"], p["conv_b"], p["norm_scale"], p["norm_shift"])


# ---------------------------------------------------------------------------
# Fused head: concat([x2, x3, g]) @ mlp1 (split weights) -> mlp2 -> mlp3 -> mlp4,
# with eval-mode BN folded into the weights (no activation between layers).
# ---------------------------------------------------------------------------
def _head_kernel(x2_ref, x3_ref, g_ref,
                 w1a_ref, w1b_ref, w1g_ref, b1_ref,
                 w2_ref, b2_ref, w3_ref, b3_ref, w4_ref, b4_ref, o_ref):
    bf = jnp.bfloat16
    f32 = jnp.float32
    h = jnp.dot(x2_ref[...].astype(bf), w1a_ref[...], preferred_element_type=f32)
    h = h + jnp.dot(x3_ref[...].astype(bf), w1b_ref[...], preferred_element_type=f32)
    h = h + jnp.dot(g_ref[...].astype(bf), w1g_ref[...], preferred_element_type=f32)
    h = h + b1_ref[...]                                           # mlp1 (+BN folded)
    h = jnp.dot(h.astype(bf), w2_ref[...], preferred_element_type=f32) + b2_ref[...]
    h = jnp.dot(h.astype(bf), w3_ref[...], preferred_element_type=f32) + b3_ref[...]
    h = jnp.dot(h.astype(bf), w4_ref[...], preferred_element_type=f32) + b4_ref[...]
    o_ref[...] = h.astype(o_ref.dtype)


def head_mlp(x2, x3, g, hp, tile=512):
    B, N, c_pt = x2.shape
    cg = g.shape[-1]
    cout = hp["w4"].shape[1]
    tgn = _pick_tile(N, tile)

    def full(a):
        return pl.BlockSpec(a.shape, lambda b, j: (0, 0))

    return pl.pallas_call(
        _head_kernel,
        out_shape=jax.ShapeDtypeStruct((B, N, cout), jnp.float32),
        grid=(B, N // tgn),
        in_specs=[
            pl.BlockSpec((None, tgn, c_pt), lambda b, j: (b, j, 0)),
            pl.BlockSpec((None, tgn, c_pt), lambda b, j: (b, j, 0)),
            pl.BlockSpec((None, 1, cg), lambda b, j: (b, 0, 0)),
            full(hp["w1_x2"]), full(hp["w1_x3"]), full(hp["w1_g"]), full(hp["b1"]),
            full(hp["w2"]), full(hp["b2"]),
            full(hp["w3"]), full(hp["b3"]),
            full(hp["w4"]), full(hp["b4"]),
        ],
        out_specs=pl.BlockSpec((None, tgn, cout), lambda b, j: (b, j, 0)),
        compiler_params=pltpu.CompilerParams(
            dimension_semantics=("parallel", "parallel")),
    )(x2, x3, g,
      hp["w1_x2"], hp["w1_x3"], hp["w1_g"], hp["b1"],
      hp["w2"], hp["b2"], hp["w3"], hp["b3"], hp["w4"], hp["b4"])


# ---------------------------------------------------------------------------
# DGN forward
# ---------------------------------------------------------------------------
def dgn_forward(x_bcn, params, k=5):
    """x_bcn: (B, C, N) (PyTorch convention) -> (B, out_channel, N)."""
    x = jnp.transpose(x_bcn, (0, 2, 1)).astype(jnp.float32)     # (B, N, C)
    cin_p = params["ec1"]["w1"].shape[0]
    c = x.shape[-1]
    if cin_p != c:
        # Zero-pad point channels to a sublane-friendly width; does not change
        # the kNN distances or the conv result (extra weight rows are zero).
        x = jnp.pad(x, ((0, 0), (0, 0), (0, cin_p - c)))
    x1 = edge_conv(x, params["ec1"], k)                         # (B, N, 64)
    x2 = edge_conv(x1, params["ec2"], k)                        # (B, N, 64)
    x3 = edge_conv(x2, params["ec3"], k)                        # (B, N, 64)
    g = global_feature(x3, params)                              # (B, 1, 1024)
    out = head_mlp(x2, x3, g, params["head"])                   # (B, N, out)
    return jnp.transpose(out, (0, 2, 1))


# ---------------------------------------------------------------------------
# Deterministic synthetic parameters + kernel-side preparation (bf16 weights,
# folded BatchNorm, split mlp1, channel padding).
# ---------------------------------------------------------------------------
def _bn_params(key, c):
    k1, k2 = jax.random.split(key)
    scale = 1.0 + 0.05 * jax.random.normal(k1, (c,), jnp.float32)
    shift = 0.05 * jax.random.normal(k2, (c,), jnp.float32)
    return scale, shift


def init_edgeconv(key, cin, cout):
    ks = jax.random.split(key, 5)
    return {
        "w1": 0.1 * jax.random.normal(ks[0], (cin, 64), jnp.float32),
        "w2": 0.1 * jax.random.normal(ks[1], (64, 64), jnp.float32),
        "w3": 0.1 * jax.random.normal(ks[2], (64, cout), jnp.float32),
        "bn1": _bn_params(ks[3], 64),
        "bn2": _bn_params(ks[4], cout),
    }


def init_dgn(key, in_channel, out_channel=256):
    ks = jax.random.split(key, 10)
    p = {
        "ec1": init_edgeconv(ks[0], in_channel, 64),
        "ec2": init_edgeconv(ks[1], 64, 64),
        "ec3": init_edgeconv(ks[2], 64, 64),
        "conv_w": 0.1 * jax.random.normal(ks[3], (64, 1024), jnp.float32),
        "conv_b": 0.05 * jax.random.normal(ks[4], (1024,), jnp.float32),
        "norm": _bn_params(ks[5], 1024),
    }

    def mlp(key, cin, cout, with_bn=True):
        k1, k2, k3 = jax.random.split(key, 3)
        w = 0.1 * jax.random.normal(k1, (cin, cout), jnp.float32)
        b = 0.05 * jax.random.normal(k2, (cout,), jnp.float32)
        if with_bn:
            s, sh = _bn_params(k3, cout)
        else:
            s, sh = jnp.ones((cout,), jnp.float32), jnp.zeros((cout,), jnp.float32)
        return {"w": w, "b": b, "scale": s, "shift": sh}

    p["mlp1"] = mlp(ks[6], 2 * 64 + 1024, 256)
    p["mlp2"] = mlp(ks[7], 256, 256)
    p["mlp3"] = mlp(ks[8], 256, 128)
    p["mlp4"] = mlp(ks[9], 128, out_channel, with_bn=False)
    return p


def prepare_params(raw):
    """Kernel-ready params: bf16 matmul weights, (1, C) f32 affine vectors,
    channel padding for the first EdgeConv, and eval-mode BN folded into the
    activation-free head MLP layers."""
    def row(v):
        return v.reshape(1, -1).astype(jnp.float32)

    def wcast(w):
        return w.astype(jnp.bfloat16)

    out = {}
    for name in ("ec1", "ec2", "ec3"):
        e = raw[name]
        w1 = e["w1"]
        cin = w1.shape[0]
        cin_p = max(8, ((cin + 7) // 8) * 8)
        if cin_p != cin:
            w1 = jnp.pad(w1, ((0, cin_p - cin), (0, 0)))
        s1, sh1 = e["bn1"]
        s2, sh2 = e["bn2"]
        out[name] = {
            "w1": wcast(w1), "w2": wcast(e["w2"]), "w3": wcast(e["w3"]),
            "bn1_scale": row(s1), "bn1_shift": row(sh1),
            "bn2_scale": row(s2), "bn2_shift": row(sh2),
        }

    ns, nsh = raw["norm"]
    out["conv_w"] = wcast(raw["conv_w"])
    out["conv_b"] = row(raw["conv_b"])
    out["norm_scale"] = row(ns)
    out["norm_shift"] = row(nsh)

    # mlp1..mlp3: Conv1d -> BatchNorm1d -> Dropout(0.5); no activation, so fold:
    # (x @ w + b) * s + sh == x @ (w * s) + (b * s + sh)
    def fold(m):
        w = m["w"] * m["scale"][None, :]
        b = m["b"] * m["scale"] + m["shift"]
        return w, b

    w1, b1 = fold(raw["mlp1"])
    w2, b2 = fold(raw["mlp2"])
    w3, b3 = fold(raw["mlp3"])
    w4, b4 = raw["mlp4"]["w"], raw["mlp4"]["b"]
    out["head"] = {
        # split along concat order [x2 (64) | x3 (64) | globalFeat (1024)]
        "w1_x2": wcast(w1[:64]), "w1_x3": wcast(w1[64:128]), "w1_g": wcast(w1[128:]),
        "b1": row(b1),
        "w2": wcast(w2), "b2": row(b2),
        "w3": wcast(w3), "b3": row(b3),
        "w4": wcast(w4), "b4": row(b4),
    }
    return out


if __name__ == "__main__":
    key = jax.random.PRNGKey(0)
    kx, kp = jax.random.split(key)
    B, C, N = 2, 3, 16          # small point cloud: 3-channel coords, 16 points
    out_channel, k = 64, 5
    x = jax.random.normal(kx, (B, C, N), jnp.float32)
    raw_params = init_dgn(kp, in_channel=C, out_channel=out_channel)
    params = prepare_params(raw_params)

    fwd = jax.jit(functools.partial(dgn_forward, k=k))
    out = fwd(x, params)
    jax.block_until_ready(out)
    assert out.shape == (B, out_channel, N), out.shape
    assert bool(jnp.all(jnp.isfinite(out)))
    print("KERNEL_OK")
</pallas_src>

<mosaic_0001>
module attributes {stable_mosaic.version = 11 : i64} {
  func.func @_edgeconv_kernel(%arg0: i32, %arg1: memref<5x32x8xf32, #tpu.memory_space<vmem>>, %arg2: memref<8x64xbf16, #tpu.memory_space<vmem>>, %arg3: memref<64x64xbf16, #tpu.memory_space<vmem>>, %arg4: memref<64x64xbf16, #tpu.memory_space<vmem>>, %arg5: memref<1x64xf32, #tpu.memory_space<vmem>>, %arg6: memref<1x64xf32, #tpu.memory_space<vmem>>, %arg7: memref<1x64xf32, #tpu.memory_space<vmem>>, %arg8: memref<1x64xf32, #tpu.memory_space<vmem>>, %arg9: memref<32x64xf32, #tpu.memory_space<vmem>>) attributes {dimension_semantics = [#tpu.dimension_semantics<parallel>], iteration_bounds = array<i64: 1>, scalar_prefetch = 0 : i64, scratch_operands = 0 : i64, tpu.core_type = #tpu.core_type<tc>, window_params = [{transform_indices = @transform_0, window_bounds = array<i64: 5, 32, 8>}, {pipeline_mode = #tpu.pipeline_mode<synchronous>, transform_indices = @transform_1, window_bounds = array<i64: 8, 64>}, {pipeline_mode = #tpu.pipeline_mode<synchronous>, transform_indices = @transform_2, window_bounds = array<i64: 64, 64>}, {pipeline_mode = #tpu.pipeline_mode<synchronous>, transform_indices = @transform_3, window_bounds = array<i64: 64, 64>}, {pipeline_mode = #tpu.pipeline_mode<synchronous>, transform_indices = @transform_4, window_bounds = array<i64: 1, 64>}, {pipeline_mode = #tpu.pipeline_mode<synchronous>, transform_indices = @transform_5, window_bounds = array<i64: 1, 64>}, {pipeline_mode = #tpu.pipeline_mode<synchronous>, transform_indices = @transform_6, window_bounds = array<i64: 1, 64>}, {pipeline_mode = #tpu.pipeline_mode<synchronous>, transform_indices = @transform_7, window_bounds = array<i64: 1, 64>}, {transform_indices = @transform_8, window_bounds = array<i64: 32, 64>}]} {
    %c0 = arith.constant 0 : index
    %c0_0 = arith.constant 0 : index
    %c0_1 = arith.constant 0 : index
    %0 = vector.load %arg1[%c0, %c0_0, %c0_1] : memref<5x32x8xf32, #tpu.memory_space<vmem>>, vector<1x32x8xf32>
    %1 = vector.shape_cast %0 : vector<1x32x8xf32> to vector<32x8xf32>
    %2 = arith.truncf %1 : vector<32x8xf32> to vector<32x8xbf16>
    %c0_2 = arith.constant 0 : index
    %c0_3 = arith.constant 0 : index
    %3 = vector.load %arg2[%c0_2, %c0_3] : memref<8x64xbf16, #tpu.memory_space<vmem>>, vector<8x64xbf16>
    %cst = arith.constant dense<0.000000e+00> : vector<32x64xf32>
    %4 = tpu.matmul %2, %3, %cst {dimension_numbers = #tpu.dot_dimension_numbers<[1], [0], [0], [1], [0, 0, 1, 1], [], []>} : vector<32x8xbf16>, vector<8x64xbf16>, vector<32x64xf32> -> vector<32x64xf32>
    %cst_4 = arith.constant 0.000000e+00 : f32
    %5 = vector.broadcast %cst_4 : f32 to vector<32x64xf32>
    %6 = arith.cmpf oge, %4, %5 : vector<32x64xf32>
    %cst_5 = arith.constant 2.000000e-01 : f32
    %7 = vector.broadcast %cst_5 : f32 to vector<32x64xf32>
    %8 = arith.mulf %7, %4 : vector<32x64xf32>
    %9 = arith.select %6, %4, %8 : vector<32x64xi1>, vector<32x64xf32>
    %c0_6 = arith.constant 0 : index
    %c0_7 = arith.constant 0 : index
    %10 = vector.load %arg5[%c0_6, %c0_7] : memref<1x64xf32, #tpu.memory_space<vmem>>, vector<1x64xf32>
    %11 = vector.broadcast %10 : vector<1x64xf32> to vector<32x64xf32>
    %12 = arith.mulf %9, %11 : vector<32x64xf32>
    %c0_8 = arith.constant 0 : index
    %c0_9 = arith.constant 0 : index
    %13 = vector.load %arg6[%c0_8, %c0_9] : memref<1x64xf32, #tpu.memory_space<vmem>>, vector<1x64xf32>
    %14 = vector.broadcast %13 : vector<1x64xf32> to vector<32x64xf32>
    %15 = arith.addf %12, %14 : vector<32x64xf32>
    %16 = arith.truncf %15 : vector<32x64xf32> to vector<32x64xbf16>
    %c0_10 = arith.constant 0 : index
    %c0_11 = arith.constant 0 : index
    %17 = vector.load %arg3[%c0_10, %c0_11] : memref<64x64xbf16, #tpu.memory_space<vmem>>, vector<64x64xbf16>
    %cst_12 = arith.constant dense<0.000000e+00> : vector<32x64xf32>
    %18 = tpu.matmul %16, %17, %cst_12 {dimension_numbers = #tpu.dot_dimension_numbers<[1], [0], [0], [1], [0, 0, 1, 1], [], []>} : vector<32x64xbf16>, vector<64x64xbf16>, vector<32x64xf32> -> vector<32x64xf32>
    %cst_13 = arith.constant 0.000000e+00 : f32
    %19 = vector.broadcast %cst_13 : f32 to vector<32x64xf32>
    %20 = arith.cmpf oge, %18, %19 : vector<32x64xf32>
    %cst_14 = arith.constant 2.000000e-01 : f32
    %21 = vector.broadcast %cst_14 : f32 to vector<32x64xf32>
    %22 = arith.mulf %21, %18 : vector<32x64xf32>
    %23 = arith.select %20, %18, %22 : vector<32x64xi1>, vector<32x64xf32>
    %c0_15 = arith.constant 0 : index
    %c0_16 = arith.constant 0 : index
    %24 = vector.load %arg5[%c0_15, %c0_16] : memref<1x64xf32, #tpu.memory_space<vmem>>, vector<1x64xf32>
    %25 = vector.broadcast %24 : vector<1x64xf32> to vector<32x64xf32>
    %26 = arith.mulf %23, %25 : vector<32x64xf32>
    %c0_17 = arith.constant 0 : index
    %c0_18 = arith.constant 0 : index
    %27 = vector.load %arg6[%c0_17, %c0_18] : memref<1x64xf32, #tpu.memory_space<vmem>>, vector<1x64xf32>
    %28 = vector.broadcast %27 : vector<1x64xf32> to vector<32x64xf32>
    %29 = arith.addf %26, %28 : vector<32x64xf32>
    %30 = arith.truncf %29 : vector<32x64xf32> to vector<32x64xbf16>
    %c0_19 = arith.constant 0 : index
    %c0_20 = arith.constant 0 : index
    %31 = vector.load %arg4[%c0_19, %c0_20] : memref<64x64xbf16, #tpu.memory_space<vmem>>, vector<64x64xbf16>
    %cst_21 = arith.constant dense<0.000000e+00> : vector<32x64xf32>
    %32 = tpu.matmul %30, %31, %cst_21 {dimension_numbers = #tpu.dot_dimension_numbers<[1], [0], [0], [1], [0, 0, 1, 1], [], []>} : vector<32x64xbf16>, vector<64x64xbf16>, vector<32x64xf32> -> vector<32x64xf32>
    %cst_22 = arith.constant 0.000000e+00 : f32
    %33 = vector.broadcast %cst_22 : f32 to vector<32x64xf32>
    %34 = arith.cmpf oge, %32, %33 : vector<32x64xf32>
    %cst_23 = arith.constant 2.000000e-01 : f32
    %35 = vector.broadcast %cst_23 : f32 to vector<32x64xf32>
    %36 = arith.mulf %35, %32 : vector<32x64xf32>
    %37 = arith.select %34, %32, %36 : vector<32x64xi1>, vector<32x64xf32>
    %c0_24 = arith.constant 0 : index
    %c0_25 = arith.constant 0 : index
    %38 = vector.load %arg7[%c0_24, %c0_25] : memref<1x64xf32, #tpu.memory_space<vmem>>, vector<1x64xf32>
    %39 = vector.broadcast %38 : vector<1x64xf32> to vector<32x64xf32>
    %40 = arith.mulf %37, %39 : vector<32x64xf32>
    %c0_26 = arith.constant 0 : index
    %c0_27 = arith.constant 0 : index
    %41 = vector.load %arg8[%c0_26, %c0_27] : memref<1x64xf32, #tpu.memory_space<vmem>>, vector<1x64xf32>
    %42 = vector.broadcast %41 : vector<1x64xf32> to vector<32x64xf32>
    %43 = arith.addf %40, %42 : vector<32x64xf32>
    %c1 = arith.constant 1 : index
    %c0_28 = arith.constant 0 : index
    %c0_29 = arith.constant 0 : index
    %44 = vector.load %arg1[%c1, %c0_28, %c0_29] : memref<5x32x8xf32, #tpu.memory_space<vmem>>, vector<1x32x8xf32>
    %45 = vector.shape_cast %44 : vector<1x32x8xf32> to vector<32x8xf32>
    %46 = arith.truncf %45 : vector<32x8xf32> to vector<32x8xbf16>
    %c0_30 = arith.constant 0 : index
    %c0_31 = arith.constant 0 : index
    %47 = vector.load %arg2[%c0_30, %c0_31] : memref<8x64xbf16, #tpu.memory_space<vmem>>, vector<8x64xbf16>
    %cst_32 = arith.constant dense<0.000000e+00> : vector<32x64xf32>
    %48 = tpu.matmul %46, %47, %cst_32 {dimension_numbers = #tpu.dot_dimension_numbers<[1], [0], [0], [1], [0, 0, 1, 1], [], []>} : vector<32x8xbf16>, vector<8x64xbf16>, vector<32x64xf32> -> vector<32x64xf32>
    %cst_33 = arith.constant 0.000000e+00 : f32
    %49 = vector.broadcast %cst_33 : f32 to vector<32x64xf32>
    %50 = arith.cmpf oge, %48, %49 : vector<32x64xf32>
    %cst_34 = arith.constant 2.000000e-01 : f32
    %51 = vector.broadcast %cst_34 : f32 to vector<32x64xf32>
    %52 = arith.mulf %51, %48 : vector<32x64xf32>
    %53 = arith.select %50, %48, %52 : vector<32x64xi1>, vector<32x64xf32>
    %c0_35 = arith.constant 0 : index
    %c0_36 = arith.constant 0 : index
    %54 = vector.load %arg5[%c0_35, %c0_36] : memref<1x64xf32, #tpu.memory_space<vmem>>, vector<1x64xf32>
    %55 = vector.broadcast %54 : vector<1x64xf32> to vector<32x64xf32>
    %56 = arith.mulf %53, %55 : vector<32x64xf32>
    %c0_37 = arith.constant 0 : index
    %c0_38 = arith.constant 0 : index
    %57 = vector.load %arg6[%c0_37, %c0_38] : memref<1x64xf32, #tpu.memory_space<vmem>>, vector<1x64xf32>
    %58 = vector.broadcast %57 : vector<1x64xf32> to vector<32x64xf32>
    %59 = arith.addf %56, %58 : vector<32x64xf32>
    %60 = arith.truncf %59 : vector<32x64xf32> to vector<32x64xbf16>
    %c0_39 = arith.constant 0 : index
    %c0_40 = arith.constant 0 : index
    %61 = vector.load %arg3[%c0_39, %c0_40] : memref<64x64xbf16, #tpu.memory_space<vmem>>, vector<64x64xbf16>
    %cst_41 = arith.constant dense<0.000000e+00> : vector<32x64xf32>
    %62 = tpu.matmul %60, %61, %cst_41 {dimension_numbers = #tpu.dot_dimension_numbers<[1], [0], [0], [1], [0, 0, 1, 1], [], []>} : vector<32x64xbf16>, vector<64x64xbf16>, vector<32x64xf32> -> vector<32x64xf32>
    %cst_42 = arith.constant 0.000000e+00 : f32
    %63 = vector.broadcast %cst_42 : f32 to vector<32x64xf32>
    %64 = arith.cmpf oge, %62, %63 : vector<32x64xf32>
    %cst_43 = arith.constant 2.000000e-01 : f32
    %65 = vector.broadcast %cst_43 : f32 to vector<32x64xf32>
    %66 = arith.mulf %65, %62 : vector<32x64xf32>
    %67 = arith.select %64, %62, %66 : vector<32x64xi1>, vector<32x64xf32>
    %c0_44 = arith.constant 0 : index
    %c0_45 = arith.constant 0 : index
    %68 = vector.load %arg5[%c0_44, %c0_45] : memref<1x64xf32, #tpu.memory_space<vmem>>, vector<1x64xf32>
    %69 = vector.broadcast %68 : vector<1x64xf32> to vector<32x64xf32>
    %70 = arith.mulf %67, %69 : vector<32x64xf32>
    %c0_46 = arith.constant 0 : index
    %c0_47 = arith.constant 0 : index
    %71 = vector.load %arg6[%c0_46, %c0_47] : memref<1x64xf32, #tpu.memory_space<vmem>>, vector<1x64xf32>
    %72 = vector.broadcast %71 : vector<1x64xf32> to vector<32x64xf32>
    %73 = arith.addf %70, %72 : vector<32x64xf32>
    %74 = arith.truncf %73 : vector<32x64xf32> to vector<32x64xbf16>
    %c0_48 = arith.constant 0 : index
    %c0_49 = arith.constant 0 : index
    %75 = vector.load %arg4[%c0_48, %c0_49] : memref<64x64xbf16, #tpu.memory_space<vmem>>, vector<64x64xbf16>
    %cst_50 = arith.constant dense<0.000000e+00> : vector<32x64xf32>
    %76 = tpu.matmul %74, %75, %cst_50 {dimension_numbers = #tpu.dot_dimension_numbers<[1], [0], [0], [1], [0, 0, 1, 1], [], []>} : vector<32x64xbf16>, vector<64x64xbf16>, vector<32x64xf32> -> vector<32x64xf32>
    %cst_51 = arith.constant 0.000000e+00 : f32
    %77 = vector.broadcast %cst_51 : f32 to vector<32x64xf32>
    %78 = arith.cmpf oge, %76, %77 : vector<32x64xf32>
    %cst_52 = arith.constant 2.000000e-01 : f32
    %79 = vector.broadcast %cst_52 : f32 to vector<32x64xf32>
    %80 = arith.mulf %79, %76 : vector<32x64xf32>
    %81 = arith.select %78, %76, %80 : vector<32x64xi1>, vector<32x64xf32>
    %c0_53 = arith.constant 0 : index
    %c0_54 = arith.constant 0 : index
    %82 = vector.load %arg7[%c0_53, %c0_54] : memref<1x64xf32, #tpu.memory_space<vmem>>, vector<1x64xf32>
    %83 = vector.broadcast %82 : vector<1x64xf32> to vector<32x64xf32>
    %84 = arith.mulf %81, %83 : vector<32x64xf32>
    %c0_55 = arith.constant 0 : index
    %c0_56 = arith.constant 0 : index
    %85 = vector.load %arg8[%c0_55, %c0_56] : memref<1x64xf32, #tpu.memory_space<vmem>>, vector<1x64xf32>
    %86 = vector.broadcast %85 : vector<1x64xf32> to vector<32x64xf32>
    %87 = arith.addf %84, %86 : vector<32x64xf32>
    %88 = arith.maximumf %43, %87 : vector<32x64xf32>
    %c2 = arith.constant 2 : index
    %c0_57 = arith.constant 0 : index
    %c0_58 = arith.constant 0 : index
    %89 = vector.load %arg1[%c2, %c0_57, %c0_58] : memref<5x32x8xf32, #tpu.memory_space<vmem>>, vector<1x32x8xf32>
    %90 = vector.shape_cast %89 : vector<1x32x8xf32> to vector<32x8xf32>
    %91 = arith.truncf %90 : vector<32x8xf32> to vector<32x8xbf16>
    %c0_59 = arith.constant 0 : index
    %c0_60 = arith.constant 0 : index
    %92 = vector.load %arg2[%c0_59, %c0_60] : memref<8x64xbf16, #tpu.memory_space<vmem>>, vector<8x64xbf16>
    %cst_61 = arith.constant dense<0.000000e+00> : vector<32x64xf32>
    %93 = tpu.matmul %91, %92, %cst_61 {dimension_numbers = #tpu.dot_dimension_numbers<[1], [0], [0], [1], [0, 0, 1, 1], [], []>} : vector<32x8xbf16>, vector<8x64xbf16>, vector<32x64xf32> -> vector<32x64xf32>
    %cst_62 = arith.constant 0.000000e+00 : f32
    %94 = vector.broadcast %cst_62 : f32 to vector<32x64xf32>
    %95 = arith.cmpf oge, %93, %94 : vector<32x64xf32>
    %cst_63 = arith.constant 2.000000e-01 : f32
    %96 = vector.broadcast %cst_63 : f32 to vector<32x64xf32>
    %97 = arith.mulf %96, %93 : vector<32x64xf32>
    %98 = arith.select %95, %93, %97 : vector<32x64xi1>, vector<32x64xf32>
    %c0_64 = arith.constant 0 : index
    %c0_65 = arith.constant 0 : index
    %99 = vector.load %arg5[%c0_64, %c0_65] : memref<1x64xf32, #tpu.memory_space<vmem>>, vector<1x64xf32>
    %100 = vector.broadcast %99 : vector<1x64xf32> to vector<32x64xf32>
    %101 = arith.mulf %98, %100 : vector<32x64xf32>
    %c0_66 = arith.constant 0 : index
    %c0_67 = arith.constant 0 : index
    %102 = vector.load %arg6[%c0_66, %c0_67] : memref<1x64xf32, #tpu.memory_space<vmem>>, vector<1x64xf32>
    %103 = vector.broadcast %102 : vector<1x64xf32> to vector<32x64xf32>
    %104 = arith.addf %101, %103 : vector<32x64xf32>
    %105 = arith.truncf %104 : vector<32x64xf32> to vector<32x64xbf16>
    %c0_68 = arith.constant 0 : index
    %c0_69 = arith.constant 0 : index
    %106 = vector.load %arg3[%c0_68, %c0_69] : memref<64x64xbf16, #tpu.memory_space<vmem>>, vector<64x64xbf16>
    %cst_70 = arith.constant dense<0.000000e+00> : vector<32x64xf32>
    %107 = tpu.matmul %105, %106, %cst_70 {dimension_numbers = #tpu.dot_dimension_numbers<[1], [0], [0], [1], [0, 0, 1, 1], [], []>} : vector<32x64xbf16>, vector<64x64xbf16>, vector<32x64xf32> -> vector<32x64xf32>
    %cst_71 = arith.constant 0.000000e+00 : f32
    %108 = vector.broadcast %cst_71 : f32 to vector<32x64xf32>
    %109 = arith.cmpf oge, %107, %108 : vector<32x64xf32>
    %cst_72 = arith.constant 2.000000e-01 : f32
    %110 = vector.broadcast %cst_72 : f32 to vector<32x64xf32>
    %111 = arith.mulf %110, %107 : vector<32x64xf32>
    %112 = arith.select %109, %107, %111 : vector<32x64xi1>, vector<32x64xf32>
    %c0_73 = arith.constant 0 : index
    %c0_74 = arith.constant 0 : index
    %113 = vector.load %arg5[%c0_73, %c0_74] : memref<1x64xf32, #tpu.memory_space<vmem>>, vector<1x64xf32>
    %114 = vector.broadcast %113 : vector<1x64xf32> to vector<32x64xf32>
    %115 = arith.mulf %112, %114 : vector<32x64xf32>
    %c0_75 = arith.constant 0 : index
    %c0_76 = arith.constant 0 : index
    %116 = vector.load %arg6[%c0_75, %c0_76] : memref<1x64xf32, #tpu.memory_space<vmem>>, vector<1x64xf32>
    %117 = vector.broadcast %116 : vector<1x64xf32> to vector<32x64xf32>
    %118 = arith.addf %115, %117 : vector<32x64xf32>
    %119 = arith.truncf %118 : vector<32x64xf32> to vector<32x64xbf16>
    %c0_77 = arith.constant 0 : index
    %c0_78 = arith.constant 0 : index
    %120 = vector.load %arg4[%c0_77, %c0_78] : memref<64x64xbf16, #tpu.memory_space<vmem>>, vector<64x64xbf16>
    %cst_79 = arith.constant dense<0.000000e+00> : vector<32x64xf32>
    %121 = tpu.matmul %119, %120, %cst_79 {dimension_numbers = #tpu.dot_dimension_numbers<[1], [0], [0], [1], [0, 0, 1, 1], [], []>} : vector<32x64xbf16>, vector<64x64xbf16>, vector<32x64xf32> -> vector<32x64xf32>
    %cst_80 = arith.constant 0.000000e+00 : f32
    %122 = vector.broadcast %cst_80 : f32 to vector<32x64xf32>
    %123 = arith.cmpf oge, %121, %122 : vector<32x64xf32>
    %cst_81 = arith.constant 2.000000e-01 : f32
    %124 = vector.broadcast %cst_81 : f32 to vector<32x64xf32>
    %125 = arith.mulf %124, %121 : vector<32x64xf32>
    %126 = arith.select %123, %121, %125 : vector<32x64xi1>, vector<32x64xf32>
    %c0_82 = arith.constant 0 : index
    %c0_83 = arith.constant 0 : index
    %127 = vector.load %arg7[%c0_82, %c0_83] : memref<1x64xf32, #tpu.memory_space<vmem>>, vector<1x64xf32>
    %128 = vector.broadcast %127 : vector<1x64xf32> to vector<32x64xf32>
    %129 = arith.mulf %126, %128 : vector<32x64xf32>
    %c0_84 = arith.constant 0 : index
    %c0_85 = arith.constant 0 : index
    %130 = vector.load %arg8[%c0_84, %c0_85] : memref<1x64xf32, #tpu.memory_space<vmem>>, vector<1x64xf32>
    %131 = vector.broadcast %130 : vector<1x64xf32> to vector<32x64xf32>
    %132 = arith.addf %129, %131 : vector<32x64xf32>
    %133 = arith.maximumf %88, %132 : vector<32x64xf32>
    %c3 = arith.constant 3 : index
    %c0_86 = arith.constant 0 : index
    %c0_87 = arith.constant 0 : index
    %134 = vector.load %arg1[%c3, %c0_86, %c0_87] : memref<5x32x8xf32, #tpu.memory_space<vmem>>, vector<1x32x8xf32>
    %135 = vector.shape_cast %134 : vector<1x32x8xf32> to vector<32x8xf32>
    %136 = arith.truncf %135 : vector<32x8xf32> to vector<32x8xbf16>
    %c0_88 = arith.constant 0 : index
    %c0_89 = arith.constant 0 : index
    %137 = vector.load %arg2[%c0_88, %c0_89] : memref<8x64xbf16, #tpu.memory_space<vmem>>, vector<8x64xbf16>
    %cst_90 = arith.constant dense<0.000000e+00> : vector<32x64xf32>
    %138 = tpu.matmul %136, %137, %cst_90 {dimension_numbers = #tpu.dot_dimension_numbers<[1], [0], [0], [1], [0, 0, 1, 1], [], []>} : vector<32x8xbf16>, vector<8x64xbf16>, vector<32x64xf32> -> vector<32x64xf32>
    %cst_91 = arith.constant 0.000000e+00 : f32
    %139 = vector.broadcast %cst_91 : f32 to vector<32x64xf32>
    %140 = arith.cmpf oge, %138, %139 : vector<32x64xf32>
    %cst_92 = arith.constant 2.000000e-01 : f32
    %141 = vector.broadcast %cst_92 : f32 to vector<32x64xf32>
    %142 = arith.mulf %141, %138 : vector<32x64xf32>
    %143 = arith.select %140, %138, %142 : vector<32x64xi1>, vector<32x64xf32>
    %c0_93 = arith.constant 0 : index
    %c0_94 = arith.constant 0 : index
    %144 = vector.load %arg5[%c0_93, %c0_94] : memref<1x64xf32, #tpu.memory_space<vmem>>, vector<1x64xf32>
    %145 = vector.broadcast %144 : vector<1x64xf32> to vector<32x64xf32>
    %146 = arith.mulf %143, %145 : vector<32x64xf32>
    %c0_95 = arith.constant 0 : index
    %c0_96 = arith.constant 0 : index
    %147 = vector.load %arg6[%c0_95, %c0_96] : memref<1x64xf32, #tpu.memory_space<vmem>>, vector<1x64xf32>
    %148 = vector.broadcast %147 : vector<1x64xf32> to vector<32x64xf32>
    %149 = arith.addf %146, %148 : vector<32x64xf32>
    %150 = arith.truncf %149 : vector<32x64xf32> to vector<32x64xbf16>
    %c0_97 = arith.constant 0 : index
    %c0_98 = arith.constant 0 : index
    %151 = vector.load %arg3[%c0_97, %c0_98] : memref<64x64xbf16, #tpu.memory_space<vmem>>, vector<64x64xbf16>
    %cst_99 = arith.constant dense<0.000000e+00> : vector<32x64xf32>
    %152 = tpu.matmul %150, %151, %cst_99 {dimension_numbers = #tpu.dot_dimension_numbers<[1], [0], [0], [1], [0, 0, 1, 1], [], []>} : vector<32x64xbf16>, vector<64x64xbf16>, vector<32x64xf32> -> vector<32x64xf32>
    %cst_100 = arith.constant 0.000000e+00 : f32
    %153 = vector.broadcast %cst_100 : f32 to vector<32x64xf32>
    %154 = arith.cmpf oge, %152, %153 : vector<32x64xf32>
    %cst_101 = arith.constant 2.000000e-01 : f32
    %155 = vector.broadcast %cst_101 : f32 to vector<32x64xf32>
    %156 = arith.mulf %155, %152 : vector<32x64xf32>
    %157 = arith.select %154, %152, %156 : vector<32x64xi1>, vector<32x64xf32>
    %c0_102 = arith.constant 0 : index
    %c0_103 = arith.constant 0 : index
    %158 = vector.load %arg5[%c0_102, %c0_103] : memref<1x64xf32, #tpu.memory_space<vmem>>, vector<1x64xf32>
    %159 = vector.broadcast %158 : vector<1x64xf32> to vector<32x64xf32>
    %160 = arith.mulf %157, %159 : vector<32x64xf32>
    %c0_104 = arith.constant 0 : index
    %c0_105 = arith.constant 0 : index
    %161 = vector.load %arg6[%c0_104, %c0_105] : memref<1x64xf32, #tpu.memory_space<vmem>>, vector<1x64xf32>
    %162 = vector.broadcast %161 : vector<1x64xf32> to vector<32x64xf32>
    %163 = arith.addf %160, %162 : vector<32x64xf32>
    %164 = arith.truncf %163 : vector<32x64xf32> to vector<32x64xbf16>
    %c0_106 = arith.constant 0 : index
    %c0_107 = arith.constant 0 : index
    %165 = vector.load %arg4[%c0_106, %c0_107] : memref<64x64xbf16, #tpu.memory_space<vmem>>, vector<64x64xbf16>
    %cst_108 = arith.constant dense<0.000000e+00> : vector<32x64xf32>
    %166 = tpu.matmul %164, %165, %cst_108 {dimension_numbers = #tpu.dot_dimension_numbers<[1], [0], [0], [1], [0, 0, 1, 1], [], []>} : vector<32x64xbf16>, vector<64x64xbf16>, vector<32x64xf32> -> vector<32x64xf32>
    %cst_109 = arith.constant 0.000000e+00 : f32
    %167 = vector.broadcast %cst_109 : f32 to vector<32x64xf32>
    %168 = arith.cmpf oge, %166, %167 : vector<32x64xf32>
    %cst_110 = arith.constant 2.000000e-01 : f32
    %169 = vector.broadcast %cst_110 : f32 to vector<32x64xf32>
    %170 = arith.mulf %169, %166 : vector<32x64xf32>
    %171 = arith.select %168, %166, %170 : vector<32x64xi1>, vector<32x64xf32>
    %c0_111 = arith.constant 0 : index
    %c0_112 = arith.constant 0 : index
    %172 = vector.load %arg7[%c0_111, %c0_112] : memref<1x64xf32, #tpu.memory_space<vmem>>, vector<1x64xf32>
    %173 = vector.broadcast %172 : vector<1x64xf32> to vector<32x64xf32>
    %174 = arith.mulf %171, %173 : vector<32x64xf32>
    %c0_113 = arith.constant 0 : index
    %c0_114 = arith.constant 0 : index
    %175 = vector.load %arg8[%c0_113, %c0_114] : memref<1x64xf32, #tpu.memory_space<vmem>>, vector<1x64xf32>
    %176 = vector.broadcast %175 : vector<1x64xf32> to vector<32x64xf32>
    %177 = arith.addf %174, %176 : vector<32x64xf32>
    %178 = arith.maximumf %133, %177 : vector<32x64xf32>
    %c4 = arith.constant 4 : index
    %c0_115 = arith.constant 0 : index
    %c0_116 = arith.constant 0 : index
    %179 = vector.load %arg1[%c4, %c0_115, %c0_116] : memref<5x32x8xf32, #tpu.memory_space<vmem>>, vector<1x32x8xf32>
    %180 = vector.shape_cast %179 : vector<1x32x8xf32> to vector<32x8xf32>
    %181 = arith.truncf %180 : vector<32x8xf32> to vector<32x8xbf16>
    %c0_117 = arith.constant 0 : index
    %c0_118 = arith.constant 0 : index
    %182 = vector.load %arg2[%c0_117, %c0_118] : memref<8x64xbf16, #tpu.memory_space<vmem>>, vector<8x64xbf16>
    %cst_119 = arith.constant dense<0.000000e+00> : vector<32x64xf32>
    %183 = tpu.matmul %181, %182, %cst_119 {dimension_numbers = #tpu.dot_dimension_numbers<[1], [0], [0], [1], [0, 0, 1, 1], [], []>} : vector<32x8xbf16>, vector<8x64xbf16>, vector<32x64xf32> -> vector<32x64xf32>
    %cst_120 = arith.constant 0.000000e+00 : f32
    %184 = vector.broadcast %cst_120 : f32 to vector<32x64xf32>
    %185 = arith.cmpf oge, %183, %184 : vector<32x64xf32>
    %cst_121 = arith.constant 2.000000e-01 : f32
    %186 = vector.broadcast %cst_121 : f32 to vector<32x64xf32>
    %187 = arith.mulf %186, %183 : vector<32x64xf32>
    %188 = arith.select %185, %183, %187 : vector<32x64xi1>, vector<32x64xf32>
    %c0_122 = arith.constant 0 : index
    %c0_123 = arith.constant 0 : index
    %189 = vector.load %arg5[%c0_122, %c0_123] : memref<1x64xf32, #tpu.memory_space<vmem>>, vector<1x64xf32>
    %190 = vector.broadcast %189 : vector<1x64xf32> to vector<32x64xf32>
    %191 = arith.mulf %188, %190 : vector<32x64xf32>
    %c0_124 = arith.constant 0 : index
    %c0_125 = arith.constant 0 : index
    %192 = vector.load %arg6[%c0_124, %c0_125] : memref<1x64xf32, #tpu.memory_space<vmem>>, vector<1x64xf32>
    %193 = vector.broadcast %192 : vector<1x64xf32> to vector<32x64xf32>
    %194 = arith.addf %191, %193 : vector<32x64xf32>
    %195 = arith.truncf %194 : vector<32x64xf32> to vector<32x64xbf16>
    %c0_126 = arith.constant 0 : index
    %c0_127 = arith.constant 0 : index
    %196 = vector.load %arg3[%c0_126, %c0_127] : memref<64x64xbf16, #tpu.memory_space<vmem>>, vector<64x64xbf16>
    %cst_128 = arith.constant dense<0.000000e+00> : vector<32x64xf32>
    %197 = tpu.matmul %195, %196, %cst_128 {dimension_numbers = #tpu.dot_dimension_numbers<[1], [0], [0], [1], [0, 0, 1, 1], [], []>} : vector<32x64xbf16>, vector<64x64xbf16>, vector<32x64xf32> -> vector<32x64xf32>
    %cst_129 = arith.constant 0.000000e+00 : f32
    %198 = vector.broadcast %cst_129 : f32 to vector<32x64xf32>
    %199 = arith.cmpf oge, %197, %198 : vector<32x64xf32>
    %cst_130 = arith.constant 2.000000e-01 : f32
    %200 = vector.broadcast %cst_130 : f32 to vector<32x64xf32>
    %201 = arith.mulf %200, %197 : vector<32x64xf32>
    %202 = arith.select %199, %197, %201 : vector<32x64xi1>, vector<32x64xf32>
    %c0_131 = arith.constant 0 : index
    %c0_132 = arith.constant 0 : index
    %203 = vector.load %arg5[%c0_131, %c0_132] : memref<1x64xf32, #tpu.memory_space<vmem>>, vector<1x64xf32>
    %204 = vector.broadcast %203 : vector<1x64xf32> to vector<32x64xf32>
    %205 = arith.mulf %202, %204 : vector<32x64xf32>
    %c0_133 = arith.constant 0 : index
    %c0_134 = arith.constant 0 : index
    %206 = vector.load %arg6[%c0_133, %c0_134] : memref<1x64xf32, #tpu.memory_space<vmem>>, vector<1x64xf32>
    %207 = vector.broadcast %206 : vector<1x64xf32> to vector<32x64xf32>
    %208 = arith.addf %205, %207 : vector<32x64xf32>
    %209 = arith.truncf %208 : vector<32x64xf32> to vector<32x64xbf16>
    %c0_135 = arith.constant 0 : index
    %c0_136 = arith.constant 0 : index
    %210 = vector.load %arg4[%c0_135, %c0_136] : memref<64x64xbf16, #tpu.memory_space<vmem>>, vector<64x64xbf16>
    %cst_137 = arith.constant dense<0.000000e+00> : vector<32x64xf32>
    %211 = tpu.matmul %209, %210, %cst_137 {dimension_numbers = #tpu.dot_dimension_numbers<[1], [0], [0], [1], [0, 0, 1, 1], [], []>} : vector<32x64xbf16>, vector<64x64xbf16>, vector<32x64xf32> -> vector<32x64xf32>
    %cst_138 = arith.constant 0.000000e+00 : f32
    %212 = vector.broadcast %cst_138 : f32 to vector<32x64xf32>
    %213 = arith.cmpf oge, %211, %212 : vector<32x64xf32>
    %cst_139 = arith.constant 2.000000e-01 : f32
    %214 = vector.broadcast %cst_139 : f32 to vector<32x64xf32>
    %215 = arith.mulf %214, %211 : vector<32x64xf32>
    %216 = arith.select %213, %211, %215 : vector<32x64xi1>, vector<32x64xf32>
    %c0_140 = arith.constant 0 : index
    %c0_141 = arith.constant 0 : index
    %217 = vector.load %arg7[%c0_140, %c0_141] : memref<1x64xf32, #tpu.memory_space<vmem>>, vector<1x64xf32>
    %218 = vector.broadcast %217 : vector<1x64xf32> to vector<32x64xf32>
    %219 = arith.mulf %216, %218 : vector<32x64xf32>
    %c0_142 = arith.constant 0 : index
    %c0_143 = arith.constant 0 : index
    %220 = vector.load %arg8[%c0_142, %c0_143] : memref<1x64xf32, #tpu.memory_space<vmem>>, vector<1x64xf32>
    %221 = vector.broadcast %220 : vector<1x64xf32> to vector<32x64xf32>
    %222 = arith.addf %219, %221 : vector<32x64xf32>
    %223 = arith.maximumf %178, %222 : vector<32x64xf32>
    %c0_144 = arith.constant 0 : index
    %c0_145 = arith.constant 0 : index
    %224 = vector.load %arg9[%c0_144, %c0_145] : memref<32x64xf32, #tpu.memory_space<vmem>>, vector<32x64xf32>
    tpu.vector_store %arg9[%c0_144, %c0_145], %223 {strides = array<i32>} : memref<32x64xf32, #tpu.memory_space<vmem>>, vector<32x64xf32>,
    return
  }
  func.func @transform_0(%arg0: i32) -> (i32, i32, i32) {
    %c0_i32 = arith.constant 0 : i32
    %c0_i32_0 = arith.constant 0 : i32
    %c0_i32_1 = arith.constant 0 : i32
    return %c0_i32, %arg0, %c0_i32_0 : i32, i32, i32
  }
  func.func @transform_1(%arg0: i32) -> (i32, i32) {
    %c0_i32 = arith.constant 0 : i32
    %c0_i32_0 = arith.constant 0 : i32
    %c0_i32_1 = arith.constant 0 : i32
    return %c0_i32, %c0_i32_0 : i32, i32
  }
  func.func @transform_2(%arg0: i32) -> (i32, i32) {
    %c0_i32 = arith.constant 0 : i32
    %c0_i32_0 = arith.constant 0 : i32
    %c0_i32_1 = arith.constant 0 : i32
    return %c0_i32, %c0_i32_0 : i32, i32
  }
  func.func @transform_3(%arg0: i32) -> (i32, i32) {
    %c0_i32 = arith.constant 0 : i32
    %c0_i32_0 = arith.constant 0 : i32
    %c0_i32_1 = arith.constant 0 : i32
    return %c0_i32, %c0_i32_0 : i32, i32
  }
  func.func @transform_4(%arg0: i32) -> (i32, i32) {
    %c0_i32 = arith.constant 0 : i32
    %c0_i32_0 = arith.constant 0 : i32
    %c0_i32_1 = arith.constant 0 : i32
    return %c0_i32, %c0_i32_0 : i32, i32
  }
  func.func @transform_5(%arg0: i32) -> (i32, i32) {
    %c0_i32 = arith.constant 0 : i32
    %c0_i32_0 = arith.constant 0 : i32
    %c0_i32_1 = arith.constant 0 : i32
    return %c0_i32, %c0_i32_0 : i32, i32
  }
  func.func @transform_6(%arg0: i32) -> (i32, i32) {
    %c0_i32 = arith.constant 0 : i32
    %c0_i32_0 = arith.constant 0 : i32
    %c0_i32_1 = arith.constant 0 : i32
    return %c0_i32, %c0_i32_0 : i32, i32
  }
  func.func @transform_7(%arg0: i32) -> (i32, i32) {
    %c0_i32 = arith.constant 0 : i32
    %c0_i32_0 = arith.constant 0 : i32
    %c0_i32_1 = arith.constant 0 : i32
    return %c0_i32, %c0_i32_0 : i32, i32
  }
  func.func @transform_8(%arg0: i32) -> (i32, i32) {
    %c0_i32 = arith.constant 0 : i32
    %c0_i32_0 = arith.constant 0 : i32
    return %arg0, %c0_i32 : i32, i32
  }
}

module attributes {stable_mosaic.version = 11 : i64} {
  func.func @_edgeconv_kernel(%arg0: i32, %arg1: memref<5x32x64xf32, #tpu.memory_space<vmem>>, %arg2: memref<64x64xbf16, #tpu.memory_space<vmem>>, %arg3: memref<64x64xbf16, #tpu.memory_space<vmem>>, %arg4: memref<64x64xbf16, #tpu.memory_space<vmem>>, %arg5: memref<1x64xf32, #tpu.memory_space<vmem>>, %arg6: memref<1x64xf32, #tpu.memory_space<vmem>>, %arg7: memref<1x64xf32, #tpu.memory_space<vmem>>, %arg8: memref<1x64xf32, #tpu.memory_space<vmem>>, %arg9: memref<32x64xf32, #tpu.memory_space<vmem>>) attributes {dimension_semantics = [#tpu.dimension_semantics<parallel>], iteration_bounds = array<i64: 1>, scalar_prefetch = 0 : i64, scratch_operands = 0 : i64, tpu.core_type = #tpu.core_type<tc>, window_params = [{transform_indices = @transform_0, window_bounds = array<i64: 5, 32, 64>}, {pipeline_mode = #tpu.pipeline_mode<synchronous>, transform_indices = @transform_1, window_bounds = array<i64: 64, 64>}, {pipeline_mode = #tpu.pipeline_mode<synchronous>, transform_indices = @transform_2, window_bounds = array<i64: 64, 64>}, {pipeline_mode = #tpu.pipeline_mode<synchronous>, transform_indices = @transform_3, window_bounds = array<i64: 64, 64>}, {pipeline_mode = #tpu.pipeline_mode<synchronous>, transform_indices = @transform_4, window_bounds = array<i64: 1, 64>}, {pipeline_mode = #tpu.pipeline_mode<synchronous>, transform_indices = @transform_5, window_bounds = array<i64: 1, 64>}, {pipeline_mode = #tpu.pipeline_mode<synchronous>, transform_indices = @transform_6, window_bounds = array<i64: 1, 64>}, {pipeline_mode = #tpu.pipeline_mode<synchronous>, transform_indices = @transform_7, window_bounds = array<i64: 1, 64>}, {transform_indices = @transform_8, window_bounds = array<i64: 32, 64>}]} {
    %c0 = arith.constant 0 : index
    %c0_0 = arith.constant 0 : index
    %c0_1 = arith.constant 0 : index
    %0 = vector.load %arg1[%c0, %c0_0, %c0_1] : memref<5x32x64xf32, #tpu.memory_space<vmem>>, vector<1x32x64xf32>
    %1 = vector.shape_cast %0 : vector<1x32x64xf32> to vector<32x64xf32>
    %2 = arith.truncf %1 : vector<32x64xf32> to vector<32x64xbf16>
    %c0_2 = arith.constant 0 : index
    %c0_3 = arith.constant 0 : index
    %3 = vector.load %arg2[%c0_2, %c0_3] : memref<64x64xbf16, #tpu.memory_space<vmem>>, vector<64x64xbf16>
    %cst = arith.constant dense<0.000000e+00> : vector<32x64xf32>
    %4 = tpu.matmul %2, %3, %cst {dimension_numbers = #tpu.dot_dimension_numbers<[1], [0], [0], [1], [0, 0, 1, 1], [], []>} : vector<32x64xbf16>, vector<64x64xbf16>, vector<32x64xf32> -> vector<32x64xf32>
    %cst_4 = arith.constant 0.000000e+00 : f32
    %5 = vector.broadcast %cst_4 : f32 to vector<32x64xf32>
    %6 = arith.cmpf oge, %4, %5 : vector<32x64xf32>
    %cst_5 = arith.constant 2.000000e-01 : f32
    %7 = vector.broadcast %cst_5 : f32 to vector<32x64xf32>
    %8 = arith.mulf %7, %4 : vector<32x64xf32>
    %9 = arith.select %6, %4, %8 : vector<32x64xi1>, vector<32x64xf32>
    %c0_6 = arith.constant 0 : index
    %c0_7 = arith.constant 0 : index
    %10 = vector.load %arg5[%c0_6, %c0_7] : memref<1x64xf32, #tpu.memory_space<vmem>>, vector<1x64xf32>
    %11 = vector.broadcast %10 : vector<1x64xf32> to vector<32x64xf32>
    %12 = arith.mulf %9, %11 : vector<32x64xf32>
    %c0_8 = arith.constant 0 : index
    %c0_9 = arith.constant 0 : index
    %13 = vector.load %arg6[%c0_8, %c0_9] : memref<1x64xf32, #tpu.memory_space<vmem>>, vector<1x64xf32>
    %14 = vector.broadcast %13 : vector<1x64xf32> to vector<32x64xf32>
    %15 = arith.addf %12, %14 : vector<32x64xf32>
    %16 = arith.truncf %15 : vector<32x64xf32> to vector<32x64xbf16>
    %c0_10 = arith.constant 0 : index
    %c0_11 = arith.constant 0 : index
    %17 = vector.load %arg3[%c0_10, %c0_11] : memref<64x64xbf16, #tpu.memory_space<vmem>>, vector<64x64xbf16>
    %cst_12 = arith.constant dense<0.000000e+00> : vector<32x64xf32>
    %18 = tpu.matmul %16, %17, %cst_12 {dimension_numbers = #tpu.dot_dimension_numbers<[1], [0], [0], [1], [0, 0, 1, 1], [], []>} : vector<32x64xbf16>, vector<64x64xbf16>, vector<32x64xf32> -> vector<32x64xf32>
    %cst_13 = arith.constant 0.000000e+00 : f32
    %19 = vector.broadcast %cst_13 : f32 to vector<32x64xf32>
    %20 = arith.cmpf oge, %18, %19 : vector<32x64xf32>
    %cst_14 = arith.constant 2.000000e-01 : f32
    %21 = vector.broadcast %cst_14 : f32 to vector<32x64xf32>
    %22 = arith.mulf %21, %18 : vector<32x64xf32>
    %23 = arith.select %20, %18, %22 : vector<32x64xi1>, vector<32x64xf32>
    %c0_15 = arith.constant 0 : index
    %c0_16 = arith.constant 0 : index
    %24 = vector.load %arg5[%c0_15, %c0_16] : memref<1x64xf32, #tpu.memory_space<vmem>>, vector<1x64xf32>
    %25 = vector.broadcast %24 : vector<1x64xf32> to vector<32x64xf32>
    %26 = arith.mulf %23, %25 : vector<32x64xf32>
    %c0_17 = arith.constant 0 : index
    %c0_18 = arith.constant 0 : index
    %27 = vector.load %arg6[%c0_17, %c0_18] : memref<1x64xf32, #tpu.memory_space<vmem>>, vector<1x64xf32>
    %28 = vector.broadcast %27 : vector<1x64xf32> to vector<32x64xf32>
    %29 = arith.addf %26, %28 : vector<32x64xf32>
    %30 = arith.truncf %29 : vector<32x64xf32> to vector<32x64xbf16>
    %c0_19 = arith.constant 0 : index
    %c0_20 = arith.constant 0 : index
    %31 = vector.load %arg4[%c0_19, %c0_20] : memref<64x64xbf16, #tpu.memory_space<vmem>>, vector<64x64xbf16>
    %cst_21 = arith.constant dense<0.000000e+00> : vector<32x64xf32>
    %32 = tpu.matmul %30, %31, %cst_21 {dimension_numbers = #tpu.dot_dimension_numbers<[1], [0], [0], [1], [0, 0, 1, 1], [], []>} : vector<32x64xbf16>, vector<64x64xbf16>, vector<32x64xf32> -> vector<32x64xf32>
    %cst_22 = arith.constant 0.000000e+00 : f32
    %33 = vector.broadcast %cst_22 : f32 to vector<32x64xf32>
    %34 = arith.cmpf oge, %32, %33 : vector<32x64xf32>
    %cst_23 = arith.constant 2.000000e-01 : f32
    %35 = vector.broadcast %cst_23 : f32 to vector<32x64xf32>
    %36 = arith.mulf %35, %32 : vector<32x64xf32>
    %37 = arith.select %34, %32, %36 : vector<32x64xi1>, vector<32x64xf32>
    %c0_24 = arith.constant 0 : index
    %c0_25 = arith.constant 0 : index
    %38 = vector.load %arg7[%c0_24, %c0_25] : memref<1x64xf32, #tpu.memory_space<vmem>>, vector<1x64xf32>
    %39 = vector.broadcast %38 : vector<1x64xf32> to vector<32x64xf32>
    %40 = arith.mulf %37, %39 : vector<32x64xf32>
    %c0_26 = arith.constant 0 : index
    %c0_27 = arith.constant 0 : index
    %41 = vector.load %arg8[%c0_26, %c0_27] : memref<1x64xf32, #tpu.memory_space<vmem>>, vector<1x64xf32>
    %42 = vector.broadcast %41 : vector<1x64xf32> to vector<32x64xf32>
    %43 = arith.addf %40, %42 : vector<32x64xf32>
    %c1 = arith.constant 1 : index
    %c0_28 = arith.constant 0 : index
    %c0_29 = arith.constant 0 : index
    %44 = vector.load %arg1[%c1, %c0_28, %c0_29] : memref<5x32x64xf32, #tpu.memory_space<vmem>>, vector<1x32x64xf32>
    %45 = vector.shape_cast %44 : vector<1x32x64xf32> to vector<32x64xf32>
    %46 = arith.truncf %45 : vector<32x64xf32> to vector<32x64xbf16>
    %c0_30 = arith.constant 0 : index
    %c0_31 = arith.constant 0 : index
    %47 = vector.load %arg2[%c0_30, %c0_31] : memref<64x64xbf16, #tpu.memory_space<vmem>>, vector<64x64xbf16>
    %cst_32 = arith.constant dense<0.000000e+00> : vector<32x64xf32>
    %48 = tpu.matmul %46, %47, %cst_32 {dimension_numbers = #tpu.dot_dimension_numbers<[1], [0], [0], [1], [0, 0, 1, 1], [], []>} : vector<32x64xbf16>, vector<64x64xbf16>, vector<32x64xf32> -> vector<32x64xf32>
    %cst_33 = arith.constant 0.000000e+00 : f32
    %49 = vector.broadcast %cst_33 : f32 to vector<32x64xf32>
    %50 = arith.cmpf oge, %48, %49 : vector<32x64xf32>
    %cst_34 = arith.constant 2.000000e-01 : f32
    %51 = vector.broadcast %cst_34 : f32 to vector<32x64xf32>
    %52 = arith.mulf %51, %48 : vector<32x64xf32>
    %53 = arith.select %50, %48, %52 : vector<32x64xi1>, vector<32x64xf32>
    %c0_35 = arith.constant 0 : index
    %c0_36 = arith.constant 0 : index
    %54 = vector.load %arg5[%c0_35, %c0_36] : memref<1x64xf32, #tpu.memory_space<vmem>>, vector<1x64xf32>
    %55 = vector.broadcast %54 : vector<1x64xf32> to vector<32x64xf32>
    %56 = arith.mulf %53, %55 : vector<32x64xf32>
    %c0_37 = arith.constant 0 : index
    %c0_38 = arith.constant 0 : index
    %57 = vector.load %arg6[%c0_37, %c0_38] : memref<1x64xf32, #tpu.memory_space<vmem>>, vector<1x64xf32>
    %58 = vector.broadcast %57 : vector<1x64xf32> to vector<32x64xf32>
    %59 = arith.addf %56, %58 : vector<32x64xf32>
    %60 = arith.truncf %59 : vector<32x64xf32> to vector<32x64xbf16>
    %c0_39 = arith.constant 0 : index
    %c0_40 = arith.constant 0 : index
    %61 = vector.load %arg3[%c0_39, %c0_40] : memref<64x64xbf16, #tpu.memory_space<vmem>>, vector<64x64xbf16>
    %cst_41 = arith.constant dense<0.000000e+00> : vector<32x64xf32>
    %62 = tpu.matmul %60, %61, %cst_41 {dimension_numbers = #tpu.dot_dimension_numbers<[1], [0], [0], [1], [0, 0, 1, 1], [], []>} : vector<32x64xbf16>, vector<64x64xbf16>, vector<32x64xf32> -> vector<32x64xf32>
    %cst_42 = arith.constant 0.000000e+00 : f32
    %63 = vector.broadcast %cst_42 : f32 to vector<32x64xf32>
    %64 = arith.cmpf oge, %62, %63 : vector<32x64xf32>
    %cst_43 = arith.constant 2.000000e-01 : f32
    %65 = vector.broadcast %cst_43 : f32 to vector<32x64xf32>
    %66 = arith.mulf %65, %62 : vector<32x64xf32>
    %67 = arith.select %64, %62, %66 : vector<32x64xi1>, vector<32x64xf32>
    %c0_44 = arith.constant 0 : index
    %c0_45 = arith.constant 0 : index
    %68 = vector.load %arg5[%c0_44, %c0_45] : memref<1x64xf32, #tpu.memory_space<vmem>>, vector<1x64xf32>
    %69 = vector.broadcast %68 : vector<1x64xf32> to vector<32x64xf32>
    %70 = arith.mulf %67, %69 : vector<32x64xf32>
    %c0_46 = arith.constant 0 : index
    %c0_47 = arith.constant 0 : index
    %71 = vector.load %arg6[%c0_46, %c0_47] : memref<1x64xf32, #tpu.memory_space<vmem>>, vector<1x64xf32>
    %72 = vector.broadcast %71 : vector<1x64xf32> to vector<32x64xf32>
    %73 = arith.addf %70, %72 : vector<32x64xf32>
    %74 = arith.truncf %73 : vector<32x64xf32> to vector<32x64xbf16>
    %c0_48 = arith.constant 0 : index
    %c0_49 = arith.constant 0 : index
    %75 = vector.load %arg4[%c0_48, %c0_49] : memref<64x64xbf16, #tpu.memory_space<vmem>>, vector<64x64xbf16>
    %cst_50 = arith.constant dense<0.000000e+00> : vector<32x64xf32>
    %76 = tpu.matmul %74, %75, %cst_50 {dimension_numbers = #tpu.dot_dimension_numbers<[1], [0], [0], [1], [0, 0, 1, 1], [], []>} : vector<32x64xbf16>, vector<64x64xbf16>, vector<32x64xf32> -> vector<32x64xf32>
    %cst_51 = arith.constant 0.000000e+00 : f32
    %77 = vector.broadcast %cst_51 : f32 to vector<32x64xf32>
    %78 = arith.cmpf oge, %76, %77 : vector<32x64xf32>
    %cst_52 = arith.constant 2.000000e-01 : f32
    %79 = vector.broadcast %cst_52 : f32 to vector<32x64xf32>
    %80 = arith.mulf %79, %76 : vector<32x64xf32>
    %81 = arith.select %78, %76, %80 : vector<32x64xi1>, vector<32x64xf32>
    %c0_53 = arith.constant 0 : index
    %c0_54 = arith.constant 0 : index
    %82 = vector.load %arg7[%c0_53, %c0_54] : memref<1x64xf32, #tpu.memory_space<vmem>>, vector<1x64xf32>
    %83 = vector.broadcast %82 : vector<1x64xf32> to vector<32x64xf32>
    %84 = arith.mulf %81, %83 : vector<32x64xf32>
    %c0_55 = arith.constant 0 : index
    %c0_56 = arith.constant 0 : index
    %85 = vector.load %arg8[%c0_55, %c0_56] : memref<1x64xf32, #tpu.memory_space<vmem>>, vector<1x64xf32>
    %86 = vector.broadcast %85 : vector<1x64xf32> to vector<32x64xf32>
    %87 = arith.addf %84, %86 : vector<32x64xf32>
    %88 = arith.maximumf %43, %87 : vector<32x64xf32>
    %c2 = arith.constant 2 : index
    %c0_57 = arith.constant 0 : index
    %c0_58 = arith.constant 0 : index
    %89 = vector.load %arg1[%c2, %c0_57, %c0_58] : memref<5x32x64xf32, #tpu.memory_space<vmem>>, vector<1x32x64xf32>
    %90 = vector.shape_cast %89 : vector<1x32x64xf32> to vector<32x64xf32>
    %91 = arith.truncf %90 : vector<32x64xf32> to vector<32x64xbf16>
    %c0_59 = arith.constant 0 : index
    %c0_60 = arith.constant 0 : index
    %92 = vector.load %arg2[%c0_59, %c0_60] : memref<64x64xbf16, #tpu.memory_space<vmem>>, vector<64x64xbf16>
    %cst_61 = arith.constant dense<0.000000e+00> : vector<32x64xf32>
    %93 = tpu.matmul %91, %92, %cst_61 {dimension_numbers = #tpu.dot_dimension_numbers<[1], [0], [0], [1], [0, 0, 1, 1], [], []>} : vector<32x64xbf16>, vector<64x64xbf16>, vector<32x64xf32> -> vector<32x64xf32>
    %cst_62 = arith.constant 0.000000e+00 : f32
    %94 = vector.broadcast %cst_62 : f32 to vector<32x64xf32>
    %95 = arith.cmpf oge, %93, %94 : vector<32x64xf32>
    %cst_63 = arith.constant 2.000000e-01 : f32
    %96 = vector.broadcast %cst_63 : f32 to vector<32x64xf32>
    %97 = arith.mulf %96, %93 : vector<32x64xf32>
    %98 = arith.select %95, %93, %97 : vector<32x64xi1>, vector<32x64xf32>
    %c0_64 = arith.constant 0 : index
    %c0_65 = arith.constant 0 : index
    %99 = vector.load %arg5[%c0_64, %c0_65] : memref<1x64xf32, #tpu.memory_space<vmem>>, vector<1x64xf32>
    %100 = vector.broadcast %99 : vector<1x64xf32> to vector<32x64xf32>
    %101 = arith.mulf %98, %100 : vector<32x64xf32>
    %c0_66 = arith.constant 0 : index
    %c0_67 = arith.constant 0 : index
    %102 = vector.load %arg6[%c0_66, %c0_67] : memref<1x64xf32, #tpu.memory_space<vmem>>, vector<1x64xf32>
    %103 = vector.broadcast %102 : vector<1x64xf32> to vector<32x64xf32>
    %104 = arith.addf %101, %103 : vector<32x64xf32>
    %105 = arith.truncf %104 : vector<32x64xf32> to vector<32x64xbf16>
    %c0_68 = arith.constant 0 : index
    %c0_69 = arith.constant 0 : index
    %106 = vector.load %arg3[%c0_68, %c0_69] : memref<64x64xbf16, #tpu.memory_space<vmem>>, vector<64x64xbf16>
    %cst_70 = arith.constant dense<0.000000e+00> : vector<32x64xf32>
    %107 = tpu.matmul %105, %106, %cst_70 {dimension_numbers = #tpu.dot_dimension_numbers<[1], [0], [0], [1], [0, 0, 1, 1], [], []>} : vector<32x64xbf16>, vector<64x64xbf16>, vector<32x64xf32> -> vector<32x64xf32>
    %cst_71 = arith.constant 0.000000e+00 : f32
    %108 = vector.broadcast %cst_71 : f32 to vector<32x64xf32>
    %109 = arith.cmpf oge, %107, %108 : vector<32x64xf32>
    %cst_72 = arith.constant 2.000000e-01 : f32
    %110 = vector.broadcast %cst_72 : f32 to vector<32x64xf32>
    %111 = arith.mulf %110, %107 : vector<32x64xf32>
    %112 = arith.select %109, %107, %111 : vector<32x64xi1>, vector<32x64xf32>
    %c0_73 = arith.constant 0 : index
    %c0_74 = arith.constant 0 : index
    %113 = vector.load %arg5[%c0_73, %c0_74] : memref<1x64xf32, #tpu.memory_space<vmem>>, vector<1x64xf32>
    %114 = vector.broadcast %113 : vector<1x64xf32> to vector<32x64xf32>
    %115 = arith.mulf %112, %114 : vector<32x64xf32>
    %c0_75 = arith.constant 0 : index
    %c0_76 = arith.constant 0 : index
    %116 = vector.load %arg6[%c0_75, %c0_76] : memref<1x64xf32, #tpu.memory_space<vmem>>, vector<1x64xf32>
    %117 = vector.broadcast %116 : vector<1x64xf32> to vector<32x64xf32>
    %118 = arith.addf %115, %117 : vector<32x64xf32>
    %119 = arith.truncf %118 : vector<32x64xf32> to vector<32x64xbf16>
    %c0_77 = arith.constant 0 : index
    %c0_78 = arith.constant 0 : index
    %120 = vector.load %arg4[%c0_77, %c0_78] : memref<64x64xbf16, #tpu.memory_space<vmem>>, vector<64x64xbf16>
    %cst_79 = arith.constant dense<0.000000e+00> : vector<32x64xf32>
    %121 = tpu.matmul %119, %120, %cst_79 {dimension_numbers = #tpu.dot_dimension_numbers<[1], [0], [0], [1], [0, 0, 1, 1], [], []>} : vector<32x64xbf16>, vector<64x64xbf16>, vector<32x64xf32> -> vector<32x64xf32>
    %cst_80 = arith.constant 0.000000e+00 : f32
    %122 = vector.broadcast %cst_80 : f32 to vector<32x64xf32>
    %123 = arith.cmpf oge, %121, %122 : vector<32x64xf32>
    %cst_81 = arith.constant 2.000000e-01 : f32
    %124 = vector.broadcast %cst_81 : f32 to vector<32x64xf32>
    %125 = arith.mulf %124, %121 : vector<32x64xf32>
    %126 = arith.select %123, %121, %125 : vector<32x64xi1>, vector<32x64xf32>
    %c0_82 = arith.constant 0 : index
    %c0_83 = arith.constant 0 : index
    %127 = vector.load %arg7[%c0_82, %c0_83] : memref<1x64xf32, #tpu.memory_space<vmem>>, vector<1x64xf32>
    %128 = vector.broadcast %127 : vector<1x64xf32> to vector<32x64xf32>
    %129 = arith.mulf %126, %128 : vector<32x64xf32>
    %c0_84 = arith.constant 0 : index
    %c0_85 = arith.constant 0 : index
    %130 = vector.load %arg8[%c0_84, %c0_85] : memref<1x64xf32, #tpu.memory_space<vmem>>, vector<1x64xf32>
    %131 = vector.broadcast %130 : vector<1x64xf32> to vector<32x64xf32>
    %132 = arith.addf %129, %131 : vector<32x64xf32>
    %133 = arith.maximumf %88, %132 : vector<32x64xf32>
    %c3 = arith.constant 3 : index
    %c0_86 = arith.constant 0 : index
    %c0_87 = arith.constant 0 : index
    %134 = vector.load %arg1[%c3, %c0_86, %c0_87] : memref<5x32x64xf32, #tpu.memory_space<vmem>>, vector<1x32x64xf32>
    %135 = vector.shape_cast %134 : vector<1x32x64xf32> to vector<32x64xf32>
    %136 = arith.truncf %135 : vector<32x64xf32> to vector<32x64xbf16>
    %c0_88 = arith.constant 0 : index
    %c0_89 = arith.constant 0 : index
    %137 = vector.load %arg2[%c0_88, %c0_89] : memref<64x64xbf16, #tpu.memory_space<vmem>>, vector<64x64xbf16>
    %cst_90 = arith.constant dense<0.000000e+00> : vector<32x64xf32>
    %138 = tpu.matmul %136, %137, %cst_90 {dimension_numbers = #tpu.dot_dimension_numbers<[1], [0], [0], [1], [0, 0, 1, 1], [], []>} : vector<32x64xbf16>, vector<64x64xbf16>, vector<32x64xf32> -> vector<32x64xf32>
    %cst_91 = arith.constant 0.000000e+00 : f32
    %139 = vector.broadcast %cst_91 : f32 to vector<32x64xf32>
    %140 = arith.cmpf oge, %138, %139 : vector<32x64xf32>
    %cst_92 = arith.constant 2.000000e-01 : f32
    %141 = vector.broadcast %cst_92 : f32 to vector<32x64xf32>
    %142 = arith.mulf %141, %138 : vector<32x64xf32>
    %143 = arith.select %140, %138, %142 : vector<32x64xi1>, vector<32x64xf32>
    %c0_93 = arith.constant 0 : index
    %c0_94 = arith.constant 0 : index
    %144 = vector.load %arg5[%c0_93, %c0_94] : memref<1x64xf32, #tpu.memory_space<vmem>>, vector<1x64xf32>
    %145 = vector.broadcast %144 : vector<1x64xf32> to vector<32x64xf32>
    %146 = arith.mulf %143, %145 : vector<32x64xf32>
    %c0_95 = arith.constant 0 : index
    %c0_96 = arith.constant 0 : index
    %147 = vector.load %arg6[%c0_95, %c0_96] : memref<1x64xf32, #tpu.memory_space<vmem>>, vector<1x64xf32>
    %148 = vector.broadcast %147 : vector<1x64xf32> to vector<32x64xf32>
    %149 = arith.addf %146, %148 : vector<32x64xf32>
    %150 = arith.truncf %149 : vector<32x64xf32> to vector<32x64xbf16>
    %c0_97 = arith.constant 0 : index
    %c0_98 = arith.constant 0 : index
    %151 = vector.load %arg3[%c0_97, %c0_98] : memref<64x64xbf16, #tpu.memory_space<vmem>>, vector<64x64xbf16>
    %cst_99 = arith.constant dense<0.000000e+00> : vector<32x64xf32>
    %152 = tpu.matmul %150, %151, %cst_99 {dimension_numbers = #tpu.dot_dimension_numbers<[1], [0], [0], [1], [0, 0, 1, 1], [], []>} : vector<32x64xbf16>, vector<64x64xbf16>, vector<32x64xf32> -> vector<32x64xf32>
    %cst_100 = arith.constant 0.000000e+00 : f32
    %153 = vector.broadcast %cst_100 : f32 to vector<32x64xf32>
    %154 = arith.cmpf oge, %152, %153 : vector<32x64xf32>
    %cst_101 = arith.constant 2.000000e-01 : f32
    %155 = vector.broadcast %cst_101 : f32 to vector<32x64xf32>
    %156 = arith.mulf %155, %152 : vector<32x64xf32>
    %157 = arith.select %154, %152, %156 : vector<32x64xi1>, vector<32x64xf32>
    %c0_102 = arith.constant 0 : index
    %c0_103 = arith.constant 0 : index
    %158 = vector.load %arg5[%c0_102, %c0_103] : memref<1x64xf32, #tpu.memory_space<vmem>>, vector<1x64xf32>
    %159 = vector.broadcast %158 : vector<1x64xf32> to vector<32x64xf32>
    %160 = arith.mulf %157, %159 : vector<32x64xf32>
    %c0_104 = arith.constant 0 : index
    %c0_105 = arith.constant 0 : index
    %161 = vector.load %arg6[%c0_104, %c0_105] : memref<1x64xf32, #tpu.memory_space<vmem>>, vector<1x64xf32>
    %162 = vector.broadcast %161 : vector<1x64xf32> to vector<32x64xf32>
    %163 = arith.addf %160, %162 : vector<32x64xf32>
    %164 = arith.truncf %163 : vector<32x64xf32> to vector<32x64xbf16>
    %c0_106 = arith.constant 0 : index
    %c0_107 = arith.constant 0 : index
    %165 = vector.load %arg4[%c0_106, %c0_107] : memref<64x64xbf16, #tpu.memory_space<vmem>>, vector<64x64xbf16>
    %cst_108 = arith.constant dense<0.000000e+00> : vector<32x64xf32>
    %166 = tpu.matmul %164, %165, %cst_108 {dimension_numbers = #tpu.dot_dimension_numbers<[1], [0], [0], [1], [0, 0, 1, 1], [], []>} : vector<32x64xbf16>, vector<64x64xbf16>, vector<32x64xf32> -> vector<32x64xf32>
    %cst_109 = arith.constant 0.000000e+00 : f32
    %167 = vector.broadcast %cst_109 : f32 to vector<32x64xf32>
    %168 = arith.cmpf oge, %166, %167 : vector<32x64xf32>
    %cst_110 = arith.constant 2.000000e-01 : f32
    %169 = vector.broadcast %cst_110 : f32 to vector<32x64xf32>
    %170 = arith.mulf %169, %166 : vector<32x64xf32>
    %171 = arith.select %168, %166, %170 : vector<32x64xi1>, vector<32x64xf32>
    %c0_111 = arith.constant 0 : index
    %c0_112 = arith.constant 0 : index
    %172 = vector.load %arg7[%c0_111, %c0_112] : memref<1x64xf32, #tpu.memory_space<vmem>>, vector<1x64xf32>
    %173 = vector.broadcast %172 : vector<1x64xf32> to vector<32x64xf32>
    %174 = arith.mulf %171, %173 : vector<32x64xf32>
    %c0_113 = arith.constant 0 : index
    %c0_114 = arith.constant 0 : index
    %175 = vector.load %arg8[%c0_113, %c0_114] : memref<1x64xf32, #tpu.memory_space<vmem>>, vector<1x64xf32>
    %176 = vector.broadcast %175 : vector<1x64xf32> to vector<32x64xf32>
    %177 = arith.addf %174, %176 : vector<32x64xf32>
    %178 = arith.maximumf %133, %177 : vector<32x64xf32>
    %c4 = arith.constant 4 : index
    %c0_115 = arith.constant 0 : index
    %c0_116 = arith.constant 0 : index
    %179 = vector.load %arg1[%c4, %c0_115, %c0_116] : memref<5x32x64xf32, #tpu.memory_space<vmem>>, vector<1x32x64xf32>
    %180 = vector.shape_cast %179 : vector<1x32x64xf32> to vector<32x64xf32>
    %181 = arith.truncf %180 : vector<32x64xf32> to vector<32x64xbf16>
    %c0_117 = arith.constant 0 : index
    %c0_118 = arith.constant 0 : index
    %182 = vector.load %arg2[%c0_117, %c0_118] : memref<64x64xbf16, #tpu.memory_space<vmem>>, vector<64x64xbf16>
    %cst_119 = arith.constant dense<0.000000e+00> : vector<32x64xf32>
    %183 = tpu.matmul %181, %182, %cst_119 {dimension_numbers = #tpu.dot_dimension_numbers<[1], [0], [0], [1], [0, 0, 1, 1], [], []>} : vector<32x64xbf16>, vector<64x64xbf16>, vector<32x64xf32> -> vector<32x64xf32>
    %cst_120 = arith.constant 0.000000e+00 : f32
    %184 = vector.broadcast %cst_120 : f32 to vector<32x64xf32>
    %185 = arith.cmpf oge, %183, %184 : vector<32x64xf32>
    %cst_121 = arith.constant 2.000000e-01 : f32
    %186 = vector.broadcast %cst_121 : f32 to vector<32x64xf32>
    %187 = arith.mulf %186, %183 : vector<32x64xf32>
    %188 = arith.select %185, %183, %187 : vector<32x64xi1>, vector<32x64xf32>
    %c0_122 = arith.constant 0 : index
    %c0_123 = arith.constant 0 : index
    %189 = vector.load %arg5[%c0_122, %c0_123] : memref<1x64xf32, #tpu.memory_space<vmem>>, vector<1x64xf32>
    %190 = vector.broadcast %189 : vector<1x64xf32> to vector<32x64xf32>
    %191 = arith.mulf %188, %190 : vector<32x64xf32>
    %c0_124 = arith.constant 0 : index
    %c0_125 = arith.constant 0 : index
    %192 = vector.load %arg6[%c0_124, %c0_125] : memref<1x64xf32, #tpu.memory_space<vmem>>, vector<1x64xf32>
    %193 = vector.broadcast %192 : vector<1x64xf32> to vector<32x64xf32>
    %194 = arith.addf %191, %193 : vector<32x64xf32>
    %195 = arith.truncf %194 : vector<32x64xf32> to vector<32x64xbf16>
    %c0_126 = arith.constant 0 : index
    %c0_127 = arith.constant 0 : index
    %196 = vector.load %arg3[%c0_126, %c0_127] : memref<64x64xbf16, #tpu.memory_space<vmem>>, vector<64x64xbf16>
    %cst_128 = arith.constant dense<0.000000e+00> : vector<32x64xf32>
    %197 = tpu.matmul %195, %196, %cst_128 {dimension_numbers = #tpu.dot_dimension_numbers<[1], [0], [0], [1], [0, 0, 1, 1], [], []>} : vector<32x64xbf16>, vector<64x64xbf16>, vector<32x64xf32> -> vector<32x64xf32>
    %cst_129 = arith.constant 0.000000e+00 : f32
    %198 = vector.broadcast %cst_129 : f32 to vector<32x64xf32>
    %199 = arith.cmpf oge, %197, %198 : vector<32x64xf32>
    %cst_130 = arith.constant 2.000000e-01 : f32
    %200 = vector.broadcast %cst_130 : f32 to vector<32x64xf32>
    %201 = arith.mulf %200, %197 : vector<32x64xf32>
    %202 = arith.select %199, %197, %201 : vector<32x64xi1>, vector<32x64xf32>
    %c0_131 = arith.constant 0 : index
    %c0_132 = arith.constant 0 : index
    %203 = vector.load %arg5[%c0_131, %c0_132] : memref<1x64xf32, #tpu.memory_space<vmem>>, vector<1x64xf32>
    %204 = vector.broadcast %203 : vector<1x64xf32> to vector<32x64xf32>
    %205 = arith.mulf %202, %204 : vector<32x64xf32>
    %c0_133 = arith.constant 0 : index
    %c0_134 = arith.constant 0 : index
    %206 = vector.load %arg6[%c0_133, %c0_134] : memref<1x64xf32, #tpu.memory_space<vmem>>, vector<1x64xf32>
    %207 = vector.broadcast %206 : vector<1x64xf32> to vector<32x64xf32>
    %208 = arith.addf %205, %207 : vector<32x64xf32>
    %209 = arith.truncf %208 : vector<32x64xf32> to vector<32x64xbf16>
    %c0_135 = arith.constant 0 : index
    %c0_136 = arith.constant 0 : index
    %210 = vector.load %arg4[%c0_135, %c0_136] : memref<64x64xbf16, #tpu.memory_space<vmem>>, vector<64x64xbf16>
    %cst_137 = arith.constant dense<0.000000e+00> : vector<32x64xf32>
    %211 = tpu.matmul %209, %210, %cst_137 {dimension_numbers = #tpu.dot_dimension_numbers<[1], [0], [0], [1], [0, 0, 1, 1], [], []>} : vector<32x64xbf16>, vector<64x64xbf16>, vector<32x64xf32> -> vector<32x64xf32>
    %cst_138 = arith.constant 0.000000e+00 : f32
    %212 = vector.broadcast %cst_138 : f32 to vector<32x64xf32>
    %213 = arith.cmpf oge, %211, %212 : vector<32x64xf32>
    %cst_139 = arith.constant 2.000000e-01 : f32
    %214 = vector.broadcast %cst_139 : f32 to vector<32x64xf32>
    %215 = arith.mulf %214, %211 : vector<32x64xf32>
    %216 = arith.select %213, %211, %215 : vector<32x64xi1>, vector<32x64xf32>
    %c0_140 = arith.constant 0 : index
    %c0_141 = arith.constant 0 : index
    %217 = vector.load %arg7[%c0_140, %c0_141] : memref<1x64xf32, #tpu.memory_space<vmem>>, vector<1x64xf32>
    %218 = vector.broadcast %217 : vector<1x64xf32> to vector<32x64xf32>
    %219 = arith.mulf %216, %218 : vector<32x64xf32>
    %c0_142 = arith.constant 0 : index
    %c0_143 = arith.constant 0 : index
    %220 = vector.load %arg8[%c0_142, %c0_143] : memref<1x64xf32, #tpu.memory_space<vmem>>, vector<1x64xf32>
    %221 = vector.broadcast %220 : vector<1x64xf32> to vector<32x64xf32>
    %222 = arith.addf %219, %221 : vector<32x64xf32>
    %223 = arith.maximumf %178, %222 : vector<32x64xf32>
    %c0_144 = arith.constant 0 : index
    %c0_145 = arith.constant 0 : index
    %224 = vector.load %arg9[%c0_144, %c0_145] : memref<32x64xf32, #tpu.memory_space<vmem>>, vector<32x64xf32>
    tpu.vector_store %arg9[%c0_144, %c0_145], %223 {strides = array<i32>} : memref<32x64xf32, #tpu.memory_space<vmem>>, vector<32x64xf32>,
    return
  }
  func.func @transform_0(%arg0: i32) -> (i32, i32, i32) {
    %c0_i32 = arith.constant 0 : i32
    %c0_i32_0 = arith.constant 0 : i32
    %c0_i32_1 = arith.constant 0 : i32
    return %c0_i32, %arg0, %c0_i32_0 : i32, i32, i32
  }
  func.func @transform_1(%arg0: i32) -> (i32, i32) {
    %c0_i32 = arith.constant 0 : i32
    %c0_i32_0 = arith.constant 0 : i32
    %c0_i32_1 = arith.constant 0 : i32
    return %c0_i32, %c0_i32_0 : i32, i32
  }
  func.func @transform_2(%arg0: i32) -> (i32, i32) {
    %c0_i32 = arith.constant 0 : i32
    %c0_i32_0 = arith.constant 0 : i32
    %c0_i32_1 = arith.constant 0 : i32
    return %c0_i32, %c0_i32_0 : i32, i32
  }
  func.func @transform_3(%arg0: i32) -> (i32, i32) {
    %c0_i32 = arith.constant 0 : i32
    %c0_i32_0 = arith.constant 0 : i32
    %c0_i32_1 = arith.constant 0 : i32
    return %c0_i32, %c0_i32_0 : i32, i32
  }
  func.func @transform_4(%arg0: i32) -> (i32, i32) {
    %c0_i32 = arith.constant 0 : i32
    %c0_i32_0 = arith.constant 0 : i32
    %c0_i32_1 = arith.constant 0 : i32
    return %c0_i32, %c0_i32_0 : i32, i32
  }
  func.func @transform_5(%arg0: i32) -> (i32, i32) {
    %c0_i32 = arith.constant 0 : i32
    %c0_i32_0 = arith.constant 0 : i32
    %c0_i32_1 = arith.constant 0 : i32
    return %c0_i32, %c0_i32_0 : i32, i32
  }
  func.func @transform_6(%arg0: i32) -> (i32, i32) {
    %c0_i32 = arith.constant 0 : i32
    %c0_i32_0 = arith.constant 0 : i32
    %c0_i32_1 = arith.constant 0 : i32
    return %c0_i32, %c0_i32_0 : i32, i32
  }
  func.func @transform_7(%arg0: i32) -> (i32, i32) {
    %c0_i32 = arith.constant 0 : i32
    %c0_i32_0 = arith.constant 0 : i32
    %c0_i32_1 = arith.constant 0 : i32
    return %c0_i32, %c0_i32_0 : i32, i32
  }
  func.func @transform_8(%arg0: i32) -> (i32, i32) {
    %c0_i32 = arith.constant 0 : i32
    %c0_i32_0 = arith.constant 0 : i32
    return %arg0, %c0_i32 : i32, i32
  }
}

module attributes {stable_mosaic.version = 11 : i64} {
  func.func @_globalfeat_kernel(%arg0: i32, %arg1: i32, %arg2: memref<1x16x64xf32, #tpu.memory_space<vmem>>, %arg3: memref<64x1024xbf16, #tpu.memory_space<vmem>>, %arg4: memref<1x1024xf32, #tpu.memory_space<vmem>>, %arg5: memref<1x1024xf32, #tpu.memory_space<vmem>>, %arg6: memref<1x1024xf32, #tpu.memory_space<vmem>>, %arg7: memref<1x1x1024xf32, #tpu.memory_space<vmem>>, %arg8: memref<1x1024xf32, #tpu.memory_space<vmem>>) attributes {dimension_semantics = [#tpu.dimension_semantics<parallel>, #tpu.dimension_semantics<arbitrary>], iteration_bounds = array<i64: 2, 1>, scalar_prefetch = 0 : i64, scratch_operands = 1 : i64, tpu.core_type = #tpu.core_type<tc>, window_params = [{transform_indices = @transform_0, window_bounds = array<i64: 1, 16, 64>}, {pipeline_mode = #tpu.pipeline_mode<synchronous>, transform_indices = @transform_1, window_bounds = array<i64: 64, 1024>}, {pipeline_mode = #tpu.pipeline_mode<synchronous>, transform_indices = @transform_2, window_bounds = array<i64: 1, 1024>}, {pipeline_mode = #tpu.pipeline_mode<synchronous>, transform_indices = @transform_3, window_bounds = array<i64: 1, 1024>}, {pipeline_mode = #tpu.pipeline_mode<synchronous>, transform_indices = @transform_4, window_bounds = array<i64: 1, 1024>}, {transform_indices = @transform_5, window_bounds = array<i64: 1, 1, 1024>}]} {
    %c0 = arith.constant 0 : index
    %c0_0 = arith.constant 0 : index
    %c0_1 = arith.constant 0 : index
    %0 = vector.load %arg2[%c0, %c0_0, %c0_1] : memref<1x16x64xf32, #tpu.memory_space<vmem>>, vector<1x16x64xf32>
    %1 = vector.shape_cast %0 : vector<1x16x64xf32> to vector<16x64xf32>
    %2 = arith.truncf %1 : vector<16x64xf32> to vector<16x64xbf16>
    %c0_2 = arith.constant 0 : index
    %c0_3 = arith.constant 0 : index
    %3 = vector.load %arg3[%c0_2, %c0_3] : memref<64x1024xbf16, #tpu.memory_space<vmem>>, vector<64x1024xbf16>
    %cst = arith.constant dense<0.000000e+00> : vector<16x1024xf32>
    %4 = tpu.matmul %2, %3, %cst {dimension_numbers = #tpu.dot_dimension_numbers<[1], [0], [0], [1], [0, 0, 1, 1], [], []>} : vector<16x64xbf16>, vector<64x1024xbf16>, vector<16x1024xf32> -> vector<16x1024xf32>
    %c0_4 = arith.constant 0 : index
    %c0_5 = arith.constant 0 : index
    %5 = vector.load %arg4[%c0_4, %c0_5] : memref<1x1024xf32, #tpu.memory_space<vmem>>, vector<1x1024xf32>
    %6 = vector.broadcast %5 : vector<1x1024xf32> to vector<16x1024xf32>
    %7 = arith.addf %4, %6 : vector<16x1024xf32>
    %cst_6 = arith.constant 0.000000e+00 : f32
    %8 = vector.broadcast %cst_6 : f32 to vector<16x1024xf32>
    %9 = arith.cmpf oge, %7, %8 : vector<16x1024xf32>
    %cst_7 = arith.constant 2.000000e-01 : f32
    %10 = vector.broadcast %cst_7 : f32 to vector<16x1024xf32>
    %11 = arith.mulf %10, %7 : vector<16x1024xf32>
    %12 = arith.select %9, %7, %11 : vector<16x1024xi1>, vector<16x1024xf32>
    %c0_8 = arith.constant 0 : index
    %c0_9 = arith.constant 0 : index
    %13 = vector.load %arg5[%c0_8, %c0_9] : memref<1x1024xf32, #tpu.memory_space<vmem>>, vector<1x1024xf32>
    %14 = vector.broadcast %13 : vector<1x1024xf32> to vector<16x1024xf32>
    %15 = arith.mulf %12, %14 : vector<16x1024xf32>
    %c0_10 = arith.constant 0 : index
    %c0_11 = arith.constant 0 : index
    %16 = vector.load %arg6[%c0_10, %c0_11] : memref<1x1024xf32, #tpu.memory_space<vmem>>, vector<1x1024xf32>
    %17 = vector.broadcast %16 : vector<1x1024xf32> to vector<16x1024xf32>
    %18 = arith.addf %15, %17 : vector<16x1024xf32>
    %cst_12 = arith.constant dense<0xFF800000> : vector<1024xf32>
    %19 = vector.multi_reduction <maximumf>, %18, %cst_12 [0] : vector<16x1024xf32> to vector<1024xf32>
    %20 = vector.shape_cast %19 : vector<1024xf32> to vector<1x1024xf32>
    %c0_i32 = arith.constant 0 : i32
    %21 = arith.cmpi eq, %arg1, %c0_i32 : i32
    %22 = arith.extui %21 : i1 to i32
    %c0_i32_13 = arith.constant 0 : i32
    %23 = arith.cmpi ne, %22, %c0_i32_13 : i32
    scf.if %23 {
      %c0_18 = arith.constant 0 : index
      %c0_19 = arith.constant 0 : index
      %30 = vector.load %arg8[%c0_18, %c0_19] : memref<1x1024xf32, #tpu.memory_space<vmem>>, vector<1x1024xf32>
      tpu.vector_store %arg8[%c0_18, %c0_19], %20 {strides = array<i32>} : memref<1x1024xf32, #tpu.memory_space<vmem>>, vector<1x1024xf32>,
    } else {
    }
    %c0_i32_14 = arith.constant 0 : i32
    %24 = arith.cmpi sgt, %arg1, %c0_i32_14 : i32
    %25 = arith.extui %24 : i1 to i32
    %c0_i32_15 = arith.constant 0 : i32
    %26 = arith.cmpi ne, %25, %c0_i32_15 : i32
    scf.if %26 {
      %c0_18 = arith.constant 0 : index
      %c0_19 = arith.constant 0 : index
      %30 = vector.load %arg8[%c0_18, %c0_19] : memref<1x1024xf32, #tpu.memory_space<vmem>>, vector<1x1024xf32>
      %31 = arith.maximumf %30, %20 : vector<1x1024xf32>
      %c0_20 = arith.constant 0 : index
      %c0_21 = arith.constant 0 : index
      %32 = vector.load %arg8[%c0_20, %c0_21] : memref<1x1024xf32, #tpu.memory_space<vmem>>, vector<1x1024xf32>
      tpu.vector_store %arg8[%c0_20, %c0_21], %31 {strides = array<i32>} : memref<1x1024xf32, #tpu.memory_space<vmem>>, vector<1x1024xf32>,
    } else {
    }
    %c0_i32_16 = arith.constant 0 : i32
    %27 = arith.cmpi eq, %arg1, %c0_i32_16 : i32
    %28 = arith.extui %27 : i1 to i32
    %c0_i32_17 = arith.constant 0 : i32
    %29 = arith.cmpi ne, %28, %c0_i32_17 : i32
    scf.if %29 {
      %c0_18 = arith.constant 0 : index
      %c0_19 = arith.constant 0 : index
      %30 = vector.load %arg8[%c0_18, %c0_19] : memref<1x1024xf32, #tpu.memory_space<vmem>>, vector<1x1024xf32>
      %c0_20 = arith.constant 0 : index
      %c0_21 = arith.constant 0 : index
      %c0_22 = arith.constant 0 : index
      %31 = vector.load %arg7[%c0_20, %c0_21, %c0_22] : memref<1x1x1024xf32, #tpu.memory_space<vmem>>, vector<1x1x1024xf32>
      %32 = vector.shape_cast %31 : vector<1x1x1024xf32> to vector<1x1024xf32>
      %33 = vector.shape_cast %30 : vector<1x1024xf32> to vector<1x1x1024xf32>
      tpu.vector_store %arg7[%c0_20, %c0_21, %c0_22], %33 {strides = array<i32>} : memref<1x1x1024xf32, #tpu.memory_space<vmem>>, vector<1x1x1024xf32>,
    } else {
    }
    return
  }
  func.func @transform_0(%arg0: i32, %arg1: i32) -> (i32, i32, i32) {
    %c0_i32 = arith.constant 0 : i32
    %c0_i32_0 = arith.constant 0 : i32
    return %arg0, %arg1, %c0_i32 : i32, i32, i32
  }
  func.func @transform_1(%arg0: i32, %arg1: i32) -> (i32, i32) {
    %c0_i32 = arith.constant 0 : i32
    %c0_i32_0 = arith.constant 0 : i32
    %c0_i32_1 = arith.constant 0 : i32
    return %c0_i32, %c0_i32_0 : i32, i32
  }
  func.func @transform_2(%arg0: i32, %arg1: i32) -> (i32, i32) {
    %c0_i32 = arith.constant 0 : i32
    %c0_i32_0 = arith.constant 0 : i32
    %c0_i32_1 = arith.constant 0 : i32
    return %c0_i32, %c0_i32_0 : i32, i32
  }
  func.func @transform_3(%arg0: i32, %arg1: i32) -> (i32, i32) {
    %c0_i32 = arith.constant 0 : i32
    %c0_i32_0 = arith.constant 0 : i32
    %c0_i32_1 = arith.constant 0 : i32
    return %c0_i32, %c0_i32_0 : i32, i32
  }
  func.func @transform_4(%arg0: i32, %arg1: i32) -> (i32, i32) {
    %c0_i32 = arith.constant 0 : i32
    %c0_i32_0 = arith.constant 0 : i32
    %c0_i32_1 = arith.constant 0 : i32
    return %c0_i32, %c0_i32_0 : i32, i32
  }
  func.func @transform_5(%arg0: i32, %arg1: i32) -> (i32, i32, i32) {
    %c0_i32 = arith.constant 0 : i32
    %c0_i32_0 = arith.constant 0 : i32
    %c0_i32_1 = arith.constant 0 : i32
    return %arg0, %c0_i32, %c0_i32_0 : i32, i32, i32
  }
}

module attributes {stable_mosaic.version = 11 : i64} {
  func.func @_head_kernel(%arg0: i32, %arg1: i32, %arg2: memref<1x16x64xf32, #tpu.memory_space<vmem>>, %arg3: memref<1x16x64xf32, #tpu.memory_space<vmem>>, %arg4: memref<1x1x1024xf32, #tpu.memory_space<vmem>>, %arg5: memref<64x256xbf16, #tpu.memory_space<vmem>>, %arg6: memref<64x256xbf16, #tpu.memory_space<vmem>>, %arg7: memref<1024x256xbf16, #tpu.memory_space<vmem>>, %arg8: memref<1x256xf32, #tpu.memory_space<vmem>>, %arg9: memref<256x256xbf16, #tpu.memory_space<vmem>>, %arg10: memref<1x256xf32, #tpu.memory_space<vmem>>, %arg11: memref<256x128xbf16, #tpu.memory_space<vmem>>, %arg12: memref<1x128xf32, #tpu.memory_space<vmem>>, %arg13: memref<128x64xbf16, #tpu.memory_space<vmem>>, %arg14: memref<1x64xf32, #tpu.memory_space<vmem>>, %arg15: memref<1x16x64xf32, #tpu.memory_space<vmem>>) attributes {dimension_semantics = [#tpu.dimension_semantics<parallel>, #tpu.dimension_semantics<parallel>], iteration_bounds = array<i64: 2, 1>, scalar_prefetch = 0 : i64, scratch_operands = 0 : i64, tpu.core_type = #tpu.core_type<tc>, window_params = [{transform_indices = @transform_0, window_bounds = array<i64: 1, 16, 64>}, {transform_indices = @transform_1, window_bounds = array<i64: 1, 16, 64>}, {transform_indices = @transform_2, window_bounds = array<i64: 1, 1, 1024>}, {pipeline_mode = #tpu.pipeline_mode<synchronous>, transform_indices = @transform_3, window_bounds = array<i64: 64, 256>}, {pipeline_mode = #tpu.pipeline_mode<synchronous>, transform_indices = @transform_4, window_bounds = array<i64: 64, 256>}, {pipeline_mode = #tpu.pipeline_mode<synchronous>, transform_indices = @transform_5, window_bounds = array<i64: 1024, 256>}, {pipeline_mode = #tpu.pipeline_mode<synchronous>, transform_indices = @transform_6, window_bounds = array<i64: 1, 256>}, {pipeline_mode = #tpu.pipeline_mode<synchronous>, transform_indices = @transform_7, window_bounds = array<i64: 256, 256>}, {pipeline_mode = #tpu.pipeline_mode<synchronous>, transform_indices = @transform_8, window_bounds = array<i64: 1, 256>}, {pipeline_mode = #tpu.pipeline_mode<synchronous>, transform_indices = @transform_9, window_bounds = array<i64: 256, 128>}, {pipeline_mode = #tpu.pipeline_mode<synchronous>, transform_indices = @transform_10, window_bounds = array<i64: 1, 128>}, {pipeline_mode = #tpu.pipeline_mode<synchronous>, transform_indices = @transform_11, window_bounds = array<i64: 128, 64>}, {pipeline_mode = #tpu.pipeline_mode<synchronous>, transform_indices = @transform_12, window_bounds = array<i64: 1, 64>}, {transform_indices = @transform_13, window_bounds = array<i64: 1, 16, 64>}]} {
    %c0 = arith.constant 0 : index
    %c0_0 = arith.constant 0 : index
    %c0_1 = arith.constant 0 : index
    %0 = vector.load %arg2[%c0, %c0_0, %c0_1] : memref<1x16x64xf32, #tpu.memory_space<vmem>>, vector<1x16x64xf32>
    %1 = vector.shape_cast %0 : vector<1x16x64xf32> to vector<16x64xf32>
    %2 = arith.truncf %1 : vector<16x64xf32> to vector<16x64xbf16>
    %c0_2 = arith.constant 0 : index
    %c0_3 = arith.constant 0 : index
    %3 = vector.load %arg5[%c0_2, %c0_3] : memref<64x256xbf16, #tpu.memory_space<vmem>>, vector<64x256xbf16>
    %cst = arith.constant dense<0.000000e+00> : vector<16x256xf32>
    %4 = tpu.matmul %2, %3, %cst {dimension_numbers = #tpu.dot_dimension_numbers<[1], [0], [0], [1], [0, 0, 1, 1], [], []>} : vector<16x64xbf16>, vector<64x256xbf16>, vector<16x256xf32> -> vector<16x256xf32>
    %c0_4 = arith.constant 0 : index
    %c0_5 = arith.constant 0 : index
    %c0_6 = arith.constant 0 : index
    %5 = vector.load %arg3[%c0_4, %c0_5, %c0_6] : memref<1x16x64xf32, #tpu.memory_space<vmem>>, vector<1x16x64xf32>
    %6 = vector.shape_cast %5 : vector<1x16x64xf32> to vector<16x64xf32>
    %7 = arith.truncf %6 : vector<16x64xf32> to vector<16x64xbf16>
    %c0_7 = arith.constant 0 : index
    %c0_8 = arith.constant 0 : index
    %8 = vector.load %arg6[%c0_7, %c0_8] : memref<64x256xbf16, #tpu.memory_space<vmem>>, vector<64x256xbf16>
    %cst_9 = arith.constant dense<0.000000e+00> : vector<16x256xf32>
    %9 = tpu.matmul %7, %8, %cst_9 {dimension_numbers = #tpu.dot_dimension_numbers<[1], [0], [0], [1], [0, 0, 1, 1], [], []>} : vector<16x64xbf16>, vector<64x256xbf16>, vector<16x256xf32> -> vector<16x256xf32>
    %10 = arith.addf %4, %9 : vector<16x256xf32>
    %c0_10 = arith.constant 0 : index
    %c0_11 = arith.constant 0 : index
    %c0_12 = arith.constant 0 : index
    %11 = vector.load %arg4[%c0_10, %c0_11, %c0_12] : memref<1x1x1024xf32, #tpu.memory_space<vmem>>, vector<1x1x1024xf32>
    %12 = vector.shape_cast %11 : vector<1x1x1024xf32> to vector<1x1024xf32>
    %13 = arith.truncf %12 : vector<1x1024xf32> to vector<1x1024xbf16>
    %c0_13 = arith.constant 0 : index
    %c0_14 = arith.constant 0 : index
    %14 = vector.load %arg7[%c0_13, %c0_14] : memref<1024x256xbf16, #tpu.memory_space<vmem>>, vector<1024x256xbf16>
    %cst_15 = arith.constant dense<0.000000e+00> : vector<1x256xf32>
    %15 = tpu.matmul %13, %14, %cst_15 {dimension_numbers = #tpu.dot_dimension_numbers<[1], [0], [0], [1], [0, 0, 1, 1], [], []>} : vector<1x1024xbf16>, vector<1024x256xbf16>, vector<1x256xf32> -> vector<1x256xf32>
    %16 = vector.broadcast %15 : vector<1x256xf32> to vector<16x256xf32>
    %17 = arith.addf %10, %16 : vector<16x256xf32>
    %c0_16 = arith.constant 0 : index
    %c0_17 = arith.constant 0 : index
    %18 = vector.load %arg8[%c0_16, %c0_17] : memref<1x256xf32, #tpu.memory_space<vmem>>, vector<1x256xf32>
    %19 = vector.broadcast %18 : vector<1x256xf32> to vector<16x256xf32>
    %20 = arith.addf %17, %19 : vector<16x256xf32>
    %21 = arith.truncf %20 : vector<16x256xf32> to vector<16x256xbf16>
    %c0_18 = arith.constant 0 : index
    %c0_19 = arith.constant 0 : index
    %22 = vector.load %arg9[%c0_18, %c0_19] : memref<256x256xbf16, #tpu.memory_space<vmem>>, vector<256x256xbf16>
    %cst_20 = arith.constant dense<0.000000e+00> : vector<16x256xf32>
    %23 = tpu.matmul %21, %22, %cst_20 {dimension_numbers = #tpu.dot_dimension_numbers<[1], [0], [0], [1], [0, 0, 1, 1], [], []>} : vector<16x256xbf16>, vector<256x256xbf16>, vector<16x256xf32> -> vector<16x256xf32>
    %c0_21 = arith.constant 0 : index
    %c0_22 = arith.constant 0 : index
    %24 = vector.load %arg10[%c0_21, %c0_22] : memref<1x256xf32, #tpu.memory_space<vmem>>, vector<1x256xf32>
    %25 = vector.broadcast %24 : vector<1x256xf32> to vector<16x256xf32>
    %26 = arith.addf %23, %25 : vector<16x256xf32>
    %27 = arith.truncf %26 : vector<16x256xf32> to vector<16x256xbf16>
    %c0_23 = arith.constant 0 : index
    %c0_24 = arith.constant 0 : index
    %28 = vector.load %arg11[%c0_23, %c0_24] : memref<256x128xbf16, #tpu.memory_space<vmem>>, vector<256x128xbf16>
    %cst_25 = arith.constant dense<0.000000e+00> : vector<16x128xf32>
    %29 = tpu.matmul %27, %28, %cst_25 {dimension_numbers = #tpu.dot_dimension_numbers<[1], [0], [0], [1], [0, 0, 1, 1], [], []>} : vector<16x256xbf16>, vector<256x128xbf16>, vector<16x128xf32> -> vector<16x128xf32>
    %c0_26 = arith.constant 0 : index
    %c0_27 = arith.constant 0 : index
    %30 = vector.load %arg12[%c0_26, %c0_27] : memref<1x128xf32, #tpu.memory_space<vmem>>, vector<1x128xf32>
    %31 = vector.broadcast %30 : vector<1x128xf32> to vector<16x128xf32>
    %32 = arith.addf %29, %31 : vector<16x128xf32>
    %33 = arith.truncf %32 : vector<16x128xf32> to vector<16x128xbf16>
    %c0_28 = arith.constant 0 : index
    %c0_29 = arith.constant 0 : index
    %34 = vector.load %arg13[%c0_28, %c0_29] : memref<128x64xbf16, #tpu.memory_space<vmem>>, vector<128x64xbf16>
    %cst_30 = arith.constant dense<0.000000e+00> : vector<16x64xf32>
    %35 = tpu.matmul %33, %34, %cst_30 {dimension_numbers = #tpu.dot_dimension_numbers<[1], [0], [0], [1], [0, 0, 1, 1], [], []>} : vector<16x128xbf16>, vector<128x64xbf16>, vector<16x64xf32> -> vector<16x64xf32>
    %c0_31 = arith.constant 0 : index
    %c0_32 = arith.constant 0 : index
    %36 = vector.load %arg14[%c0_31, %c0_32] : memref<1x64xf32, #tpu.memory_space<vmem>>, vector<1x64xf32>
    %37 = vector.broadcast %36 : vector<1x64xf32> to vector<16x64xf32>
    %38 = arith.addf %35, %37 : vector<16x64xf32>
    %c0_33 = arith.constant 0 : index
    %c0_34 = arith.constant 0 : index
    %c0_35 = arith.constant 0 : index
    %39 = vector.load %arg15[%c0_33, %c0_34, %c0_35] : memref<1x16x64xf32, #tpu.memory_space<vmem>>, vector<1x16x64xf32>
    %40 = vector.shape_cast %39 : vector<1x16x64xf32> to vector<16x64xf32>
    %41 = vector.shape_cast %38 : vector<16x64xf32> to vector<1x16x64xf32>
    tpu.vector_store %arg15[%c0_33, %c0_34, %c0_35], %41 {strides = array<i32>} : memref<1x16x64xf32, #tpu.memory_space<vmem>>, vector<1x16x64xf32>,
    return
  }
  func.func @transform_0(%arg0: i32, %arg1: i32) -> (i32, i32, i32) {
    %c0_i32 = arith.constant 0 : i32
    %c0_i32_0 = arith.constant 0 : i32
    return %arg0, %arg1, %c0_i32 : i32, i32, i32
  }
  func.func @transform_1(%arg0: i32, %arg1: i32) -> (i32, i32, i32) {
    %c0_i32 = arith.constant 0 : i32
    %c0_i32_0 = arith.constant 0 : i32
    return %arg0, %arg1, %c0_i32 : i32, i32, i32
  }
  func.func @transform_2(%arg0: i32, %arg1: i32) -> (i32, i32, i32) {
    %c0_i32 = arith.constant 0 : i32
    %c0_i32_0 = arith.constant 0 : i32
    %c0_i32_1 = arith.constant 0 : i32
    return %arg0, %c0_i32, %c0_i32_0 : i32, i32, i32
  }
  func.func @transform_3(%arg0: i32, %arg1: i32) -> (i32, i32) {
    %c0_i32 = arith.constant 0 : i32
    %c0_i32_0 = arith.constant 0 : i32
    %c0_i32_1 = arith.constant 0 : i32
    return %c0_i32, %c0_i32_0 : i32, i32
  }
  func.func @transform_4(%arg0: i32, %arg1: i32) -> (i32, i32) {
    %c0_i32 = arith.constant 0 : i32
    %c0_i32_0 = arith.constant 0 : i32
    %c0_i32_1 = arith.constant 0 : i32
    return %c0_i32, %c0_i32_0 : i32, i32
  }
  func.func @transform_5(%arg0: i32, %arg1: i32) -> (i32, i32) {
    %c0_i32 = arith.constant 0 : i32
    %c0_i32_0 = arith.constant 0 : i32
    %c0_i32_1 = arith.constant 0 : i32
    return %c0_i32, %c0_i32_0 : i32, i32
  }
  func.func @transform_6(%arg0: i32, %arg1: i32) -> (i32, i32) {
    %c0_i32 = arith.constant 0 : i32
    %c0_i32_0 = arith.constant 0 : i32
    %c0_i32_1 = arith.constant 0 : i32
    return %c0_i32, %c0_i32_0 : i32, i32
  }
  func.func @transform_7(%arg0: i32, %arg1: i32) -> (i32, i32) {
    %c0_i32 = arith.constant 0 : i32
    %c0_i32_0 = arith.constant 0 : i32
    %c0_i32_1 = arith.constant 0 : i32
    return %c0_i32, %c0_i32_0 : i32, i32
  }
  func.func @transform_8(%arg0: i32, %arg1: i32) -> (i32, i32) {
    %c0_i32 = arith.constant 0 : i32
    %c0_i32_0 = arith.constant 0 : i32
    %c0_i32_1 = arith.constant 0 : i32
    return %c0_i32, %c0_i32_0 : i32, i32
  }
  func.func @transform_9(%arg0: i32, %arg1: i32) -> (i32, i32) {
    %c0_i32 = arith.constant 0 : i32
    %c0_i32_0 = arith.constant 0 : i32
    %c0_i32_1 = arith.constant 0 : i32
    return %c0_i32, %c0_i32_0 : i32, i32
  }
  func.func @transform_10(%arg0: i32, %arg1: i32) -> (i32, i32) {
    %c0_i32 = arith.constant 0 : i32
    %c0_i32_0 = arith.constant 0 : i32
    %c0_i32_1 = arith.constant 0 : i32
    return %c0_i32, %c0_i32_0 : i32, i32
  }
  func.func @transform_11(%arg0: i32, %arg1: i32) -> (i32, i32) {
    %c0_i32 = arith.constant 0 : i32
    %c0_i32_0 = arith.constant 0 : i32
    %c0_i32_1 = arith.constant 0 : i32
    return %c0_i32, %c0_i32_0 : i32, i32
  }
  func.func @transform_12(%arg0: i32, %arg1: i32) -> (i32, i32) {
    %c0_i32 = arith.constant 0 : i32
    %c0_i32_0 = arith.constant 0 : i32
    %c0_i32_1 = arith.constant 0 : i32
    return %c0_i32, %c0_i32_0 : i32, i32
  }
  func.func @transform_13(%arg0: i32, %arg1: i32) -> (i32, i32, i32) {
    %c0_i32 = arith.constant 0 : i32
    %c0_i32_0 = arith.constant 0 : i32
    return %arg0, %arg1, %c0_i32 : i32, i32, i32
  }
}

</mosaic_0001>

<llo_original>
// kernel: sub.17
$region0: #{sub.17}
  %s0 = inlined_call_operand.vmem [shape: f32[32], index: 0, kind: input, shape index: {}]
  %s1 = inlined_call_operand.vmem [shape: f32[2,16], index: 1, kind: output, shape index: {}]
  $region1: #{sub.17} parent=0
    #allocation0 [shape = 'u8[4096]{0}', space=vmem, size = 0x1000, scoped, tag = 'scoped mem for output reshape']
    #allocation1 [shape = 'u8[4096]{0}', space=vmem, size = 0x1000, scoped, tag = 'scoped mem for input reshape']
    %s3 = sshllo.u32 0, 1
    %v4 = vld [vmem:[%s0] sm:%s3]
    %5 = vst [vmem:[#allocation1] sm:%s3] %v4
    %v6 = vld [vmem:[#allocation1] sm:$0x1]
    %vm7 = vcmask 130048
    %8 = vst.msk [vmem:[#allocation0] sm:$0x1] %vm7, %v6
    %v9 = vld [vmem:[#allocation1] sm:$0x1]
    %10 = vrot.lane.b32.xlu0 %v9, 112
    %v11 = vpop.permute.xlu0 %10
    %vm12 = vcmask 130048
    %s13 = scalar_lea.vmem [#allocation0], 1
    %14 = vst.msk [vmem:[%s13] sm:$0x1] %vm12, %v11
    %s16 = sshllo.u32 0, 2
    %v18 = vld [vmem:[#allocation0] sm:%s16]
    %s19 = sshllo.u32 0, 2
    %20 = vst [vmem:[%s1] sm:%s19] %v18

// kernel: dgn_forward.5
$region0: #{dgn_forward.5}
  #allocation0 [shape = 'u32[]', space=smem, size = 0x4, offset = 0x4, fixed_abs, tag = 'smem constant byte address 0x4 - core index']
  #allocation1 [shape = 'u32[144,128]{1,0:T(1,128)}', space=vmem, size = 0x12000, scoped, tag = 'internal scratch']
  %s0 = inlined_call_operand.vmem [shape: f32[5,32,8], index: 0, kind: input, shape index: {}]
  %s1 = inlined_call_operand.vmem [shape: bf16[8,64], index: 1, kind: input, shape index: {}]
  %s2 = inlined_call_operand.vmem [shape: bf16[64,64], index: 2, kind: input, shape index: {}]
  %s3 = inlined_call_operand.vmem [shape: bf16[64,64], index: 3, kind: input, shape index: {}]
  %s4 = inlined_call_operand.vmem [shape: f32[1,64], index: 4, kind: input, shape index: {}]
  %s5 = inlined_call_operand.vmem [shape: f32[1,64], index: 5, kind: input, shape index: {}]
  %s6 = inlined_call_operand.vmem [shape: f32[1,64], index: 6, kind: input, shape index: {}]
  %s7 = inlined_call_operand.vmem [shape: f32[1,64], index: 7, kind: input, shape index: {}]
  %s8 = inlined_call_operand.vmem [shape: f32[32,64], index: 8, kind: output, shape index: {}]
  %s9 = sld [smem:[#allocation0]]
  $region42: #{dgn_forward.5} parent=0
    _
  %s11 = ssub.s32 1, %s9
  %s12 = scalar_select 0, %s11, %s9
  // Predicated region
  $region2: #{dgn_forward.5} parent=0 // pred_check
    _
  $region3: #{dgn_forward.5} parent=0 // pred_check_branch
    %14 = sbr.rel (0) target = $region5
  $region4: #{dgn_forward.5} parent=0 // pred_region
    _
  $region5: #{dgn_forward.5} parent=0 // pred_fallthru
    _
  // Predicated region
  $region6: #{dgn_forward.5} parent=0 // pred_check
    _
  $region7: #{dgn_forward.5} parent=0 // pred_check_branch
    %16 = sbr.rel (0) target = $region9
  $region8: #{dgn_forward.5} parent=0 // pred_region
    _
  $region9: #{dgn_forward.5} parent=0 // pred_fallthru
    _
  // Predicated region
  $region10: #{dgn_forward.5} parent=0 // pred_check
    _
  $region11: #{dgn_forward.5} parent=0 // pred_check_branch
    %18 = sbr.rel (0) target = $region13
  $region12: #{dgn_forward.5} parent=0 // pred_region
    _
  $region13: #{dgn_forward.5} parent=0 // pred_fallthru
    _
  // Predicated region
  $region14: #{dgn_forward.5} parent=0 // pred_check
    _
  $region15: #{dgn_forward.5} parent=0 // pred_check_branch
    %20 = sbr.rel (0) target = $region17
  $region16: #{dgn_forward.5} parent=0 // pred_region
    _
  $region17: #{dgn_forward.5} parent=0 // pred_fallthru
    _
  // Predicated region
  $region18: #{dgn_forward.5} parent=0 // pred_check
    _
  $region19: #{dgn_forward.5} parent=0 // pred_check_branch
    %22 = sbr.rel (0) target = $region21
  $region20: #{dgn_forward.5} parent=0 // pred_region
    _
  $region21: #{dgn_forward.5} parent=0 // pred_fallthru
    _
  // Predicated region
  $region22: #{dgn_forward.5} parent=0 // pred_check
    _
  $region23: #{dgn_forward.5} parent=0 // pred_check_branch
    %24 = sbr.rel (0) target = $region25
  $region24: #{dgn_forward.5} parent=0 // pred_region
    _
  $region25: #{dgn_forward.5} parent=0 // pred_fallthru
    _
  // Predicated region
  $region26: #{dgn_forward.5} parent=0 // pred_check
    _
  $region27: #{dgn_forward.5} parent=0 // pred_check_branch
    %26 = sbr.rel (0) target = $region29
  $region28: #{dgn_forward.5} parent=0 // pred_region
    _
  $region29: #{dgn_forward.5} parent=0 // pred_fallthru
    _
  // Predicated region
  $region30: #{dgn_forward.5} parent=0 // pred_check
    _
  $region31: #{dgn_forward.5} parent=0 // pred_check_branch
    %28 = sbr.rel (0) target = $region33
  $region32: #{dgn_forward.5} parent=0 // pred_region
    _
  $region33: #{dgn_forward.5} parent=0 // pred_fallthru
    _
  %v30 = vld [vmem:[%s0] sm:$0xff]
  %v31 = vld [vmem:[%s0 + $0x8] sm:$0xff]
  %v32 = vld [vmem:[%s0 + $0x10] sm:$0xff]
  %v33 = vld [vmem:[%s0 + $0x18] sm:$0xff]
  %v34 = vpack.c.bf16 %v31, %v30
  %v35 = vpack.c.bf16 %v33, %v32
  %v36 = vld [vmem:[%s1] sm:$0xf]
  %vm37 = vcmask 64512
  %v39 = vsel %vm37, %v34, 0
  %v42 = vsel %vm37, %v35, 0
  %vm44 = vcmask 1043456
  %v46 = vsel %vm44, %v36, 0
  %48 = vmatprep.subr.bf16.mxu0 0
  %49 = vmatpush1.bf16.msra.mxu0 %v46
  %50 = vmatprep.subr.bf16.mxu0 0
  %51 = vmatpush1.bf16.msra.mxu0 0
  %52 = vmatprep.subr.bf16.mxu0 0
  %53 = vmatpush1.bf16.msra.mxu0 0
  %54 = vmatprep.subr.bf16.mxu0 0
  %55 = vmatpush1.bf16.msra.mxu0 0
  %56 = vmatprep.subr.bf16.mxu0 0
  %57 = vmatpush1.bf16.msra.mxu0 0
  %58 = vmatprep.subr.bf16.mxu0 0
  %59 = vmatpush1.bf16.msra.mxu0 0
  %60 = vmatprep.subr.bf16.mxu0 0
  %61 = vmatpush1.bf16.msra.mxu0 0
  %62 = vmatprep.subr.bf16.mxu0 0
  %63 = vmatpush1.bf16.msra.mxu0 0
  %64 = vmatprep.subr.bf16.mxu0 0
  %65 = vmatpush1.bf16.msra.mxu0 0
  %66 = vmatprep.subr.bf16.mxu0 0
  %67 = vmatpush1.bf16.msra.mxu0 0
  %68 = vmatprep.subr.bf16.mxu0 0
  %69 = vmatpush1.bf16.msra.mxu0 0
  %70 = vmatprep.subr.bf16.mxu0 0
  %71 = vmatpush1.bf16.msra.mxu0 0
  %72 = vmatprep.subr.bf16.mxu0 0
  %73 = vmatpush1.bf16.msra.mxu0 0
  %74 = vmatprep.subr.bf16.mxu0 0
  %75 = vmatpush1.bf16.msra.mxu0 0
  %76 = vmatprep.subr.bf16.mxu0 0
  %77 = vmatpush1.bf16.msra.mxu0 0
  %78 = vmatprep.subr.bf16.mxu0 0
  %79 = vmatpush1.bf16.msra.mxu0 0
  %80 = vmatprep.mubr.bf16.mxu0 0
  %81 = vmatmul.mubr.bf16.gmra.mrb[0].mxu0 %v39
  %v82 = vpop.f32.mrb[0].mxu0
  %v83 = vadd.f32 0.0, %v82
  %v84 = vpop.f32.mrb[0].mxu0
  %v85 = vpop.f32.mrb[0].mxu0
  %v86 = vadd.f32 0.0, %v85
  %v87 = vpop.f32.mrb[0].mxu0
  %88 = vmatprep.mubr.bf16.mxu0 0
  %89 = vmatmul.mubr.bf16.gmra.mrb[0].mxu0 %v42
  %v90 = vpop.f32.mrb[0].mxu0
  %v91 = vadd.f32 0.0, %v90
  %v92 = vpop.f32.mrb[0].mxu0
  %v93 = vpop.f32.mrb[0].mxu0
  %v94 = vadd.f32 0.0, %v93
  %v95 = vpop.f32.mrb[0].mxu0
  %96 = vdwg.mxu0
  %vm97 = vcmp.ge.f32.partialorder %v83, 0.0
  %vm98 = vcmp.ge.f32.partialorder %v86, 0.0
  %vm99 = vcmp.ge.f32.partialorder %v91, 0.0
  %vm100 = vcmp.ge.f32.partialorder %v94, 0.0
  %v101 = vmul.f32 %v83, 0.2
  %v102 = vmul.f32 %v86, 0.2
  %v103 = vmul.f32 %v91, 0.2
  %v104 = vmul.f32 %v94, 0.2
  %v105 = vsel %vm97, %v83, %v101
  %v106 = vsel %vm98, %v86, %v102
  %v107 = vsel %vm99, %v91, %v103
  %v108 = vsel %vm100, %v94, %v104
  %v109 = vld [vmem:[%s4] sm:$0x1]
  %v111 = vlaneseq
  %v112 = vshrl.u32 %v111, 7
  %v113 = vsub.s32 0, %v112
  %v114 = vrot.slane %v109, %v113
  %v116 = vmul.f32 %v105, %v114
  %v117 = vmul.f32 %v106, %v114
  %v118 = vmul.f32 %v107, %v114
  %v119 = vmul.f32 %v108, %v114
  %v120 = vld [vmem:[%s5] sm:$0x1]
  %v122 = vlaneseq
  %v123 = vshrl.u32 %v122, 7
  %v124 = vsub.s32 0, %v123
  %v125 = vrot.slane %v120, %v124
  %v127 = vadd.f32 %v116, %v125
  %v128 = vadd.f32 %v117, %v125
  %v129 = vadd.f32 %v118, %v125
  %v130 = vadd.f32 %v119, %v125
  %v131 = vpack.c.bf16 %v128, %v127
  %v132 = vpack.c.bf16 %v130, %v129
  %v133 = vld [vmem:[%s2] sm:$0xf]
  %v134 = vld [vmem:[%s2 + $0x4] sm:$0xf]
  %v135 = vld [vmem:[%s2 + $0x8] sm:$0xf]
  %v136 = vld [vmem:[%s2 + $0xc] sm:$0xf]
  %v137 = vld [vmem:[%s2 + $0x10] sm:$0xf]
  %v138 = vld [vmem:[%s2 + $0x14] sm:$0xf]
  %v139 = vld [vmem:[%s2 + $0x18] sm:$0xf]
  %v140 = vld [vmem:[%s2 + $0x1c] sm:$0xf]
  %v149 = vunpack.c.l.b16 %v133
  %v150 = vunpack.c.l.b16 %v134
  %v151 = vunpack.c.l.b16 %v135
  %v152 = vunpack.c.l.b16 %v136
  %v153 = vunpack.c.l.b16 %v137
  %v154 = vunpack.c.l.b16 %v138
  %v155 = vunpack.c.l.b16 %v139
  %v156 = vunpack.c.l.b16 %v140
  %v157 = vpack.c.b16 %v150, %v149
  %v158 = vpack.c.b16 %v152, %v151
  %v159 = vpack.c.b16 %v154, %v153
  %v160 = vpack.c.b16 %v156, %v155
  %vm165 = vcmask 523264
  %v167 = vsel %vm165, %v131, 0
  %v170 = vsel %vm165, %v132, 0
  %172 = vmatprep.subr.bf16.mxu0 0
  %173 = vmatpush1.bf16.msra.mxu0 %v157
  %174 = vmatprep.subr.bf16.mxu0 0
  %175 = vmatpush1.bf16.msra.mxu0 %v158
  %176 = vmatprep.subr.bf16.mxu0 0
  %177 = vmatpush1.bf16.msra.mxu0 %v159
  %178 = vmatprep.subr.bf16.mxu0 0
  %179 = vmatpush1.bf16.msra.mxu0 %v160
  %180 = vmatprep.subr.bf16.mxu0 0
  %181 = vmatpush1.bf16.msra.mxu0 0
  %182 = vmatprep.subr.bf16.mxu0 0
  %183 = vmatpush1.bf16.msra.mxu0 0
  %184 = vmatprep.subr.bf16.mxu0 0
  %185 = vmatpush1.bf16.msra.mxu0 0
  %186 = vmatprep.subr.bf16.mxu0 0
  %187 = vmatpush1.bf16.msra.mxu0 0
  %188 = vmatprep.subr.bf16.mxu0 0
  %189 = vmatpush1.bf16.msra.mxu0 0
  %190 = vmatprep.subr.bf16.mxu0 0
  %191 = vmatpush1.bf16.msra.mxu0 0
  %192 = vmatprep.subr.bf16.mxu0 0
  %193 = vmatpush1.bf16.msra.mxu0 0
  %194 = vmatprep.subr.bf16.mxu0 0
  %195 = vmatpush1.bf16.msra.mxu0 0
  %196 = vmatprep.subr.bf16.mxu0 0
  %197 = vmatpush1.bf16.msra.mxu0 0
  %198 = vmatprep.subr.bf16.mxu0 0
  %199 = vmatpush1.bf16.msra.mxu0 0
  %200 = vmatprep.subr.bf16.mxu0 0
  %201 = vmatpush1.bf16.msra.mxu0 0
  %202 = vmatprep.subr.bf16.mxu0 0
  %203 = vmatpush1.bf16.msra.mxu0 0
  %204 = vmatprep.mubr.bf16.mxu0 0
  %205 = vmatmul.mubr.bf16.gmra.mrb[0].mxu0 %v167
  %v206 = vpop.f32.mrb[0].mxu0
  %v207 = vadd.f32 0.0, %v206
  %v208 = vpop.f32.mrb[0].mxu0
  %v209 = vpop.f32.mrb[0].mxu0
  %v210 = vadd.f32 0.0, %v209
  %v211 = vpop.f32.mrb[0].mxu0
  %212 = vmatprep.mubr.bf16.mxu0 0
  %213 = vmatmul.mubr.bf16.gmra.mrb[0].mxu0 %v170
  %v214 = vpop.f32.mrb[0].mxu0
  %v215 = vadd.f32 0.0, %v214
  %v216 = vpop.f32.mrb[0].mxu0
  %v217 = vpop.f32.mrb[0].mxu0
  %v218 = vadd.f32 0.0, %v217
  %v219 = vpop.f32.mrb[0].mxu0
  %220 = vdwg.mxu0
  %vm221 = vcmp.ge.f32.partialorder %v207, 0.0
  %vm222 = vcmp.ge.f32.partialorder %v210, 0.0
  %vm223 = vcmp.ge.f32.partialorder %v215, 0.0
  %vm224 = vcmp.ge.f32.partialorder %v218, 0.0
  %v225 = vmul.f32 %v207, 0.2
  %v226 = vmul.f32 %v210, 0.2
  %v227 = vmul.f32 %v215, 0.2
  %v228 = vmul.f32 %v218, 0.2
  %v229 = vsel %vm221, %v207, %v225
  %v230 = vsel %vm222, %v210, %v226
  %v231 = vsel %vm223, %v215, %v227
  %v232 = vsel %vm224, %v218, %v228
  %v233 = vmul.f32 %v229, %v114
  %v234 = vmul.f32 %v230, %v114
  %v235 = vmul.f32 %v231, %v114
  %v236 = vmul.f32 %v232, %v114
  %v237 = vadd.f32 %v233, %v125
  %v238 = vadd.f32 %v234, %v125
  %v239 = vadd.f32 %v235, %v125
  %v240 = vadd.f32 %v236, %v125
  %v241 = vpack.c.bf16 %v238, %v237
  %v242 = vpack.c.bf16 %v240, %v239
  %v243 = vld [vmem:[%s3] sm:$0xf]
  %v244 = vld [vmem:[%s3 + $0x4] sm:$0xf]
  %v245 = vld [vmem:[%s3 + $0x8] sm:$0xf]
  %v246 = vld [vmem:[%s3 + $0xc] sm:$0xf]
  %v247 = vld [vmem:[%s3 + $0x10] sm:$0xf]
  %v248 = vld [vmem:[%s3 + $0x14] sm:$0xf]
  %v249 = vld [vmem:[%s3 + $0x18] sm:$0xf]
  %v250 = vld [vmem:[%s3 + $0x1c] sm:$0xf]
  %v259 = vunpack.c.l.b16 %v243
  %v260 = vunpack.c.l.b16 %v244
  %v261 = vunpack.c.l.b16 %v245
  %v262 = vunpack.c.l.b16 %v246
  %v263 = vunpack.c.l.b16 %v247
  %v264 = vunpack.c.l.b16 %v248
  %v265 = vunpack.c.l.b16 %v249
  %v266 = vunpack.c.l.b16 %v250
  %v267 = vpack.c.b16 %v260, %v259
  %v268 = vpack.c.b16 %v262, %v261
  %v269 = vpack.c.b16 %v264, %v263
  %v270 = vpack.c.b16 %v266, %v265
  %v276 = vsel %vm165, %v241, 0
  %v279 = vsel %vm165, %v242, 0
  %281 = vmatprep.subr.bf16.mxu0 0
  %282 = vmatpush1.bf16.msra.mxu0 %v267
  %283 = vmatprep.subr.bf16.mxu0 0
  %284 = vmatpush1.bf16.msra.mxu0 %v268
  %285 = vmatprep.subr.bf16.mxu0 0
  %286 = vmatpush1.bf16.msra.mxu0 %v269
  %287 = vmatprep.subr.bf16.mxu0 0
  %288 = vmatpush1.bf16.msra.mxu0 %v270
  %289 = vmatprep.subr.bf16.mxu0 0
  %290 = vmatpush1.bf16.msra.mxu0 0
  %291 = vmatprep.subr.bf16.mxu0 0
  %292 = vmatpush1.bf16.msra.mxu0 0
  %293 = vmatprep.subr.bf16.mxu0 0
  %294 = vmatpush1.bf16.msra.mxu0 0
  %295 = vmatprep.subr.bf16.mxu0 0
  %296 = vmatpush1.bf16.msra.mxu0 0
  %297 = vmatprep.subr.bf16.mxu0 0
  %298 = vmatpush1.bf16.msra.mxu0 0
  %299 = vmatprep.subr.bf16.mxu0 0
  %300 = vmatpush1.bf16.msra.mxu0 0
  %301 = vmatprep.subr.bf16.mxu0 0
  %302 = vmatpush1.bf16.msra.mxu0 0
  %303 = vmatprep.subr.bf16.mxu0 0
  %304 = vmatpush1.bf16.msra.mxu0 0
  %305 = vmatprep.subr.bf16.mxu0 0
  %306 = vmatpush1.bf16.msra.mxu0 0
  %307 = vmatprep.subr.bf16.mxu0 0
  %308 = vmatpush1.bf16.msra.mxu0 0
  %309 = vmatprep.subr.bf16.mxu0 0
  %310 = vmatpush1.bf16.msra.mxu0 0
  %311 = vmatprep.subr.bf16.mxu0 0
  %312 = vmatpush1.bf16.msra.mxu0 0
  %313 = vmatprep.mubr.bf16.mxu0 0
  %314 = vmatmul.mubr.bf16.gmra.mrb[0].mxu0 %v276
  %v315 = vpop.f32.mrb[0].mxu0
  %v316 = vadd.f32 0.0, %v315
  %v317 = vpop.f32.mrb[0].mxu0
  %v318 = vpop.f32.mrb[0].mxu0
  %v319 = vadd.f32 0.0, %v318
  %v320 = vpop.f32.mrb[0].mxu0
  %321 = vmatprep.mubr.bf16.mxu0 0
  %322 = vmatmul.mubr.bf16.gmra.mrb[0].mxu0 %v279
  %v323 = vpop.f32.mrb[0].mxu0
  %v324 = vadd.f32 0.0, %v323
  %v325 = vpop.f32.mrb[0].mxu0
  %v326 = vpop.f32.mrb[0].mxu0
  %v327 = vadd.f32 0.0, %v326
  %v328 = vpop.f32.mrb[0].mxu0
  %329 = vdwg.mxu0
  %vm330 = vcmp.ge.f32.partialorder %v316, 0.0
  %vm331 = vcmp.ge.f32.partialorder %v319, 0.0
  %vm332 = vcmp.ge.f32.partialorder %v324, 0.0
  %vm333 = vcmp.ge.f32.partialorder %v327, 0.0
  %v334 = vmul.f32 %v316, 0.2
  %v335 = vmul.f32 %v319, 0.2
  %v336 = vmul.f32 %v324, 0.2
  %v337 = vmul.f32 %v327, 0.2
  %v338 = vsel %vm330, %v316, %v334
  %v339 = vsel %vm331, %v319, %v335
  %v340 = vsel %vm332, %v324, %v336
  %v341 = vsel %vm333, %v327, %v337
  %v342 = vld [vmem:[%s6] sm:$0x1]
  %v344 = vlaneseq
  %v345 = vshrl.u32 %v344, 7
  %v346 = vsub.s32 0, %v345
  %v347 = vrot.slane %v342, %v346
  %v349 = vmul.f32 %v338, %v347
  %v350 = vmul.f32 %v339, %v347
  %v351 = vmul.f32 %v340, %v347
  %v352 = vmul.f32 %v341, %v347
  %v353 = vld [vmem:[%s7] sm:$0x1]
  %v355 = vlaneseq
  %v356 = vshrl.u32 %v355, 7
  %v357 = vsub.s32 0, %v356
  %v358 = vrot.slane %v353, %v357
  %v360 = vadd.f32 %v349, %v358
  %v361 = vadd.f32 %v350, %v358
  %v362 = vadd.f32 %v351, %v358
  %v363 = vadd.f32 %v352, %v358
  %s364 = scalar_lea.vmem %s0, 32
  %v365 = vld [vmem:[%s364] sm:$0xff]
  %v366 = vld [vmem:[%s364 + $0x8] sm:$0xff]
  %v367 = vld [vmem:[%s364 + $0x10] sm:$0xff]
  %v368 = vld [vmem:[%s364 + $0x18] sm:$0xff]
  %v369 = vpack.c.bf16 %v366, %v365
  %v370 = vpack.c.bf16 %v368, %v367
  %v372 = vsel %vm37, %v369, 0
  %v375 = vsel %vm37, %v370, 0
  %377 = vmatprep.subr.bf16.mxu0 0
  %378 = vmatpush1.bf16.msra.mxu0 %v46
  %379 = vmatprep.subr.bf16.mxu0 0
  %380 = vmatpush1.bf16.msra.mxu0 0
  %381 = vmatprep.subr.bf16.mxu0 0
  %382 = vmatpush1.bf16.msra.mxu0 0
  %383 = vmatprep.subr.bf16.mxu0 0
  %384 = vmatpush1.bf16.msra.mxu0 0
  %385 = vmatprep.subr.bf16.mxu0 0
  %386 = vmatpush1.bf16.msra.mxu0 0
  %387 = vmatprep.subr.bf16.mxu0 0
  %388 = vmatpush1.bf16.msra.mxu0 0
  %389 = vmatprep.subr.bf16.mxu0 0
  %390 = vmatpush1.bf16.msra.mxu0 0
  %391 = vmatprep.subr.bf16.mxu0 0
  %392 = vmatpush1.bf16.msra.mxu0 0
  %393 = vmatprep.subr.bf16.mxu0 0
  %394 = vmatpush1.bf16.msra.mxu0 0
  %395 = vmatprep.subr.bf16.mxu0 0
  %396 = vmatpush1.bf16.msra.mxu0 0
  %397 = vmatprep.subr.bf16.mxu0 0
  %398 = vmatpush1.bf16.msra.mxu0 0
  %399 = vmatprep.subr.bf16.mxu0 0
  %400 = vmatpush1.bf16.msra.mxu0 0
  %401 = vmatprep.subr.bf16.mxu0 0
  %402 = vmatpush1.bf16.msra.mxu0 0
  %403 = vmatprep.subr.bf16.mxu0 0
  %404 = vmatpush1.bf16.msra.mxu0 0
  %405 = vmatprep.subr.bf16.mxu0 0
  %406 = vmatpush1.bf16.msra.mxu0 0
  %407 = vmatprep.subr.bf16.mxu0 0
  %408 = vmatpush1.bf16.msra.mxu0 0
  %409 = vmatprep.mubr.bf16.mxu0 0
  %410 = vmatmul.mubr.bf16.gmra.mrb[0].mxu0 %v372
  %v411 = vpop.f32.mrb[0].mxu0
  %v412 = vadd.f32 0.0, %v411
  %v413 = vpop.f32.mrb[0].mxu0
  %v414 = vpop.f32.mrb[0].mxu0
  %v415 = vadd.f32 0.0, %v414
  %v416 = vpop.f32.mrb[0].mxu0
  %417 = vmatprep.mubr.bf16.mxu0 0
  %418 = vmatmul.mubr.bf16.gmra.mrb[0].mxu0 %v375
  %v419 = vpop.f32.mrb[0].mxu0
  %v420 = vadd.f32 0.0, %v419
  %v421 = vpop.f32.mrb[0].mxu0
  %v422 = vpop.f32.mrb[0].mxu0
  %v423 = vadd.f32 0.0, %v422
  %v424 = vpop.f32.mrb[0].mxu0
  %425 = vdwg.mxu0
  %vm426 = vcmp.ge.f32.partialorder %v412, 0.0
  %vm427 = vcmp.ge.f32.partialorder %v415, 0.0
  %vm428 = vcmp.ge.f32.partialorder %v420, 0.0
  %vm429 = vcmp.ge.f32.partialorder %v423, 0.0
  %v430 = vmul.f32 %v412, 0.2
  %v431 = vmul.f32 %v415, 0.2
  %v432 = vmul.f32 %v420, 0.2
  %v433 = vmul.f32 %v423, 0.2
  %v434 = vsel %vm426, %v412, %v430
  %v435 = vsel %vm427, %v415, %v431
  %v436 = vsel %vm428, %v420, %v432
  %v437 = vsel %vm429, %v423, %v433
  %v438 = vmul.f32 %v434, %v114
  %v439 = vmul.f32 %v435, %v114
  %v440 = vmul.f32 %v436, %v114
  %v441 = vmul.f32 %v437, %v114
  %v442 = vadd.f32 %v438, %v125
  %v443 = vadd.f32 %v439, %v125
  %v444 = vadd.f32 %v440, %v125
  %v445 = vadd.f32 %v441, %v125
  %v446 = vpack.c.bf16 %v443, %v442
  %v447 = vpack.c.bf16 %v445, %v444
  %v449 = vsel %vm165, %v446, 0
  %v452 = vsel %vm165, %v447, 0
  %454 = vmatprep.subr.bf16.mxu0 0
  %455 = vmatpush1.bf16.msra.mxu0 %v157
  %456 = vmatprep.subr.bf16.mxu0 0
  %457 = vmatpush1.bf16.msra.mxu0 %v158
  %458 = vmatprep.subr.bf16.mxu0 0
  %459 = vmatpush1.bf16.msra.mxu0 %v159
  %460 = vmatprep.subr.bf16.mxu0 0
  %461 = vmatpush1.bf16.msra.mxu0 %v160
  %462 = vmatprep.subr.bf16.mxu0 0
  %463 = vmatpush1.bf16.msra.mxu0 0
  %464 = vmatprep.subr.bf16.mxu0 0
  %465 = vmatpush1.bf16.msra.mxu0 0
  %466 = vmatprep.subr.bf16.mxu0 0
  %467 = vmatpush1.bf16.msra.mxu0 0
  %468 = vmatprep.subr.bf16.mxu0 0
  %469 = vmatpush1.bf16.msra.mxu0 0
  %470 = vmatprep.subr.bf16.mxu0 0
  %471 = vmatpush1.bf16.msra.mxu0 0
  %472 = vmatprep.subr.bf16.mxu0 0
  %473 = vmatpush1.bf16.msra.mxu0 0
  %474 = vmatprep.subr.bf16.mxu0 0
  %475 = vmatpush1.bf16.msra.mxu0 0
  %476 = vmatprep.subr.bf16.mxu0 0
  %477 = vmatpush1.bf16.msra.mxu0 0
  %478 = vmatprep.subr.bf16.mxu0 0
  %479 = vmatpush1.bf16.msra.mxu0 0
  %480 = vmatprep.subr.bf16.mxu0 0
  %481 = vmatpush1.bf16.msra.mxu0 0
  %482 = vmatprep.subr.bf16.mxu0 0
  %483 = vmatpush1.bf16.msra.mxu0 0
  %484 = vmatprep.subr.bf16.mxu0 0
  %485 = vmatpush1.bf16.msra.mxu0 0
  %486 = vmatprep.mubr.bf16.mxu0 0
  %487 = vmatmul.mubr.bf16.gmra.mrb[0].mxu0 %v449
  %v488 = vpop.f32.mrb[0].mxu0
  %v489 = vadd.f32 0.0, %v488
  %v490 = vpop.f32.mrb[0].mxu0
  %v491 = vpop.f32.mrb[0].mxu0
  %v492 = vadd.f32 0.0, %v491
  %v493 = vpop.f32.mrb[0].mxu0
  %494 = vmatprep.mubr.bf16.mxu0 0
  %495 = vmatmul.mubr.bf16.gmra.mrb[0].mxu0 %v452
  %v496 = vpop.f32.mrb[0].mxu0
  %v497 = vadd.f32 0.0, %v496
  %v498 = vpop.f32.mrb[0].mxu0
  %v499 = vpop.f32.mrb[0].mxu0
  %v500 = vadd.f32 0.0, %v499
  %v501 = vpop.f32.mrb[0].mxu0
  %502 = vdwg.mxu0
  %vm503 = vcmp.ge.f32.partialorder %v489, 0.0
  %vm504 = vcmp.ge.f32.partialorder %v492, 0.0
  %vm505 = vcmp.ge.f32.partialorder %v497, 0.0
  %vm506 = vcmp.ge.f32.partialorder %v500, 0.0
  %v507 = vmul.f32 %v489, 0.2
  %v508 = vmul.f32 %v492, 0.2
  %v509 = vmul.f32 %v497, 0.2
  %v510 = vmul.f32 %v500, 0.2
  %v511 = vsel %vm503, %v489, %v507
  %v512 = vsel %vm504, %v492, %v508
  %v513 = vsel %vm505, %v497, %v509
  %v514 = vsel %vm506, %v500, %v510
  %v515 = vmul.f32 %v511, %v114
  %v516 = vmul.f32 %v512, %v114
  %v517 = vmul.f32 %v513, %v114
  %v518 = vmul.f32 %v514, %v114
  %v519 = vadd.f32 %v515, %v125
  %v520 = vadd.f32 %v516, %v125
  %v521 = vadd.f32 %v517, %v125
  %v522 = vadd.f32 %v518, %v125
  %v523 = vpack.c.bf16 %v520, %v519
  %v524 = vpack.c.bf16 %v522, %v521
  %v526 = vsel %vm165, %v523, 0
  %v529 = vsel %vm165, %v524, 0
  %531 = vmatprep.subr.bf16.mxu0 0
  %532 = vmatpush1.bf16.msra.mxu0 %v267
  %533 = vmatprep.subr.bf16.mxu0 0
  %534 = vmatpush1.bf16.msra.mxu0 %v268
  %535 = vmatprep.subr.bf16.mxu0 0
  %536 = vmatpush1.bf16.msra.mxu0 %v269
  %537 = vmatprep.subr.bf16.mxu0 0
  %538 = vmatpush1.bf16.msra.mxu0 %v270
  %539 = vmatprep.subr.bf16.mxu0 0
  %540 = vmatpush1.bf16.msra.mxu0 0
  %541 = vmatprep.subr.bf16.mxu0 0
  %542 = vmatpush1.bf16.msra.mxu0 0
  %543 = vmatprep.subr.bf16.mxu0 0
  %544 = vmatpush1.bf16.msra.mxu0 0
  %545 = vmatprep.subr.bf16.mxu0 0
  %546 = vmatpush1.bf16.msra.mxu0 0
  %547 = vmatprep.subr.bf16.mxu0 0
  %548 = vmatpush1.bf16.msra.mxu0 0
  %549 = vmatprep.subr.bf16.mxu0 0
  %550 = vmatpush1.bf16.msra.mxu0 0
  %551 = vmatprep.subr.bf16.mxu0 0
  %552 = vmatpush1.bf16.msra.mxu0 0
  %553 = vmatprep.subr.bf16.mxu0 0
  %554 = vmatpush1.bf16.msra.mxu0 0
  %555 = vmatprep.subr.bf16.mxu0 0
  %556 = vmatpush1.bf16.msra.mxu0 0
  %557 = vmatprep.subr.bf16.mxu0 0
  %558 = vmatpush1.bf16.msra.mxu0 0
  %559 = vmatprep.subr.bf16.mxu0 0
  %560 = vmatpush1.bf16.msra.mxu0 0
  %561 = vmatprep.subr.bf16.mxu0 0
  %562 = vmatpush1.bf16.msra.mxu0 0
  %563 = vmatprep.mubr.bf16.mxu0 0
  %564 = vmatmul.mubr.bf16.gmra.mrb[0].mxu0 %v526
  %v565 = vpop.f32.mrb[0].mxu0
  %v566 = vadd.f32 0.0, %v565
  %v567 = vpop.f32.mrb[0].mxu0
  %v568 = vpop.f32.mrb[0].mxu0
  %v569 = vadd.f32 0.0, %v568
  %v570 = vpop.f32.mrb[0].mxu0
  %571 = vmatprep.mubr.bf16.mxu0 0
  %572 = vmatmul.mubr.bf16.gmra.mrb[0].mxu0 %v529
  %v573 = vpop.f32.mrb[0].mxu0
  %v574 = vadd.f32 0.0, %v573
  %v575 = vpop.f32.mrb[0].mxu0
  %v576 = vpop.f32.mrb[0].mxu0
  %v577 = vadd.f32 0.0, %v576
  %v578 = vpop.f32.mrb[0].mxu0
  %579 = vdwg.mxu0
  %vm580 = vcmp.ge.f32.partialorder %v566, 0.0
  %vm581 = vcmp.ge.f32.partialorder %v569, 0.0
  %vm582 = vcmp.ge.f32.partialorder %v574, 0.0
  %vm583 = vcmp.ge.f32.partialorder %v577, 0.0
  %v584 = vmul.f32 %v566, 0.2
  %v585 = vmul.f32 %v569, 0.2
  %v586 = vmul.f32 %v574, 0.2
  %v587 = vmul.f32 %v577, 0.2
  %v588 = vsel %vm580, %v566, %v584
  %v589 = vsel %vm581, %v569, %v585
  %v590 = vsel %vm582, %v574, %v586
  %v591 = vsel %vm583, %v577, %v587
  %v592 = vmul.f32 %v588, %v347
  %v593 = vmul.f32 %v589, %v347
  %v594 = vmul.f32 %v590, %v347
  %v595 = vmul.f32 %v591, %v347
  %v596 = vadd.f32 %v592, %v358
  %v597 = vadd.f32 %v593, %v358
  %v598 = vadd.f32 %v594, %v358
  %v599 = vadd.f32 %v595, %v358
  %v600 = vmax.f32 %v360, %v596
  %v601 = vmax.f32 %v361, %v597
  %v602 = vmax.f32 %v362, %v598
  %v603 = vmax.f32 %v363, %v599
  %s604 = scalar_lea.vmem %s0, 64
  %v605 = vld [vmem:[%s604] sm:$0xff]
  %v606 = vld [vmem:[%s604 + $0x8] sm:$0xff]
  %v607 = vld [vmem:[%s604 + $0x10] sm:$0xff]
  %v608 = vld [vmem:[%s604 + $0x18] sm:$0xff]
  %v609 = vpack.c.bf16 %v606, %v605
  %v610 = vpack.c.bf16 %v608, %v607
  %v612 = vsel %vm37, %v609, 0
  %v615 = vsel %vm37, %v610, 0
  %617 = vmatprep.subr.bf16.mxu0 0
  %618 = vmatpush1.bf16.msra.mxu0 %v46
  %619 = vmatprep.subr.bf16.mxu0 0
  %620 = vmatpush1.bf16.msra.mxu0 0
  %621 = vmatprep.subr.bf16.mxu0 0
  %622 = vmatpush1.bf16.msra.mxu0 0
  %623 = vmatprep.subr.bf16.mxu0 0
  %624 = vmatpush1.bf16.msra.mxu0 0
  %625 = vmatprep.subr.bf16.mxu0 0
  %626 = vmatpush1.bf16.msra.mxu0 0
  %627 = vmatprep.subr.bf16.mxu0 0
  %628 = vmatpush1.bf16.msra.mxu0 0
  %629 = vmatprep.subr.bf16.mxu0 0
  %630 = vmatpush1.bf16.msra.mxu0 0
  %631 = vmatprep.subr.bf16.mxu0 0
  %632 = vmatpush1.bf16.msra.mxu0 0
  %633 = vmatprep.subr.bf16.mxu0 0
  %634 = vmatpush1.bf16.msra.mxu0 0
  %635 = vmatprep.subr.bf16.mxu0 0
  %636 = vmatpush1.bf16.msra.mxu0 0
  %637 = vmatprep.subr.bf16.mxu0 0
  %638 = vmatpush1.bf16.msra.mxu0 0
  %639 = vmatprep.subr.bf16.mxu0 0
  %640 = vmatpush1.bf16.msra.mxu0 0
  %641 = vmatprep.subr.bf16.mxu0 0
  %642 = vmatpush1.bf16.msra.mxu0 0
  %643 = vmatprep.subr.bf16.mxu0 0
  %644 = vmatpush1.bf16.msra.mxu0 0
  %645 = vmatprep.subr.bf16.mxu0 0
  %646 = vmatpush1.bf16.msra.mxu0 0
  %647 = vmatprep.subr.bf16.mxu0 0
  %648 = vmatpush1.bf16.msra.mxu0 0
  %649 = vmatprep.mubr.bf16.mxu0 0
  %650 = vmatmul.mubr.bf16.gmra.mrb[0].mxu0 %v612
  %v651 = vpop.f32.mrb[0].mxu0
  %v652 = vadd.f32 0.0, %v651
  %v653 = vpop.f32.mrb[0].mxu0
  %v654 = vpop.f32.mrb[0].mxu0
  %v655 = vadd.f32 0.0, %v654
  %v656 = vpop.f32.mrb[0].mxu0
  %657 = vmatprep.mubr.bf16.mxu0 0
  %658 = vmatmul.mubr.bf16.gmra.mrb[0].mxu0 %v615
  %v659 = vpop.f32.mrb[0].mxu0
  %v660 = vadd.f32 0.0, %v659
  %v661 = vpop.f32.mrb[0].mxu0
  %v662 = vpop.f32.mrb[0].mxu0
  %v663 = vadd.f32 0.0, %v662
  %v664 = vpop.f32.mrb[0].mxu0
  %665 = vdwg.mxu0
  %vm666 = vcmp.ge.f32.partialorder %v652, 0.0
  %vm667 = vcmp.ge.f32.partialorder %v655, 0.0
  %vm668 = vcmp.ge.f32.partialorder %v660, 0.0
  %vm669 = vcmp.ge.f32.partialorder %v663, 0.0
  %v670 = vmul.f32 %v652, 0.2
  %v671 = vmul.f32 %v655, 0.2
  %v672 = vmul.f32 %v660, 0.2
  %v673 = vmul.f32 %v663, 0.2
  %v674 = vsel %vm666, %v652, %v670
  %v675 = vsel %vm667, %v655, %v671
  %v676 = vsel %vm668, %v660, %v672
  %v677 = vsel %vm669, %v663, %v673
  %v678 = vmul.f32 %v674, %v114
  %v679 = vmul.f32 %v675, %v114
  %v680 = vmul.f32 %v676, %v114
  %v681 = vmul.f32 %v677, %v114
  %v682 = vadd.f32 %v678, %v125
  %v683 = vadd.f32 %v679, %v125
  %v684 = vadd.f32 %v680, %v125
  %v685 = vadd.f32 %v681, %v125
  %v686 = vpack.c.bf16 %v683, %v682
  %v687 = vpack.c.bf16 %v685, %v684
  %v689 = vsel %vm165, %v686, 0
  %v692 = vsel %vm165, %v687, 0
  %694 = vmatprep.subr.bf16.mxu0 0
  %695 = vmatpush1.bf16.msra.mxu0 %v157
  %696 = vmatprep.subr.bf16.mxu0 0
  %697 = vmatpush1.bf16.msra.mxu0 %v158
  %698 = vmatprep.subr.bf16.mxu0 0
  %699 = vmatpush1.bf16.msra.mxu0 %v159
  %700 = vmatprep.subr.bf16.mxu0 0
  %701 = vmatpush1.bf16.msra.mxu0 %v160
  %702 = vmatprep.subr.bf16.mxu0 0
  %703 = vmatpush1.bf16.msra.mxu0 0
  %704 = vmatprep.subr.bf16.mxu0 0
  %705 = vmatpush1.bf16.msra.mxu0 0
  %706 = vmatprep.subr.bf16.mxu0 0
  %707 = vmatpush1.bf16.msra.mxu0 0
  %708 = vmatprep.subr.bf16.mxu0 0
  %709 = vmatpush1.bf16.msra.mxu0 0
  %710 = vmatprep.subr.bf16.mxu0 0
  %711 = vmatpush1.bf16.msra.mxu0 0
  %712 = vmatprep.subr.bf16.mxu0 0
  %713 = vmatpush1.bf16.msra.mxu0 0
  %714 = vmatprep.subr.bf16.mxu0 0
  %715 = vmatpush1.bf16.msra.mxu0 0
  %716 = vmatprep.subr.bf16.mxu0 0
  %717 = vmatpush1.bf16.msra.mxu0 0
  %718 = vmatprep.subr.bf16.mxu0 0
  %719 = vmatpush1.bf16.msra.mxu0 0
  %720 = vmatprep.subr.bf16.mxu0 0
  %721 = vmatpush1.bf16.msra.mxu0 0
  %722 = vmatprep.subr.bf16.mxu0 0
  %723 = vmatpush1.bf16.msra.mxu0 0
  %724 = vmatprep.subr.bf16.mxu0 0
  %725 = vmatpush1.bf16.msra.mxu0 0
  %726 = vmatprep.mubr.bf16.mxu0 0
  %727 = vmatmul.mubr.bf16.gmra.mrb[0].mxu0 %v689
  %v728 = vpop.f32.mrb[0].mxu0
  %v729 = vadd.f32 0.0, %v728
  %v730 = vpop.f32.mrb[0].mxu0
  %v731 = vpop.f32.mrb[0].mxu0
  %v732 = vadd.f32 0.0, %v731
  %v733 = vpop.f32.mrb[0].mxu0
  %734 = vmatprep.mubr.bf16.mxu0 0
  %735 = vmatmul.mubr.bf16.gmra.mrb[0].mxu0 %v692
  %v736 = vpop.f32.mrb[0].mxu0
  %v737 = vadd.f32 0.0, %v736
  %v738 = vpop.f32.mrb[0].mxu0
  %v739 = vpop.f32.mrb[0].mxu0
  %v740 = vadd.f32 0.0, %v739
  %v741 = vpop.f32.mrb[0].mxu0
  %742 = vdwg.mxu0
  %vm743 = vcmp.ge.f32.partialorder %v729, 0.0
  %vm744 = vcmp.ge.f32.partialorder %v732, 0.0
  %vm745 = vcmp.ge.f32.partialorder %v737, 0.0
  %vm746 = vcmp.ge.f32.partialorder %v740, 0.0
  %v747 = vmul.f32 %v729, 0.2
  %v748 = vmul.f32 %v732, 0.2
  %v749 = vmul.f32 %v737, 0.2
  %v750 = vmul.f32 %v740, 0.2
  %v751 = vsel %vm743, %v729, %v747
  %v752 = vsel %vm744, %v732, %v748
  %v753 = vsel %vm745, %v737, %v749
  %v754 = vsel %vm746, %v740, %v750
  %v755 = vmul.f32 %v751, %v114
  %v756 = vmul.f32 %v752, %v114
  %v757 = vmul.f32 %v753, %v114
  %v758 = vmul.f32 %v754, %v114
  %v759 = vadd.f32 %v755, %v125
  %v760 = vadd.f32 %v756, %v125
  %v761 = vadd.f32 %v757, %v125
  %v762 = vadd.f32 %v758, %v125
  %v763 = vpack.c.bf16 %v760, %v759
  %v764 = vpack.c.bf16 %v762, %v761
  %v766 = vsel %vm165, %v763, 0
  %v769 = vsel %vm165, %v764, 0
  %771 = vmatprep.subr.bf16.mxu0 0
  %772 = vmatpush1.bf16.msra.mxu0 %v267
  %773 = vmatprep.subr.bf16.mxu0 0
  %774 = vmatpush1.bf16.msra.mxu0 %v268
  %775 = vmatprep.subr.bf16.mxu0 0
  %776 = vmatpush1.bf16.msra.mxu0 %v269
  %777 = vmatprep.subr.bf16.mxu0 0
  %778 = vmatpush1.bf16.msra.mxu0 %v270
  %779 = vmatprep.subr.bf16.mxu0 0
  %780 = vmatpush1.bf16.msra.mxu0 0
  %781 = vmatprep.subr.bf16.mxu0 0
  %782 = vmatpush1.bf16.msra.mxu0 0
  %783 = vmatprep.subr.bf16.mxu0 0
  %784 = vmatpush1.bf16.msra.mxu0 0
  %785 = vmatprep.subr.bf16.mxu0 0
  %786 = vmatpush1.bf16.msra.mxu0 0
  %787 = vmatprep.subr.bf16.mxu0 0
  %788 = vmatpush1.bf16.msra.mxu0 0
  %789 = vmatprep.subr.bf16.mxu0 0
  %790 = vmatpush1.bf16.msra.mxu0 0
  %791 = vmatprep.subr.bf16.mxu0 0
  %792 = vmatpush1.bf16.msra.mxu0 0
  %793 = vmatprep.subr.bf16.mxu0 0
  %794 = vmatpush1.bf16.msra.mxu0 0
  %795 = vmatprep.subr.bf16.mxu0 0
  %796 = vmatpush1.bf16.msra.mxu0 0
  %797 = vmatprep.subr.bf16.mxu0 0
  %798 = vmatpush1.bf16.msra.mxu0 0
  %799 = vmatprep.subr.bf16.mxu0 0
  %800 = vmatpush1.bf16.msra.mxu0 0
  %801 = vmatprep.subr.bf16.mxu0 0
  %802 = vmatpush1.bf16.msra.mxu0 0
  %803 = vmatprep.mubr.bf16.mxu0 0
  %804 = vmatmul.mubr.bf16.gmra.mrb[0].mxu0 %v766
  %v805 = vpop.f32.mrb[0].mxu0
  %v806 = vadd.f32 0.0, %v805
  %v807 = vpop.f32.mrb[0].mxu0
  %v808 = vpop.f32.mrb[0].mxu0
  %v809 = vadd.f32 0.0, %v808
  %v810 = vpop.f32.mrb[0].mxu0
  %811 = vmatprep.mubr.bf16.mxu0 0
  %812 = vmatmul.mubr.bf16.gmra.mrb[0].mxu0 %v769
  %v813 = vpop.f32.mrb[0].mxu0
  %v814 = vadd.f32 0.0, %v813
  %v815 = vpop.f32.mrb[0].mxu0
  %v816 = vpop.f32.mrb[0].mxu0
  %v817 = vadd.f32 0.0, %v816
  %v818 = vpop.f32.mrb[0].mxu0
  %819 = vdwg.mxu0
  %vm820 = vcmp.ge.f32.partialorder %v806, 0.0
  %vm821 = vcmp.ge.f32.partialorder %v809, 0.0
  %vm822 = vcmp.ge.f32.partialorder %v814, 0.0
  %vm823 = vcmp.ge.f32.partialorder %v817, 0.0
  %v824 = vmul.f32 %v806, 0.2
  %v825 = vmul.f32 %v809, 0.2
  %v826 = vmul.f32 %v814, 0.2
  %v827 = vmul.f32 %v817, 0.2
  %v828 = vsel %vm820, %v806, %v824
  %v829 = vsel %vm821, %v809, %v825
  %v830 = vsel %vm822, %v814, %v826
  %v831 = vsel %vm823, %v817, %v827
  %v832 = vmul.f32 %v828, %v347
  %v833 = vmul.f32 %v829, %v347
  %v834 = vmul.f32 %v830, %v347
  %v835 = vmul.f32 %v831, %v347
  %v836 = vadd.f32 %v832, %v358
  %v837 = vadd.f32 %v833, %v358
  %v838 = vadd.f32 %v834, %v358
  %v839 = vadd.f32 %v835, %v358
  %v840 = vmax.f32 %v600, %v836
  %v841 = vmax.f32 %v601, %v837
  %v842 = vmax.f32 %v602, %v838
  %v843 = vmax.f32 %v603, %v839
  %s844 = scalar_lea.vmem %s0, 96
  %v845 = vld [vmem:[%s844] sm:$0xff]
  %v846 = vld [vmem:[%s844 + $0x8] sm:$0xff]
  %v847 = vld [vmem:[%s844 + $0x10] sm:$0xff]
  %v848 = vld [vmem:[%s844 + $0x18] sm:$0xff]
  %v849 = vpack.c.bf16 %v846, %v845
  %v850 = vpack.c.bf16 %v848, %v847
  %v852 = vsel %vm37, %v849, 0
  %v855 = vsel %vm37, %v850, 0
  %857 = vmatprep.subr.bf16.mxu0 0
  %858 = vmatpush1.bf16.msra.mxu0 %v46
  %859 = vmatprep.subr.bf16.mxu0 0
  %860 = vmatpush1.bf16.msra.mxu0 0
  %861 = vmatprep.subr.bf16.mxu0 0
  %862 = vmatpush1.bf16.msra.mxu0 0
  %863 = vmatprep.subr.bf16.mxu0 0
  %864 = vmatpush1.bf16.msra.mxu0 0
  %865 = vmatprep.subr.bf16.mxu0 0
  %866 = vmatpush1.bf16.msra.mxu0 0
  %867 = vmatprep.subr.bf16.mxu0 0
  %868 = vmatpush1.bf16.msra.mxu0 0
  %869 = vmatprep.subr.bf16.mxu0 0
  %870 = vmatpush1.bf16.msra.mxu0 0
  %871 = vmatprep.subr.bf16.mxu0 0
  %872 = vmatpush1.bf16.msra.mxu0 0
  %873 = vmatprep.subr.bf16.mxu0 0
  %874 = vmatpush1.bf16.msra.mxu0 0
  %875 = vmatprep.subr.bf16.mxu0 0
  %876 = vmatpush1.bf16.msra.mxu0 0
  %877 = vmatprep.subr.bf16.mxu0 0
  %878 = vmatpush1.bf16.msra.mxu0 0
  %879 = vmatprep.subr.bf16.mxu0 0
  %880 = vmatpush1.bf16.msra.mxu0 0
  %881 = vmatprep.subr.bf16.mxu0 0
  %882 = vmatpush1.bf16.msra.mxu0 0
  %883 = vmatprep.subr.bf16.mxu0 0
  %884 = vmatpush1.bf16.msra.mxu0 0
  %885 = vmatprep.subr.bf16.mxu0 0
  %886 = vmatpush1.bf16.msra.mxu0 0
  %887 = vmatprep.subr.bf16.mxu0 0
  %888 = vmatpush1.bf16.msra.mxu0 0
  %889 = vmatprep.mubr.bf16.mxu0 0
  %890 = vmatmul.mubr.bf16.gmra.mrb[0].mxu0 %v852
  %v891 = vpop.f32.mrb[0].mxu0
  %v892 = vadd.f32 0.0, %v891
  %v893 = vpop.f32.mrb[0].mxu0
  %v894 = vpop.f32.mrb[0].mxu0
  %v895 = vadd.f32 0.0, %v894
  %v896 = vpop.f32.mrb[0].mxu0
  %897 = vmatprep.mubr.bf16.mxu0 0
  %898 = vmatmul.mubr.bf16.gmra.mrb[0].mxu0 %v855
  %v899 = vpop.f32.mrb[0].mxu0
  %v900 = vadd.f32 0.0, %v899
  %v901 = vpop.f32.mrb[0].mxu0
  %v902 = vpop.f32.mrb[0].mxu0
  %v903 = vadd.f32 0.0, %v902
  %v904 = vpop.f32.mrb[0].mxu0
  %905 = vdwg.mxu0
  %vm906 = vcmp.ge.f32.partialorder %v892, 0.0
  %vm907 = vcmp.ge.f32.partialorder %v895, 0.0
  %vm908 = vcmp.ge.f32.partialorder %v900, 0.0
  %vm909 = vcmp.ge.f32.partialorder %v903, 0.0
  %v910 = vmul.f32 %v892, 0.2
  %v911 = vmul.f32 %v895, 0.2
  %v912 = vmul.f32 %v900, 0.2
  %v913 = vmul.f32 %v903, 0.2
  %v914 = vsel %vm906, %v892, %v910
  %v915 = vsel %vm907, %v895, %v911
  %v916 = vsel %vm908, %v900, %v912
  %v917 = vsel %vm909, %v903, %v913
  %v918 = vmul.f32 %v914, %v114
  %v919 = vmul.f32 %v915, %v114
  %v920 = vmul.f32 %v916, %v114
  %v921 = vmul.f32 %v917, %v114
  %v922 = vadd.f32 %v918, %v125
  %v923 = vadd.f32 %v919, %v125
  %v924 = vadd.f32 %v920, %v125
  %v925 = vadd.f32 %v921, %v125
  %v926 = vpack.c.bf16 %v923, %v922
  %v927 = vpack.c.bf16 %v925, %v924
  %v929 = vsel %vm165, %v926, 0
  %v932 = vsel %vm165, %v927, 0
  %934 = vmatprep.subr.bf16.mxu0 0
  %935 = vmatpush1.bf16.msra.mxu0 %v157
  %936 = vmatprep.subr.bf16.mxu0 0
  %937 = vmatpush1.bf16.msra.mxu0 %v158
  %938 = vmatprep.subr.bf16.mxu0 0
  %939 = vmatpush1.bf16.msra.mxu0 %v159
  %940 = vmatprep.subr.bf16.mxu0 0
  %941 = vmatpush1.bf16.msra.mxu0 %v160
  %942 = vmatprep.subr.bf16.mxu0 0
  %943 = vmatpush1.bf16.msra.mxu0 0
  %944 = vmatprep.subr.bf16.mxu0 0
  %945 = vmatpush1.bf16.msra.mxu0 0
  %946 = vmatprep.subr.bf16.mxu0 0
  %947 = vmatpush1.bf16.msra.mxu0 0
  %948 = vmatprep.subr.bf16.mxu0 0
  %949 = vmatpush1.bf16.msra.mxu0 0
  %950 = vmatprep.subr.bf16.mxu0 0
  %951 = vmatpush1.bf16.msra.mxu0 0
  %952 = vmatprep.subr.bf16.mxu0 0
  %953 = vmatpush1.bf16.msra.mxu0 0
  %954 = vmatprep.subr.bf16.mxu0 0
  %955 = vmatpush1.bf16.msra.mxu0 0
  %956 = vmatprep.subr.bf16.mxu0 0
  %957 = vmatpush1.bf16.msra.mxu0 0
  %958 = vmatprep.subr.bf16.mxu0 0
  %959 = vmatpush1.bf16.msra.mxu0 0
  %960 = vmatprep.subr.bf16.mxu0 0
  %961 = vmatpush1.bf16.msra.mxu0 0
  %962 = vmatprep.subr.bf16.mxu0 0
  %963 = vmatpush1.bf16.msra.mxu0 0
  %964 = vmatprep.subr.bf16.mxu0 0
  %965 = vmatpush1.bf16.msra.mxu0 0
  %966 = vmatprep.mubr.bf16.mxu0 0
  %967 = vmatmul.mubr.bf16.gmra.mrb[0].mxu0 %v929
  %v968 = vpop.f32.mrb[0].mxu0
  %v969 = vadd.f32 0.0, %v968
  %v970 = vpop.f32.mrb[0].mxu0
  %v971 = vpop.f32.mrb[0].mxu0
  %v972 = vadd.f32 0.0, %v971
  %v973 = vpop.f32.mrb[0].mxu0
  %974 = vmatprep.mubr.bf16.mxu0 0
  %975 = vmatmul.mubr.bf16.gmra.mrb[0].mxu0 %v932
  %v976 = vpop.f32.mrb[0].mxu0
  %v977 = vadd.f32 0.0, %v976
  %v978 = vpop.f32.mrb[0].mxu0
  %v979 = vpop.f32.mrb[0].mxu0
  %v980 = vadd.f32 0.0, %v979
  %v981 = vpop.f32.mrb[0].mxu0
  %982 = vdwg.mxu0
  %vm983 = vcmp.ge.f32.partialorder %v969, 0.0
  %vm984 = vcmp.ge.f32.partialorder %v972, 0.0
  %vm985 = vcmp.ge.f32.partialorder %v977, 0.0
  %vm986 = vcmp.ge.f32.partialorder %v980, 0.0
  %v987 = vmul.f32 %v969, 0.2
  %v988 = vmul.f32 %v972, 0.2
  %v989 = vmul.f32 %v977, 0.2
  %v990 = vmul.f32 %v980, 0.2
  %v991 = vsel %vm983, %v969, %v987
  %v992 = vsel %vm984, %v972, %v988
  %v993 = vsel %vm985, %v977, %v989
  %v994 = vsel %vm986, %v980, %v990
  %v995 = vmul.f32 %v991, %v114
  %v996 = vmul.f32 %v992, %v114
  %v997 = vmul.f32 %v993, %v114
  %v998 = vmul.f32 %v994, %v114
  %v999 = vadd.f32 %v995, %v125
  %v1000 = vadd.f32 %v996, %v125
  %v1001 = vadd.f32 %v997, %v125
  %v1002 = vadd.f32 %v998, %v125
  %v1003 = vpack.c.bf16 %v1000, %v999
  %v1004 = vpack.c.bf16 %v1002, %v1001
  %v1006 = vsel %vm165, %v1003, 0
  %v1009 = vsel %vm165, %v1004, 0
  %1011 = vmatprep.subr.bf16.mxu0 0
  %1012 = vmatpush1.bf16.msra.mxu0 %v267
  %1013 = vmatprep.subr.bf16.mxu0 0
  %1014 = vmatpush1.bf16.msra.mxu0 %v268
  %1015 = vmatprep.subr.bf16.mxu0 0
  %1016 = vmatpush1.bf16.msra.mxu0 %v269
  %1017 = vmatprep.subr.bf16.mxu0 0
  %1018 = vmatpush1.bf16.msra.mxu0 %v270
  %1019 = vmatprep.subr.bf16.mxu0 0
  %1020 = vmatpush1.bf16.msra.mxu0 0
  %1021 = vmatprep.subr.bf16.mxu0 0
  %1022 = vmatpush1.bf16.msra.mxu0 0
  %1023 = vmatprep.subr.bf16.mxu0 0
  %1024 = vmatpush1.bf16.msra.mxu0 0
  %1025 = vmatprep.subr.bf16.mxu0 0
  %1026 = vmatpush1.bf16.msra.mxu0 0
  %1027 = vmatprep.subr.bf16.mxu0 0
  %1028 = vmatpush1.bf16.msra.mxu0 0
  %1029 = vmatprep.subr.bf16.mxu0 0
  %1030 = vmatpush1.bf16.msra.mxu0 0
  %1031 = vmatprep.subr.bf16.mxu0 0
  %1032 = vmatpush1.bf16.msra.mxu0 0
  %1033 = vmatprep.subr.bf16.mxu0 0
  %1034 = vmatpush1.bf16.msra.mxu0 0
  %1035 = vmatprep.subr.bf16.mxu0 0
  %1036 = vmatpush1.bf16.msra.mxu0 0
  %1037 = vmatprep.subr.bf16.mxu0 0
  %1038 = vmatpush1.bf16.msra.mxu0 0
  %1039 = vmatprep.subr.bf16.mxu0 0
  %1040 = vmatpush1.bf16.msra.mxu0 0
  %1041 = vmatprep.subr.bf16.mxu0 0
  %1042 = vmatpush1.bf16.msra.mxu0 0
  %1043 = vmatprep.mubr.bf16.mxu0 0
  %1044 = vmatmul.mubr.bf16.gmra.mrb[0].mxu0 %v1006
  %v1045 = vpop.f32.mrb[0].mxu0
  %v1046 = vadd.f32 0.0, %v1045
  %v1047 = vpop.f32.mrb[0].mxu0
  %v1048 = vpop.f32.mrb[0].mxu0
  %v1049 = vadd.f32 0.0, %v1048
  %v1050 = vpop.f32.mrb[0].mxu0
  %1051 = vmatprep.mubr.bf16.mxu0 0
  %1052 = vmatmul.mubr.bf16.gmra.mrb[0].mxu0 %v1009
  %v1053 = vpop.f32.mrb[0].mxu0
  %v1054 = vadd.f32 0.0, %v1053
  %v1055 = vpop.f32.mrb[0].mxu0
  %v1056 = vpop.f32.mrb[0].mxu0
  %v1057 = vadd.f32 0.0, %v1056
  %v1058 = vpop.f32.mrb[0].mxu0
  %1059 = vdwg.mxu0
  %vm1060 = vcmp.ge.f32.partialorder %v1046, 0.0
  %vm1061 = vcmp.ge.f32.partialorder %v1049, 0.0
  %vm1062 = vcmp.ge.f32.partialorder %v1054, 0.0
  %vm1063 = vcmp.ge.f32.partialorder %v1057, 0.0
  %v1064 = vmul.f32 %v1046, 0.2
  %v1065 = vmul.f32 %v1049, 0.2
  %v1066 = vmul.f32 %v1054, 0.2
  %v1067 = vmul.f32 %v1057, 0.2
  %v1068 = vsel %vm1060, %v1046, %v1064
  %v1069 = vsel %vm1061, %v1049, %v1065
  %v1070 = vsel %vm1062, %v1054, %v1066
  %v1071 = vsel %vm1063, %v1057, %v1067
  %v1072 = vmul.f32 %v1068, %v347
  %v1073 = vmul.f32 %v1069, %v347
  %v1074 = vmul.f32 %v1070, %v347
  %v1075 = vmul.f32 %v1071, %v347
  %v1076 = vadd.f32 %v1072, %v358
  %v1077 = vadd.f32 %v1073, %v358
  %v1078 = vadd.f32 %v1074, %v358
  %v1079 = vadd.f32 %v1075, %v358
  %v1080 = vmax.f32 %v840, %v1076
  %v1081 = vmax.f32 %v841, %v1077
  %v1082 = vmax.f32 %v842, %v1078
  %v1083 = vmax.f32 %v843, %v1079
  %s1084 = scalar_lea.vmem %s0, 128
  %v1085 = vld [vmem:[%s1084] sm:$0xff]
  %v1086 = vld [vmem:[%s1084 + $0x8] sm:$0xff]
  %v1087 = vld [vmem:[%s1084 + $0x10] sm:$0xff]
  %v1088 = vld [vmem:[%s1084 + $0x18] sm:$0xff]
  %v1089 = vpack.c.bf16 %v1086, %v1085
  %v1090 = vpack.c.bf16 %v1088, %v1087
  %v1092 = vsel %vm37, %v1089, 0
  %v1095 = vsel %vm37, %v1090, 0
  %1097 = vmatprep.subr.bf16.mxu0 0
  %1098 = vmatpush1.bf16.msra.mxu0 %v46
  %1099 = vmatprep.subr.bf16.mxu0 0
  %1100 = vmatpush1.bf16.msra.mxu0 0
  %1101 = vmatprep.subr.bf16.mxu0 0
  %1102 = vmatpush1.bf16.msra.mxu0 0
  %1103 = vmatprep.subr.bf16.mxu0 0
  %1104 = vmatpush1.bf16.msra.mxu0 0
  %1105 = vmatprep.subr.bf16.mxu0 0
  %1106 = vmatpush1.bf16.msra.mxu0 0
  %1107 = vmatprep.subr.bf16.mxu0 0
  %1108 = vmatpush1.bf16.msra.mxu0 0
  %1109 = vmatprep.subr.bf16.mxu0 0
  %1110 = vmatpush1.bf16.msra.mxu0 0
  %1111 = vmatprep.subr.bf16.mxu0 0
  %1112 = vmatpush1.bf16.msra.mxu0 0
  %1113 = vmatprep.subr.bf16.mxu0 0
  %1114 = vmatpush1.bf16.msra.mxu0 0
  %1115 = vmatprep.subr.bf16.mxu0 0
  %1116 = vmatpush1.bf16.msra.mxu0 0
  %1117 = vmatprep.subr.bf16.mxu0 0
  %1118 = vmatpush1.bf16.msra.mxu0 0
  %1119 = vmatprep.subr.bf16.mxu0 0
  %1120 = vmatpush1.bf16.msra.mxu0 0
  %1121 = vmatprep.subr.bf16.mxu0 0
  %1122 = vmatpush1.bf16.msra.mxu0 0
  %1123 = vmatprep.subr.bf16.mxu0 0
  %1124 = vmatpush1.bf16.msra.mxu0 0
  %1125 = vmatprep.subr.bf16.mxu0 0
  %1126 = vmatpush1.bf16.msra.mxu0 0
  %1127 = vmatprep.subr.bf16.mxu0 0
  %1128 = vmatpush1.bf16.msra.mxu0 0
  %1129 = vmatprep.mubr.bf16.mxu0 0
  %1130 = vmatmul.mubr.bf16.gmra.mrb[0].mxu0 %v1092
  %v1131 = vpop.f32.mrb[0].mxu0
  %v1132 = vadd.f32 0.0, %v1131
  %v1133 = vpop.f32.mrb[0].mxu0
  %v1134 = vpop.f32.mrb[0].mxu0
  %v1135 = vadd.f32 0.0, %v1134
  %v1136 = vpop.f32.mrb[0].mxu0
  %1137 = vmatprep.mubr.bf16.mxu0 0
  %1138 = vmatmul.mubr.bf16.gmra.mrb[0].mxu0 %v1095
  %v1139 = vpop.f32.mrb[0].mxu0
  %v1140 = vadd.f32 0.0, %v1139
  %v1141 = vpop.f32.mrb[0].mxu0
  %v1142 = vpop.f32.mrb[0].mxu0
  %v1143 = vadd.f32 0.0, %v1142
  %v1144 = vpop.f32.mrb[0].mxu0
  %1145 = vdwg.mxu0
  %vm1146 = vcmp.ge.f32.partialorder %v1132, 0.0
  %vm1147 = vcmp.ge.f32.partialorder %v1135, 0.0
  %vm1148 = vcmp.ge.f32.partialorder %v1140, 0.0
  %vm1149 = vcmp.ge.f32.partialorder %v1143, 0.0
  %v1150 = vmul.f32 %v1132, 0.2
  %v1151 = vmul.f32 %v1135, 0.2
  %v1152 = vmul.f32 %v1140, 0.2
  %v1153 = vmul.f32 %v1143, 0.2
  %v1154 = vsel %vm1146, %v1132, %v1150
  %v1155 = vsel %vm1147, %v1135, %v1151
  %v1156 = vsel %vm1148, %v1140, %v1152
  %v1157 = vsel %vm1149, %v1143, %v1153
  %v1158 = vmul.f32 %v1154, %v114
  %v1159 = vmul.f32 %v1155, %v114
  %v1160 = vmul.f32 %v1156, %v114
  %v1161 = vmul.f32 %v1157, %v114
  %v1162 = vadd.f32 %v1158, %v125
  %v1163 = vadd.f32 %v1159, %v125
  %v1164 = vadd.f32 %v1160, %v125
  %v1165 = vadd.f32 %v1161, %v125
  %v1166 = vpack.c.bf16 %v1163, %v1162
  %v1167 = vpack.c.bf16 %v1165, %v1164
  %v1169 = vsel %vm165, %v1166, 0
  %v1172 = vsel %vm165, %v1167, 0
  %1174 = vmatprep.subr.bf16.mxu0 0
  %1175 = vmatpush1.bf16.msra.mxu0 %v157
  %1176 = vmatprep.subr.bf16.mxu0 0
  %1177 = vmatpush1.bf16.msra.mxu0 %v158
  %1178 = vmatprep.subr.bf16.mxu0 0
  %1179 = vmatpush1.bf16.msra.mxu0 %v159
  %1180 = vmatprep.subr.bf16.mxu0 0
  %1181 = vmatpush1.bf16.msra.mxu0 %v160
  %1182 = vmatprep.subr.bf16.mxu0 0
  %1183 = vmatpush1.bf16.msra.mxu0 0
  %1184 = vmatprep.subr.bf16.mxu0 0
  %1185 = vmatpush1.bf16.msra.mxu0 0
  %1186 = vmatprep.subr.bf16.mxu0 0
  %1187 = vmatpush1.bf16.msra.mxu0 0
  %1188 = vmatprep.subr.bf16.mxu0 0
  %1189 = vmatpush1.bf16.msra.mxu0 0
  %1190 = vmatprep.subr.bf16.mxu0 0
  %1191 = vmatpush1.bf16.msra.mxu0 0
  %1192 = vmatprep.subr.bf16.mxu0 0
  %1193 = vmatpush1.bf16.msra.mxu0 0
  %1194 = vmatprep.subr.bf16.mxu0 0
  %1195 = vmatpush1.bf16.msra.mxu0 0
  %1196 = vmatprep.subr.bf16.mxu0 0
  %1197 = vmatpush1.bf16.msra.mxu0 0
  %1198 = vmatprep.subr.bf16.mxu0 0
  %1199 = vmatpush1.bf16.msra.mxu0 0
  %1200 = vmatprep.subr.bf16.mxu0 0
  %1201 = vmatpush1.bf16.msra.mxu0 0
  %1202 = vmatprep.subr.bf16.mxu0 0
  %1203 = vmatpush1.bf16.msra.mxu0 0
  %1204 = vmatprep.subr.bf16.mxu0 0
  %1205 = vmatpush1.bf16.msra.mxu0 0
  %1206 = vmatprep.mubr.bf16.mxu0 0
  %1207 = vmatmul.mubr.bf16.gmra.mrb[0].mxu0 %v1169
  %v1208 = vpop.f32.mrb[0].mxu0
  %v1209 = vadd.f32 0.0, %v1208
  %v1210 = vpop.f32.mrb[0].mxu0
  %v1211 = vpop.f32.mrb[0].mxu0
  %v1212 = vadd.f32 0.0, %v1211
  %v1213 = vpop.f32.mrb[0].mxu0
  %1214 = vmatprep.mubr.bf16.mxu0 0
  %1215 = vmatmul.mubr.bf16.gmra.mrb[0].mxu0 %v1172
  %v1216 = vpop.f32.mrb[0].mxu0
  %v1217 = vadd.f32 0.0, %v1216
  %v1218 = vpop.f32.mrb[0].mxu0
  %v1219 = vpop.f32.mrb[0].mxu0
  %v1220 = vadd.f32 0.0, %v1219
  %v1221 = vpop.f32.mrb[0].mxu0
  %1222 = vdwg.mxu0
  %vm1223 = vcmp.ge.f32.partialorder %v1209, 0.0
  %vm1224 = vcmp.ge.f32.partialorder %v1212, 0.0
  %vm1225 = vcmp.ge.f32.partialorder %v1217, 0.0
  %vm1226 = vcmp.ge.f32.partialorder %v1220, 0.0
  %v1227 = vmul.f32 %v1209, 0.2
  %v1228 = vmul.f32 %v1212, 0.2
  %v1229 = vmul.f32 %v1217, 0.2
  %v1230 = vmul.f32 %v1220, 0.2
  %v1231 = vsel %vm1223, %v1209, %v1227
  %v1232 = vsel %vm1224, %v1212, %v1228
  %v1233 = vsel %vm1225, %v1217, %v1229
  %v1234 = vsel %vm1226, %v1220, %v1230
  %v1235 = vmul.f32 %v1231, %v114
  %v1236 = vmul.f32 %v1232, %v114
  %v1237 = vmul.f32 %v1233, %v114
  %v1238 = vmul.f32 %v1234, %v114
  %v1239 = vadd.f32 %v1235, %v125
  %v1240 = vadd.f32 %v1236, %v125
  %v1241 = vadd.f32 %v1237, %v125
  %v1242 = vadd.f32 %v1238, %v125
  %v1243 = vpack.c.bf16 %v1240, %v1239
  %v1244 = vpack.c.bf16 %v1242, %v1241
  %v1246 = vsel %vm165, %v1243, 0
  %v1249 = vsel %vm165, %v1244, 0
  %1251 = vmatprep.subr.bf16.mxu0 0
  %1252 = vmatpush1.bf16.msra.mxu0 %v267
  %1253 = vmatprep.subr.bf16.mxu0 0
  %1254 = vmatpush1.bf16.msra.mxu0 %v268
  %1255 = vmatprep.subr.bf16.mxu0 0
  %1256 = vmatpush1.bf16.msra.mxu0 %v269
  %1257 = vmatprep.subr.bf16.mxu0 0
  %1258 = vmatpush1.bf16.msra.mxu0 %v270
  %1259 = vmatprep.subr.bf16.mxu0 0
  %1260 = vmatpush1.bf16.msra.mxu0 0
  %1261 = vmatprep.subr.bf16.mxu0 0
  %1262 = vmatpush1.bf16.msra.mxu0 0
  %1263 = vmatprep.subr.bf16.mxu0 0
  %1264 = vmatpush1.bf16.msra.mxu0 0
  %1265 = vmatprep.subr.bf16.mxu0 0
  %1266 = vmatpush1.bf16.msra.mxu0 0
  %1267 = vmatprep.subr.bf16.mxu0 0
  %1268 = vmatpush1.bf16.msra.mxu0 0
  %1269 = vmatprep.subr.bf16.mxu0 0
  %1270 = vmatpush1.bf16.msra.mxu0 0
  %1271 = vmatprep.subr.bf16.mxu0 0
  %1272 = vmatpush1.bf16.msra.mxu0 0
  %1273 = vmatprep.subr.bf16.mxu0 0
  %1274 = vmatpush1.bf16.msra.mxu0 0
  %1275 = vmatprep.subr.bf16.mxu0 0
  %1276 = vmatpush1.bf16.msra.mxu0 0
  %1277 = vmatprep.subr.bf16.mxu0 0
  %1278 = vmatpush1.bf16.msra.mxu0 0
  %1279 = vmatprep.subr.bf16.mxu0 0
  %1280 = vmatpush1.bf16.msra.mxu0 0
  %1281 = vmatprep.subr.bf16.mxu0 0
  %1282 = vmatpush1.bf16.msra.mxu0 0
  %1283 = vmatprep.mubr.bf16.mxu0 0
  %1284 = vmatmul.mubr.bf16.gmra.mrb[0].mxu0 %v1246
  %v1285 = vpop.f32.mrb[0].mxu0
  %v1286 = vadd.f32 0.0, %v1285
  %v1287 = vpop.f32.mrb[0].mxu0
  %v1288 = vpop.f32.mrb[0].mxu0
  %v1289 = vadd.f32 0.0, %v1288
  %v1290 = vpop.f32.mrb[0].mxu0
  %1291 = vmatprep.mubr.bf16.mxu0 0
  %1292 = vmatmul.mubr.bf16.gmra.mrb[0].mxu0 %v1249
  %v1293 = vpop.f32.mrb[0].mxu0
  %v1294 = vadd.f32 0.0, %v1293
  %v1295 = vpop.f32.mrb[0].mxu0
  %v1296 = vpop.f32.mrb[0].mxu0
  %v1297 = vadd.f32 0.0, %v1296
  %v1298 = vpop.f32.mrb[0].mxu0
  %1299 = vdwg.mxu0
  %vm1300 = vcmp.ge.f32.partialorder %v1286, 0.0
  %vm1301 = vcmp.ge.f32.partialorder %v1289, 0.0
  %vm1302 = vcmp.ge.f32.partialorder %v1294, 0.0
  %vm1303 = vcmp.ge.f32.partialorder %v1297, 0.0
  %v1304 = vmul.f32 %v1286, 0.2
  %v1305 = vmul.f32 %v1289, 0.2
  %v1306 = vmul.f32 %v1294, 0.2
  %v1307 = vmul.f32 %v1297, 0.2
  %v1308 = vsel %vm1300, %v1286, %v1304
  %v1309 = vsel %vm1301, %v1289, %v1305
  %v1310 = vsel %vm1302, %v1294, %v1306
  %v1311 = vsel %vm1303, %v1297, %v1307
  %v1312 = vmul.f32 %v1308, %v347
  %v1313 = vmul.f32 %v1309, %v347
  %v1314 = vmul.f32 %v1310, %v347
  %v1315 = vmul.f32 %v1311, %v347
  %v1316 = vadd.f32 %v1312, %v358
  %v1317 = vadd.f32 %v1313, %v358
  %v1318 = vadd.f32 %v1314, %v358
  %v1319 = vadd.f32 %v1315, %v358
  %v1320 = vmax.f32 %v1080, %v1316
  %v1321 = vmax.f32 %v1081, %v1317
  %v1322 = vmax.f32 %v1082, %v1318
  %v1323 = vmax.f32 %v1083, %v1319
  %1324 = vst.msk [vmem:[%s8] sm:$0xff] %vm165, %v1320
  %1325 = vst.msk [vmem:[%s8 + $0x8] sm:$0xff] %vm165, %v1321
  %1326 = vst.msk [vmem:[%s8 + $0x10] sm:$0xff] %vm165, %v1322
  %1327 = vst.msk [vmem:[%s8 + $0x18] sm:$0xff] %vm165, %v1323
  // Predicated region
  $region34: #{dgn_forward.5} parent=0 // pred_check
    _
  $region35: #{dgn_forward.5} parent=0 // pred_check_branch
    %1329 = sbr.rel (0) target = $region37
  $region36: #{dgn_forward.5} parent=0 // pred_region
    _
  $region37: #{dgn_forward.5} parent=0 // pred_fallthru
    _
  // Predicated region
  $region38: #{dgn_forward.5} parent=0 // pred_check
    _
  $region39: #{dgn_forward.5} parent=0 // pred_check_branch
    %1331 = sbr.rel (0) target = $region41
  $region40: #{dgn_forward.5} parent=0 // pred_region
    _
  $region41: #{dgn_forward.5} parent=0 // pred_fallthru
    _

// kernel: dgn_forward.6
$region0: #{dgn_forward.6}
  #allocation0 [shape = 'u32[]', space=smem, size = 0x4, offset = 0x4, fixed_abs, tag = 'smem constant byte address 0x4 - core index']
  #allocation1 [shape = 'u32[144,128]{1,0:T(1,128)}', space=vmem, size = 0x12000, scoped, tag = 'internal scratch']
  %s0 = inlined_call_operand.vmem [shape: f32[5,32,64], index: 0, kind: input, shape index: {}]
  %s1 = inlined_call_operand.vmem [shape: bf16[64,64], index: 1, kind: input, shape index: {}]
  %s2 = inlined_call_operand.vmem [shape: bf16[64,64], index: 2, kind: input, shape index: {}]
  %s3 = inlined_call_operand.vmem [shape: bf16[64,64], index: 3, kind: input, shape index: {}]
  %s4 = inlined_call_operand.vmem [shape: f32[1,64], index: 4, kind: input, shape index: {}]
  %s5 = inlined_call_operand.vmem [shape: f32[1,64], index: 5, kind: input, shape index: {}]
  %s6 = inlined_call_operand.vmem [shape: f32[1,64], index: 6, kind: input, shape index: {}]
  %s7 = inlined_call_operand.vmem [shape: f32[1,64], index: 7, kind: input, shape index: {}]
  %s8 = inlined_call_operand.vmem [shape: f32[32,64], index: 8, kind: output, shape index: {}]
  %s9 = sld [smem:[#allocation0]]
  $region42: #{dgn_forward.6} parent=0
    _
  %s11 = ssub.s32 1, %s9
  %s12 = scalar_select 0, %s11, %s9
  // Predicated region
  $region2: #{dgn_forward.6} parent=0 // pred_check
    _
  $region3: #{dgn_forward.6} parent=0 // pred_check_branch
    %14 = sbr.rel (0) target = $region5
  $region4: #{dgn_forward.6} parent=0 // pred_region
    _
  $region5: #{dgn_forward.6} parent=0 // pred_fallthru
    _
  // Predicated region
  $region6: #{dgn_forward.6} parent=0 // pred_check
    _
  $region7: #{dgn_forward.6} parent=0 // pred_check_branch
    %16 = sbr.rel (0) target = $region9
  $region8: #{dgn_forward.6} parent=0 // pred_region
    _
  $region9: #{dgn_forward.6} parent=0 // pred_fallthru
    _
  // Predicated region
  $region10: #{dgn_forward.6} parent=0 // pred_check
    _
  $region11: #{dgn_forward.6} parent=0 // pred_check_branch
    %18 = sbr.rel (0) target = $region13
  $region12: #{dgn_forward.6} parent=0 // pred_region
    _
  $region13: #{dgn_forward.6} parent=0 // pred_fallthru
    _
  // Predicated region
  $region14: #{dgn_forward.6} parent=0 // pred_check
    _
  $region15: #{dgn_forward.6} parent=0 // pred_check_branch
    %20 = sbr.rel (0) target = $region17
  $region16: #{dgn_forward.6} parent=0 // pred_region
    _
  $region17: #{dgn_forward.6} parent=0 // pred_fallthru
    _
  // Predicated region
  $region18: #{dgn_forward.6} parent=0 // pred_check
    _
  $region19: #{dgn_forward.6} parent=0 // pred_check_branch
    %22 = sbr.rel (0) target = $region21
  $region20: #{dgn_forward.6} parent=0 // pred_region
    _
  $region21: #{dgn_forward.6} parent=0 // pred_fallthru
    _
  // Predicated region
  $region22: #{dgn_forward.6} parent=0 // pred_check
    _
  $region23: #{dgn_forward.6} parent=0 // pred_check_branch
    %24 = sbr.rel (0) target = $region25
  $region24: #{dgn_forward.6} parent=0 // pred_region
    _
  $region25: #{dgn_forward.6} parent=0 // pred_fallthru
    _
  // Predicated region
  $region26: #{dgn_forward.6} parent=0 // pred_check
    _
  $region27: #{dgn_forward.6} parent=0 // pred_check_branch
    %26 = sbr.rel (0) target = $region29
  $region28: #{dgn_forward.6} parent=0 // pred_region
    _
  $region29: #{dgn_forward.6} parent=0 // pred_fallthru
    _
  // Predicated region
  $region30: #{dgn_forward.6} parent=0 // pred_check
    _
  $region31: #{dgn_forward.6} parent=0 // pred_check_branch
    %28 = sbr.rel (0) target = $region33
  $region32: #{dgn_forward.6} parent=0 // pred_region
    _
  $region33: #{dgn_forward.6} parent=0 // pred_fallthru
    _
  %v30 = vld [vmem:[%s0] sm:$0xff]
  %v31 = vld [vmem:[%s0 + $0x8] sm:$0xff]
  %v32 = vld [vmem:[%s0 + $0x10] sm:$0xff]
  %v33 = vld [vmem:[%s0 + $0x18] sm:$0xff]
  %v34 = vpack.c.bf16 %v31, %v30
  %v35 = vpack.c.bf16 %v33, %v32
  %v36 = vld [vmem:[%s1] sm:$0xf]
  %v37 = vld [vmem:[%s1 + $0x4] sm:$0xf]
  %v38 = vld [vmem:[%s1 + $0x8] sm:$0xf]
  %v39 = vld [vmem:[%s1 + $0xc] sm:$0xf]
  %v40 = vld [vmem:[%s1 + $0x10] sm:$0xf]
  %v41 = vld [vmem:[%s1 + $0x14] sm:$0xf]
  %v42 = vld [vmem:[%s1 + $0x18] sm:$0xf]
  %v43 = vld [vmem:[%s1 + $0x1c] sm:$0xf]
  %v52 = vunpack.c.l.b16 %v36
  %v53 = vunpack.c.l.b16 %v37
  %v54 = vunpack.c.l.b16 %v38
  %v55 = vunpack.c.l.b16 %v39
  %v56 = vunpack.c.l.b16 %v40
  %v57 = vunpack.c.l.b16 %v41
  %v58 = vunpack.c.l.b16 %v42
  %v59 = vunpack.c.l.b16 %v43
  %v60 = vpack.c.b16 %v53, %v52
  %v61 = vpack.c.b16 %v55, %v54
  %v62 = vpack.c.b16 %v57, %v56
  %v63 = vpack.c.b16 %v59, %v58
  %vm68 = vcmask 523264
  %v70 = vsel %vm68, %v34, 0
  %v73 = vsel %vm68, %v35, 0
  %75 = vmatprep.subr.bf16.mxu0 0
  %76 = vmatpush1.bf16.msra.mxu0 %v60
  %77 = vmatprep.subr.bf16.mxu0 0
  %78 = vmatpush1.bf16.msra.mxu0 %v61
  %79 = vmatprep.subr.bf16.mxu0 0
  %80 = vmatpush1.bf16.msra.mxu0 %v62
  %81 = vmatprep.subr.bf16.mxu0 0
  %82 = vmatpush1.bf16.msra.mxu0 %v63
  %83 = vmatprep.subr.bf16.mxu0 0
  %84 = vmatpush1.bf16.msra.mxu0 0
  %85 = vmatprep.subr.bf16.mxu0 0
  %86 = vmatpush1.bf16.msra.mxu0 0
  %87 = vmatprep.subr.bf16.mxu0 0
  %88 = vmatpush1.bf16.msra.mxu0 0
  %89 = vmatprep.subr.bf16.mxu0 0
  %90 = vmatpush1.bf16.msra.mxu0 0
  %91 = vmatprep.subr.bf16.mxu0 0
  %92 = vmatpush1.bf16.msra.mxu0 0
  %93 = vmatprep.subr.bf16.mxu0 0
  %94 = vmatpush1.bf16.msra.mxu0 0
  %95 = vmatprep.subr.bf16.mxu0 0
  %96 = vmatpush1.bf16.msra.mxu0 0
  %97 = vmatprep.subr.bf16.mxu0 0
  %98 = vmatpush1.bf16.msra.mxu0 0
  %99 = vmatprep.subr.bf16.mxu0 0
  %100 = vmatpush1.bf16.msra.mxu0 0
  %101 = vmatprep.subr.bf16.mxu0 0
  %102 = vmatpush1.bf16.msra.mxu0 0
  %103 = vmatprep.subr.bf16.mxu0 0
  %104 = vmatpush1.bf16.msra.mxu0 0
  %105 = vmatprep.subr.bf16.mxu0 0
  %106 = vmatpush1.bf16.msra.mxu0 0
  %107 = vmatprep.mubr.bf16.mxu0 0
  %108 = vmatmul.mubr.bf16.gmra.mrb[0].mxu0 %v70
  %v109 = vpop.f32.mrb[0].mxu0
  %v110 = vadd.f32 0.0, %v109
  %v111 = vpop.f32.mrb[0].mxu0
  %v112 = vpop.f32.mrb[0].mxu0
  %v113 = vadd.f32 0.0, %v112
  %v114 = vpop.f32.mrb[0].mxu0
  %115 = vmatprep.mubr.bf16.mxu0 0
  %116 = vmatmul.mubr.bf16.gmra.mrb[0].mxu0 %v73
  %v117 = vpop.f32.mrb[0].mxu0
  %v118 = vadd.f32 0.0, %v117
  %v119 = vpop.f32.mrb[0].mxu0
  %v120 = vpop.f32.mrb[0].mxu0
  %v121 = vadd.f32 0.0, %v120
  %v122 = vpop.f32.mrb[0].mxu0
  %123 = vdwg.mxu0
  %vm124 = vcmp.ge.f32.partialorder %v110, 0.0
  %vm125 = vcmp.ge.f32.partialorder %v113, 0.0
  %vm126 = vcmp.ge.f32.partialorder %v118, 0.0
  %vm127 = vcmp.ge.f32.partialorder %v121, 0.0
  %v128 = vmul.f32 %v110, 0.2
  %v129 = vmul.f32 %v113, 0.2
  %v130 = vmul.f32 %v118, 0.2
  %v131 = vmul.f32 %v121, 0.2
  %v132 = vsel %vm124, %v110, %v128
  %v133 = vsel %vm125, %v113, %v129
  %v134 = vsel %vm126, %v118, %v130
  %v135 = vsel %vm127, %v121, %v131
  %v136 = vld [vmem:[%s4] sm:$0x1]
  %v138 = vlaneseq
  %v139 = vshrl.u32 %v138, 7
  %v140 = vsub.s32 0, %v139
  %v141 = vrot.slane %v136, %v140
  %v143 = vmul.f32 %v132, %v141
  %v144 = vmul.f32 %v133, %v141
  %v145 = vmul.f32 %v134, %v141
  %v146 = vmul.f32 %v135, %v141
  %v147 = vld [vmem:[%s5] sm:$0x1]
  %v149 = vlaneseq
  %v150 = vshrl.u32 %v149, 7
  %v151 = vsub.s32 0, %v150
  %v152 = vrot.slane %v147, %v151
  %v154 = vadd.f32 %v143, %v152
  %v155 = vadd.f32 %v144, %v152
  %v156 = vadd.f32 %v145, %v152
  %v157 = vadd.f32 %v146, %v152
  %v158 = vpack.c.bf16 %v155, %v154
  %v159 = vpack.c.bf16 %v157, %v156
  %v160 = vld [vmem:[%s2] sm:$0xf]
  %v161 = vld [vmem:[%s2 + $0x4] sm:$0xf]
  %v162 = vld [vmem:[%s2 + $0x8] sm:$0xf]
  %v163 = vld [vmem:[%s2 + $0xc] sm:$0xf]
  %v164 = vld [vmem:[%s2 + $0x10] sm:$0xf]
  %v165 = vld [vmem:[%s2 + $0x14] sm:$0xf]
  %v166 = vld [vmem:[%s2 + $0x18] sm:$0xf]
  %v167 = vld [vmem:[%s2 + $0x1c] sm:$0xf]
  %v176 = vunpack.c.l.b16 %v160
  %v177 = vunpack.c.l.b16 %v161
  %v178 = vunpack.c.l.b16 %v162
  %v179 = vunpack.c.l.b16 %v163
  %v180 = vunpack.c.l.b16 %v164
  %v181 = vunpack.c.l.b16 %v165
  %v182 = vunpack.c.l.b16 %v166
  %v183 = vunpack.c.l.b16 %v167
  %v184 = vpack.c.b16 %v177, %v176
  %v185 = vpack.c.b16 %v179, %v178
  %v186 = vpack.c.b16 %v181, %v180
  %v187 = vpack.c.b16 %v183, %v182
  %v193 = vsel %vm68, %v158, 0
  %v196 = vsel %vm68, %v159, 0
  %198 = vmatprep.subr.bf16.mxu0 0
  %199 = vmatpush1.bf16.msra.mxu0 %v184
  %200 = vmatprep.subr.bf16.mxu0 0
  %201 = vmatpush1.bf16.msra.mxu0 %v185
  %202 = vmatprep.subr.bf16.mxu0 0
  %203 = vmatpush1.bf16.msra.mxu0 %v186
  %204 = vmatprep.subr.bf16.mxu0 0
  %205 = vmatpush1.bf16.msra.mxu0 %v187
  %206 = vmatprep.subr.bf16.mxu0 0
  %207 = vmatpush1.bf16.msra.mxu0 0
  %208 = vmatprep.subr.bf16.mxu0 0
  %209 = vmatpush1.bf16.msra.mxu0 0
  %210 = vmatprep.subr.bf16.mxu0 0
  %211 = vmatpush1.bf16.msra.mxu0 0
  %212 = vmatprep.subr.bf16.mxu0 0
  %213 = vmatpush1.bf16.msra.mxu0 0
  %214 = vmatprep.subr.bf16.mxu0 0
  %215 = vmatpush1.bf16.msra.mxu0 0
  %216 = vmatprep.subr.bf16.mxu0 0
  %217 = vmatpush1.bf16.msra.mxu0 0
  %218 = vmatprep.subr.bf16.mxu0 0
  %219 = vmatpush1.bf16.msra.mxu0 0
  %220 = vmatprep.subr.bf16.mxu0 0
  %221 = vmatpush1.bf16.msra.mxu0 0
  %222 = vmatprep.subr.bf16.mxu0 0
  %223 = vmatpush1.bf16.msra.mxu0 0
  %224 = vmatprep.subr.bf16.mxu0 0
  %225 = vmatpush1.bf16.msra.mxu0 0
  %226 = vmatprep.subr.bf16.mxu0 0
  %227 = vmatpush1.bf16.msra.mxu0 0
  %228 = vmatprep.subr.bf16.mxu0 0
  %229 = vmatpush1.bf16.msra.mxu0 0
  %230 = vmatprep.mubr.bf16.mxu0 0
  %231 = vmatmul.mubr.bf16.gmra.mrb[0].mxu0 %v193
  %v232 = vpop.f32.mrb[0].mxu0
  %v233 = vadd.f32 0.0, %v232
  %v234 = vpop.f32.mrb[0].mxu0
  %v235 = vpop.f32.mrb[0].mxu0
  %v236 = vadd.f32 0.0, %v235
  %v237 = vpop.f32.mrb[0].mxu0
  %238 = vmatprep.mubr.bf16.mxu0 0
  %239 = vmatmul.mubr.bf16.gmra.mrb[0].mxu0 %v196
  %v240 = vpop.f32.mrb[0].mxu0
  %v241 = vadd.f32 0.0, %v240
  %v242 = vpop.f32.mrb[0].mxu0
  %v243 = vpop.f32.mrb[0].mxu0
  %v244 = vadd.f32 0.0, %v243
  %v245 = vpop.f32.mrb[0].mxu0
  %246 = vdwg.mxu0
  %vm247 = vcmp.ge.f32.partialorder %v233, 0.0
  %vm248 = vcmp.ge.f32.partialorder %v236, 0.0
  %vm249 = vcmp.ge.f32.partialorder %v241, 0.0
  %vm250 = vcmp.ge.f32.partialorder %v244, 0.0
  %v251 = vmul.f32 %v233, 0.2
  %v252 = vmul.f32 %v236, 0.2
  %v253 = vmul.f32 %v241, 0.2
  %v254 = vmul.f32 %v244, 0.2
  %v255 = vsel %vm247, %v233, %v251
  %v256 = vsel %vm248, %v236, %v252
  %v257 = vsel %vm249, %v241, %v253
  %v258 = vsel %vm250, %v244, %v254
  %v259 = vmul.f32 %v255, %v141
  %v260 = vmul.f32 %v256, %v141
  %v261 = vmul.f32 %v257, %v141
  %v262 = vmul.f32 %v258, %v141
  %v263 = vadd.f32 %v259, %v152
  %v264 = vadd.f32 %v260, %v152
  %v265 = vadd.f32 %v261, %v152
  %v266 = vadd.f32 %v262, %v152
  %v267 = vpack.c.bf16 %v264, %v263
  %v268 = vpack.c.bf16 %v266, %v265
  %v269 = vld [vmem:[%s3] sm:$0xf]
  %v270 = vld [vmem:[%s3 + $0x4] sm:$0xf]
  %v271 = vld [vmem:[%s3 + $0x8] sm:$0xf]
  %v272 = vld [vmem:[%s3 + $0xc] sm:$0xf]
  %v273 = vld [vmem:[%s3 + $0x10] sm:$0xf]
  %v274 = vld [vmem:[%s3 + $0x14] sm:$0xf]
  %v275 = vld [vmem:[%s3 + $0x18] sm:$0xf]
  %v276 = vld [vmem:[%s3 + $0x1c] sm:$0xf]
  %v285 = vunpack.c.l.b16 %v269
  %v286 = vunpack.c.l.b16 %v270
  %v287 = vunpack.c.l.b16 %v271
  %v288 = vunpack.c.l.b16 %v272
  %v289 = vunpack.c.l.b16 %v273
  %v290 = vunpack.c.l.b16 %v274
  %v291 = vunpack.c.l.b16 %v275
  %v292 = vunpack.c.l.b16 %v276
  %v293 = vpack.c.b16 %v286, %v285
  %v294 = vpack.c.b16 %v288, %v287
  %v295 = vpack.c.b16 %v290, %v289
  %v296 = vpack.c.b16 %v292, %v291
  %v302 = vsel %vm68, %v267, 0
  %v305 = vsel %vm68, %v268, 0
  %307 = vmatprep.subr.bf16.mxu0 0
  %308 = vmatpush1.bf16.msra.mxu0 %v293
  %309 = vmatprep.subr.bf16.mxu0 0
  %310 = vmatpush1.bf16.msra.mxu0 %v294
  %311 = vmatprep.subr.bf16.mxu0 0
  %312 = vmatpush1.bf16.msra.mxu0 %v295
  %313 = vmatprep.subr.bf16.mxu0 0
  %314 = vmatpush1.bf16.msra.mxu0 %v296
  %315 = vmatprep.subr.bf16.mxu0 0
  %316 = vmatpush1.bf16.msra.mxu0 0
  %317 = vmatprep.subr.bf16.mxu0 0
  %318 = vmatpush1.bf16.msra.mxu0 0
  %319 = vmatprep.subr.bf16.mxu0 0
  %320 = vmatpush1.bf16.msra.mxu0 0
  %321 = vmatprep.subr.bf16.mxu0 0
  %322 = vmatpush1.bf16.msra.mxu0 0
  %323 = vmatprep.subr.bf16.mxu0 0
  %324 = vmatpush1.bf16.msra.mxu0 0
  %325 = vmatprep.subr.bf16.mxu0 0
  %326 = vmatpush1.bf16.msra.mxu0 0
  %327 = vmatprep.subr.bf16.mxu0 0
  %328 = vmatpush1.bf16.msra.mxu0 0
  %329 = vmatprep.subr.bf16.mxu0 0
  %330 = vmatpush1.bf16.msra.mxu0 0
  %331 = vmatprep.subr.bf16.mxu0 0
  %332 = vmatpush1.bf16.msra.mxu0 0
  %333 = vmatprep.subr.bf16.mxu0 0
  %334 = vmatpush1.bf16.msra.mxu0 0
  %335 = vmatprep.subr.bf16.mxu0 0
  %336 = vmatpush1.bf16.msra.mxu0 0
  %337 = vmatprep.subr.bf16.mxu0 0
  %338 = vmatpush1.bf16.msra.mxu0 0
  %339 = vmatprep.mubr.bf16.mxu0 0
  %340 = vmatmul.mubr.bf16.gmra.mrb[0].mxu0 %v302
  %v341 = vpop.f32.mrb[0].mxu0
  %v342 = vadd.f32 0.0, %v341
  %v343 = vpop.f32.mrb[0].mxu0
  %v344 = vpop.f32.mrb[0].mxu0
  %v345 = vadd.f32 0.0, %v344
  %v346 = vpop.f32.mrb[0].mxu0
  %347 = vmatprep.mubr.bf16.mxu0 0
  %348 = vmatmul.mubr.bf16.gmra.mrb[0].mxu0 %v305
  %v349 = vpop.f32.mrb[0].mxu0
  %v350 = vadd.f32 0.0, %v349
  %v351 = vpop.f32.mrb[0].mxu0
  %v352 = vpop.f32.mrb[0].mxu0
  %v353 = vadd.f32 0.0, %v352
  %v354 = vpop.f32.mrb[0].mxu0
  %355 = vdwg.mxu0
  %vm356 = vcmp.ge.f32.partialorder %v342, 0.0
  %vm357 = vcmp.ge.f32.partialorder %v345, 0.0
  %vm358 = vcmp.ge.f32.partialorder %v350, 0.0
  %vm359 = vcmp.ge.f32.partialorder %v353, 0.0
  %v360 = vmul.f32 %v342, 0.2
  %v361 = vmul.f32 %v345, 0.2
  %v362 = vmul.f32 %v350, 0.2
  %v363 = vmul.f32 %v353, 0.2
  %v364 = vsel %vm356, %v342, %v360
  %v365 = vsel %vm357, %v345, %v361
  %v366 = vsel %vm358, %v350, %v362
  %v367 = vsel %vm359, %v353, %v363
  %v368 = vld [vmem:[%s6] sm:$0x1]
  %v370 = vlaneseq
  %v371 = vshrl.u32 %v370, 7
  %v372 = vsub.s32 0, %v371
  %v373 = vrot.slane %v368, %v372
  %v375 = vmul.f32 %v364, %v373
  %v376 = vmul.f32 %v365, %v373
  %v377 = vmul.f32 %v366, %v373
  %v378 = vmul.f32 %v367, %v373
  %v379 = vld [vmem:[%s7] sm:$0x1]
  %v381 = vlaneseq
  %v382 = vshrl.u32 %v381, 7
  %v383 = vsub.s32 0, %v382
  %v384 = vrot.slane %v379, %v383
  %v386 = vadd.f32 %v375, %v384
  %v387 = vadd.f32 %v376, %v384
  %v388 = vadd.f32 %v377, %v384
  %v389 = vadd.f32 %v378, %v384
  %s390 = scalar_lea.vmem %s0, 32
  %v391 = vld [vmem:[%s390] sm:$0xff]
  %v392 = vld [vmem:[%s390 + $0x8] sm:$0xff]
  %v393 = vld [vmem:[%s390 + $0x10] sm:$0xff]
  %v394 = vld [vmem:[%s390 + $0x18] sm:$0xff]
  %v395 = vpack.c.bf16 %v392, %v391
  %v396 = vpack.c.bf16 %v394, %v393
  %v398 = vsel %vm68, %v395, 0
  %v401 = vsel %vm68, %v396, 0
  %403 = vmatprep.subr.bf16.mxu0 0
  %404 = vmatpush1.bf16.msra.mxu0 %v60
  %405 = vmatprep.subr.bf16.mxu0 0
  %406 = vmatpush1.bf16.msra.mxu0 %v61
  %407 = vmatprep.subr.bf16.mxu0 0
  %408 = vmatpush1.bf16.msra.mxu0 %v62
  %409 = vmatprep.subr.bf16.mxu0 0
  %410 = vmatpush1.bf16.msra.mxu0 %v63
  %411 = vmatprep.subr.bf16.mxu0 0
  %412 = vmatpush1.bf16.msra.mxu0 0
  %413 = vmatprep.subr.bf16.mxu0 0
  %414 = vmatpush1.bf16.msra.mxu0 0
  %415 = vmatprep.subr.bf16.mxu0 0
  %416 = vmatpush1.bf16.msra.mxu0 0
  %417 = vmatprep.subr.bf16.mxu0 0
  %418 = vmatpush1.bf16.msra.mxu0 0
  %419 = vmatprep.subr.bf16.mxu0 0
  %420 = vmatpush1.bf16.msra.mxu0 0
  %421 = vmatprep.subr.bf16.mxu0 0
  %422 = vmatpush1.bf16.msra.mxu0 0
  %423 = vmatprep.subr.bf16.mxu0 0
  %424 = vmatpush1.bf16.msra.mxu0 0
  %425 = vmatprep.subr.bf16.mxu0 0
  %426 = vmatpush1.bf16.msra.mxu0 0
  %427 = vmatprep.subr.bf16.mxu0 0
  %428 = vmatpush1.bf16.msra.mxu0 0
  %429 = vmatprep.subr.bf16.mxu0 0
  %430 = vmatpush1.bf16.msra.mxu0 0
  %431 = vmatprep.subr.bf16.mxu0 0
  %432 = vmatpush1.bf16.msra.mxu0 0
  %433 = vmatprep.subr.bf16.mxu0 0
  %434 = vmatpush1.bf16.msra.mxu0 0
  %435 = vmatprep.mubr.bf16.mxu0 0
  %436 = vmatmul.mubr.bf16.gmra.mrb[0].mxu0 %v398
  %v437 = vpop.f32.mrb[0].mxu0
  %v438 = vadd.f32 0.0, %v437
  %v439 = vpop.f32.mrb[0].mxu0
  %v440 = vpop.f32.mrb[0].mxu0
  %v441 = vadd.f32 0.0, %v440
  %v442 = vpop.f32.mrb[0].mxu0
  %443 = vmatprep.mubr.bf16.mxu0 0
  %444 = vmatmul.mubr.bf16.gmra.mrb[0].mxu0 %v401
  %v445 = vpop.f32.mrb[0].mxu0
  %v446 = vadd.f32 0.0, %v445
  %v447 = vpop.f32.mrb[0].mxu0
  %v448 = vpop.f32.mrb[0].mxu0
  %v449 = vadd.f32 0.0, %v448
  %v450 = vpop.f32.mrb[0].mxu0
  %451 = vdwg.mxu0
  %vm452 = vcmp.ge.f32.partialorder %v438, 0.0
  %vm453 = vcmp.ge.f32.partialorder %v441, 0.0
  %vm454 = vcmp.ge.f32.partialorder %v446, 0.0
  %vm455 = vcmp.ge.f32.partialorder %v449, 0.0
  %v456 = vmul.f32 %v438, 0.2
  %v457 = vmul.f32 %v441, 0.2
  %v458 = vmul.f32 %v446, 0.2
  %v459 = vmul.f32 %v449, 0.2
  %v460 = vsel %vm452, %v438, %v456
  %v461 = vsel %vm453, %v441, %v457
  %v462 = vsel %vm454, %v446, %v458
  %v463 = vsel %vm455, %v449, %v459
  %v464 = vmul.f32 %v460, %v141
  %v465 = vmul.f32 %v461, %v141
  %v466 = vmul.f32 %v462, %v141
  %v467 = vmul.f32 %v463, %v141
  %v468 = vadd.f32 %v464, %v152
  %v469 = vadd.f32 %v465, %v152
  %v470 = vadd.f32 %v466, %v152
  %v471 = vadd.f32 %v467, %v152
  %v472 = vpack.c.bf16 %v469, %v468
  %v473 = vpack.c.bf16 %v471, %v470
  %v475 = vsel %vm68, %v472, 0
  %v478 = vsel %vm68, %v473, 0
  %480 = vmatprep.subr.bf16.mxu0 0
  %481 = vmatpush1.bf16.msra.mxu0 %v184
  %482 = vmatprep.subr.bf16.mxu0 0
  %483 = vmatpush1.bf16.msra.mxu0 %v185
  %484 = vmatprep.subr.bf16.mxu0 0
  %485 = vmatpush1.bf16.msra.mxu0 %v186
  %486 = vmatprep.subr.bf16.mxu0 0
  %487 = vmatpush1.bf16.msra.mxu0 %v187
  %488 = vmatprep.subr.bf16.mxu0 0
  %489 = vmatpush1.bf16.msra.mxu0 0
  %490 = vmatprep.subr.bf16.mxu0 0
  %491 = vmatpush1.bf16.msra.mxu0 0
  %492 = vmatprep.subr.bf16.mxu0 0
  %493 = vmatpush1.bf16.msra.mxu0 0
  %494 = vmatprep.subr.bf16.mxu0 0
  %495 = vmatpush1.bf16.msra.mxu0 0
  %496 = vmatprep.subr.bf16.mxu0 0
  %497 = vmatpush1.bf16.msra.mxu0 0
  %498 = vmatprep.subr.bf16.mxu0 0
  %499 = vmatpush1.bf16.msra.mxu0 0
  %500 = vmatprep.subr.bf16.mxu0 0
  %501 = vmatpush1.bf16.msra.mxu0 0
  %502 = vmatprep.subr.bf16.mxu0 0
  %503 = vmatpush1.bf16.msra.mxu0 0
  %504 = vmatprep.subr.bf16.mxu0 0
  %505 = vmatpush1.bf16.msra.mxu0 0
  %506 = vmatprep.subr.bf16.mxu0 0
  %507 = vmatpush1.bf16.msra.mxu0 0
  %508 = vmatprep.subr.bf16.mxu0 0
  %509 = vmatpush1.bf16.msra.mxu0 0
  %510 = vmatprep.subr.bf16.mxu0 0
  %511 = vmatpush1.bf16.msra.mxu0 0
  %512 = vmatprep.mubr.bf16.mxu0 0
  %513 = vmatmul.mubr.bf16.gmra.mrb[0].mxu0 %v475
  %v514 = vpop.f32.mrb[0].mxu0
  %v515 = vadd.f32 0.0, %v514
  %v516 = vpop.f32.mrb[0].mxu0
  %v517 = vpop.f32.mrb[0].mxu0
  %v518 = vadd.f32 0.0, %v517
  %v519 = vpop.f32.mrb[0].mxu0
  %520 = vmatprep.mubr.bf16.mxu0 0
  %521 = vmatmul.mubr.bf16.gmra.mrb[0].mxu0 %v478
  %v522 = vpop.f32.mrb[0].mxu0
  %v523 = vadd.f32 0.0, %v522
  %v524 = vpop.f32.mrb[0].mxu0
  %v525 = vpop.f32.mrb[0].mxu0
  %v526 = vadd.f32 0.0, %v525
  %v527 = vpop.f32.mrb[0].mxu0
  %528 = vdwg.mxu0
  %vm529 = vcmp.ge.f32.partialorder %v515, 0.0
  %vm530 = vcmp.ge.f32.partialorder %v518, 0.0
  %vm531 = vcmp.ge.f32.partialorder %v523, 0.0
  %vm532 = vcmp.ge.f32.partialorder %v526, 0.0
  %v533 = vmul.f32 %v515, 0.2
  %v534 = vmul.f32 %v518, 0.2
  %v535 = vmul.f32 %v523, 0.2
  %v536 = vmul.f32 %v526, 0.2
  %v537 = vsel %vm529, %v515, %v533
  %v538 = vsel %vm530, %v518, %v534
  %v539 = vsel %vm531, %v523, %v535
  %v540 = vsel %vm532, %v526, %v536
  %v541 = vmul.f32 %v537, %v141
  %v542 = vmul.f32 %v538, %v141
  %v543 = vmul.f32 %v539, %v141
  %v544 = vmul.f32 %v540, %v141
  %v545 = vadd.f32 %v541, %v152
  %v546 = vadd.f32 %v542, %v152
  %v547 = vadd.f32 %v543, %v152
  %v548 = vadd.f32 %v544, %v152
  %v549 = vpack.c.bf16 %v546, %v545
  %v550 = vpack.c.bf16 %v548, %v547
  %v552 = vsel %vm68, %v549, 0
  %v555 = vsel %vm68, %v550, 0
  %557 = vmatprep.subr.bf16.mxu0 0
  %558 = vmatpush1.bf16.msra.mxu0 %v293
  %559 = vmatprep.subr.bf16.mxu0 0
  %560 = vmatpush1.bf16.msra.mxu0 %v294
  %561 = vmatprep.subr.bf16.mxu0 0
  %562 = vmatpush1.bf16.msra.mxu0 %v295
  %563 = vmatprep.subr.bf16.mxu0 0
  %564 = vmatpush1.bf16.msra.mxu0 %v296
  %565 = vmatprep.subr.bf16.mxu0 0
  %566 = vmatpush1.bf16.msra.mxu0 0
  %567 = vmatprep.subr.bf16.mxu0 0
  %568 = vmatpush1.bf16.msra.mxu0 0
  %569 = vmatprep.subr.bf16.mxu0 0
  %570 = vmatpush1.bf16.msra.mxu0 0
  %571 = vmatprep.subr.bf16.mxu0 0
  %572 = vmatpush1.bf16.msra.mxu0 0
  %573 = vmatprep.subr.bf16.mxu0 0
  %574 = vmatpush1.bf16.msra.mxu0 0
  %575 = vmatprep.subr.bf16.mxu0 0
  %576 = vmatpush1.bf16.msra.mxu0 0
  %577 = vmatprep.subr.bf16.mxu0 0
  %578 = vmatpush1.bf16.msra.mxu0 0
  %579 = vmatprep.subr.bf16.mxu0 0
  %580 = vmatpush1.bf16.msra.mxu0 0
  %581 = vmatprep.subr.bf16.mxu0 0
  %582 = vmatpush1.bf16.msra.mxu0 0
  %583 = vmatprep.subr.bf16.mxu0 0
  %584 = vmatpush1.bf16.msra.mxu0 0
  %585 = vmatprep.subr.bf16.mxu0 0
  %586 = vmatpush1.bf16.msra.mxu0 0
  %587 = vmatprep.subr.bf16.mxu0 0
  %588 = vmatpush1.bf16.msra.mxu0 0
  %589 = vmatprep.mubr.bf16.mxu0 0
  %590 = vmatmul.mubr.bf16.gmra.mrb[0].mxu0 %v552
  %v591 = vpop.f32.mrb[0].mxu0
  %v592 = vadd.f32 0.0, %v591
  %v593 = vpop.f32.mrb[0].mxu0
  %v594 = vpop.f32.mrb[0].mxu0
  %v595 = vadd.f32 0.0, %v594
  %v596 = vpop.f32.mrb[0].mxu0
  %597 = vmatprep.mubr.bf16.mxu0 0
  %598 = vmatmul.mubr.bf16.gmra.mrb[0].mxu0 %v555
  %v599 = vpop.f32.mrb[0].mxu0
  %v600 = vadd.f32 0.0, %v599
  %v601 = vpop.f32.mrb[0].mxu0
  %v602 = vpop.f32.mrb[0].mxu0
  %v603 = vadd.f32 0.0, %v602
  %v604 = vpop.f32.mrb[0].mxu0
  %605 = vdwg.mxu0
  %vm606 = vcmp.ge.f32.partialorder %v592, 0.0
  %vm607 = vcmp.ge.f32.partialorder %v595, 0.0
  %vm608 = vcmp.ge.f32.partialorder %v600, 0.0
  %vm609 = vcmp.ge.f32.partialorder %v603, 0.0
  %v610 = vmul.f32 %v592, 0.2
  %v611 = vmul.f32 %v595, 0.2
  %v612 = vmul.f32 %v600, 0.2
  %v613 = vmul.f32 %v603, 0.2
  %v614 = vsel %vm606, %v592, %v610
  %v615 = vsel %vm607, %v595, %v611
  %v616 = vsel %vm608, %v600, %v612
  %v617 = vsel %vm609, %v603, %v613
  %v618 = vmul.f32 %v614, %v373
  %v619 = vmul.f32 %v615, %v373
  %v620 = vmul.f32 %v616, %v373
  %v621 = vmul.f32 %v617, %v373
  %v622 = vadd.f32 %v618, %v384
  %v623 = vadd.f32 %v619, %v384
  %v624 = vadd.f32 %v620, %v384
  %v625 = vadd.f32 %v621, %v384
  %v626 = vmax.f32 %v386, %v622
  %v627 = vmax.f32 %v387, %v623
  %v628 = vmax.f32 %v388, %v624
  %v629 = vmax.f32 %v389, %v625
  %s630 = scalar_lea.vmem %s0, 64
  %v631 = vld [vmem:[%s630] sm:$0xff]
  %v632 = vld [vmem:[%s630 + $0x8] sm:$0xff]
  %v633 = vld [vmem:[%s630 + $0x10] sm:$0xff]
  %v634 = vld [vmem:[%s630 + $0x18] sm:$0xff]
  %v635 = vpack.c.bf16 %v632, %v631
  %v636 = vpack.c.bf16 %v634, %v633
  %v638 = vsel %vm68, %v635, 0
  %v641 = vsel %vm68, %v636, 0
  %643 = vmatprep.subr.bf16.mxu0 0
  %644 = vmatpush1.bf16.msra.mxu0 %v60
  %645 = vmatprep.subr.bf16.mxu0 0
  %646 = vmatpush1.bf16.msra.mxu0 %v61
  %647 = vmatprep.subr.bf16.mxu0 0
  %648 = vmatpush1.bf16.msra.mxu0 %v62
  %649 = vmatprep.subr.bf16.mxu0 0
  %650 = vmatpush1.bf16.msra.mxu0 %v63
  %651 = vmatprep.subr.bf16.mxu0 0
  %652 = vmatpush1.bf16.msra.mxu0 0
  %653 = vmatprep.subr.bf16.mxu0 0
  %654 = vmatpush1.bf16.msra.mxu0 0
  %655 = vmatprep.subr.bf16.mxu0 0
  %656 = vmatpush1.bf16.msra.mxu0 0
  %657 = vmatprep.subr.bf16.mxu0 0
  %658 = vmatpush1.bf16.msra.mxu0 0
  %659 = vmatprep.subr.bf16.mxu0 0
  %660 = vmatpush1.bf16.msra.mxu0 0
  %661 = vmatprep.subr.bf16.mxu0 0
  %662 = vmatpush1.bf16.msra.mxu0 0
  %663 = vmatprep.subr.bf16.mxu0 0
  %664 = vmatpush1.bf16.msra.mxu0 0
  %665 = vmatprep.subr.bf16.mxu0 0
  %666 = vmatpush1.bf16.msra.mxu0 0
  %667 = vmatprep.subr.bf16.mxu0 0
  %668 = vmatpush1.bf16.msra.mxu0 0
  %669 = vmatprep.subr.bf16.mxu0 0
  %670 = vmatpush1.bf16.msra.mxu0 0
  %671 = vmatprep.subr.bf16.mxu0 0
  %672 = vmatpush1.bf16.msra.mxu0 0
  %673 = vmatprep.subr.bf16.mxu0 0
  %674 = vmatpush1.bf16.msra.mxu0 0
  %675 = vmatprep.mubr.bf16.mxu0 0
  %676 = vmatmul.mubr.bf16.gmra.mrb[0].mxu0 %v638
  %v677 = vpop.f32.mrb[0].mxu0
  %v678 = vadd.f32 0.0, %v677
  %v679 = vpop.f32.mrb[0].mxu0
  %v680 = vpop.f32.mrb[0].mxu0
  %v681 = vadd.f32 0.0, %v680
  %v682 = vpop.f32.mrb[0].mxu0
  %683 = vmatprep.mubr.bf16.mxu0 0
  %684 = vmatmul.mubr.bf16.gmra.mrb[0].mxu0 %v641
  %v685 = vpop.f32.mrb[0].mxu0
  %v686 = vadd.f32 0.0, %v685
  %v687 = vpop.f32.mrb[0].mxu0
  %v688 = vpop.f32.mrb[0].mxu0
  %v689 = vadd.f32 0.0, %v688
  %v690 = vpop.f32.mrb[0].mxu0
  %691 = vdwg.mxu0
  %vm692 = vcmp.ge.f32.partialorder %v678, 0.0
  %vm693 = vcmp.ge.f32.partialorder %v681, 0.0
  %vm694 = vcmp.ge.f32.partialorder %v686, 0.0
  %vm695 = vcmp.ge.f32.partialorder %v689, 0.0
  %v696 = vmul.f32 %v678, 0.2
  %v697 = vmul.f32 %v681, 0.2
  %v698 = vmul.f32 %v686, 0.2
  %v699 = vmul.f32 %v689, 0.2
  %v700 = vsel %vm692, %v678, %v696
  %v701 = vsel %vm693, %v681, %v697
  %v702 = vsel %vm694, %v686, %v698
  %v703 = vsel %vm695, %v689, %v699
  %v704 = vmul.f32 %v700, %v141
  %v705 = vmul.f32 %v701, %v141
  %v706 = vmul.f32 %v702, %v141
  %v707 = vmul.f32 %v703, %v141
  %v708 = vadd.f32 %v704, %v152
  %v709 = vadd.f32 %v705, %v152
  %v710 = vadd.f32 %v706, %v152
  %v711 = vadd.f32 %v707, %v152
  %v712 = vpack.c.bf16 %v709, %v708
  %v713 = vpack.c.bf16 %v711, %v710
  %v715 = vsel %vm68, %v712, 0
  %v718 = vsel %vm68, %v713, 0
  %720 = vmatprep.subr.bf16.mxu0 0
  %721 = vmatpush1.bf16.msra.mxu0 %v184
  %722 = vmatprep.subr.bf16.mxu0 0
  %723 = vmatpush1.bf16.msra.mxu0 %v185
  %724 = vmatprep.subr.bf16.mxu0 0
  %725 = vmatpush1.bf16.msra.mxu0 %v186
  %726 = vmatprep.subr.bf16.mxu0 0
  %727 = vmatpush1.bf16.msra.mxu0 %v187
  %728 = vmatprep.subr.bf16.mxu0 0
  %729 = vmatpush1.bf16.msra.mxu0 0
  %730 = vmatprep.subr.bf16.mxu0 0
  %731 = vmatpush1.bf16.msra.mxu0 0
  %732 = vmatprep.subr.bf16.mxu0 0
  %733 = vmatpush1.bf16.msra.mxu0 0
  %734 = vmatprep.subr.bf16.mxu0 0
  %735 = vmatpush1.bf16.msra.mxu0 0
  %736 = vmatprep.subr.bf16.mxu0 0
  %737 = vmatpush1.bf16.msra.mxu0 0
  %738 = vmatprep.subr.bf16.mxu0 0
  %739 = vmatpush1.bf16.msra.mxu0 0
  %740 = vmatprep.subr.bf16.mxu0 0
  %741 = vmatpush1.bf16.msra.mxu0 0
  %742 = vmatprep.subr.bf16.mxu0 0
  %743 = vmatpush1.bf16.msra.mxu0 0
  %744 = vmatprep.subr.bf16.mxu0 0
  %745 = vmatpush1.bf16.msra.mxu0 0
  %746 = vmatprep.subr.bf16.mxu0 0
  %747 = vmatpush1.bf16.msra.mxu0 0
  %748 = vmatprep.subr.bf16.mxu0 0
  %749 = vmatpush1.bf16.msra.mxu0 0
  %750 = vmatprep.subr.bf16.mxu0 0
  %751 = vmatpush1.bf16.msra.mxu0 0
  %752 = vmatprep.mubr.bf16.mxu0 0
  %753 = vmatmul.mubr.bf16.gmra.mrb[0].mxu0 %v715
  %v754 = vpop.f32.mrb[0].mxu0
  %v755 = vadd.f32 0.0, %v754
  %v756 = vpop.f32.mrb[0].mxu0
  %v757 = vpop.f32.mrb[0].mxu0
  %v758 = vadd.f32 0.0, %v757
  %v759 = vpop.f32.mrb[0].mxu0
  %760 = vmatprep.mubr.bf16.mxu0 0
  %761 = vmatmul.mubr.bf16.gmra.mrb[0].mxu0 %v718
  %v762 = vpop.f32.mrb[0].mxu0
  %v763 = vadd.f32 0.0, %v762
  %v764 = vpop.f32.mrb[0].mxu0
  %v765 = vpop.f32.mrb[0].mxu0
  %v766 = vadd.f32 0.0, %v765
  %v767 = vpop.f32.mrb[0].mxu0
  %768 = vdwg.mxu0
  %vm769 = vcmp.ge.f32.partialorder %v755, 0.0
  %vm770 = vcmp.ge.f32.partialorder %v758, 0.0
  %vm771 = vcmp.ge.f32.partialorder %v763, 0.0
  %vm772 = vcmp.ge.f32.partialorder %v766, 0.0
  %v773 = vmul.f32 %v755, 0.2
  %v774 = vmul.f32 %v758, 0.2
  %v775 = vmul.f32 %v763, 0.2
  %v776 = vmul.f32 %v766, 0.2
  %v777 = vsel %vm769, %v755, %v773
  %v778 = vsel %vm770, %v758, %v774
  %v779 = vsel %vm771, %v763, %v775
  %v780 = vsel %vm772, %v766, %v776
  %v781 = vmul.f32 %v777, %v141
  %v782 = vmul.f32 %v778, %v141
  %v783 = vmul.f32 %v779, %v141
  %v784 = vmul.f32 %v780, %v141
  %v785 = vadd.f32 %v781, %v152
  %v786 = vadd.f32 %v782, %v152
  %v787 = vadd.f32 %v783, %v152
  %v788 = vadd.f32 %v784, %v152
  %v789 = vpack.c.bf16 %v786, %v785
  %v790 = vpack.c.bf16 %v788, %v787
  %v792 = vsel %vm68, %v789, 0
  %v795 = vsel %vm68, %v790, 0
  %797 = vmatprep.subr.bf16.mxu0 0
  %798 = vmatpush1.bf16.msra.mxu0 %v293
  %799 = vmatprep.subr.bf16.mxu0 0
  %800 = vmatpush1.bf16.msra.mxu0 %v294
  %801 = vmatprep.subr.bf16.mxu0 0
  %802 = vmatpush1.bf16.msra.mxu0 %v295
  %803 = vmatprep.subr.bf16.mxu0 0
  %804 = vmatpush1.bf16.msra.mxu0 %v296
  %805 = vmatprep.subr.bf16.mxu0 0
  %806 = vmatpush1.bf16.msra.mxu0 0
  %807 = vmatprep.subr.bf16.mxu0 0
  %808 = vmatpush1.bf16.msra.mxu0 0
  %809 = vmatprep.subr.bf16.mxu0 0
  %810 = vmatpush1.bf16.msra.mxu0 0
  %811 = vmatprep.subr.bf16.mxu0 0
  %812 = vmatpush1.bf16.msra.mxu0 0
  %813 = vmatprep.subr.bf16.mxu0 0
  %814 = vmatpush1.bf16.msra.mxu0 0
  %815 = vmatprep.subr.bf16.mxu0 0
  %816 = vmatpush1.bf16.msra.mxu0 0
  %817 = vmatprep.subr.bf16.mxu0 0
  %818 = vmatpush1.bf16.msra.mxu0 0
  %819 = vmatprep.subr.bf16.mxu0 0
  %820 = vmatpush1.bf16.msra.mxu0 0
  %821 = vmatprep.subr.bf16.mxu0 0
  %822 = vmatpush1.bf16.msra.mxu0 0
  %823 = vmatprep.subr.bf16.mxu0 0
  %824 = vmatpush1.bf16.msra.mxu0 0
  %825 = vmatprep.subr.bf16.mxu0 0
  %826 = vmatpush1.bf16.msra.mxu0 0
  %827 = vmatprep.subr.bf16.mxu0 0
  %828 = vmatpush1.bf16.msra.mxu0 0
  %829 = vmatprep.mubr.bf16.mxu0 0
  %830 = vmatmul.mubr.bf16.gmra.mrb[0].mxu0 %v792
  %v831 = vpop.f32.mrb[0].mxu0
  %v832 = vadd.f32 0.0, %v831
  %v833 = vpop.f32.mrb[0].mxu0
  %v834 = vpop.f32.mrb[0].mxu0
  %v835 = vadd.f32 0.0, %v834
  %v836 = vpop.f32.mrb[0].mxu0
  %837 = vmatprep.mubr.bf16.mxu0 0
  %838 = vmatmul.mubr.bf16.gmra.mrb[0].mxu0 %v795
  %v839 = vpop.f32.mrb[0].mxu0
  %v840 = vadd.f32 0.0, %v839
  %v841 = vpop.f32.mrb[0].mxu0
  %v842 = vpop.f32.mrb[0].mxu0
  %v843 = vadd.f32 0.0, %v842
  %v844 = vpop.f32.mrb[0].mxu0
  %845 = vdwg.mxu0
  %vm846 = vcmp.ge.f32.partialorder %v832, 0.0
  %vm847 = vcmp.ge.f32.partialorder %v835, 0.0
  %vm848 = vcmp.ge.f32.partialorder %v840, 0.0
  %vm849 = vcmp.ge.f32.partialorder %v843, 0.0
  %v850 = vmul.f32 %v832, 0.2
  %v851 = vmul.f32 %v835, 0.2
  %v852 = vmul.f32 %v840, 0.2
  %v853 = vmul.f32 %v843, 0.2
  %v854 = vsel %vm846, %v832, %v850
  %v855 = vsel %vm847, %v835, %v851
  %v856 = vsel %vm848, %v840, %v852
  %v857 = vsel %vm849, %v843, %v853
  %v858 = vmul.f32 %v854, %v373
  %v859 = vmul.f32 %v855, %v373
  %v860 = vmul.f32 %v856, %v373
  %v861 = vmul.f32 %v857, %v373
  %v862 = vadd.f32 %v858, %v384
  %v863 = vadd.f32 %v859, %v384
  %v864 = vadd.f32 %v860, %v384
  %v865 = vadd.f32 %v861, %v384
  %v866 = vmax.f32 %v626, %v862
  %v867 = vmax.f32 %v627, %v863
  %v868 = vmax.f32 %v628, %v864
  %v869 = vmax.f32 %v629, %v865
  %s870 = scalar_lea.vmem %s0, 96
  %v871 = vld [vmem:[%s870] sm:$0xff]
  %v872 = vld [vmem:[%s870 + $0x8] sm:$0xff]
  %v873 = vld [vmem:[%s870 + $0x10] sm:$0xff]
  %v874 = vld [vmem:[%s870 + $0x18] sm:$0xff]
  %v875 = vpack.c.bf16 %v872, %v871
  %v876 = vpack.c.bf16 %v874, %v873
  %v878 = vsel %vm68, %v875, 0
  %v881 = vsel %vm68, %v876, 0
  %883 = vmatprep.subr.bf16.mxu0 0
  %884 = vmatpush1.bf16.msra.mxu0 %v60
  %885 = vmatprep.subr.bf16.mxu0 0
  %886 = vmatpush1.bf16.msra.mxu0 %v61
  %887 = vmatprep.subr.bf16.mxu0 0
  %888 = vmatpush1.bf16.msra.mxu0 %v62
  %889 = vmatprep.subr.bf16.mxu0 0
  %890 = vmatpush1.bf16.msra.mxu0 %v63
  %891 = vmatprep.subr.bf16.mxu0 0
  %892 = vmatpush1.bf16.msra.mxu0 0
  %893 = vmatprep.subr.bf16.mxu0 0
  %894 = vmatpush1.bf16.msra.mxu0 0
  %895 = vmatprep.subr.bf16.mxu0 0
  %896 = vmatpush1.bf16.msra.mxu0 0
  %897 = vmatprep.subr.bf16.mxu0 0
  %898 = vmatpush1.bf16.msra.mxu0 0
  %899 = vmatprep.subr.bf16.mxu0 0
  %900 = vmatpush1.bf16.msra.mxu0 0
  %901 = vmatprep.subr.bf16.mxu0 0
  %902 = vmatpush1.bf16.msra.mxu0 0
  %903 = vmatprep.subr.bf16.mxu0 0
  %904 = vmatpush1.bf16.msra.mxu0 0
  %905 = vmatprep.subr.bf16.mxu0 0
  %906 = vmatpush1.bf16.msra.mxu0 0
  %907 = vmatprep.subr.bf16.mxu0 0
  %908 = vmatpush1.bf16.msra.mxu0 0
  %909 = vmatprep.subr.bf16.mxu0 0
  %910 = vmatpush1.bf16.msra.mxu0 0
  %911 = vmatprep.subr.bf16.mxu0 0
  %912 = vmatpush1.bf16.msra.mxu0 0
  %913 = vmatprep.subr.bf16.mxu0 0
  %914 = vmatpush1.bf16.msra.mxu0 0
  %915 = vmatprep.mubr.bf16.mxu0 0
  %916 = vmatmul.mubr.bf16.gmra.mrb[0].mxu0 %v878
  %v917 = vpop.f32.mrb[0].mxu0
  %v918 = vadd.f32 0.0, %v917
  %v919 = vpop.f32.mrb[0].mxu0
  %v920 = vpop.f32.mrb[0].mxu0
  %v921 = vadd.f32 0.0, %v920
  %v922 = vpop.f32.mrb[0].mxu0
  %923 = vmatprep.mubr.bf16.mxu0 0
  %924 = vmatmul.mubr.bf16.gmra.mrb[0].mxu0 %v881
  %v925 = vpop.f32.mrb[0].mxu0
  %v926 = vadd.f32 0.0, %v925
  %v927 = vpop.f32.mrb[0].mxu0
  %v928 = vpop.f32.mrb[0].mxu0
  %v929 = vadd.f32 0.0, %v928
  %v930 = vpop.f32.mrb[0].mxu0
  %931 = vdwg.mxu0
  %vm932 = vcmp.ge.f32.partialorder %v918, 0.0
  %vm933 = vcmp.ge.f32.partialorder %v921, 0.0
  %vm934 = vcmp.ge.f32.partialorder %v926, 0.0
  %vm935 = vcmp.ge.f32.partialorder %v929, 0.0
  %v936 = vmul.f32 %v918, 0.2
  %v937 = vmul.f32 %v921, 0.2
  %v938 = vmul.f32 %v926, 0.2
  %v939 = vmul.f32 %v929, 0.2
  %v940 = vsel %vm932, %v918, %v936
  %v941 = vsel %vm933, %v921, %v937
  %v942 = vsel %vm934, %v926, %v938
  %v943 = vsel %vm935, %v929, %v939
  %v944 = vmul.f32 %v940, %v141
  %v945 = vmul.f32 %v941, %v141
  %v946 = vmul.f32 %v942, %v141
  %v947 = vmul.f32 %v943, %v141
  %v948 = vadd.f32 %v944, %v152
  %v949 = vadd.f32 %v945, %v152
  %v950 = vadd.f32 %v946, %v152
  %v951 = vadd.f32 %v947, %v152
  %v952 = vpack.c.bf16 %v949, %v948
  %v953 = vpack.c.bf16 %v951, %v950
  %v955 = vsel %vm68, %v952, 0
  %v958 = vsel %vm68, %v953, 0
  %960 = vmatprep.subr.bf16.mxu0 0
  %961 = vmatpush1.bf16.msra.mxu0 %v184
  %962 = vmatprep.subr.bf16.mxu0 0
  %963 = vmatpush1.bf16.msra.mxu0 %v185
  %964 = vmatprep.subr.bf16.mxu0 0
  %965 = vmatpush1.bf16.msra.mxu0 %v186
  %966 = vmatprep.subr.bf16.mxu0 0
  %967 = vmatpush1.bf16.msra.mxu0 %v187
  %968 = vmatprep.subr.bf16.mxu0 0
  %969 = vmatpush1.bf16.msra.mxu0 0
  %970 = vmatprep.subr.bf16.mxu0 0
  %971 = vmatpush1.bf16.msra.mxu0 0
  %972 = vmatprep.subr.bf16.mxu0 0
  %973 = vmatpush1.bf16.msra.mxu0 0
  %974 = vmatprep.subr.bf16.mxu0 0
  %975 = vmatpush1.bf16.msra.mxu0 0
  %976 = vmatprep.subr.bf16.mxu0 0
  %977 = vmatpush1.bf16.msra.mxu0 0
  %978 = vmatprep.subr.bf16.mxu0 0
  %979 = vmatpush1.bf16.msra.mxu0 0
  %980 = vmatprep.subr.bf16.mxu0 0
  %981 = vmatpush1.bf16.msra.mxu0 0
  %982 = vmatprep.subr.bf16.mxu0 0
  %983 = vmatpush1.bf16.msra.mxu0 0
  %984 = vmatprep.subr.bf16.mxu0 0
  %985 = vmatpush1.bf16.msra.mxu0 0
  %986 = vmatprep.subr.bf16.mxu0 0
  %987 = vmatpush1.bf16.msra.mxu0 0
  %988 = vmatprep.subr.bf16.mxu0 0
  %989 = vmatpush1.bf16.msra.mxu0 0
  %990 = vmatprep.subr.bf16.mxu0 0
  %991 = vmatpush1.bf16.msra.mxu0 0
  %992 = vmatprep.mubr.bf16.mxu0 0
  %993 = vmatmul.mubr.bf16.gmra.mrb[0].mxu0 %v955
  %v994 = vpop.f32.mrb[0].mxu0
  %v995 = vadd.f32 0.0, %v994
  %v996 = vpop.f32.mrb[0].mxu0
  %v997 = vpop.f32.mrb[0].mxu0
  %v998 = vadd.f32 0.0, %v997
  %v999 = vpop.f32.mrb[0].mxu0
  %1000 = vmatprep.mubr.bf16.mxu0 0
  %1001 = vmatmul.mubr.bf16.gmra.mrb[0].mxu0 %v958
  %v1002 = vpop.f32.mrb[0].mxu0
  %v1003 = vadd.f32 0.0, %v1002
  %v1004 = vpop.f32.mrb[0].mxu0
  %v1005 = vpop.f32.mrb[0].mxu0
  %v1006 = vadd.f32 0.0, %v1005
  %v1007 = vpop.f32.mrb[0].mxu0
  %1008 = vdwg.mxu0
  %vm1009 = vcmp.ge.f32.partialorder %v995, 0.0
  %vm1010 = vcmp.ge.f32.partialorder %v998, 0.0
  %vm1011 = vcmp.ge.f32.partialorder %v1003, 0.0
  %vm1012 = vcmp.ge.f32.partialorder %v1006, 0.0
  %v1013 = vmul.f32 %v995, 0.2
  %v1014 = vmul.f32 %v998, 0.2
  %v1015 = vmul.f32 %v1003, 0.2
  %v1016 = vmul.f32 %v1006, 0.2
  %v1017 = vsel %vm1009, %v995, %v1013
  %v1018 = vsel %vm1010, %v998, %v1014
  %v1019 = vsel %vm1011, %v1003, %v1015
  %v1020 = vsel %vm1012, %v1006, %v1016
  %v1021 = vmul.f32 %v1017, %v141
  %v1022 = vmul.f32 %v1018, %v141
  %v1023 = vmul.f32 %v1019, %v141
  %v1024 = vmul.f32 %v1020, %v141
  %v1025 = vadd.f32 %v1021, %v152
  %v1026 = vadd.f32 %v1022, %v152
  %v1027 = vadd.f32 %v1023, %v152
  %v1028 = vadd.f32 %v1024, %v152
  %v1029 = vpack.c.bf16 %v1026, %v1025
  %v1030 = vpack.c.bf16 %v1028, %v1027
  %v1032 = vsel %vm68, %v1029, 0
  %v1035 = vsel %vm68, %v1030, 0
  %1037 = vmatprep.subr.bf16.mxu0 0
  %1038 = vmatpush1.bf16.msra.mxu0 %v293
  %1039 = vmatprep.subr.bf16.mxu0 0
  %1040 = vmatpush1.bf16.msra.mxu0 %v294
  %1041 = vmatprep.subr.bf16.mxu0 0
  %1042 = vmatpush1.bf16.msra.mxu0 %v295
  %1043 = vmatprep.subr.bf16.mxu0 0
  %1044 = vmatpush1.bf16.msra.mxu0 %v296
  %1045 = vmatprep.subr.bf16.mxu0 0
  %1046 = vmatpush1.bf16.msra.mxu0 0
  %1047 = vmatprep.subr.bf16.mxu0 0
  %1048 = vmatpush1.bf16.msra.mxu0 0
  %1049 = vmatprep.subr.bf16.mxu0 0
  %1050 = vmatpush1.bf16.msra.mxu0 0
  %1051 = vmatprep.subr.bf16.mxu0 0
  %1052 = vmatpush1.bf16.msra.mxu0 0
  %1053 = vmatprep.subr.bf16.mxu0 0
  %1054 = vmatpush1.bf16.msra.mxu0 0
  %1055 = vmatprep.subr.bf16.mxu0 0
  %1056 = vmatpush1.bf16.msra.mxu0 0
  %1057 = vmatprep.subr.bf16.mxu0 0
  %1058 = vmatpush1.bf16.msra.mxu0 0
  %1059 = vmatprep.subr.bf16.mxu0 0
  %1060 = vmatpush1.bf16.msra.mxu0 0
  %1061 = vmatprep.subr.bf16.mxu0 0
  %1062 = vmatpush1.bf16.msra.mxu0 0
  %1063 = vmatprep.subr.bf16.mxu0 0
  %1064 = vmatpush1.bf16.msra.mxu0 0
  %1065 = vmatprep.subr.bf16.mxu0 0
  %1066 = vmatpush1.bf16.msra.mxu0 0
  %1067 = vmatprep.subr.bf16.mxu0 0
  %1068 = vmatpush1.bf16.msra.mxu0 0
  %1069 = vmatprep.mubr.bf16.mxu0 0
  %1070 = vmatmul.mubr.bf16.gmra.mrb[0].mxu0 %v1032
  %v1071 = vpop.f32.mrb[0].mxu0
  %v1072 = vadd.f32 0.0, %v1071
  %v1073 = vpop.f32.mrb[0].mxu0
  %v1074 = vpop.f32.mrb[0].mxu0
  %v1075 = vadd.f32 0.0, %v1074
  %v1076 = vpop.f32.mrb[0].mxu0
  %1077 = vmatprep.mubr.bf16.mxu0 0
  %1078 = vmatmul.mubr.bf16.gmra.mrb[0].mxu0 %v1035
  %v1079 = vpop.f32.mrb[0].mxu0
  %v1080 = vadd.f32 0.0, %v1079
  %v1081 = vpop.f32.mrb[0].mxu0
  %v1082 = vpop.f32.mrb[0].mxu0
  %v1083 = vadd.f32 0.0, %v1082
  %v1084 = vpop.f32.mrb[0].mxu0
  %1085 = vdwg.mxu0
  %vm1086 = vcmp.ge.f32.partialorder %v1072, 0.0
  %vm1087 = vcmp.ge.f32.partialorder %v1075, 0.0
  %vm1088 = vcmp.ge.f32.partialorder %v1080, 0.0
  %vm1089 = vcmp.ge.f32.partialorder %v1083, 0.0
  %v1090 = vmul.f32 %v1072, 0.2
  %v1091 = vmul.f32 %v1075, 0.2
  %v1092 = vmul.f32 %v1080, 0.2
  %v1093 = vmul.f32 %v1083, 0.2
  %v1094 = vsel %vm1086, %v1072, %v1090
  %v1095 = vsel %vm1087, %v1075, %v1091
  %v1096 = vsel %vm1088, %v1080, %v1092
  %v1097 = vsel %vm1089, %v1083, %v1093
  %v1098 = vmul.f32 %v1094, %v373
  %v1099 = vmul.f32 %v1095, %v373
  %v1100 = vmul.f32 %v1096, %v373
  %v1101 = vmul.f32 %v1097, %v373
  %v1102 = vadd.f32 %v1098, %v384
  %v1103 = vadd.f32 %v1099, %v384
  %v1104 = vadd.f32 %v1100, %v384
  %v1105 = vadd.f32 %v1101, %v384
  %v1106 = vmax.f32 %v866, %v1102
  %v1107 = vmax.f32 %v867, %v1103
  %v1108 = vmax.f32 %v868, %v1104
  %v1109 = vmax.f32 %v869, %v1105
  %s1110 = scalar_lea.vmem %s0, 128
  %v1111 = vld [vmem:[%s1110] sm:$0xff]
  %v1112 = vld [vmem:[%s1110 + $0x8] sm:$0xff]
  %v1113 = vld [vmem:[%s1110 + $0x10] sm:$0xff]
  %v1114 = vld [vmem:[%s1110 + $0x18] sm:$0xff]
  %v1115 = vpack.c.bf16 %v1112, %v1111
  %v1116 = vpack.c.bf16 %v1114, %v1113
  %v1118 = vsel %vm68, %v1115, 0
  %v1121 = vsel %vm68, %v1116, 0
  %1123 = vmatprep.subr.bf16.mxu0 0
  %1124 = vmatpush1.bf16.msra.mxu0 %v60
  %1125 = vmatprep.subr.bf16.mxu0 0
  %1126 = vmatpush1.bf16.msra.mxu0 %v61
  %1127 = vmatprep.subr.bf16.mxu0 0
  %1128 = vmatpush1.bf16.msra.mxu0 %v62
  %1129 = vmatprep.subr.bf16.mxu0 0
  %1130 = vmatpush1.bf16.msra.mxu0 %v63
  %1131 = vmatprep.subr.bf16.mxu0 0
  %1132 = vmatpush1.bf16.msra.mxu0 0
  %1133 = vmatprep.subr.bf16.mxu0 0
  %1134 = vmatpush1.bf16.msra.mxu0 0
  %1135 = vmatprep.subr.bf16.mxu0 0
  %1136 = vmatpush1.bf16.msra.mxu0 0
  %1137 = vmatprep.subr.bf16.mxu0 0
  %1138 = vmatpush1.bf16.msra.mxu0 0
  %1139 = vmatprep.subr.bf16.mxu0 0
  %1140 = vmatpush1.bf16.msra.mxu0 0
  %1141 = vmatprep.subr.bf16.mxu0 0
  %1142 = vmatpush1.bf16.msra.mxu0 0
  %1143 = vmatprep.subr.bf16.mxu0 0
  %1144 = vmatpush1.bf16.msra.mxu0 0
  %1145 = vmatprep.subr.bf16.mxu0 0
  %1146 = vmatpush1.bf16.msra.mxu0 0
  %1147 = vmatprep.subr.bf16.mxu0 0
  %1148 = vmatpush1.bf16.msra.mxu0 0
  %1149 = vmatprep.subr.bf16.mxu0 0
  %1150 = vmatpush1.bf16.msra.mxu0 0
  %1151 = vmatprep.subr.bf16.mxu0 0
  %1152 = vmatpush1.bf16.msra.mxu0 0
  %1153 = vmatprep.subr.bf16.mxu0 0
  %1154 = vmatpush1.bf16.msra.mxu0 0
  %1155 = vmatprep.mubr.bf16.mxu0 0
  %1156 = vmatmul.mubr.bf16.gmra.mrb[0].mxu0 %v1118
  %v1157 = vpop.f32.mrb[0].mxu0
  %v1158 = vadd.f32 0.0, %v1157
  %v1159 = vpop.f32.mrb[0].mxu0
  %v1160 = vpop.f32.mrb[0].mxu0
  %v1161 = vadd.f32 0.0, %v1160
  %v1162 = vpop.f32.mrb[0].mxu0
  %1163 = vmatprep.mubr.bf16.mxu0 0
  %1164 = vmatmul.mubr.bf16.gmra.mrb[0].mxu0 %v1121
  %v1165 = vpop.f32.mrb[0].mxu0
  %v1166 = vadd.f32 0.0, %v1165
  %v1167 = vpop.f32.mrb[0].mxu0
  %v1168 = vpop.f32.mrb[0].mxu0
  %v1169 = vadd.f32 0.0, %v1168
  %v1170 = vpop.f32.mrb[0].mxu0
  %1171 = vdwg.mxu0
  %vm1172 = vcmp.ge.f32.partialorder %v1158, 0.0
  %vm1173 = vcmp.ge.f32.partialorder %v1161, 0.0
  %vm1174 = vcmp.ge.f32.partialorder %v1166, 0.0
  %vm1175 = vcmp.ge.f32.partialorder %v1169, 0.0
  %v1176 = vmul.f32 %v1158, 0.2
  %v1177 = vmul.f32 %v1161, 0.2
  %v1178 = vmul.f32 %v1166, 0.2
  %v1179 = vmul.f32 %v1169, 0.2
  %v1180 = vsel %vm1172, %v1158, %v1176
  %v1181 = vsel %vm1173, %v1161, %v1177
  %v1182 = vsel %vm1174, %v1166, %v1178
  %v1183 = vsel %vm1175, %v1169, %v1179
  %v1184 = vmul.f32 %v1180, %v141
  %v1185 = vmul.f32 %v1181, %v141
  %v1186 = vmul.f32 %v1182, %v141
  %v1187 = vmul.f32 %v1183, %v141
  %v1188 = vadd.f32 %v1184, %v152
  %v1189 = vadd.f32 %v1185, %v152
  %v1190 = vadd.f32 %v1186, %v152
  %v1191 = vadd.f32 %v1187, %v152
  %v1192 = vpack.c.bf16 %v1189, %v1188
  %v1193 = vpack.c.bf16 %v1191, %v1190
  %v1195 = vsel %vm68, %v1192, 0
  %v1198 = vsel %vm68, %v1193, 0
  %1200 = vmatprep.subr.bf16.mxu0 0
  %1201 = vmatpush1.bf16.msra.mxu0 %v184
  %1202 = vmatprep.subr.bf16.mxu0 0
  %1203 = vmatpush1.bf16.msra.mxu0 %v185
  %1204 = vmatprep.subr.bf16.mxu0 0
  %1205 = vmatpush1.bf16.msra.mxu0 %v186
  %1206 = vmatprep.subr.bf16.mxu0 0
  %1207 = vmatpush1.bf16.msra.mxu0 %v187
  %1208 = vmatprep.subr.bf16.mxu0 0
  %1209 = vmatpush1.bf16.msra.mxu0 0
  %1210 = vmatprep.subr.bf16.mxu0 0
  %1211 = vmatpush1.bf16.msra.mxu0 0
  %1212 = vmatprep.subr.bf16.mxu0 0
  %1213 = vmatpush1.bf16.msra.mxu0 0
  %1214 = vmatprep.subr.bf16.mxu0 0
  %1215 = vmatpush1.bf16.msra.mxu0 0
  %1216 = vmatprep.subr.bf16.mxu0 0
  %1217 = vmatpush1.bf16.msra.mxu0 0
  %1218 = vmatprep.subr.bf16.mxu0 0
  %1219 = vmatpush1.bf16.msra.mxu0 0
  %1220 = vmatprep.subr.bf16.mxu0 0
  %1221 = vmatpush1.bf16.msra.mxu0 0
  %1222 = vmatprep.subr.bf16.mxu0 0
  %1223 = vmatpush1.bf16.msra.mxu0 0
  %1224 = vmatprep.subr.bf16.mxu0 0
  %1225 = vmatpush1.bf16.msra.mxu0 0
  %1226 = vmatprep.subr.bf16.mxu0 0
  %1227 = vmatpush1.bf16.msra.mxu0 0
  %1228 = vmatprep.subr.bf16.mxu0 0
  %1229 = vmatpush1.bf16.msra.mxu0 0
  %1230 = vmatprep.subr.bf16.mxu0 0
  %1231 = vmatpush1.bf16.msra.mxu0 0
  %1232 = vmatprep.mubr.bf16.mxu0 0
  %1233 = vmatmul.mubr.bf16.gmra.mrb[0].mxu0 %v1195
  %v1234 = vpop.f32.mrb[0].mxu0
  %v1235 = vadd.f32 0.0, %v1234
  %v1236 = vpop.f32.mrb[0].mxu0
  %v1237 = vpop.f32.mrb[0].mxu0
  %v1238 = vadd.f32 0.0, %v1237
  %v1239 = vpop.f32.mrb[0].mxu0
  %1240 = vmatprep.mubr.bf16.mxu0 0
  %1241 = vmatmul.mubr.bf16.gmra.mrb[0].mxu0 %v1198
  %v1242 = vpop.f32.mrb[0].mxu0
  %v1243 = vadd.f32 0.0, %v1242
  %v1244 = vpop.f32.mrb[0].mxu0
  %v1245 = vpop.f32.mrb[0].mxu0
  %v1246 = vadd.f32 0.0, %v1245
  %v1247 = vpop.f32.mrb[0].mxu0
  %1248 = vdwg.mxu0
  %vm1249 = vcmp.ge.f32.partialorder %v1235, 0.0
  %vm1250 = vcmp.ge.f32.partialorder %v1238, 0.0
  %vm1251 = vcmp.ge.f32.partialorder %v1243, 0.0
  %vm1252 = vcmp.ge.f32.partialorder %v1246, 0.0
  %v1253 = vmul.f32 %v1235, 0.2
  %v1254 = vmul.f32 %v1238, 0.2
  %v1255 = vmul.f32 %v1243, 0.2
  %v1256 = vmul.f32 %v1246, 0.2
  %v1257 = vsel %vm1249, %v1235, %v1253
  %v1258 = vsel %vm1250, %v1238, %v1254
  %v1259 = vsel %vm1251, %v1243, %v1255
  %v1260 = vsel %vm1252, %v1246, %v1256
  %v1261 = vmul.f32 %v1257, %v141
  %v1262 = vmul.f32 %v1258, %v141
  %v1263 = vmul.f32 %v1259, %v141
  %v1264 = vmul.f32 %v1260, %v141
  %v1265 = vadd.f32 %v1261, %v152
  %v1266 = vadd.f32 %v1262, %v152
  %v1267 = vadd.f32 %v1263, %v152
  %v1268 = vadd.f32 %v1264, %v152
  %v1269 = vpack.c.bf16 %v1266, %v1265
  %v1270 = vpack.c.bf16 %v1268, %v1267
  %v1272 = vsel %vm68, %v1269, 0
  %v1275 = vsel %vm68, %v1270, 0
  %1277 = vmatprep.subr.bf16.mxu0 0
  %1278 = vmatpush1.bf16.msra.mxu0 %v293
  %1279 = vmatprep.subr.bf16.mxu0 0
  %1280 = vmatpush1.bf16.msra.mxu0 %v294
  %1281 = vmatprep.subr.bf16.mxu0 0
  %1282 = vmatpush1.bf16.msra.mxu0 %v295
  %1283 = vmatprep.subr.bf16.mxu0 0
  %1284 = vmatpush1.bf16.msra.mxu0 %v296
  %1285 = vmatprep.subr.bf16.mxu0 0
  %1286 = vmatpush1.bf16.msra.mxu0 0
  %1287 = vmatprep.subr.bf16.mxu0 0
  %1288 = vmatpush1.bf16.msra.mxu0 0
  %1289 = vmatprep.subr.bf16.mxu0 0
  %1290 = vmatpush1.bf16.msra.mxu0 0
  %1291 = vmatprep.subr.bf16.mxu0 0
  %1292 = vmatpush1.bf16.msra.mxu0 0
  %1293 = vmatprep.subr.bf16.mxu0 0
  %1294 = vmatpush1.bf16.msra.mxu0 0
  %1295 = vmatprep.subr.bf16.mxu0 0
  %1296 = vmatpush1.bf16.msra.mxu0 0
  %1297 = vmatprep.subr.bf16.mxu0 0
  %1298 = vmatpush1.bf16.msra.mxu0 0
  %1299 = vmatprep.subr.bf16.mxu0 0
  %1300 = vmatpush1.bf16.msra.mxu0 0
  %1301 = vmatprep.subr.bf16.mxu0 0
  %1302 = vmatpush1.bf16.msra.mxu0 0
  %1303 = vmatprep.subr.bf16.mxu0 0
  %1304 = vmatpush1.bf16.msra.mxu0 0
  %1305 = vmatprep.subr.bf16.mxu0 0
  %1306 = vmatpush1.bf16.msra.mxu0 0
  %1307 = vmatprep.subr.bf16.mxu0 0
  %1308 = vmatpush1.bf16.msra.mxu0 0
  %1309 = vmatprep.mubr.bf16.mxu0 0
  %1310 = vmatmul.mubr.bf16.gmra.mrb[0].mxu0 %v1272
  %v1311 = vpop.f32.mrb[0].mxu0
  %v1312 = vadd.f32 0.0, %v1311
  %v1313 = vpop.f32.mrb[0].mxu0
  %v1314 = vpop.f32.mrb[0].mxu0
  %v1315 = vadd.f32 0.0, %v1314
  %v1316 = vpop.f32.mrb[0].mxu0
  %1317 = vmatprep.mubr.bf16.mxu0 0
  %1318 = vmatmul.mubr.bf16.gmra.mrb[0].mxu0 %v1275
  %v1319 = vpop.f32.mrb[0].mxu0
  %v1320 = vadd.f32 0.0, %v1319
  %v1321 = vpop.f32.mrb[0].mxu0
  %v1322 = vpop.f32.mrb[0].mxu0
  %v1323 = vadd.f32 0.0, %v1322
  %v1324 = vpop.f32.mrb[0].mxu0
  %1325 = vdwg.mxu0
  %vm1326 = vcmp.ge.f32.partialorder %v1312, 0.0
  %vm1327 = vcmp.ge.f32.partialorder %v1315, 0.0
  %vm1328 = vcmp.ge.f32.partialorder %v1320, 0.0
  %vm1329 = vcmp.ge.f32.partialorder %v1323, 0.0
  %v1330 = vmul.f32 %v1312, 0.2
  %v1331 = vmul.f32 %v1315, 0.2
  %v1332 = vmul.f32 %v1320, 0.2
  %v1333 = vmul.f32 %v1323, 0.2
  %v1334 = vsel %vm1326, %v1312, %v1330
  %v1335 = vsel %vm1327, %v1315, %v1331
  %v1336 = vsel %vm1328, %v1320, %v1332
  %v1337 = vsel %vm1329, %v1323, %v1333
  %v1338 = vmul.f32 %v1334, %v373
  %v1339 = vmul.f32 %v1335, %v373
  %v1340 = vmul.f32 %v1336, %v373
  %v1341 = vmul.f32 %v1337, %v373
  %v1342 = vadd.f32 %v1338, %v384
  %v1343 = vadd.f32 %v1339, %v384
  %v1344 = vadd.f32 %v1340, %v384
  %v1345 = vadd.f32 %v1341, %v384
  %v1346 = vmax.f32 %v1106, %v1342
  %v1347 = vmax.f32 %v1107, %v1343
  %v1348 = vmax.f32 %v1108, %v1344
  %v1349 = vmax.f32 %v1109, %v1345
  %1350 = vst.msk [vmem:[%s8] sm:$0xff] %vm68, %v1346
  %1351 = vst.msk [vmem:[%s8 + $0x8] sm:$0xff] %vm68, %v1347
  %1352 = vst.msk [vmem:[%s8 + $0x10] sm:$0xff] %vm68, %v1348
  %1353 = vst.msk [vmem:[%s8 + $0x18] sm:$0xff] %vm68, %v1349
  // Predicated region
  $region34: #{dgn_forward.6} parent=0 // pred_check
    _
  $region35: #{dgn_forward.6} parent=0 // pred_check_branch
    %1355 = sbr.rel (0) target = $region37
  $region36: #{dgn_forward.6} parent=0 // pred_region
    _
  $region37: #{dgn_forward.6} parent=0 // pred_fallthru
    _
  // Predicated region
  $region38: #{dgn_forward.6} parent=0 // pred_check
    _
  $region39: #{dgn_forward.6} parent=0 // pred_check_branch
    %1357 = sbr.rel (0) target = $region41
  $region40: #{dgn_forward.6} parent=0 // pred_region
    _
  $region41: #{dgn_forward.6} parent=0 // pred_fallthru
    _

// kernel: dgn_forward.8
$region0: #{dgn_forward.8}
  #allocation0 [shape = 'u32[]', space=smem, size = 0x4, offset = 0x4, fixed_abs, tag = 'smem constant byte address 0x4 - core index']
  #allocation1 [shape = 'u32[144,128]{1,0:T(1,128)}', space=vmem, size = 0x12000, scoped, tag = 'internal scratch']
  #allocation2 [shape = 'f32[1,1024]{1,0:T(1,128)}', space=vmem, size = 0x1000, scoped, tag = 'scratch operand']
  %s0 = inlined_call_operand.vmem [shape: f32[2,16,64], index: 0, kind: input, shape index: {}]
  %s1 = inlined_call_operand.vmem [shape: bf16[64,1024], index: 1, kind: input, shape index: {}]
  %s2 = inlined_call_operand.vmem [shape: f32[1,1024], index: 2, kind: input, shape index: {}]
  %s3 = inlined_call_operand.vmem [shape: f32[1,1024], index: 3, kind: input, shape index: {}]
  %s4 = inlined_call_operand.vmem [shape: f32[1,1024], index: 4, kind: input, shape index: {}]
  %s5 = inlined_call_operand.vmem [shape: f32[2,1,1024], index: 5, kind: output, shape index: {}]
  %s6 = sld [smem:[#allocation0]]
  $region65: #{dgn_forward.8} parent=0
    _
  %s8 = ssub.s32 1, %s6
  %s9 = scalar_select 0, %s8, %s6
  loop: start=0, step=1, limit=4
  $region2: #{dgn_forward.8} parent=0 // loop_pre_header
    _
  $region3: #{dgn_forward.8} parent=0 // loop_header
    %s11 = sphi 0, %s15
    %p12 = scmp.ge.s32.totalorder %s11, 4
    %s18 = sphi 0, %s30
    %s19 = sphi 0, %s26
    %s20 = sphi 0, %s18
    %s21 = sphi 0, %s19
    %s22 = sphi 0, %s20
    %s23 = sphi 0, %s21
    %s35 = sphi 0, %s37
    %s38 = sphi 0, %s35
    %s39 = sphi 0, %s38
    %s55 = sphi 0, %s39
    %s59 = sphi 0, %s59
    %s61 = sphi 0, %s59
    %s62 = sphi 0, %s61
    %s76 = sphi 0, %s62
    %s80 = sphi 0, %s80
    %s82 = sphi 0, %s80
    %s83 = sphi 0, %s82
    %s97 = sphi 0, %s83
    %s101 = sphi 0, %s101
    %s103 = sphi 0, %s101
    %s104 = sphi 0, %s103
    %s118 = sphi 0, %s104
    %s122 = sphi 0, %s122
    %s124 = sphi 0, %s122
    %s125 = sphi 0, %s124
    %s139 = sphi 0, %s125
    %s145 = sphi 0, %s147
    %s148 = sphi 0, %s145
    %s149 = sphi 0, %s148
    %s165 = sphi 0, %s149
  $region4: #{dgn_forward.8} parent=0 // loop_header_branch
    %14 = sbr.rel (%p12) target = $region8
  $region5: #{dgn_forward.8} parent=0 // loop_body
    %s16 = ssub.s32 %s11, 1
    %s17 = ssub.s32 %s11, 2
    %s24 = sadd.s32 1, %s19
    %p25 = scmp.ge.s32.totalorder %s24, 1
    %s26 = scalar_select %p25, 0, %s24
    %s27 = sadd.s32 1, %s18
    %s28 = scalar_select %p25, %s27, %s18
    %p29 = scmp.ge.s32.totalorder %s28, 2
    %s30 = scalar_select %p29, 0, %s28
    %s31 = ssub.s32 %s18, %s30
    %s32 = ssub.s32 %s19, %s26
    %s33 = sor.u32 %s31, %s32
    %p34 = scmp.eq.s32.totalorder %s33, 0
    %s36 = sadd.s32 %s35, 1
    %s37 = scalar_select %p34, %s35, %s36
    %p40 = pneg %p34
    %p41 = scmp.eq.s32.totalorder %s11, 1
    %p42 = por %p40, %p41
    %p43 = scmp.ne.s32.totalorder %s35, %s38
    %p44 = scmp.eq.s32.totalorder %s11, 0
    %p45 = por %p43, %p44
    %p46 = scmp.ne.s32.totalorder %s35, %s38
    %p47 = scmp.eq.s32.totalorder %s16, 1
    %p48 = por %p46, %p47
    %p49 = scmp.ne.s32.totalorder %s38, %s39
    %p50 = scmp.eq.s32.totalorder %s16, 0
    %p51 = por %p49, %p50
    %p52 = scmp.ne.s32.totalorder %s38, %s39
    %p53 = scmp.eq.s32.totalorder %s17, 1
    %p54 = por %p52, %p53
    %p56 = scmp.ne.s32.totalorder %s39, %s55
    %p57 = scmp.eq.s32.totalorder %s17, 0
    %p58 = por %p56, %p57
    %s60 = sadd.s32 %s59, 1
    %p63 = scmp.eq.s32.totalorder %s11, 1
    %p64 = scmp.ne.s32.totalorder %s59, %s61
    %p65 = scmp.eq.s32.totalorder %s11, 0
    %p66 = por %p64, %p65
    %p67 = scmp.ne.s32.totalorder %s59, %s61
    %p68 = scmp.eq.s32.totalorder %s16, 1
    %p69 = por %p67, %p68
    %p70 = scmp.ne.s32.totalorder %s61, %s62
    %p71 = scmp.eq.s32.totalorder %s16, 0
    %p72 = por %p70, %p71
    %p73 = scmp.ne.s32.totalorder %s61, %s62
    %p74 = scmp.eq.s32.totalorder %s17, 1
    %p75 = por %p73, %p74
    %p77 = scmp.ne.s32.totalorder %s62, %s76
    %p78 = scmp.eq.s32.totalorder %s17, 0
    %p79 = por %p77, %p78
    %s81 = sadd.s32 %s80, 1
    %p84 = scmp.eq.s32.totalorder %s11, 1
    %p85 = scmp.ne.s32.totalorder %s80, %s82
    %p86 = scmp.eq.s32.totalorder %s11, 0
    %p87 = por %p85, %p86
    %p88 = scmp.ne.s32.totalorder %s80, %s82
    %p89 = scmp.eq.s32.totalorder %s16, 1
    %p90 = por %p88, %p89
    %p91 = scmp.ne.s32.totalorder %s82, %s83
    %p92 = scmp.eq.s32.totalorder %s16, 0
    %p93 = por %p91, %p92
    %p94 = scmp.ne.s32.totalorder %s82, %s83
    %p95 = scmp.eq.s32.totalorder %s17, 1
    %p96 = por %p94, %p95
    %p98 = scmp.ne.s32.totalorder %s83, %s97
    %p99 = scmp.eq.s32.totalorder %s17, 0
    %p100 = por %p98, %p99
    %s102 = sadd.s32 %s101, 1
    %p105 = scmp.eq.s32.totalorder %s11, 1
    %p106 = scmp.ne.s32.totalorder %s101, %s103
    %p107 = scmp.eq.s32.totalorder %s11, 0
    %p108 = por %p106, %p107
    %p109 = scmp.ne.s32.totalorder %s101, %s103
    %p110 = scmp.eq.s32.totalorder %s16, 1
    %p111 = por %p109, %p110
    %p112 = scmp.ne.s32.totalorder %s103, %s104
    %p113 = scmp.eq.s32.totalorder %s16, 0
    %p114 = por %p112, %p113
    %p115 = scmp.ne.s32.totalorder %s103, %s104
    %p116 = scmp.eq.s32.totalorder %s17, 1
    %p117 = por %p115, %p116
    %p119 = scmp.ne.s32.totalorder %s104, %s118
    %p120 = scmp.eq.s32.totalorder %s17, 0
    %p121 = por %p119, %p120
    %s123 = sadd.s32 %s122, 1
    %p126 = scmp.eq.s32.totalorder %s11, 1
    %p127 = scmp.ne.s32.totalorder %s122, %s124
    %p128 = scmp.eq.s32.totalorder %s11, 0
    %p129 = por %p127, %p128
    %p130 = scmp.ne.s32.totalorder %s122, %s124
    %p131 = scmp.eq.s32.totalorder %s16, 1
    %p132 = por %p130, %p131
    %p133 = scmp.ne.s32.totalorder %s124, %s125
    %p134 = scmp.eq.s32.totalorder %s16, 0
    %p135 = por %p133, %p134
    %p136 = scmp.ne.s32.totalorder %s124, %s125
    %p137 = scmp.eq.s32.totalorder %s17, 1
    %p138 = por %p136, %p137
    %p140 = scmp.ne.s32.totalorder %s125, %s139
    %p141 = scmp.eq.s32.totalorder %s17, 0
    %p142 = por %p140, %p141
    %s143 = ssub.s32 %s18, %s30
    %p144 = scmp.eq.s32.totalorder %s143, 0
    %s146 = sadd.s32 %s145, 1
    %s147 = scalar_select %p144, %s145, %s146
    %p150 = pneg %p144
    %p151 = scmp.eq.s32.totalorder %s11, 1
    %p152 = por %p150, %p151
    %p153 = scmp.ne.s32.totalorder %s145, %s148
    %p154 = scmp.eq.s32.totalorder %s11, 0
    %p155 = por %p153, %p154
    %p156 = scmp.ne.s32.totalorder %s145, %s148
    %p157 = scmp.eq.s32.totalorder %s16, 1
    %p158 = por %p156, %p157
    %p159 = scmp.ne.s32.totalorder %s148, %s149
    %p160 = scmp.eq.s32.totalorder %s16, 0
    %p161 = por %p159, %p160
    %p162 = scmp.ne.s32.totalorder %s148, %s149
    %p163 = scmp.eq.s32.totalorder %s17, 1
    %p164 = por %p162, %p163
    %p166 = scmp.ne.s32.totalorder %s149, %s165
    %p167 = scmp.eq.s32.totalorder %s17, 0
    %p168 = por %p166, %p167
    %p169 = scmp.le.s32.totalorder 1, %s11
    %p170 = scmp.lt.s32.totalorder %s11, 3
    %p171 = pnand %p169, %p170
    %p172 = pneg %p171
    // Predicated region
    $region9: #{dgn_forward.8} parent=5 // pred_check
      _
    $region10: #{dgn_forward.8} parent=5 // pred_check_branch
      %174 = sbr.rel (%p171) target = $region12
    $region11: #{dgn_forward.8} parent=5 // pred_region
      %s175 = ssub.s32 %s11, 1
      // Predicated region
      $region13: #{dgn_forward.8} parent=11 // pred_check
        %p176 = pneg %p72
      $region14: #{dgn_forward.8} parent=11 // pred_check_branch
        %178 = sbr.rel (%p176) target = $region16
      $region15: #{dgn_forward.8} parent=11 // pred_region
        _
      $region16: #{dgn_forward.8} parent=11 // pred_fallthru
        _
      // Predicated region
      $region17: #{dgn_forward.8} parent=11 // pred_check
        %p179 = pneg %p93
      $region18: #{dgn_forward.8} parent=11 // pred_check_branch
        %181 = sbr.rel (%p179) target = $region20
      $region19: #{dgn_forward.8} parent=11 // pred_region
        _
      $region20: #{dgn_forward.8} parent=11 // pred_fallthru
        _
      // Predicated region
      $region21: #{dgn_forward.8} parent=11 // pred_check
        %p182 = pneg %p114
      $region22: #{dgn_forward.8} parent=11 // pred_check_branch
        %184 = sbr.rel (%p182) target = $region24
      $region23: #{dgn_forward.8} parent=11 // pred_region
        _
      $region24: #{dgn_forward.8} parent=11 // pred_fallthru
        _
      // Predicated region
      $region25: #{dgn_forward.8} parent=11 // pred_check
        %p185 = pneg %p135
      $region26: #{dgn_forward.8} parent=11 // pred_check_branch
        %187 = sbr.rel (%p185) target = $region28
      $region27: #{dgn_forward.8} parent=11 // pred_region
        _
      $region28: #{dgn_forward.8} parent=11 // pred_fallthru
        _
    $region12: #{dgn_forward.8} parent=5 // pred_fallthru
      _
    %p188 = scmp.lt.s32.totalorder %s11, 2
    // Predicated region
    $region29: #{dgn_forward.8} parent=5 // pred_check
      %p189 = pneg %p188
    $region30: #{dgn_forward.8} parent=5 // pred_check_branch
      %191 = sbr.rel (%p189) target = $region32
    $region31: #{dgn_forward.8} parent=5 // pred_region
      // Predicated region
      $region33: #{dgn_forward.8} parent=31 // pred_check
        %p192 = pneg %p45
      $region34: #{dgn_forward.8} parent=31 // pred_check_branch
        %194 = sbr.rel (%p192) target = $region36
      $region35: #{dgn_forward.8} parent=31 // pred_region
        %s195 = smul.u32 2, %s19
        %p196 = scmp.lt.s32.totalorder %s18, 1
        %s197 = scalar_select %p196, %s18, 1
        %p198 = scmp.lt.s32.totalorder %s195, 1
        %s199 = scalar_select %p198, %s195, 1
        %s200 = smul.addr %s197, 2
        %s201 = sadd.s32 %s199, %s200
        %s202 = smul.addr %s201, 8
        %s203 = scalar_lea.vmem %s0, %s202
        %s204 = smul.u32 2, %s19
      $region36: #{dgn_forward.8} parent=31 // pred_fallthru
        _
    $region32: #{dgn_forward.8} parent=5 // pred_fallthru
      _
    %p205 = scmp.le.s32.totalorder 1, %s11
    %p206 = scmp.lt.s32.totalorder %s11, 3
    %p207 = pnand %p205, %p206
    %p208 = pneg %p207
    // Predicated region
    $region37: #{dgn_forward.8} parent=5 // pred_check
      _
    $region38: #{dgn_forward.8} parent=5 // pred_check_branch
      %210 = sbr.rel (%p207) target = $region40
    $region39: #{dgn_forward.8} parent=5 // pred_region
      %s211 = ssub.s32 %s11, 1
      %s212 = smul.u32 2, %s21
      %p213 = scmp.lt.s32.totalorder %s20, 1
      %s214 = scalar_select %p213, %s20, 1
      %p215 = scmp.lt.s32.totalorder %s212, 1
      %s216 = scalar_select %p215, %s212, 1
      %s217 = smul.addr %s214, 2
      %s218 = sadd.s32 %s216, %s217
      %s219 = smul.addr %s218, 8
      %s220 = scalar_lea.vmem %s0, %s219
      %p221 = pneg %p51
      %p222 = pneg %p48
      %p223 = pneg %p72
      %p224 = pneg %p69
      %p225 = pneg %p93
      %p226 = pneg %p90
      %p227 = pneg %p114
      %p228 = pneg %p111
      %p229 = pneg %p135
      %p230 = pneg %p132
      %p231 = pneg %p161
      %p232 = pneg %p158
      %p233 = scmp.lt.s32.totalorder %s20, 1
      %s234 = scalar_select %p233, %s20, 1
      %s235 = smul.addr %s234, 8
      %s236 = scalar_lea.vmem %s5, %s235
      %s237 = smul.u32 2, %s21
      %p238 = scmp.lt.s32.totalorder %s20, 1
      %s239 = scalar_select %p238, %s20, 1
      %p240 = scmp.lt.s32.totalorder %s237, 1
      %s241 = scalar_select %p240, %s237, 1
      %s242 = smul.addr %s239, 2
      %s243 = sadd.s32 %s241, %s242
      %s244 = smul.addr %s243, 8
      %s245 = scalar_lea.vmem %s0, %s244
      %s246 = smul.u32 2, %s21
      %p247 = scmp.lt.s32.totalorder %s20, 1
      %s248 = scalar_select %p247, %s20, 1
      %s249 = smul.addr %s248, 8
      %s250 = scalar_lea.vmem %s5, %s249
      %v252 = vld [vmem:[%s245] sm:$0xff]
      %v253 = vld [vmem:[%s245 + $0x8] sm:$0xff]
      %v254 = vpack.c.bf16 %v253, %v252
      %v255 = vld [vmem:[%s1] sm:$0xff]
      %v256 = vld [vmem:[%s1 + $0x8] sm:$0xff]
      %v257 = vld [vmem:[%s1 + $0x10] sm:$0xff]
      %v258 = vld [vmem:[%s1 + $0x18] sm:$0xff]
      %v259 = vld [vmem:[%s1 + $0x20] sm:$0xff]
      %v260 = vld [vmem:[%s1 + $0x28] sm:$0xff]
      %v261 = vld [vmem:[%s1 + $0x30] sm:$0xff]
      %v262 = vld [vmem:[%s1 + $0x38] sm:$0xff]
      %v263 = vld [vmem:[%s1 + $0x40] sm:$0xff]
      %v264 = vld [vmem:[%s1 + $0x48] sm:$0xff]
      %v265 = vld [vmem:[%s1 + $0x50] sm:$0xff]
      %v266 = vld [vmem:[%s1 + $0x58] sm:$0xff]
      %v267 = vld [vmem:[%s1 + $0x60] sm:$0xff]
      %v268 = vld [vmem:[%s1 + $0x68] sm:$0xff]
      %v269 = vld [vmem:[%s1 + $0x70] sm:$0xff]
      %v270 = vld [vmem:[%s1 + $0x78] sm:$0xff]
      %v271 = vld [vmem:[%s1 + $0x80] sm:$0xff]
      %v272 = vld [vmem:[%s1 + $0x88] sm:$0xff]
      %v273 = vld [vmem:[%s1 + $0x90] sm:$0xff]
      %v274 = vld [vmem:[%s1 + $0x98] sm:$0xff]
      %v275 = vld [vmem:[%s1 + $0xa0] sm:$0xff]
      %v276 = vld [vmem:[%s1 + $0xa8] sm:$0xff]
      %v277 = vld [vmem:[%s1 + $0xb0] sm:$0xff]
      %v278 = vld [vmem:[%s1 + $0xb8] sm:$0xff]
      %v279 = vld [vmem:[%s1 + $0xc0] sm:$0xff]
      %v280 = vld [vmem:[%s1 + $0xc8] sm:$0xff]
      %v281 = vld [vmem:[%s1 + $0xd0] sm:$0xff]
      %v282 = vld [vmem:[%s1 + $0xd8] sm:$0xff]
      %v283 = vld [vmem:[%s1 + $0xe0] sm:$0xff]
      %v284 = vld [vmem:[%s1 + $0xe8] sm:$0xff]
      %v285 = vld [vmem:[%s1 + $0xf0] sm:$0xff]
      %v286 = vld [vmem:[%s1 + $0xf8] sm:$0xff]
      %v287 = vld [vmem:[%s2] sm:$0xff]
      %v289 = vlaneseq
      %v290 = vshrl.u32 %v289, 7
      %v291 = vsub.s32 0, %v290
      %v292 = vrot.slane %v287, %v291
      %v293 = vlaneseq
      %v294 = vshrl.u32 %v293, 7
      %v295 = vsub.s32 1, %v294
      %v296 = vrot.slane %v287, %v295
      %v297 = vlaneseq
      %v298 = vshrl.u32 %v297, 7
      %v299 = vsub.s32 2, %v298
      %v300 = vrot.slane %v287, %v299
      %v301 = vlaneseq
      %v302 = vshrl.u32 %v301, 7
      %v303 = vsub.s32 3, %v302
      %v304 = vrot.slane %v287, %v303
      %v305 = vlaneseq
      %v306 = vshrl.u32 %v305, 7
      %v307 = vsub.s32 4, %v306
      %v308 = vrot.slane %v287, %v307
      %v309 = vlaneseq
      %v310 = vshrl.u32 %v309, 7
      %v311 = vsub.s32 5, %v310
      %v312 = vrot.slane %v287, %v311
      %v313 = vlaneseq
      %v314 = vshrl.u32 %v313, 7
      %v315 = vsub.s32 6, %v314
      %v316 = vrot.slane %v287, %v315
      %v317 = vlaneseq
      %v318 = vshrl.u32 %v317, 7
      %v319 = vsub.s32 7, %v318
      %v320 = vrot.slane %v287, %v319
      %v361 = vunpack.c.l.b16 %v255
      %v362 = vunpack.c.h.b16 %v255
      %v363 = vunpack.c.l.b16 %v256
      %v364 = vunpack.c.h.b16 %v256
      %v365 = vunpack.c.l.b16 %v257
      %v366 = vunpack.c.h.b16 %v257
      %v367 = vunpack.c.l.b16 %v258
      %v368 = vunpack.c.h.b16 %v258
      %v369 = vunpack.c.l.b16 %v259
      %v370 = vunpack.c.h.b16 %v259
      %v371 = vunpack.c.l.b16 %v260
      %v372 = vunpack.c.h.b16 %v260
      %v373 = vunpack.c.l.b16 %v261
      %v374 = vunpack.c.h.b16 %v261
      %v375 = vunpack.c.l.b16 %v262
      %v376 = vunpack.c.h.b16 %v262
      %v377 = vunpack.c.l.b16 %v263
      %v378 = vunpack.c.h.b16 %v263
      %v379 = vunpack.c.l.b16 %v264
      %v380 = vunpack.c.h.b16 %v264
      %v381 = vunpack.c.l.b16 %v265
      %v382 = vunpack.c.h.b16 %v265
      %v383 = vunpack.c.l.b16 %v266
      %v384 = vunpack.c.h.b16 %v266
      %v385 = vunpack.c.l.b16 %v267
      %v386 = vunpack.c.h.b16 %v267
      %v387 = vunpack.c.l.b16 %v268
      %v388 = vunpack.c.h.b16 %v268
      %v389 = vunpack.c.l.b16 %v269
      %v390 = vunpack.c.h.b16 %v269
      %v391 = vunpack.c.l.b16 %v270
      %v392 = vunpack.c.h.b16 %v270
      %v393 = vunpack.c.l.b16 %v271
      %v394 = vunpack.c.h.b16 %v271
      %v395 = vunpack.c.l.b16 %v272
      %v396 = vunpack.c.h.b16 %v272
      %v397 = vunpack.c.l.b16 %v273
      %v398 = vunpack.c.h.b16 %v273
      %v399 = vunpack.c.l.b16 %v274
      %v400 = vunpack.c.h.b16 %v274
      %v401 = vunpack.c.l.b16 %v275
      %v402 = vunpack.c.h.b16 %v275
      %v403 = vunpack.c.l.b16 %v276
      %v404 = vunpack.c.h.b16 %v276
      %v405 = vunpack.c.l.b16 %v277
      %v406 = vunpack.c.h.b16 %v277
      %v407 = vunpack.c.l.b16 %v278
      %v408 = vunpack.c.h.b16 %v278
      %v409 = vunpack.c.l.b16 %v279
      %v410 = vunpack.c.h.b16 %v279
      %v411 = vunpack.c.l.b16 %v280
      %v412 = vunpack.c.h.b16 %v280
      %v413 = vunpack.c.l.b16 %v281
      %v414 = vunpack.c.h.b16 %v281
      %v415 = vunpack.c.l.b16 %v282
      %v416 = vunpack.c.h.b16 %v282
      %v417 = vunpack.c.l.b16 %v283
      %v418 = vunpack.c.h.b16 %v283
      %v419 = vunpack.c.l.b16 %v284
      %v420 = vunpack.c.h.b16 %v284
      %v421 = vunpack.c.l.b16 %v285
      %v422 = vunpack.c.h.b16 %v285
      %v423 = vunpack.c.l.b16 %v286
      %v424 = vunpack.c.h.b16 %v286
      %v425 = vpack.c.b16 %v369, %v361
      %v426 = vpack.c.b16 %v370, %v362
      %v427 = vpack.c.b16 %v371, %v363
      %v428 = vpack.c.b16 %v372, %v364
      %v429 = vpack.c.b16 %v373, %v365
      %v430 = vpack.c.b16 %v374, %v366
      %v431 = vpack.c.b16 %v375, %v367
      %v432 = vpack.c.b16 %v376, %v368
      %v433 = vpack.c.b16 %v385, %v377
      %v434 = vpack.c.b16 %v386, %v378
      %v435 = vpack.c.b16 %v387, %v379
      %v436 = vpack.c.b16 %v388, %v380
      %v437 = vpack.c.b16 %v389, %v381
      %v438 = vpack.c.b16 %v390, %v382
      %v439 = vpack.c.b16 %v391, %v383
      %v440 = vpack.c.b16 %v392, %v384
      %v441 = vpack.c.b16 %v401, %v393
      %v442 = vpack.c.b16 %v402, %v394
      %v443 = vpack.c.b16 %v403, %v395
      %v444 = vpack.c.b16 %v404, %v396
      %v445 = vpack.c.b16 %v405, %v397
      %v446 = vpack.c.b16 %v406, %v398
      %v447 = vpack.c.b16 %v407, %v399
      %v448 = vpack.c.b16 %v408, %v400
      %v449 = vpack.c.b16 %v417, %v409
      %v450 = vpack.c.b16 %v418, %v410
      %v451 = vpack.c.b16 %v419, %v411
      %v452 = vpack.c.b16 %v420, %v412
      %v453 = vpack.c.b16 %v421, %v413
      %v454 = vpack.c.b16 %v422, %v414
      %v455 = vpack.c.b16 %v423, %v415
      %v456 = vpack.c.b16 %v424, %v416
      %vm489 = vcmask 523264
      %v491 = vsel %vm489, %v254, 0
      %493 = vmatprep.subr.bf16.mxu0 %v426
      %494 = vmatpush1.bf16.msra.mxu0 %v425
      %495 = vmatprep.subr.bf16.mxu0 %v434
      %496 = vmatpush1.bf16.msra.mxu0 %v433
      %497 = vmatprep.subr.bf16.mxu0 %v442
      %498 = vmatpush1.bf16.msra.mxu0 %v441
      %499 = vmatprep.subr.bf16.mxu0 %v450
      %500 = vmatpush1.bf16.msra.mxu0 %v449
      %501 = vmatprep.subr.bf16.mxu0 0
      %502 = vmatpush1.bf16.msra.mxu0 0
      %503 = vmatprep.subr.bf16.mxu0 0
      %504 = vmatpush1.bf16.msra.mxu0 0
      %505 = vmatprep.subr.bf16.mxu0 0
      %506 = vmatpush1.bf16.msra.mxu0 0
      %507 = vmatprep.subr.bf16.mxu0 0
      %508 = vmatpush1.bf16.msra.mxu0 0
      %509 = vmatprep.subr.bf16.mxu0 0
      %510 = vmatpush1.bf16.msra.mxu0 0
      %511 = vmatprep.subr.bf16.mxu0 0
      %512 = vmatpush1.bf16.msra.mxu0 0
      %513 = vmatprep.subr.bf16.mxu0 0
      %514 = vmatpush1.bf16.msra.mxu0 0
      %515 = vmatprep.subr.bf16.mxu0 0
      %516 = vmatpush1.bf16.msra.mxu0 0
      %517 = vmatprep.subr.bf16.mxu0 0
      %518 = vmatpush1.bf16.msra.mxu0 0
      %519 = vmatprep.subr.bf16.mxu0 0
      %520 = vmatpush1.bf16.msra.mxu0 0
      %521 = vmatprep.subr.bf16.mxu0 0
      %522 = vmatpush1.bf16.msra.mxu0 0
      %523 = vmatprep.subr.bf16.mxu0 0
      %524 = vmatpush1.bf16.msra.mxu0 0
      %525 = vmatprep.mubr.bf16.mxu0 0
      %526 = vmatmul.mubr.bf16.gmra.mrb[0].mxu0 %v491
      %v527 = vpop.f32.mrb[0].mxu0
      %v528 = vadd.f32 %v292, %v527
      %v529 = vpop.f32.mrb[0].mxu0
      %v530 = vadd.f32 %v296, %v529
      %v531 = vpop.f32.mrb[0].mxu0
      %v532 = vadd.f32 %v292, %v531
      %v533 = vpop.f32.mrb[0].mxu0
      %v534 = vadd.f32 %v296, %v533
      %535 = vdwg.mxu0
      %536 = vmatprep.subr.bf16.mxu0 %v428
      %537 = vmatpush1.bf16.msra.mxu0 %v427
      %538 = vmatprep.subr.bf16.mxu0 %v436
      %539 = vmatpush1.bf16.msra.mxu0 %v435
      %540 = vmatprep.subr.bf16.mxu0 %v444
      %541 = vmatpush1.bf16.msra.mxu0 %v443
      %542 = vmatprep.subr.bf16.mxu0 %v452
      %543 = vmatpush1.bf16.msra.mxu0 %v451
      %544 = vmatprep.subr.bf16.mxu0 0
      %545 = vmatpush1.bf16.msra.mxu0 0
      %546 = vmatprep.subr.bf16.mxu0 0
      %547 = vmatpush1.bf16.msra.mxu0 0
      %548 = vmatprep.subr.bf16.mxu0 0
      %549 = vmatpush1.bf16.msra.mxu0 0
      %550 = vmatprep.subr.bf16.mxu0 0
      %551 = vmatpush1.bf16.msra.mxu0 0
      %552 = vmatprep.subr.bf16.mxu0 0
      %553 = vmatpush1.bf16.msra.mxu0 0
      %554 = vmatprep.subr.bf16.mxu0 0
      %555 = vmatpush1.bf16.msra.mxu0 0
      %556 = vmatprep.subr.bf16.mxu0 0
      %557 = vmatpush1.bf16.msra.mxu0 0
      %558 = vmatprep.subr.bf16.mxu0 0
      %559 = vmatpush1.bf16.msra.mxu0 0
      %560 = vmatprep.subr.bf16.mxu0 0
      %561 = vmatpush1.bf16.msra.mxu0 0
      %562 = vmatprep.subr.bf16.mxu0 0
      %563 = vmatpush1.bf16.msra.mxu0 0
      %564 = vmatprep.subr.bf16.mxu0 0
      %565 = vmatpush1.bf16.msra.mxu0 0
      %566 = vmatprep.subr.bf16.mxu0 0
      %567 = vmatpush1.bf16.msra.mxu0 0
      %568 = vmatprep.mubr.bf16.mxu0 0
      %569 = vmatmul.mubr.bf16.gmra.mrb[0].mxu0 %v491
      %v570 = vpop.f32.mrb[0].mxu0
      %v571 = vadd.f32 %v300, %v570
      %v572 = vpop.f32.mrb[0].mxu0
      %v573 = vadd.f32 %v304, %v572
      %v574 = vpop.f32.mrb[0].mxu0
      %v575 = vadd.f32 %v300, %v574
      %v576 = vpop.f32.mrb[0].mxu0
      %v577 = vadd.f32 %v304, %v576
      %578 = vdwg.mxu0
      %579 = vmatprep.subr.bf16.mxu0 %v430
      %580 = vmatpush1.bf16.msra.mxu0 %v429
      %581 = vmatprep.subr.bf16.mxu0 %v438
      %582 = vmatpush1.bf16.msra.mxu0 %v437
      %583 = vmatprep.subr.bf16.mxu0 %v446
      %584 = vmatpush1.bf16.msra.mxu0 %v445
      %585 = vmatprep.subr.bf16.mxu0 %v454
      %586 = vmatpush1.bf16.msra.mxu0 %v453
      %587 = vmatprep.subr.bf16.mxu0 0
      %588 = vmatpush1.bf16.msra.mxu0 0
      %589 = vmatprep.subr.bf16.mxu0 0
      %590 = vmatpush1.bf16.msra.mxu0 0
      %591 = vmatprep.subr.bf16.mxu0 0
      %592 = vmatpush1.bf16.msra.mxu0 0
      %593 = vmatprep.subr.bf16.mxu0 0
      %594 = vmatpush1.bf16.msra.mxu0 0
      %595 = vmatprep.subr.bf16.mxu0 0
      %596 = vmatpush1.bf16.msra.mxu0 0
      %597 = vmatprep.subr.bf16.mxu0 0
      %598 = vmatpush1.bf16.msra.mxu0 0
      %599 = vmatprep.subr.bf16.mxu0 0
      %600 = vmatpush1.bf16.msra.mxu0 0
      %601 = vmatprep.subr.bf16.mxu0 0
      %602 = vmatpush1.bf16.msra.mxu0 0
      %603 = vmatprep.subr.bf16.mxu0 0
      %604 = vmatpush1.bf16.msra.mxu0 0
      %605 = vmatprep.subr.bf16.mxu0 0
      %606 = vmatpush1.bf16.msra.mxu0 0
      %607 = vmatprep.subr.bf16.mxu0 0
      %608 = vmatpush1.bf16.msra.mxu0 0
      %609 = vmatprep.subr.bf16.mxu0 0
      %610 = vmatpush1.bf16.msra.mxu0 0
      %611 = vmatprep.mubr.bf16.mxu0 0
      %612 = vmatmul.mubr.bf16.gmra.mrb[0].mxu0 %v491
      %v613 = vpop.f32.mrb[0].mxu0
      %v614 = vadd.f32 %v308, %v613
      %v615 = vpop.f32.mrb[0].mxu0
      %v616 = vadd.f32 %v312, %v615
      %v617 = vpop.f32.mrb[0].mxu0
      %v618 = vadd.f32 %v308, %v617
      %v619 = vpop.f32.mrb[0].mxu0
      %v620 = vadd.f32 %v312, %v619
      %621 = vdwg.mxu0
      %622 = vmatprep.subr.bf16.mxu0 %v432
      %623 = vmatpush1.bf16.msra.mxu0 %v431
      %624 = vmatprep.subr.bf16.mxu0 %v440
      %625 = vmatpush1.bf16.msra.mxu0 %v439
      %626 = vmatprep.subr.bf16.mxu0 %v448
      %627 = vmatpush1.bf16.msra.mxu0 %v447
      %628 = vmatprep.subr.bf16.mxu0 %v456
      %629 = vmatpush1.bf16.msra.mxu0 %v455
      %630 = vmatprep.subr.bf16.mxu0 0
      %631 = vmatpush1.bf16.msra.mxu0 0
      %632 = vmatprep.subr.bf16.mxu0 0
      %633 = vmatpush1.bf16.msra.mxu0 0
      %634 = vmatprep.subr.bf16.mxu0 0
      %635 = vmatpush1.bf16.msra.mxu0 0
      %636 = vmatprep.subr.bf16.mxu0 0
      %637 = vmatpush1.bf16.msra.mxu0 0
      %638 = vmatprep.subr.bf16.mxu0 0
      %639 = vmatpush1.bf16.msra.mxu0 0
      %640 = vmatprep.subr.bf16.mxu0 0
      %641 = vmatpush1.bf16.msra.mxu0 0
      %642 = vmatprep.subr.bf16.mxu0 0
      %643 = vmatpush1.bf16.msra.mxu0 0
      %644 = vmatprep.subr.bf16.mxu0 0
      %645 = vmatpush1.bf16.msra.mxu0 0
      %646 = vmatprep.subr.bf16.mxu0 0
      %647 = vmatpush1.bf16.msra.mxu0 0
      %648 = vmatprep.subr.bf16.mxu0 0
      %649 = vmatpush1.bf16.msra.mxu0 0
      %650 = vmatprep.subr.bf16.mxu0 0
      %651 = vmatpush1.bf16.msra.mxu0 0
      %652 = vmatprep.subr.bf16.mxu0 0
      %653 = vmatpush1.bf16.msra.mxu0 0
      %654 = vmatprep.mubr.bf16.mxu0 0
      %655 = vmatmul.mubr.bf16.gmra.mrb[0].mxu0 %v491
      %v656 = vpop.f32.mrb[0].mxu0
      %v657 = vadd.f32 %v316, %v656
      %v658 = vpop.f32.mrb[0].mxu0
      %v659 = vadd.f32 %v320, %v658
      %v660 = vpop.f32.mrb[0].mxu0
      %v661 = vadd.f32 %v316, %v660
      %v662 = vpop.f32.mrb[0].mxu0
      %v663 = vadd.f32 %v320, %v662
      %664 = vdwg.mxu0
      %vm665 = vcmp.ge.f32.partialorder %v528, 0.0
      %vm666 = vcmp.ge.f32.partialorder %v530, 0.0
      %vm667 = vcmp.ge.f32.partialorder %v571, 0.0
      %vm668 = vcmp.ge.f32.partialorder %v573, 0.0
      %vm669 = vcmp.ge.f32.partialorder %v614, 0.0
      %vm670 = vcmp.ge.f32.partialorder %v616, 0.0
      %vm671 = vcmp.ge.f32.partialorder %v657, 0.0
      %vm672 = vcmp.ge.f32.partialorder %v659, 0.0
      %vm673 = vcmp.ge.f32.partialorder %v532, 0.0
      %vm674 = vcmp.ge.f32.partialorder %v534, 0.0
      %vm675 = vcmp.ge.f32.partialorder %v575, 0.0
      %vm676 = vcmp.ge.f32.partialorder %v577, 0.0
      %vm677 = vcmp.ge.f32.partialorder %v618, 0.0
      %vm678 = vcmp.ge.f32.partialorder %v620, 0.0
      %vm679 = vcmp.ge.f32.partialorder %v661, 0.0
      %vm680 = vcmp.ge.f32.partialorder %v663, 0.0
      %v681 = vmul.f32 %v528, 0.2
      %v682 = vmul.f32 %v530, 0.2
      %v683 = vmul.f32 %v571, 0.2
      %v684 = vmul.f32 %v573, 0.2
      %v685 = vmul.f32 %v614, 0.2
      %v686 = vmul.f32 %v616, 0.2
      %v687 = vmul.f32 %v657, 0.2
      %v688 = vmul.f32 %v659, 0.2
      %v689 = vmul.f32 %v532, 0.2
      %v690 = vmul.f32 %v534, 0.2
      %v691 = vmul.f32 %v575, 0.2
      %v692 = vmul.f32 %v577, 0.2
      %v693 = vmul.f32 %v618, 0.2
      %v694 = vmul.f32 %v620, 0.2
      %v695 = vmul.f32 %v661, 0.2
      %v696 = vmul.f32 %v663, 0.2
      %v697 = vsel %vm665, %v528, %v681
      %v698 = vsel %vm666, %v530, %v682
      %v699 = vsel %vm667, %v571, %v683
      %v700 = vsel %vm668, %v573, %v684
      %v701 = vsel %vm669, %v614, %v685
      %v702 = vsel %vm670, %v616, %v686
      %v703 = vsel %vm671, %v657, %v687
      %v704 = vsel %vm672, %v659, %v688
      %v705 = vsel %vm673, %v532, %v689
      %v706 = vsel %vm674, %v534, %v690
      %v707 = vsel %vm675, %v575, %v691
      %v708 = vsel %vm676, %v577, %v692
      %v709 = vsel %vm677, %v618, %v693
      %v710 = vsel %vm678, %v620, %v694
      %v711 = vsel %vm679, %v661, %v695
      %v712 = vsel %vm680, %v663, %v696
      %v713 = vld [vmem:[%s3] sm:$0xff]
      %v715 = vlaneseq
      %v716 = vshrl.u32 %v715, 7
      %v717 = vsub.s32 0, %v716
      %v718 = vrot.slane %v713, %v717
      %v719 = vlaneseq
      %v720 = vshrl.u32 %v719, 7
      %v721 = vsub.s32 1, %v720
      %v722 = vrot.slane %v713, %v721
      %v723 = vlaneseq
      %v724 = vshrl.u32 %v723, 7
      %v725 = vsub.s32 2, %v724
      %v726 = vrot.slane %v713, %v725
      %v727 = vlaneseq
      %v728 = vshrl.u32 %v727, 7
      %v729 = vsub.s32 3, %v728
      %v730 = vrot.slane %v713, %v729
      %v731 = vlaneseq
      %v732 = vshrl.u32 %v731, 7
      %v733 = vsub.s32 4, %v732
      %v734 = vrot.slane %v713, %v733
      %v735 = vlaneseq
      %v736 = vshrl.u32 %v735, 7
      %v737 = vsub.s32 5, %v736
      %v738 = vrot.slane %v713, %v737
      %v739 = vlaneseq
      %v740 = vshrl.u32 %v739, 7
      %v741 = vsub.s32 6, %v740
      %v742 = vrot.slane %v713, %v741
      %v743 = vlaneseq
      %v744 = vshrl.u32 %v743, 7
      %v745 = vsub.s32 7, %v744
      %v746 = vrot.slane %v713, %v745
      %v755 = vmul.f32 %v697, %v718
      %v756 = vmul.f32 %v698, %v722
      %v757 = vmul.f32 %v699, %v726
      %v758 = vmul.f32 %v700, %v730
      %v759 = vmul.f32 %v701, %v734
      %v760 = vmul.f32 %v702, %v738
      %v761 = vmul.f32 %v703, %v742
      %v762 = vmul.f32 %v704, %v746
      %v763 = vmul.f32 %v705, %v718
      %v764 = vmul.f32 %v706, %v722
      %v765 = vmul.f32 %v707, %v726
      %v766 = vmul.f32 %v708, %v730
      %v767 = vmul.f32 %v709, %v734
      %v768 = vmul.f32 %v710, %v738
      %v769 = vmul.f32 %v711, %v742
      %v770 = vmul.f32 %v712, %v746
      %v771 = vld [vmem:[%s4] sm:$0xff]
      %v773 = vlaneseq
      %v774 = vshrl.u32 %v773, 7
      %v775 = vsub.s32 0, %v774
      %v776 = vrot.slane %v771, %v775
      %v777 = vlaneseq
      %v778 = vshrl.u32 %v777, 7
      %v779 = vsub.s32 1, %v778
      %v780 = vrot.slane %v771, %v779
      %v781 = vlaneseq
      %v782 = vshrl.u32 %v781, 7
      %v783 = vsub.s32 2, %v782
      %v784 = vrot.slane %v771, %v783
      %v785 = vlaneseq
      %v786 = vshrl.u32 %v785, 7
      %v787 = vsub.s32 3, %v786
      %v788 = vrot.slane %v771, %v787
      %v789 = vlaneseq
      %v790 = vshrl.u32 %v789, 7
      %v791 = vsub.s32 4, %v790
      %v792 = vrot.slane %v771, %v791
      %v793 = vlaneseq
      %v794 = vshrl.u32 %v793, 7
      %v795 = vsub.s32 5, %v794
      %v796 = vrot.slane %v771, %v795
      %v797 = vlaneseq
      %v798 = vshrl.u32 %v797, 7
      %v799 = vsub.s32 6, %v798
      %v800 = vrot.slane %v771, %v799
      %v801 = vlaneseq
      %v802 = vshrl.u32 %v801, 7
      %v803 = vsub.s32 7, %v802
      %v804 = vrot.slane %v771, %v803
      %v813 = vadd.f32 %v755, %v776
      %v814 = vadd.f32 %v756, %v780
      %v815 = vadd.f32 %v757, %v784
      %v816 = vadd.f32 %v758, %v788
      %v817 = vadd.f32 %v759, %v792
      %v818 = vadd.f32 %v760, %v796
      %v819 = vadd.f32 %v761, %v800
      %v820 = vadd.f32 %v762, %v804
      %v821 = vadd.f32 %v763, %v776
      %v822 = vadd.f32 %v764, %v780
      %v823 = vadd.f32 %v765, %v784
      %v824 = vadd.f32 %v766, %v788
      %v825 = vadd.f32 %v767, %v792
      %v826 = vadd.f32 %v768, %v796
      %v827 = vadd.f32 %v769, %v800
      %v828 = vadd.f32 %v770, %v804
      %v829 = vmax.f32 %v813, %v821
      %v830 = vrot.slane %v829, 4
      %v831 = vmax.f32 %v829, %v830
      %v832 = vrot.slane %v831, 2
      %v833 = vmax.f32 %v831, %v832
      %v834 = vrot.slane %v833, 1
      %v835 = vmax.f32 %v833, %v834
      %v836 = vmax.f32 %v814, %v822
      %v837 = vrot.slane %v836, 4
      %v838 = vmax.f32 %v836, %v837
      %v839 = vrot.slane %v838, 2
      %v840 = vmax.f32 %v838, %v839
      %v841 = vrot.slane %v840, 1
      %v842 = vmax.f32 %v840, %v841
      %v843 = vmax.f32 %v815, %v823
      %v844 = vrot.slane %v843, 4
      %v845 = vmax.f32 %v843, %v844
      %v846 = vrot.slane %v845, 2
      %v847 = vmax.f32 %v845, %v846
      %v848 = vrot.slane %v847, 1
      %v849 = vmax.f32 %v847, %v848
      %v850 = vmax.f32 %v816, %v824
      %v851 = vrot.slane %v850, 4
      %v852 = vmax.f32 %v850, %v851
      %v853 = vrot.slane %v852, 2
      %v854 = vmax.f32 %v852, %v853
      %v855 = vrot.slane %v854, 1
      %v856 = vmax.f32 %v854, %v855
      %v857 = vmax.f32 %v817, %v825
      %v858 = vrot.slane %v857, 4
      %v859 = vmax.f32 %v857, %v858
      %v860 = vrot.slane %v859, 2
      %v861 = vmax.f32 %v859, %v860
      %v862 = vrot.slane %v861, 1
      %v863 = vmax.f32 %v861, %v862
      %v864 = vmax.f32 %v818, %v826
      %v865 = vrot.slane %v864, 4
      %v866 = vmax.f32 %v864, %v865
      %v867 = vrot.slane %v866, 2
      %v868 = vmax.f32 %v866, %v867
      %v869 = vrot.slane %v868, 1
      %v870 = vmax.f32 %v868, %v869
      %v871 = vmax.f32 %v819, %v827
      %v872 = vrot.slane %v871, 4
      %v873 = vmax.f32 %v871, %v872
      %v874 = vrot.slane %v873, 2
      %v875 = vmax.f32 %v873, %v874
      %v876 = vrot.slane %v875, 1
      %v877 = vmax.f32 %v875, %v876
      %v878 = vmax.f32 %v820, %v828
      %v879 = vrot.slane %v878, 4
      %v880 = vmax.f32 %v878, %v879
      %v881 = vrot.slane %v880, 2
      %v882 = vmax.f32 %v880, %v881
      %v883 = vrot.slane %v882, 1
      %v884 = vmax.f32 %v882, %v883
      %p885 = scmp.eq.s32.totalorder %s21, 0
      // Predicated region
      $region41: #{dgn_forward.8} parent=39 // pred_check
        %p886 = pneg %p885
      $region42: #{dgn_forward.8} parent=39 // pred_check_branch
        %888 = sbr.rel (%p886) target = $region44
      $region43: #{dgn_forward.8} parent=39 // pred_region
        %v897 = vcombine.low %v835, %v842
        %v898 = vcombine.low %v849, %v856
        %v899 = vcombine.low %v863, %v870
        %v900 = vcombine.low %v877, %v884
        %v902 = vunpack.c.l.s4 1966171168
        %v903 = vunpack.c.0.s8 %v902
        %v904 = vlaneseq
        %v905 = vshrl.u32 %v904, 7
        %v906 = vsub.s32 %v903, %v905
        %v907 = vrot.slane %v897, %v906
        %v909 = vunpack.c.l.s4 1966171168
        %v910 = vunpack.c.0.s8 %v909
        %v911 = vlaneseq
        %v912 = vshrl.u32 %v911, 7
        %v913 = vsub.s32 %v910, %v912
        %v914 = vrot.slane %v898, %v913
        %v916 = vunpack.c.l.s4 1966171168
        %v917 = vunpack.c.0.s8 %v916
        %v918 = vlaneseq
        %v919 = vshrl.u32 %v918, 7
        %v920 = vsub.s32 %v917, %v919
        %v921 = vrot.slane %v899, %v920
        %v923 = vunpack.c.l.s4 1966171168
        %v924 = vunpack.c.0.s8 %v923
        %v925 = vlaneseq
        %v926 = vshrl.u32 %v925, 7
        %v927 = vsub.s32 %v924, %v926
        %v928 = vrot.slane %v900, %v927
        %v929 = vcombine.low %v907, %v914
        %v930 = vcombine.low %v921, %v928
        %v932 = vunpack.c.l.s4 1966171168
        %v933 = vunpack.c.0.s8 %v932
        %v934 = vlaneseq
        %v935 = vshrl.u32 %v934, 7
        %v936 = vsub.s32 %v933, %v935
        %v937 = vrot.slane %v929, %v936
        %v939 = vunpack.c.l.s4 1966171168
        %v940 = vunpack.c.0.s8 %v939
        %v941 = vlaneseq
        %v942 = vshrl.u32 %v941, 7
        %v943 = vsub.s32 %v940, %v942
        %v944 = vrot.slane %v930, %v943
        %v945 = vcombine.low %v937, %v944
        %947 = vst [vmem:[#allocation2] sm:$0xff] %v945
      $region44: #{dgn_forward.8} parent=39 // pred_fallthru
        _
      %p948 = scmp.gt.s32.totalorder %s21, 0
      // Predicated region
      $region45: #{dgn_forward.8} parent=39 // pred_check
        %p949 = pneg %p948
      $region46: #{dgn_forward.8} parent=39 // pred_check_branch
        %951 = sbr.rel (%p949) target = $region48
      $region47: #{dgn_forward.8} parent=39 // pred_region
        %v952 = vld [vmem:[#allocation2] sm:$0xff]
        %v961 = vcombine.low %v835, %v842
        %v962 = vcombine.low %v849, %v856
        %v963 = vcombine.low %v863, %v870
        %v964 = vcombine.low %v877, %v884
        %v966 = vunpack.c.l.s4 1966171168
        %v967 = vunpack.c.0.s8 %v966
        %v968 = vlaneseq
        %v969 = vshrl.u32 %v968, 7
        %v970 = vsub.s32 %v967, %v969
        %v971 = vrot.slane %v961, %v970
        %v973 = vunpack.c.l.s4 1966171168
        %v974 = vunpack.c.0.s8 %v973
        %v975 = vlaneseq
        %v976 = vshrl.u32 %v975, 7
        %v977 = vsub.s32 %v974, %v976
        %v978 = vrot.slane %v962, %v977
        %v980 = vunpack.c.l.s4 1966171168
        %v981 = vunpack.c.0.s8 %v980
        %v982 = vlaneseq
        %v983 = vshrl.u32 %v982, 7
        %v984 = vsub.s32 %v981, %v983
        %v985 = vrot.slane %v963, %v984
        %v987 = vunpack.c.l.s4 1966171168
        %v988 = vunpack.c.0.s8 %v987
        %v989 = vlaneseq
        %v990 = vshrl.u32 %v989, 7
        %v991 = vsub.s32 %v988, %v990
        %v992 = vrot.slane %v964, %v991
        %v993 = vcombine.low %v971, %v978
        %v994 = vcombine.low %v985, %v992
        %v996 = vunpack.c.l.s4 1966171168
        %v997 = vunpack.c.0.s8 %v996
        %v998 = vlaneseq
        %v999 = vshrl.u32 %v998, 7
        %v1000 = vsub.s32 %v997, %v999
        %v1001 = vrot.slane %v993, %v1000
        %v1003 = vunpack.c.l.s4 1966171168
        %v1004 = vunpack.c.0.s8 %v1003
        %v1005 = vlaneseq
        %v1006 = vshrl.u32 %v1005, 7
        %v1007 = vsub.s32 %v1004, %v1006
        %v1008 = vrot.slane %v994, %v1007
        %v1009 = vcombine.low %v1001, %v1008
        %v1011 = vmax.f32 %v952, %v1009
        %1012 = vst [vmem:[#allocation2] sm:$0xff] %v1011
      $region48: #{dgn_forward.8} parent=39 // pred_fallthru
        _
      // Predicated region
      $region49: #{dgn_forward.8} parent=39 // pred_check
        %p1013 = pneg %p885
      $region50: #{dgn_forward.8} parent=39 // pred_check_branch
        %1015 = sbr.rel (%p1013) target = $region52
      $region51: #{dgn_forward.8} parent=39 // pred_region
        %v1016 = vld [vmem:[#allocation2] sm:$0xff]
        %1017 = vst [vmem:[%s250] sm:$0xff] %v1016
      $region52: #{dgn_forward.8} parent=39 // pred_fallthru
        _
      %p1018 = scmp.lt.s32.totalorder %s20, 1
      %s1019 = scalar_select %p1018, %s20, 1
      %s1020 = smul.addr %s1019, 8
      %s1021 = scalar_lea.vmem %s5, %s1020
      // Predicated region
      $region53: #{dgn_forward.8} parent=39 // pred_check
        %p1022 = pneg %p158
      $region54: #{dgn_forward.8} parent=39 // pred_check_branch
        %1024 = sbr.rel (%p1022) target = $region56
      $region55: #{dgn_forward.8} parent=39 // pred_region
        _
      $region56: #{dgn_forward.8} parent=39 // pred_fallthru
        _
    $region40: #{dgn_forward.8} parent=5 // pred_fallthru
      _
    %p1025 = scmp.le.s32.totalorder 2, %s11
    // Predicated region
    $region57: #{dgn_forward.8} parent=5 // pred_check
      %p1026 = pneg %p1025
    $region58: #{dgn_forward.8} parent=5 // pred_check_branch
      %1028 = sbr.rel (%p1026) target = $region60
    $region59: #{dgn_forward.8} parent=5 // pred_region
      %s1029 = ssub.s32 %s11, 2
      // Predicated region
      $region61: #{dgn_forward.8} parent=59 // pred_check
        %p1030 = pneg %p164
      $region62: #{dgn_forward.8} parent=59 // pred_check_branch
        %1032 = sbr.rel (%p1030) target = $region64
      $region63: #{dgn_forward.8} parent=59 // pred_region
        %p1033 = scmp.lt.s32.totalorder %s22, 1
        %s1034 = scalar_select %p1033, %s22, 1
        %s1035 = smul.addr %s1034, 8
        %s1036 = scalar_lea.vmem %s5, %s1035
      $region64: #{dgn_forward.8} parent=59 // pred_fallthru
        _
    $region60: #{dgn_forward.8} parent=5 // pred_fallthru
      _
  $region6: #{dgn_forward.8} parent=0 // loop_footer
    %s15 = sadd.s32 1, %s11
  $region7: #{dgn_forward.8} parent=0 // loop_footer_branch
    %10 = sbr.rel target = $region3
  $region8: #{dgn_forward.8} parent=0 // loop_exit
    _

// kernel: dgn_forward.9
$region0: #{dgn_forward.9}
  #allocation0 [shape = 'u32[]', space=smem, size = 0x4, offset = 0x4, fixed_abs, tag = 'smem constant byte address 0x4 - core index']
  #allocation1 [shape = 'u32[144,128]{1,0:T(1,128)}', space=vmem, size = 0x12000, scoped, tag = 'internal scratch']
  %s0 = inlined_call_operand.vmem [shape: f32[2,16,64], index: 0, kind: input, shape index: {}]
  %s1 = inlined_call_operand.vmem [shape: f32[2,16,64], index: 1, kind: input, shape index: {}]
  %s2 = inlined_call_operand.vmem [shape: f32[2,1,1024], index: 2, kind: input, shape index: {}]
  %s3 = inlined_call_operand.vmem [shape: bf16[64,256], index: 3, kind: input, shape index: {}]
  %s4 = inlined_call_operand.vmem [shape: bf16[64,256], index: 4, kind: input, shape index: {}]
  %s5 = inlined_call_operand.vmem [shape: bf16[1024,256], index: 5, kind: input, shape index: {}]
  %s6 = inlined_call_operand.vmem [shape: f32[1,256], index: 6, kind: input, shape index: {}]
  %s7 = inlined_call_operand.vmem [shape: bf16[256,256], index: 7, kind: input, shape index: {}]
  %s8 = inlined_call_operand.vmem [shape: f32[1,256], index: 8, kind: input, shape index: {}]
  %s9 = inlined_call_operand.vmem [shape: bf16[256,128], index: 9, kind: input, shape index: {}]
  %s10 = inlined_call_operand.vmem [shape: f32[1,128], index: 10, kind: input, shape index: {}]
  %s11 = inlined_call_operand.vmem [shape: bf16[128,64], index: 11, kind: input, shape index: {}]
  %s12 = inlined_call_operand.vmem [shape: f32[1,64], index: 12, kind: input, shape index: {}]
  %s13 = inlined_call_operand.hbm [shape: f32[2,16,64], index: 13, kind: output, shape index: {}]
  %s14 = sld [smem:[#allocation0]]
  $region85: #{dgn_forward.9} parent=0
    _
  %s16 = ssub.s32 1, %s14
  %s17 = scalar_select 0, %s16, %s14
  $region1: #{dgn_forward.9} parent=0
    #allocation2 [shape = 'u8[16384]{0}', space=vmem, size = 0x4000, scoped, tag = 'output window, operand 0']
    #allocation3 [shape = 's32[2]{0}', space=sflag, size = 0x8, scoped, tag = 'scoped memory for dgn_forward.9']
    %18 = vsyncpa [#allocation3], 0
    %s19 = scalar_lea.sflag [#allocation3], 1
    %20 = vsyncpa %s19, 0
    loop: start=0, step=1, limit=4
    $region2: #{dgn_forward.9} parent=1 // loop_pre_header
      _
    $region3: #{dgn_forward.9} parent=1 // loop_header
      %s22 = sphi 0, %s26
      %p23 = scmp.ge.s32.totalorder %s22, 4
      %s29 = sphi 0, %s41
      %s30 = sphi 0, %s37
      %s31 = sphi 0, %s29
      %s32 = sphi 0, %s30
      %s33 = sphi 0, %s31
      %s34 = sphi 0, %s32
      %s46 = sphi 0, %s48
      %s49 = sphi 0, %s46
      %s50 = sphi 0, %s49
      %s66 = sphi 0, %s50
      %s74 = sphi 0, %s76
      %s77 = sphi 0, %s74
      %s78 = sphi 0, %s77
      %s94 = sphi 0, %s78
      %s100 = sphi 0, %s102
      %s103 = sphi 0, %s100
      %s104 = sphi 0, %s103
      %s120 = sphi 0, %s104
      %s124 = sphi 0, %s124
      %s126 = sphi 0, %s124
      %s127 = sphi 0, %s126
      %s141 = sphi 0, %s127
      %s145 = sphi 0, %s145
      %s147 = sphi 0, %s145
      %s148 = sphi 0, %s147
      %s162 = sphi 0, %s148
      %s166 = sphi 0, %s166
      %s168 = sphi 0, %s166
      %s169 = sphi 0, %s168
      %s183 = sphi 0, %s169
      %s187 = sphi 0, %s187
      %s189 = sphi 0, %s187
      %s190 = sphi 0, %s189
      %s204 = sphi 0, %s190
      %s208 = sphi 0, %s208
      %s210 = sphi 0, %s208
      %s211 = sphi 0, %s210
      %s225 = sphi 0, %s211
      %s229 = sphi 0, %s229
      %s231 = sphi 0, %s229
      %s232 = sphi 0, %s231
      %s246 = sphi 0, %s232
      %s250 = sphi 0, %s250
      %s252 = sphi 0, %s250
      %s253 = sphi 0, %s252
      %s267 = sphi 0, %s253
      %s271 = sphi 0, %s271
      %s273 = sphi 0, %s271
      %s274 = sphi 0, %s273
      %s288 = sphi 0, %s274
      %s292 = sphi 0, %s292
      %s294 = sphi 0, %s292
      %s295 = sphi 0, %s294
      %s309 = sphi 0, %s295
      %s313 = sphi 0, %s313
      %s315 = sphi 0, %s313
      %s316 = sphi 0, %s315
      %s330 = sphi 0, %s316
      %s338 = sphi 0, %s340
      %s341 = sphi 0, %s338
      %s342 = sphi 0, %s341
      %s358 = sphi 0, %s342
    $region4: #{dgn_forward.9} parent=1 // loop_header_branch
      %25 = sbr.rel (%p23) target = $region8
    $region5: #{dgn_forward.9} parent=1 // loop_body
      %s27 = ssub.s32 %s22, 1
      %s28 = ssub.s32 %s22, 2
      %s35 = sadd.s32 1, %s30
      %p36 = scmp.ge.s32.totalorder %s35, 1
      %s37 = scalar_select %p36, 0, %s35
      %s38 = sadd.s32 1, %s29
      %s39 = scalar_select %p36, %s38, %s29
      %p40 = scmp.ge.s32.totalorder %s39, 2
      %s41 = scalar_select %p40, 0, %s39
      %s42 = ssub.s32 %s29, %s41
      %s43 = ssub.s32 %s30, %s37
      %s44 = sor.u32 %s42, %s43
      %p45 = scmp.eq.s32.totalorder %s44, 0
      %s47 = sadd.s32 %s46, 1
      %s48 = scalar_select %p45, %s46, %s47
      %p51 = pneg %p45
      %p52 = scmp.eq.s32.totalorder %s22, 1
      %p53 = por %p51, %p52
      %p54 = scmp.ne.s32.totalorder %s46, %s49
      %p55 = scmp.eq.s32.totalorder %s22, 0
      %p56 = por %p54, %p55
      %p57 = scmp.ne.s32.totalorder %s46, %s49
      %p58 = scmp.eq.s32.totalorder %s27, 1
      %p59 = por %p57, %p58
      %p60 = scmp.ne.s32.totalorder %s49, %s50
      %p61 = scmp.eq.s32.totalorder %s27, 0
      %p62 = por %p60, %p61
      %p63 = scmp.ne.s32.totalorder %s49, %s50
      %p64 = scmp.eq.s32.totalorder %s28, 1
      %p65 = por %p63, %p64
      %p67 = scmp.ne.s32.totalorder %s50, %s66
      %p68 = scmp.eq.s32.totalorder %s28, 0
      %p69 = por %p67, %p68
      %s70 = ssub.s32 %s29, %s41
      %s71 = ssub.s32 %s30, %s37
      %s72 = sor.u32 %s70, %s71
      %p73 = scmp.eq.s32.totalorder %s72, 0
      %s75 = sadd.s32 %s74, 1
      %s76 = scalar_select %p73, %s74, %s75
      %p79 = pneg %p73
      %p80 = scmp.eq.s32.totalorder %s22, 1
      %p81 = por %p79, %p80
      %p82 = scmp.ne.s32.totalorder %s74, %s77
      %p83 = scmp.eq.s32.totalorder %s22, 0
      %p84 = por %p82, %p83
      %p85 = scmp.ne.s32.totalorder %s74, %s77
      %p86 = scmp.eq.s32.totalorder %s27, 1
      %p87 = por %p85, %p86
      %p88 = scmp.ne.s32.totalorder %s77, %s78
      %p89 = scmp.eq.s32.totalorder %s27, 0
      %p90 = por %p88, %p89
      %p91 = scmp.ne.s32.totalorder %s77, %s78
      %p92 = scmp.eq.s32.totalorder %s28, 1
      %p93 = por %p91, %p92
      %p95 = scmp.ne.s32.totalorder %s78, %s94
      %p96 = scmp.eq.s32.totalorder %s28, 0
      %p97 = por %p95, %p96
      %s98 = ssub.s32 %s29, %s41
      %p99 = scmp.eq.s32.totalorder %s98, 0
      %s101 = sadd.s32 %s100, 1
      %s102 = scalar_select %p99, %s100, %s101
      %p105 = pneg %p99
      %p106 = scmp.eq.s32.totalorder %s22, 1
      %p107 = por %p105, %p106
      %p108 = scmp.ne.s32.totalorder %s100, %s103
      %p109 = scmp.eq.s32.totalorder %s22, 0
      %p110 = por %p108, %p109
      %p111 = scmp.ne.s32.totalorder %s100, %s103
      %p112 = scmp.eq.s32.totalorder %s27, 1
      %p113 = por %p111, %p112
      %p114 = scmp.ne.s32.totalorder %s103, %s104
      %p115 = scmp.eq.s32.totalorder %s27, 0
      %p116 = por %p114, %p115
      %p117 = scmp.ne.s32.totalorder %s103, %s104
      %p118 = scmp.eq.s32.totalorder %s28, 1
      %p119 = por %p117, %p118
      %p121 = scmp.ne.s32.totalorder %s104, %s120
      %p122 = scmp.eq.s32.totalorder %s28, 0
      %p123 = por %p121, %p122
      %s125 = sadd.s32 %s124, 1
      %p128 = scmp.eq.s32.totalorder %s22, 1
      %p129 = scmp.ne.s32.totalorder %s124, %s126
      %p130 = scmp.eq.s32.totalorder %s22, 0
      %p131 = por %p129, %p130
      %p132 = scmp.ne.s32.totalorder %s124, %s126
      %p133 = scmp.eq.s32.totalorder %s27, 1
      %p134 = por %p132, %p133
      %p135 = scmp.ne.s32.totalorder %s126, %s127
      %p136 = scmp.eq.s32.totalorder %s27, 0
      %p137 = por %p135, %p136
      %p138 = scmp.ne.s32.totalorder %s126, %s127
      %p139 = scmp.eq.s32.totalorder %s28, 1
      %p140 = por %p138, %p139
      %p142 = scmp.ne.s32.totalorder %s127, %s141
      %p143 = scmp.eq.s32.totalorder %s28, 0
      %p144 = por %p142, %p143
      %s146 = sadd.s32 %s145, 1
      %p149 = scmp.eq.s32.totalorder %s22, 1
      %p150 = scmp.ne.s32.totalorder %s145, %s147
      %p151 = scmp.eq.s32.totalorder %s22, 0
      %p152 = por %p150, %p151
      %p153 = scmp.ne.s32.totalorder %s145, %s147
      %p154 = scmp.eq.s32.totalorder %s27, 1
      %p155 = por %p153, %p154
      %p156 = scmp.ne.s32.totalorder %s147, %s148
      %p157 = scmp.eq.s32.totalorder %s27, 0
      %p158 = por %p156, %p157
      %p159 = scmp.ne.s32.totalorder %s147, %s148
      %p160 = scmp.eq.s32.totalorder %s28, 1
      %p161 = por %p159, %p160
      %p163 = scmp.ne.s32.totalorder %s148, %s162
      %p164 = scmp.eq.s32.totalorder %s28, 0
      %p165 = por %p163, %p164
      %s167 = sadd.s32 %s166, 1
      %p170 = scmp.eq.s32.totalorder %s22, 1
      %p171 = scmp.ne.s32.totalorder %s166, %s168
      %p172 = scmp.eq.s32.totalorder %s22, 0
      %p173 = por %p171, %p172
      %p174 = scmp.ne.s32.totalorder %s166, %s168
      %p175 = scmp.eq.s32.totalorder %s27, 1
      %p176 = por %p174, %p175
      %p177 = scmp.ne.s32.totalorder %s168, %s169
      %p178 = scmp.eq.s32.totalorder %s27, 0
      %p179 = por %p177, %p178
      %p180 = scmp.ne.s32.totalorder %s168, %s169
      %p181 = scmp.eq.s32.totalorder %s28, 1
      %p182 = por %p180, %p181
      %p184 = scmp.ne.s32.totalorder %s169, %s183
      %p185 = scmp.eq.s32.totalorder %s28, 0
      %p186 = por %p184, %p185
      %s188 = sadd.s32 %s187, 1
      %p191 = scmp.eq.s32.totalorder %s22, 1
      %p192 = scmp.ne.s32.totalorder %s187, %s189
      %p193 = scmp.eq.s32.totalorder %s22, 0
      %p194 = por %p192, %p193
      %p195 = scmp.ne.s32.totalorder %s187, %s189
      %p196 = scmp.eq.s32.totalorder %s27, 1
      %p197 = por %p195, %p196
      %p198 = scmp.ne.s32.totalorder %s189, %s190
      %p199 = scmp.eq.s32.totalorder %s27, 0
      %p200 = por %p198, %p199
      %p201 = scmp.ne.s32.totalorder %s189, %s190
      %p202 = scmp.eq.s32.totalorder %s28, 1
      %p203 = por %p201, %p202
      %p205 = scmp.ne.s32.totalorder %s190, %s204
      %p206 = scmp.eq.s32.totalorder %s28, 0
      %p207 = por %p205, %p206
      %s209 = sadd.s32 %s208, 1
      %p212 = scmp.eq.s32.totalorder %s22, 1
      %p213 = scmp.ne.s32.totalorder %s208, %s210
      %p214 = scmp.eq.s32.totalorder %s22, 0
      %p215 = por %p213, %p214
      %p216 = scmp.ne.s32.totalorder %s208, %s210
      %p217 = scmp.eq.s32.totalorder %s27, 1
      %p218 = por %p216, %p217
      %p219 = scmp.ne.s32.totalorder %s210, %s211
      %p220 = scmp.eq.s32.totalorder %s27, 0
      %p221 = por %p219, %p220
      %p222 = scmp.ne.s32.totalorder %s210, %s211
      %p223 = scmp.eq.s32.totalorder %s28, 1
      %p224 = por %p222, %p223
      %p226 = scmp.ne.s32.totalorder %s211, %s225
      %p227 = scmp.eq.s32.totalorder %s28, 0
      %p228 = por %p226, %p227
      %s230 = sadd.s32 %s229, 1
      %p233 = scmp.eq.s32.totalorder %s22, 1
      %p234 = scmp.ne.s32.totalorder %s229, %s231
      %p235 = scmp.eq.s32.totalorder %s22, 0
      %p236 = por %p234, %p235
      %p237 = scmp.ne.s32.totalorder %s229, %s231
      %p238 = scmp.eq.s32.totalorder %s27, 1
      %p239 = por %p237, %p238
      %p240 = scmp.ne.s32.totalorder %s231, %s232
      %p241 = scmp.eq.s32.totalorder %s27, 0
      %p242 = por %p240, %p241
      %p243 = scmp.ne.s32.totalorder %s231, %s232
      %p244 = scmp.eq.s32.totalorder %s28, 1
      %p245 = por %p243, %p244
      %p247 = scmp.ne.s32.totalorder %s232, %s246
      %p248 = scmp.eq.s32.totalorder %s28, 0
      %p249 = por %p247, %p248
      %s251 = sadd.s32 %s250, 1
      %p254 = scmp.eq.s32.totalorder %s22, 1
      %p255 = scmp.ne.s32.totalorder %s250, %s252
      %p256 = scmp.eq.s32.totalorder %s22, 0
      %p257 = por %p255, %p256
      %p258 = scmp.ne.s32.totalorder %s250, %s252
      %p259 = scmp.eq.s32.totalorder %s27, 1
      %p260 = por %p258, %p259
      %p261 = scmp.ne.s32.totalorder %s252, %s253
      %p262 = scmp.eq.s32.totalorder %s27, 0
      %p263 = por %p261, %p262
      %p264 = scmp.ne.s32.totalorder %s252, %s253
      %p265 = scmp.eq.s32.totalorder %s28, 1
      %p266 = por %p264, %p265
      %p268 = scmp.ne.s32.totalorder %s253, %s267
      %p269 = scmp.eq.s32.totalorder %s28, 0
      %p270 = por %p268, %p269
      %s272 = sadd.s32 %s271, 1
      %p275 = scmp.eq.s32.totalorder %s22, 1
      %p276 = scmp.ne.s32.totalorder %s271, %s273
      %p277 = scmp.eq.s32.totalorder %s22, 0
      %p278 = por %p276, %p277
      %p279 = scmp.ne.s32.totalorder %s271, %s273
      %p280 = scmp.eq.s32.totalorder %s27, 1
      %p281 = por %p279, %p280
      %p282 = scmp.ne.s32.totalorder %s273, %s274
      %p283 = scmp.eq.s32.totalorder %s27, 0
      %p284 = por %p282, %p283
      %p285 = scmp.ne.s32.totalorder %s273, %s274
      %p286 = scmp.eq.s32.totalorder %s28, 1
      %p287 = por %p285, %p286
      %p289 = scmp.ne.s32.totalorder %s274, %s288
      %p290 = scmp.eq.s32.totalorder %s28, 0
      %p291 = por %p289, %p290
      %s293 = sadd.s32 %s292, 1
      %p296 = scmp.eq.s32.totalorder %s22, 1
      %p297 = scmp.ne.s32.totalorder %s292, %s294
      %p298 = scmp.eq.s32.totalorder %s22, 0
      %p299 = por %p297, %p298
      %p300 = scmp.ne.s32.totalorder %s292, %s294
      %p301 = scmp.eq.s32.totalorder %s27, 1
      %p302 = por %p300, %p301
      %p303 = scmp.ne.s32.totalorder %s294, %s295
      %p304 = scmp.eq.s32.totalorder %s27, 0
      %p305 = por %p303, %p304
      %p306 = scmp.ne.s32.totalorder %s294, %s295
      %p307 = scmp.eq.s32.totalorder %s28, 1
      %p308 = por %p306, %p307
      %p310 = scmp.ne.s32.totalorder %s295, %s309
      %p311 = scmp.eq.s32.totalorder %s28, 0
      %p312 = por %p310, %p311
      %s314 = sadd.s32 %s313, 1
      %p317 = scmp.eq.s32.totalorder %s22, 1
      %p318 = scmp.ne.s32.totalorder %s313, %s315
      %p319 = scmp.eq.s32.totalorder %s22, 0
      %p320 = por %p318, %p319
      %p321 = scmp.ne.s32.totalorder %s313, %s315
      %p322 = scmp.eq.s32.totalorder %s27, 1
      %p323 = por %p321, %p322
      %p324 = scmp.ne.s32.totalorder %s315, %s316
      %p325 = scmp.eq.s32.totalorder %s27, 0
      %p326 = por %p324, %p325
      %p327 = scmp.ne.s32.totalorder %s315, %s316
      %p328 = scmp.eq.s32.totalorder %s28, 1
      %p329 = por %p327, %p328
      %p331 = scmp.ne.s32.totalorder %s316, %s330
      %p332 = scmp.eq.s32.totalorder %s28, 0
      %p333 = por %p331, %p332
      %s334 = ssub.s32 %s29, %s41
      %s335 = ssub.s32 %s30, %s37
      %s336 = sor.u32 %s334, %s335
      %p337 = scmp.eq.s32.totalorder %s336, 0
      %s339 = sadd.s32 %s338, 1
      %s340 = scalar_select %p337, %s338, %s339
      %p343 = pneg %p337
      %p344 = scmp.eq.s32.totalorder %s22, 1
      %p345 = por %p343, %p344
      %p346 = scmp.ne.s32.totalorder %s338, %s341
      %p347 = scmp.eq.s32.totalorder %s22, 0
      %p348 = por %p346, %p347
      %p349 = scmp.ne.s32.totalorder %s338, %s341
      %p350 = scmp.eq.s32.totalorder %s27, 1
      %p351 = por %p349, %p350
      %p352 = scmp.ne.s32.totalorder %s341, %s342
      %p353 = scmp.eq.s32.totalorder %s27, 0
      %p354 = por %p352, %p353
      %p355 = scmp.ne.s32.totalorder %s341, %s342
      %p356 = scmp.eq.s32.totalorder %s28, 1
      %p357 = por %p355, %p356
      %p359 = scmp.ne.s32.totalorder %s342, %s358
      %p360 = scmp.eq.s32.totalorder %s28, 0
      %p361 = por %p359, %p360
      %p362 = scmp.le.s32.totalorder 1, %s22
      %p363 = scmp.lt.s32.totalorder %s22, 3
      %p364 = pnand %p362, %p363
      %p365 = pneg %p364
      // Predicated region
      $region9: #{dgn_forward.9} parent=5 // pred_check
        _
      $region10: #{dgn_forward.9} parent=5 // pred_check_branch
        %367 = sbr.rel (%p364) target = $region12
      $region11: #{dgn_forward.9} parent=5 // pred_region
        %s368 = ssub.s32 %s22, 1
        // Predicated region
        $region13: #{dgn_forward.9} parent=11 // pred_check
          %p369 = pneg %p137
        $region14: #{dgn_forward.9} parent=11 // pred_check_branch
          %371 = sbr.rel (%p369) target = $region16
        $region15: #{dgn_forward.9} parent=11 // pred_region
          _
        $region16: #{dgn_forward.9} parent=11 // pred_fallthru
          _
        // Predicated region
        $region17: #{dgn_forward.9} parent=11 // pred_check
          %p372 = pneg %p158
        $region18: #{dgn_forward.9} parent=11 // pred_check_branch
          %374 = sbr.rel (%p372) target = $region20
        $region19: #{dgn_forward.9} parent=11 // pred_region
          _
        $region20: #{dgn_forward.9} parent=11 // pred_fallthru
          _
        // Predicated region
        $region21: #{dgn_forward.9} parent=11 // pred_check
          %p375 = pneg %p179
        $region22: #{dgn_forward.9} parent=11 // pred_check_branch
          %377 = sbr.rel (%p375) target = $region24
        $region23: #{dgn_forward.9} parent=11 // pred_region
          _
        $region24: #{dgn_forward.9} parent=11 // pred_fallthru
          _
        // Predicated region
        $region25: #{dgn_forward.9} parent=11 // pred_check
          %p378 = pneg %p200
        $region26: #{dgn_forward.9} parent=11 // pred_check_branch
          %380 = sbr.rel (%p378) target = $region28
        $region27: #{dgn_forward.9} parent=11 // pred_region
          _
        $region28: #{dgn_forward.9} parent=11 // pred_fallthru
          _
        // Predicated region
        $region29: #{dgn_forward.9} parent=11 // pred_check
          %p381 = pneg %p221
        $region30: #{dgn_forward.9} parent=11 // pred_check_branch
          %383 = sbr.rel (%p381) target = $region32
        $region31: #{dgn_forward.9} parent=11 // pred_region
          _
        $region32: #{dgn_forward.9} parent=11 // pred_fallthru
          _
        // Predicated region
        $region33: #{dgn_forward.9} parent=11 // pred_check
          %p384 = pneg %p242
        $region34: #{dgn_forward.9} parent=11 // pred_check_branch
          %386 = sbr.rel (%p384) target = $region36
        $region35: #{dgn_forward.9} parent=11 // pred_region
          _
        $region36: #{dgn_forward.9} parent=11 // pred_fallthru
          _
        // Predicated region
        $region37: #{dgn_forward.9} parent=11 // pred_check
          %p387 = pneg %p263
        $region38: #{dgn_forward.9} parent=11 // pred_check_branch
          %389 = sbr.rel (%p387) target = $region40
        $region39: #{dgn_forward.9} parent=11 // pred_region
          _
        $region40: #{dgn_forward.9} parent=11 // pred_fallthru
          _
        // Predicated region
        $region41: #{dgn_forward.9} parent=11 // pred_check
          %p390 = pneg %p284
        $region42: #{dgn_forward.9} parent=11 // pred_check_branch
          %392 = sbr.rel (%p390) target = $region44
        $region43: #{dgn_forward.9} parent=11 // pred_region
          _
        $region44: #{dgn_forward.9} parent=11 // pred_fallthru
          _
        // Predicated region
        $region45: #{dgn_forward.9} parent=11 // pred_check
          %p393 = pneg %p305
        $region46: #{dgn_forward.9} parent=11 // pred_check_branch
          %395 = sbr.rel (%p393) target = $region48
        $region47: #{dgn_forward.9} parent=11 // pred_region
          _
        $region48: #{dgn_forward.9} parent=11 // pred_fallthru
          _
        // Predicated region
        $region49: #{dgn_forward.9} parent=11 // pred_check
          %p396 = pneg %p326
        $region50: #{dgn_forward.9} parent=11 // pred_check_branch
          %398 = sbr.rel (%p396) target = $region52
        $region51: #{dgn_forward.9} parent=11 // pred_region
          _
        $region52: #{dgn_forward.9} parent=11 // pred_fallthru
          _
      $region12: #{dgn_forward.9} parent=5 // pred_fallthru
        _
      %p399 = scmp.lt.s32.totalorder %s22, 2
      // Predicated region
      $region53: #{dgn_forward.9} parent=5 // pred_check
        %p400 = pneg %p399
      $region54: #{dgn_forward.9} parent=5 // pred_check_branch
        %402 = sbr.rel (%p400) target = $region56
      $region55: #{dgn_forward.9} parent=5 // pred_region
        // Predicated region
        $region57: #{dgn_forward.9} parent=55 // pred_check
          %p403 = pneg %p56
        $region58: #{dgn_forward.9} parent=55 // pred_check_branch
          %405 = sbr.rel (%p403) target = $region60
        $region59: #{dgn_forward.9} parent=55 // pred_region
          %s406 = smul.u32 2, %s30
          %p407 = scmp.lt.s32.totalorder %s29, 1
          %s408 = scalar_select %p407, %s29, 1
          %p409 = scmp.lt.s32.totalorder %s406, 1
          %s410 = scalar_select %p409, %s406, 1
          %s411 = smul.addr %s408, 2
          %s412 = sadd.s32 %s410, %s411
          %s413 = smul.addr %s412, 8
          %s414 = scalar_lea.vmem %s0, %s413
          %s415 = smul.u32 2, %s30
        $region60: #{dgn_forward.9} parent=55 // pred_fallthru
          _
        // Predicated region
        $region61: #{dgn_forward.9} parent=55 // pred_check
          %p416 = pneg %p84
        $region62: #{dgn_forward.9} parent=55 // pred_check_branch
          %418 = sbr.rel (%p416) target = $region64
        $region63: #{dgn_forward.9} parent=55 // pred_region
          %s419 = smul.u32 2, %s30
          %p420 = scmp.lt.s32.totalorder %s29, 1
          %s421 = scalar_select %p420, %s29, 1
          %p422 = scmp.lt.s32.totalorder %s419, 1
          %s423 = scalar_select %p422, %s419, 1
          %s424 = smul.addr %s421, 2
          %s425 = sadd.s32 %s423, %s424
          %s426 = smul.addr %s425, 8
          %s427 = scalar_lea.vmem %s1, %s426
          %s428 = smul.u32 2, %s30
        $region64: #{dgn_forward.9} parent=55 // pred_fallthru
          _
        // Predicated region
        $region65: #{dgn_forward.9} parent=55 // pred_check
          %p429 = pneg %p110
        $region66: #{dgn_forward.9} parent=55 // pred_check_branch
          %431 = sbr.rel (%p429) target = $region68
        $region67: #{dgn_forward.9} parent=55 // pred_region
          %p432 = scmp.lt.s32.totalorder %s29, 1
          %s433 = scalar_select %p432, %s29, 1
          %s434 = smul.addr %s433, 8
          %s435 = scalar_lea.vmem %s2, %s434
        $region68: #{dgn_forward.9} parent=55 // pred_fallthru
          _
      $region56: #{dgn_forward.9} parent=5 // pred_fallthru
        _
      %p436 = scmp.le.s32.totalorder 1, %s22
      %p437 = scmp.lt.s32.totalorder %s22, 3
      %p438 = pnand %p436, %p437
      %p439 = pneg %p438
      // Predicated region
      $region69: #{dgn_forward.9} parent=5 // pred_check
        _
      $region70: #{dgn_forward.9} parent=5 // pred_check_branch
        %441 = sbr.rel (%p438) target = $region72
      $region71: #{dgn_forward.9} parent=5 // pred_region
        %s442 = ssub.s32 %s22, 1
        %s443 = smul.u32 2, %s32
        %p444 = scmp.lt.s32.totalorder %s31, 1
        %s445 = scalar_select %p444, %s31, 1
        %p446 = scmp.lt.s32.totalorder %s443, 1
        %s447 = scalar_select %p446, %s443, 1
        %s448 = smul.addr %s445, 2
        %s449 = sadd.s32 %s447, %s448
        %s450 = smul.addr %s449, 8
        %s451 = scalar_lea.vmem %s0, %s450
        %p452 = pneg %p62
        %p453 = pneg %p59
        %s454 = smul.u32 2, %s32
        %p455 = scmp.lt.s32.totalorder %s31, 1
        %s456 = scalar_select %p455, %s31, 1
        %p457 = scmp.lt.s32.totalorder %s454, 1
        %s458 = scalar_select %p457, %s454, 1
        %s459 = smul.addr %s456, 2
        %s460 = sadd.s32 %s458, %s459
        %s461 = smul.addr %s460, 8
        %s462 = scalar_lea.vmem %s1, %s461
        %p463 = pneg %p90
        %p464 = pneg %p87
        %p465 = scmp.lt.s32.totalorder %s31, 1
        %s466 = scalar_select %p465, %s31, 1
        %s467 = smul.addr %s466, 8
        %s468 = scalar_lea.vmem %s2, %s467
        %p469 = pneg %p116
        %p470 = pneg %p113
        %p471 = pneg %p137
        %p472 = pneg %p134
        %p473 = pneg %p158
        %p474 = pneg %p155
        %p475 = pneg %p179
        %p476 = pneg %p176
        %p477 = pneg %p200
        %p478 = pneg %p197
        %p479 = pneg %p221
        %p480 = pneg %p218
        %p481 = pneg %p242
        %p482 = pneg %p239
        %p483 = pneg %p263
        %p484 = pneg %p260
        %p485 = pneg %p284
        %p486 = pneg %p281
        %p487 = pneg %p305
        %p488 = pneg %p302
        %p489 = pneg %p326
        %p490 = pneg %p323
        %p491 = pneg %p354
        %p492 = pneg %p351
        %s493 = sand.u32 %s341, 1
        %s494 = scalar_lea.sflag [#allocation3], %s493
        %s495 = sand.u32 %s341, 1
        %s496 = smul.addr %s495, 16
        %s497 = scalar_lea.vmem [#allocation2], %s496
        %s498 = smul.u32 2, %s32
        %p499 = scmp.lt.s32.totalorder %s31, 1
        %s500 = scalar_select %p499, %s31, 1
        %p501 = scmp.lt.s32.totalorder %s498, 1
        %s502 = scalar_select %p501, %s498, 1
        %s503 = smul.addr %s500, 2
        %s504 = sadd.s32 %s502, %s503
        %s505 = smul.addr %s504, 8
        %s506 = scalar_lea.vmem %s0, %s505
        %s507 = smul.u32 2, %s32
        %s508 = smul.u32 2, %s32
        %p509 = scmp.lt.s32.totalorder %s31, 1
        %s510 = scalar_select %p509, %s31, 1
        %p511 = scmp.lt.s32.totalorder %s508, 1
        %s512 = scalar_select %p511, %s508, 1
        %s513 = smul.addr %s510, 2
        %s514 = sadd.s32 %s512, %s513
        %s515 = smul.addr %s514, 8
        %s516 = scalar_lea.vmem %s1, %s515
        %s517 = smul.u32 2, %s32
        %p518 = scmp.lt.s32.totalorder %s31, 1
        %s519 = scalar_select %p518, %s31, 1
        %s520 = smul.addr %s519, 8
        %s521 = scalar_lea.vmem %s2, %s520
        %s522 = smul.u32 2, %s32
        %v524 = vld [vmem:[%s506] sm:$0xff]
        %v525 = vld [vmem:[%s506 + $0x8] sm:$0xff]
        %v526 = vpack.c.bf16 %v525, %v524
        %v527 = vld [vmem:[%s3] sm:$0xff]
        %v528 = vld [vmem:[%s3 + $0x8] sm:$0xff]
        %v529 = vld [vmem:[%s3 + $0x10] sm:$0xff]
        %v530 = vld [vmem:[%s3 + $0x18] sm:$0xff]
        %v531 = vld [vmem:[%s3 + $0x20] sm:$0xff]
        %v532 = vld [vmem:[%s3 + $0x28] sm:$0xff]
        %v533 = vld [vmem:[%s3 + $0x30] sm:$0xff]
        %v534 = vld [vmem:[%s3 + $0x38] sm:$0xff]
        %v535 = vld [vmem:[%s516] sm:$0xff]
        %v536 = vld [vmem:[%s516 + $0x8] sm:$0xff]
        %v537 = vpack.c.bf16 %v536, %v535
        %v538 = vld [vmem:[%s4] sm:$0xff]
        %v539 = vld [vmem:[%s4 + $0x8] sm:$0xff]
        %v540 = vld [vmem:[%s4 + $0x10] sm:$0xff]
        %v541 = vld [vmem:[%s4 + $0x18] sm:$0xff]
        %v542 = vld [vmem:[%s4 + $0x20] sm:$0xff]
        %v543 = vld [vmem:[%s4 + $0x28] sm:$0xff]
        %v544 = vld [vmem:[%s4 + $0x30] sm:$0xff]
        %v545 = vld [vmem:[%s4 + $0x38] sm:$0xff]
        %v554 = vunpack.c.l.b16 %v538
        %v555 = vunpack.c.h.b16 %v538
        %v556 = vunpack.c.l.b16 %v539
        %v557 = vunpack.c.h.b16 %v539
        %v558 = vunpack.c.l.b16 %v540
        %v559 = vunpack.c.h.b16 %v540
        %v560 = vunpack.c.l.b16 %v541
        %v561 = vunpack.c.h.b16 %v541
        %v562 = vunpack.c.l.b16 %v542
        %v563 = vunpack.c.h.b16 %v542
        %v564 = vunpack.c.l.b16 %v543
        %v565 = vunpack.c.h.b16 %v543
        %v566 = vunpack.c.l.b16 %v544
        %v567 = vunpack.c.h.b16 %v544
        %v568 = vunpack.c.l.b16 %v545
        %v569 = vunpack.c.h.b16 %v545
        %v570 = vpack.c.b16 %v556, %v554
        %v571 = vpack.c.b16 %v557, %v555
        %v572 = vpack.c.b16 %v560, %v558
        %v573 = vpack.c.b16 %v561, %v559
        %v574 = vpack.c.b16 %v564, %v562
        %v575 = vpack.c.b16 %v565, %v563
        %v576 = vpack.c.b16 %v568, %v566
        %v577 = vpack.c.b16 %v569, %v567
        %vm586 = vcmask 523264
        %v588 = vsel %vm586, %v537, 0
        %590 = vmatprep.subr.bf16.mxu0 %v571
        %591 = vmatpush1.bf16.msra.mxu0 %v570
        %592 = vmatprep.subr.bf16.mxu0 %v573
        %593 = vmatpush1.bf16.msra.mxu0 %v572
        %594 = vmatprep.subr.bf16.mxu0 %v575
        %595 = vmatpush1.bf16.msra.mxu0 %v574
        %596 = vmatprep.subr.bf16.mxu0 %v577
        %597 = vmatpush1.bf16.msra.mxu0 %v576
        %598 = vmatprep.subr.bf16.mxu0 0
        %599 = vmatpush1.bf16.msra.mxu0 0
        %600 = vmatprep.subr.bf16.mxu0 0
        %601 = vmatpush1.bf16.msra.mxu0 0
        %602 = vmatprep.subr.bf16.mxu0 0
        %603 = vmatpush1.bf16.msra.mxu0 0
        %604 = vmatprep.subr.bf16.mxu0 0
        %605 = vmatpush1.bf16.msra.mxu0 0
        %606 = vmatprep.subr.bf16.mxu0 0
        %607 = vmatpush1.bf16.msra.mxu0 0
        %608 = vmatprep.subr.bf16.mxu0 0
        %609 = vmatpush1.bf16.msra.mxu0 0
        %610 = vmatprep.subr.bf16.mxu0 0
        %611 = vmatpush1.bf16.msra.mxu0 0
        %612 = vmatprep.subr.bf16.mxu0 0
        %613 = vmatpush1.bf16.msra.mxu0 0
        %614 = vmatprep.subr.bf16.mxu0 0
        %615 = vmatpush1.bf16.msra.mxu0 0
        %616 = vmatprep.subr.bf16.mxu0 0
        %617 = vmatpush1.bf16.msra.mxu0 0
        %618 = vmatprep.subr.bf16.mxu0 0
        %619 = vmatpush1.bf16.msra.mxu0 0
        %620 = vmatprep.subr.bf16.mxu0 0
        %621 = vmatpush1.bf16.msra.mxu0 0
        %622 = vmatprep.mubr.bf16.mxu0 0
        %623 = vmatmul.mubr.bf16.gmra.mrb[0].mxu0 %v588
        %v624 = vpop.f32.mrb[0].mxu0
        %v625 = vadd.f32 0.0, %v624
        %v626 = vpop.f32.mrb[0].mxu0
        %v627 = vadd.f32 0.0, %v626
        %v628 = vpop.f32.mrb[0].mxu0
        %v629 = vadd.f32 0.0, %v628
        %v630 = vpop.f32.mrb[0].mxu0
        %v631 = vadd.f32 0.0, %v630
        %632 = vdwg.mxu0
        %v641 = vunpack.c.l.b16 %v527
        %v642 = vunpack.c.h.b16 %v527
        %v643 = vunpack.c.l.b16 %v528
        %v644 = vunpack.c.h.b16 %v528
        %v645 = vunpack.c.l.b16 %v529
        %v646 = vunpack.c.h.b16 %v529
        %v647 = vunpack.c.l.b16 %v530
        %v648 = vunpack.c.h.b16 %v530
        %v649 = vunpack.c.l.b16 %v531
        %v650 = vunpack.c.h.b16 %v531
        %v651 = vunpack.c.l.b16 %v532
        %v652 = vunpack.c.h.b16 %v532
        %v653 = vunpack.c.l.b16 %v533
        %v654 = vunpack.c.h.b16 %v533
        %v655 = vunpack.c.l.b16 %v534
        %v656 = vunpack.c.h.b16 %v534
        %v657 = vpack.c.b16 %v643, %v641
        %v658 = vpack.c.b16 %v644, %v642
        %v659 = vpack.c.b16 %v647, %v645
        %v660 = vpack.c.b16 %v648, %v646
        %v661 = vpack.c.b16 %v651, %v649
        %v662 = vpack.c.b16 %v652, %v650
        %v663 = vpack.c.b16 %v655, %v653
        %v664 = vpack.c.b16 %v656, %v654
        %v674 = vsel %vm586, %v526, 0
        %676 = vmatprep.subr.bf16.mxu0 %v658
        %677 = vmatpush1.bf16.msra.mxu0 %v657
        %678 = vmatprep.subr.bf16.mxu0 %v660
        %679 = vmatpush1.bf16.msra.mxu0 %v659
        %680 = vmatprep.subr.bf16.mxu0 %v662
        %681 = vmatpush1.bf16.msra.mxu0 %v661
        %682 = vmatprep.subr.bf16.mxu0 %v664
        %683 = vmatpush1.bf16.msra.mxu0 %v663
        %684 = vmatprep.subr.bf16.mxu0 0
        %685 = vmatpush1.bf16.msra.mxu0 0
        %686 = vmatprep.subr.bf16.mxu0 0
        %687 = vmatpush1.bf16.msra.mxu0 0
        %688 = vmatprep.subr.bf16.mxu0 0
        %689 = vmatpush1.bf16.msra.mxu0 0
        %690 = vmatprep.subr.bf16.mxu0 0
        %691 = vmatpush1.bf16.msra.mxu0 0
        %692 = vmatprep.subr.bf16.mxu0 0
        %693 = vmatpush1.bf16.msra.mxu0 0
        %694 = vmatprep.subr.bf16.mxu0 0
        %695 = vmatpush1.bf16.msra.mxu0 0
        %696 = vmatprep.subr.bf16.mxu0 0
        %697 = vmatpush1.bf16.msra.mxu0 0
        %698 = vmatprep.subr.bf16.mxu0 0
        %699 = vmatpush1.bf16.msra.mxu0 0
        %700 = vmatprep.subr.bf16.mxu0 0
        %701 = vmatpush1.bf16.msra.mxu0 0
        %702 = vmatprep.subr.bf16.mxu0 0
        %703 = vmatpush1.bf16.msra.mxu0 0
        %704 = vmatprep.subr.bf16.mxu0 0
        %705 = vmatpush1.bf16.msra.mxu0 0
        %706 = vmatprep.subr.bf16.mxu0 0
        %707 = vmatpush1.bf16.msra.mxu0 0
        %708 = vmatprep.mubr.bf16.mxu0 0
        %709 = vmatmul.mubr.bf16.gmra.mrb[0].mxu0 %v674
        %v710 = vpop.f32.mrb[0].mxu0
        %v711 = vadd.f32 %v625, %v710
        %v712 = vpop.f32.mrb[0].mxu0
        %v713 = vadd.f32 %v627, %v712
        %v714 = vpop.f32.mrb[0].mxu0
        %v715 = vadd.f32 %v629, %v714
        %v716 = vpop.f32.mrb[0].mxu0
        %v717 = vadd.f32 %v631, %v716
        %718 = vdwg.mxu0
        %v719 = vld [vmem:[%s521] sm:$0xff]
        %v721 = vlaneseq
        %v722 = vshrl.u32 %v721, 7
        %v723 = vsub.s32 0, %v722
        %v724 = vrot.slane %v719, %v723
        %v725 = vlaneseq
        %v726 = vshrl.u32 %v725, 7
        %v727 = vsub.s32 1, %v726
        %v728 = vrot.slane %v719, %v727
        %v729 = vlaneseq
        %v730 = vshrl.u32 %v729, 7
        %v731 = vsub.s32 2, %v730
        %v732 = vrot.slane %v719, %v731
        %v733 = vlaneseq
        %v734 = vshrl.u32 %v733, 7
        %v735 = vsub.s32 3, %v734
        %v736 = vrot.slane %v719, %v735
        %v737 = vlaneseq
        %v738 = vshrl.u32 %v737, 7
        %v739 = vsub.s32 4, %v738
        %v740 = vrot.slane %v719, %v739
        %v741 = vlaneseq
        %v742 = vshrl.u32 %v741, 7
        %v743 = vsub.s32 5, %v742
        %v744 = vrot.slane %v719, %v743
        %v745 = vlaneseq
        %v746 = vshrl.u32 %v745, 7
        %v747 = vsub.s32 6, %v746
        %v748 = vrot.slane %v719, %v747
        %v749 = vlaneseq
        %v750 = vshrl.u32 %v749, 7
        %v751 = vsub.s32 7, %v750
        %v752 = vrot.slane %v719, %v751
        %v761 = vpack.c.bf16 %v724, %v724
        %v762 = vpack.c.bf16 %v728, %v728
        %v763 = vpack.c.bf16 %v732, %v732
        %v764 = vpack.c.bf16 %v736, %v736
        %v765 = vpack.c.bf16 %v740, %v740
        %v766 = vpack.c.bf16 %v744, %v744
        %v767 = vpack.c.bf16 %v748, %v748
        %v768 = vpack.c.bf16 %v752, %v752
        %v769 = vld [vmem:[%s5] sm:$0xff]
        %v770 = vld [vmem:[%s5 + $0x8] sm:$0xff]
        %v771 = vld [vmem:[%s5 + $0x10] sm:$0xff]
        %v772 = vld [vmem:[%s5 + $0x18] sm:$0xff]
        %v773 = vld [vmem:[%s5 + $0x20] sm:$0xff]
        %v774 = vld [vmem:[%s5 + $0x28] sm:$0xff]
        %v775 = vld [vmem:[%s5 + $0x30] sm:$0xff]
        %v776 = vld [vmem:[%s5 + $0x38] sm:$0xff]
        %v777 = vld [vmem:[%s5 + $0x40] sm:$0xff]
        %v778 = vld [vmem:[%s5 + $0x48] sm:$0xff]
        %v779 = vld [vmem:[%s5 + $0x50] sm:$0xff]
        %v780 = vld [vmem:[%s5 + $0x58] sm:$0xff]
        %v781 = vld [vmem:[%s5 + $0x60] sm:$0xff]
        %v782 = vld [vmem:[%s5 + $0x68] sm:$0xff]
        %v783 = vld [vmem:[%s5 + $0x70] sm:$0xff]
        %v784 = vld [vmem:[%s5 + $0x78] sm:$0xff]
        %v785 = vld [vmem:[%s5 + $0x80] sm:$0xff]
        %v786 = vld [vmem:[%s5 + $0x88] sm:$0xff]
        %v787 = vld [vmem:[%s5 + $0x90] sm:$0xff]
        %v788 = vld [vmem:[%s5 + $0x98] sm:$0xff]
        %v789 = vld [vmem:[%s5 + $0xa0] sm:$0xff]
        %v790 = vld [vmem:[%s5 + $0xa8] sm:$0xff]
        %v791 = vld [vmem:[%s5 + $0xb0] sm:$0xff]
        %v792 = vld [vmem:[%s5 + $0xb8] sm:$0xff]
        %v793 = vld [vmem:[%s5 + $0xc0] sm:$0xff]
        %v794 = vld [vmem:[%s5 + $0xc8] sm:$0xff]
        %v795 = vld [vmem:[%s5 + $0xd0] sm:$0xff]
        %v796 = vld [vmem:[%s5 + $0xd8] sm:$0xff]
        %v797 = vld [vmem:[%s5 + $0xe0] sm:$0xff]
        %v798 = vld [vmem:[%s5 + $0xe8] sm:$0xff]
        %v799 = vld [vmem:[%s5 + $0xf0] sm:$0xff]
        %v800 = vld [vmem:[%s5 + $0xf8] sm:$0xff]
        %v801 = vld [vmem:[%s5 + $0x100] sm:$0xff]
        %v802 = vld [vmem:[%s5 + $0x108] sm:$0xff]
        %v803 = vld [vmem:[%s5 + $0x110] sm:$0xff]
        %v804 = vld [vmem:[%s5 + $0x118] sm:$0xff]
        %v805 = vld [vmem:[%s5 + $0x120] sm:$0xff]
        %v806 = vld [vmem:[%s5 + $0x128] sm:$0xff]
        %v807 = vld [vmem:[%s5 + $0x130] sm:$0xff]
        %v808 = vld [vmem:[%s5 + $0x138] sm:$0xff]
        %v809 = vld [vmem:[%s5 + $0x140] sm:$0xff]
        %v810 = vld [vmem:[%s5 + $0x148] sm:$0xff]
        %v811 = vld [vmem:[%s5 + $0x150] sm:$0xff]
        %v812 = vld [vmem:[%s5 + $0x158] sm:$0xff]
        %v813 = vld [vmem:[%s5 + $0x160] sm:$0xff]
        %v814 = vld [vmem:[%s5 + $0x168] sm:$0xff]
        %v815 = vld [vmem:[%s5 + $0x170] sm:$0xff]
        %v816 = vld [vmem:[%s5 + $0x178] sm:$0xff]
        %v817 = vld [vmem:[%s5 + $0x180] sm:$0xff]
        %v818 = vld [vmem:[%s5 + $0x188] sm:$0xff]
        %v819 = vld [vmem:[%s5 + $0x190] sm:$0xff]
        %v820 = vld [vmem:[%s5 + $0x198] sm:$0xff]
        %v821 = vld [vmem:[%s5 + $0x1a0] sm:$0xff]
        %v822 = vld [vmem:[%s5 + $0x1a8] sm:$0xff]
        %v823 = vld [vmem:[%s5 + $0x1b0] sm:$0xff]
        %v824 = vld [vmem:[%s5 + $0x1b8] sm:$0xff]
        %v825 = vld [vmem:[%s5 + $0x1c0] sm:$0xff]
        %v826 = vld [vmem:[%s5 + $0x1c8] sm:$0xff]
        %v827 = vld [vmem:[%s5 + $0x1d0] sm:$0xff]
        %v828 = vld [vmem:[%s5 + $0x1d8] sm:$0xff]
        %v829 = vld [vmem:[%s5 + $0x1e0] sm:$0xff]
        %v830 = vld [vmem:[%s5 + $0x1e8] sm:$0xff]
        %v831 = vld [vmem:[%s5 + $0x1f0] sm:$0xff]
        %v832 = vld [vmem:[%s5 + $0x1f8] sm:$0xff]
        %v833 = vld [vmem:[%s5 + $0x200] sm:$0xff]
        %v834 = vld [vmem:[%s5 + $0x208] sm:$0xff]
        %v835 = vld [vmem:[%s5 + $0x210] sm:$0xff]
        %v836 = vld [vmem:[%s5 + $0x218] sm:$0xff]
        %v837 = vld [vmem:[%s5 + $0x220] sm:$0xff]
        %v838 = vld [vmem:[%s5 + $0x228] sm:$0xff]
        %v839 = vld [vmem:[%s5 + $0x230] sm:$0xff]
        %v840 = vld [vmem:[%s5 + $0x238] sm:$0xff]
        %v841 = vld [vmem:[%s5 + $0x240] sm:$0xff]
        %v842 = vld [vmem:[%s5 + $0x248] sm:$0xff]
        %v843 = vld [vmem:[%s5 + $0x250] sm:$0xff]
        %v844 = vld [vmem:[%s5 + $0x258] sm:$0xff]
        %v845 = vld [vmem:[%s5 + $0x260] sm:$0xff]
        %v846 = vld [vmem:[%s5 + $0x268] sm:$0xff]
        %v847 = vld [vmem:[%s5 + $0x270] sm:$0xff]
        %v848 = vld [vmem:[%s5 + $0x278] sm:$0xff]
        %v849 = vld [vmem:[%s5 + $0x280] sm:$0xff]
        %v850 = vld [vmem:[%s5 + $0x288] sm:$0xff]
        %v851 = vld [vmem:[%s5 + $0x290] sm:$0xff]
        %v852 = vld [vmem:[%s5 + $0x298] sm:$0xff]
        %v853 = vld [vmem:[%s5 + $0x2a0] sm:$0xff]
        %v854 = vld [vmem:[%s5 + $0x2a8] sm:$0xff]
        %v855 = vld [vmem:[%s5 + $0x2b0] sm:$0xff]
        %v856 = vld [vmem:[%s5 + $0x2b8] sm:$0xff]
        %v857 = vld [vmem:[%s5 + $0x2c0] sm:$0xff]
        %v858 = vld [vmem:[%s5 + $0x2c8] sm:$0xff]
        %v859 = vld [vmem:[%s5 + $0x2d0] sm:$0xff]
        %v860 = vld [vmem:[%s5 + $0x2d8] sm:$0xff]
        %v861 = vld [vmem:[%s5 + $0x2e0] sm:$0xff]
        %v862 = vld [vmem:[%s5 + $0x2e8] sm:$0xff]
        %v863 = vld [vmem:[%s5 + $0x2f0] sm:$0xff]
        %v864 = vld [vmem:[%s5 + $0x2f8] sm:$0xff]
        %v865 = vld [vmem:[%s5 + $0x300] sm:$0xff]
        %v866 = vld [vmem:[%s5 + $0x308] sm:$0xff]
        %v867 = vld [vmem:[%s5 + $0x310] sm:$0xff]
        %v868 = vld [vmem:[%s5 + $0x318] sm:$0xff]
        %v869 = vld [vmem:[%s5 + $0x320] sm:$0xff]
        %v870 = vld [vmem:[%s5 + $0x328] sm:$0xff]
        %v871 = vld [vmem:[%s5 + $0x330] sm:$0xff]
        %v872 = vld [vmem:[%s5 + $0x338] sm:$0xff]
        %v873 = vld [vmem:[%s5 + $0x340] sm:$0xff]
        %v874 = vld [vmem:[%s5 + $0x348] sm:$0xff]
        %v875 = vld [vmem:[%s5 + $0x350] sm:$0xff]
        %v876 = vld [vmem:[%s5 + $0x358] sm:$0xff]
        %v877 = vld [vmem:[%s5 + $0x360] sm:$0xff]
        %v878 = vld [vmem:[%s5 + $0x368] sm:$0xff]
        %v879 = vld [vmem:[%s5 + $0x370] sm:$0xff]
        %v880 = vld [vmem:[%s5 + $0x378] sm:$0xff]
        %v881 = vld [vmem:[%s5 + $0x380] sm:$0xff]
        %v882 = vld [vmem:[%s5 + $0x388] sm:$0xff]
        %v883 = vld [vmem:[%s5 + $0x390] sm:$0xff]
        %v884 = vld [vmem:[%s5 + $0x398] sm:$0xff]
        %v885 = vld [vmem:[%s5 + $0x3a0] sm:$0xff]
        %v886 = vld [vmem:[%s5 + $0x3a8] sm:$0xff]
        %v887 = vld [vmem:[%s5 + $0x3b0] sm:$0xff]
        %v888 = vld [vmem:[%s5 + $0x3b8] sm:$0xff]
        %v889 = vld [vmem:[%s5 + $0x3c0] sm:$0xff]
        %v890 = vld [vmem:[%s5 + $0x3c8] sm:$0xff]
        %v891 = vld [vmem:[%s5 + $0x3d0] sm:$0xff]
        %v892 = vld [vmem:[%s5 + $0x3d8] sm:$0xff]
        %v893 = vld [vmem:[%s5 + $0x3e0] sm:$0xff]
        %v894 = vld [vmem:[%s5 + $0x3e8] sm:$0xff]
        %v895 = vld [vmem:[%s5 + $0x3f0] sm:$0xff]
        %v896 = vld [vmem:[%s5 + $0x3f8] sm:$0xff]
        %v1025 = vunpack.c.l.b16 %v769
        %v1026 = vunpack.c.h.b16 %v769
        %v1027 = vunpack.c.l.b16 %v770
        %v1028 = vunpack.c.h.b16 %v770
        %v1029 = vunpack.c.l.b16 %v771
        %v1030 = vunpack.c.h.b16 %v771
        %v1031 = vunpack.c.l.b16 %v772
        %v1032 = vunpack.c.h.b16 %v772
        %v1033 = vunpack.c.l.b16 %v773
        %v1034 = vunpack.c.h.b16 %v773
        %v1035 = vunpack.c.l.b16 %v774
        %v1036 = vunpack.c.h.b16 %v774
        %v1037 = vunpack.c.l.b16 %v775
        %v1038 = vunpack.c.h.b16 %v775
        %v1039 = vunpack.c.l.b16 %v776
        %v1040 = vunpack.c.h.b16 %v776
        %v1041 = vunpack.c.l.b16 %v777
        %v1042 = vunpack.c.h.b16 %v777
        %v1043 = vunpack.c.l.b16 %v778
        %v1044 = vunpack.c.h.b16 %v778
        %v1045 = vunpack.c.l.b16 %v779
        %v1046 = vunpack.c.h.b16 %v779
        %v1047 = vunpack.c.l.b16 %v780
        %v1048 = vunpack.c.h.b16 %v780
        %v1049 = vunpack.c.l.b16 %v781
        %v1050 = vunpack.c.h.b16 %v781
        %v1051 = vunpack.c.l.b16 %v782
        %v1052 = vunpack.c.h.b16 %v782
        %v1053 = vunpack.c.l.b16 %v783
        %v1054 = vunpack.c.h.b16 %v783
        %v1055 = vunpack.c.l.b16 %v784
        %v1056 = vunpack.c.h.b16 %v784
        %v1057 = vunpack.c.l.b16 %v785
        %v1058 = vunpack.c.h.b16 %v785
        %v1059 = vunpack.c.l.b16 %v786
        %v1060 = vunpack.c.h.b16 %v786
        %v1061 = vunpack.c.l.b16 %v787
        %v1062 = vunpack.c.h.b16 %v787
        %v1063 = vunpack.c.l.b16 %v788
        %v1064 = vunpack.c.h.b16 %v788
        %v1065 = vunpack.c.l.b16 %v789
        %v1066 = vunpack.c.h.b16 %v789
        %v1067 = vunpack.c.l.b16 %v790
        %v1068 = vunpack.c.h.b16 %v790
        %v1069 = vunpack.c.l.b16 %v791
        %v1070 = vunpack.c.h.b16 %v791
        %v1071 = vunpack.c.l.b16 %v792
        %v1072 = vunpack.c.h.b16 %v792
        %v1073 = vunpack.c.l.b16 %v793
        %v1074 = vunpack.c.h.b16 %v793
        %v1075 = vunpack.c.l.b16 %v794
        %v1076 = vunpack.c.h.b16 %v794
        %v1077 = vunpack.c.l.b16 %v795
        %v1078 = vunpack.c.h.b16 %v795
        %v1079 = vunpack.c.l.b16 %v796
        %v1080 = vunpack.c.h.b16 %v796
        %v1081 = vunpack.c.l.b16 %v797
        %v1082 = vunpack.c.h.b16 %v797
        %v1083 = vunpack.c.l.b16 %v798
        %v1084 = vunpack.c.h.b16 %v798
        %v1085 = vunpack.c.l.b16 %v799
        %v1086 = vunpack.c.h.b16 %v799
        %v1087 = vunpack.c.l.b16 %v800
        %v1088 = vunpack.c.h.b16 %v800
        %v1089 = vunpack.c.l.b16 %v801
        %v1090 = vunpack.c.h.b16 %v801
        %v1091 = vunpack.c.l.b16 %v802
        %v1092 = vunpack.c.h.b16 %v802
        %v1093 = vunpack.c.l.b16 %v803
        %v1094 = vunpack.c.h.b16 %v803
        %v1095 = vunpack.c.l.b16 %v804
        %v1096 = vunpack.c.h.b16 %v804
        %v1097 = vunpack.c.l.b16 %v805
        %v1098 = vunpack.c.h.b16 %v805
        %v1099 = vunpack.c.l.b16 %v806
        %v1100 = vunpack.c.h.b16 %v806
        %v1101 = vunpack.c.l.b16 %v807
        %v1102 = vunpack.c.h.b16 %v807
        %v1103 = vunpack.c.l.b16 %v808
        %v1104 = vunpack.c.h.b16 %v808
        %v1105 = vunpack.c.l.b16 %v809
        %v1106 = vunpack.c.h.b16 %v809
        %v1107 = vunpack.c.l.b16 %v810
        %v1108 = vunpack.c.h.b16 %v810
        %v1109 = vunpack.c.l.b16 %v811
        %v1110 = vunpack.c.h.b16 %v811
        %v1111 = vunpack.c.l.b16 %v812
        %v1112 = vunpack.c.h.b16 %v812
        %v1113 = vunpack.c.l.b16 %v813
        %v1114 = vunpack.c.h.b16 %v813
        %v1115 = vunpack.c.l.b16 %v814
        %v1116 = vunpack.c.h.b16 %v814
        %v1117 = vunpack.c.l.b16 %v815
        %v1118 = vunpack.c.h.b16 %v815
        %v1119 = vunpack.c.l.b16 %v816
        %v1120 = vunpack.c.h.b16 %v816
        %v1121 = vunpack.c.l.b16 %v817
        %v1122 = vunpack.c.h.b16 %v817
        %v1123 = vunpack.c.l.b16 %v818
        %v1124 = vunpack.c.h.b16 %v818
        %v1125 = vunpack.c.l.b16 %v819
        %v1126 = vunpack.c.h.b16 %v819
        %v1127 = vunpack.c.l.b16 %v820
        %v1128 = vunpack.c.h.b16 %v820
        %v1129 = vunpack.c.l.b16 %v821
        %v1130 = vunpack.c.h.b16 %v821
        %v1131 = vunpack.c.l.b16 %v822
        %v1132 = vunpack.c.h.b16 %v822
        %v1133 = vunpack.c.l.b16 %v823
        %v1134 = vunpack.c.h.b16 %v823
        %v1135 = vunpack.c.l.b16 %v824
        %v1136 = vunpack.c.h.b16 %v824
        %v1137 = vunpack.c.l.b16 %v825
        %v1138 = vunpack.c.h.b16 %v825
        %v1139 = vunpack.c.l.b16 %v826
        %v1140 = vunpack.c.h.b16 %v826
        %v1141 = vunpack.c.l.b16 %v827
        %v1142 = vunpack.c.h.b16 %v827
        %v1143 = vunpack.c.l.b16 %v828
        %v1144 = vunpack.c.h.b16 %v828
        %v1145 = vunpack.c.l.b16 %v829
        %v1146 = vunpack.c.h.b16 %v829
        %v1147 = vunpack.c.l.b16 %v830
        %v1148 = vunpack.c.h.b16 %v830
        %v1149 = vunpack.c.l.b16 %v831
        %v1150 = vunpack.c.h.b16 %v831
        %v1151 = vunpack.c.l.b16 %v832
        %v1152 = vunpack.c.h.b16 %v832
        %v1153 = vunpack.c.l.b16 %v833
        %v1154 = vunpack.c.h.b16 %v833
        %v1155 = vunpack.c.l.b16 %v834
        %v1156 = vunpack.c.h.b16 %v834
        %v1157 = vunpack.c.l.b16 %v835
        %v1158 = vunpack.c.h.b16 %v835
        %v1159 = vunpack.c.l.b16 %v836
        %v1160 = vunpack.c.h.b16 %v836
        %v1161 = vunpack.c.l.b16 %v837
        %v1162 = vunpack.c.h.b16 %v837
        %v1163 = vunpack.c.l.b16 %v838
        %v1164 = vunpack.c.h.b16 %v838
        %v1165 = vunpack.c.l.b16 %v839
        %v1166 = vunpack.c.h.b16 %v839
        %v1167 = vunpack.c.l.b16 %v840
        %v1168 = vunpack.c.h.b16 %v840
        %v1169 = vunpack.c.l.b16 %v841
        %v1170 = vunpack.c.h.b16 %v841
        %v1171 = vunpack.c.l.b16 %v842
        %v1172 = vunpack.c.h.b16 %v842
        %v1173 = vunpack.c.l.b16 %v843
        %v1174 = vunpack.c.h.b16 %v843
        %v1175 = vunpack.c.l.b16 %v844
        %v1176 = vunpack.c.h.b16 %v844
        %v1177 = vunpack.c.l.b16 %v845
        %v1178 = vunpack.c.h.b16 %v845
        %v1179 = vunpack.c.l.b16 %v846
        %v1180 = vunpack.c.h.b16 %v846
        %v1181 = vunpack.c.l.b16 %v847
        %v1182 = vunpack.c.h.b16 %v847
        %v1183 = vunpack.c.l.b16 %v848
        %v1184 = vunpack.c.h.b16 %v848
        %v1185 = vunpack.c.l.b16 %v849
        %v1186 = vunpack.c.h.b16 %v849
        %v1187 = vunpack.c.l.b16 %v850
        %v1188 = vunpack.c.h.b16 %v850
        %v1189 = vunpack.c.l.b16 %v851
        %v1190 = vunpack.c.h.b16 %v851
        %v1191 = vunpack.c.l.b16 %v852
        %v1192 = vunpack.c.h.b16 %v852
        %v1193 = vunpack.c.l.b16 %v853
        %v1194 = vunpack.c.h.b16 %v853
        %v1195 = vunpack.c.l.b16 %v854
        %v1196 = vunpack.c.h.b16 %v854
        %v1197 = vunpack.c.l.b16 %v855
        %v1198 = vunpack.c.h.b16 %v855
        %v1199 = vunpack.c.l.b16 %v856
        %v1200 = vunpack.c.h.b16 %v856
        %v1201 = vunpack.c.l.b16 %v857
        %v1202 = vunpack.c.h.b16 %v857
        %v1203 = vunpack.c.l.b16 %v858
        %v1204 = vunpack.c.h.b16 %v858
        %v1205 = vunpack.c.l.b16 %v859
        %v1206 = vunpack.c.h.b16 %v859
        %v1207 = vunpack.c.l.b16 %v860
        %v1208 = vunpack.c.h.b16 %v860
        %v1209 = vunpack.c.l.b16 %v861
        %v1210 = vunpack.c.h.b16 %v861
        %v1211 = vunpack.c.l.b16 %v862
        %v1212 = vunpack.c.h.b16 %v862
        %v1213 = vunpack.c.l.b16 %v863
        %v1214 = vunpack.c.h.b16 %v863
        %v1215 = vunpack.c.l.b16 %v864
        %v1216 = vunpack.c.h.b16 %v864
        %v1217 = vunpack.c.l.b16 %v865
        %v1218 = vunpack.c.h.b16 %v865
        %v1219 = vunpack.c.l.b16 %v866
        %v1220 = vunpack.c.h.b16 %v866
        %v1221 = vunpack.c.l.b16 %v867
        %v1222 = vunpack.c.h.b16 %v867
        %v1223 = vunpack.c.l.b16 %v868
        %v1224 = vunpack.c.h.b16 %v868
        %v1225 = vunpack.c.l.b16 %v869
        %v1226 = vunpack.c.h.b16 %v869
        %v1227 = vunpack.c.l.b16 %v870
        %v1228 = vunpack.c.h.b16 %v870
        %v1229 = vunpack.c.l.b16 %v871
        %v1230 = vunpack.c.h.b16 %v871
        %v1231 = vunpack.c.l.b16 %v872
        %v1232 = vunpack.c.h.b16 %v872
        %v1233 = vunpack.c.l.b16 %v873
        %v1234 = vunpack.c.h.b16 %v873
        %v1235 = vunpack.c.l.b16 %v874
        %v1236 = vunpack.c.h.b16 %v874
        %v1237 = vunpack.c.l.b16 %v875
        %v1238 = vunpack.c.h.b16 %v875
        %v1239 = vunpack.c.l.b16 %v876
        %v1240 = vunpack.c.h.b16 %v876
        %v1241 = vunpack.c.l.b16 %v877
        %v1242 = vunpack.c.h.b16 %v877
        %v1243 = vunpack.c.l.b16 %v878
        %v1244 = vunpack.c.h.b16 %v878
        %v1245 = vunpack.c.l.b16 %v879
        %v1246 = vunpack.c.h.b16 %v879
        %v1247 = vunpack.c.l.b16 %v880
        %v1248 = vunpack.c.h.b16 %v880
        %v1249 = vunpack.c.l.b16 %v881
        %v1250 = vunpack.c.h.b16 %v881
        %v1251 = vunpack.c.l.b16 %v882
        %v1252 = vunpack.c.h.b16 %v882
        %v1253 = vunpack.c.l.b16 %v883
        %v1254 = vunpack.c.h.b16 %v883
        %v1255 = vunpack.c.l.b16 %v884
        %v1256 = vunpack.c.h.b16 %v884
        %v1257 = vunpack.c.l.b16 %v885
        %v1258 = vunpack.c.h.b16 %v885
        %v1259 = vunpack.c.l.b16 %v886
        %v1260 = vunpack.c.h.b16 %v886
        %v1261 = vunpack.c.l.b16 %v887
        %v1262 = vunpack.c.h.b16 %v887
        %v1263 = vunpack.c.l.b16 %v888
        %v1264 = vunpack.c.h.b16 %v888
        %v1265 = vunpack.c.l.b16 %v889
        %v1266 = vunpack.c.h.b16 %v889
        %v1267 = vunpack.c.l.b16 %v890
        %v1268 = vunpack.c.h.b16 %v890
        %v1269 = vunpack.c.l.b16 %v891
        %v1270 = vunpack.c.h.b16 %v891
        %v1271 = vunpack.c.l.b16 %v892
        %v1272 = vunpack.c.h.b16 %v892
        %v1273 = vunpack.c.l.b16 %v893
        %v1274 = vunpack.c.h.b16 %v893
        %v1275 = vunpack.c.l.b16 %v894
        %v1276 = vunpack.c.h.b16 %v894
        %v1277 = vunpack.c.l.b16 %v895
        %v1278 = vunpack.c.h.b16 %v895
        %v1279 = vunpack.c.l.b16 %v896
        %v1280 = vunpack.c.h.b16 %v896
        %v1281 = vpack.c.b16 %v1027, %v1025
        %v1282 = vpack.c.b16 %v1028, %v1026
        %v1283 = vpack.c.b16 %v1031, %v1029
        %v1284 = vpack.c.b16 %v1032, %v1030
        %v1285 = vpack.c.b16 %v1035, %v1033
        %v1286 = vpack.c.b16 %v1036, %v1034
        %v1287 = vpack.c.b16 %v1039, %v1037
        %v1288 = vpack.c.b16 %v1040, %v1038
        %v1289 = vpack.c.b16 %v1043, %v1041
        %v1290 = vpack.c.b16 %v1044, %v1042
        %v1291 = vpack.c.b16 %v1047, %v1045
        %v1292 = vpack.c.b16 %v1048, %v1046
        %v1293 = vpack.c.b16 %v1051, %v1049
        %v1294 = vpack.c.b16 %v1052, %v1050
        %v1295 = vpack.c.b16 %v1055, %v1053
        %v1296 = vpack.c.b16 %v1056, %v1054
        %v1297 = vpack.c.b16 %v1059, %v1057
        %v1298 = vpack.c.b16 %v1060, %v1058
        %v1299 = vpack.c.b16 %v1063, %v1061
        %v1300 = vpack.c.b16 %v1064, %v1062
        %v1301 = vpack.c.b16 %v1067, %v1065
        %v1302 = vpack.c.b16 %v1068, %v1066
        %v1303 = vpack.c.b16 %v1071, %v1069
        %v1304 = vpack.c.b16 %v1072, %v1070
        %v1305 = vpack.c.b16 %v1075, %v1073
        %v1306 = vpack.c.b16 %v1076, %v1074
        %v1307 = vpack.c.b16 %v1079, %v1077
        %v1308 = vpack.c.b16 %v1080, %v1078
        %v1309 = vpack.c.b16 %v1083, %v1081
        %v1310 = vpack.c.b16 %v1084, %v1082
        %v1311 = vpack.c.b16 %v1087, %v1085
        %v1312 = vpack.c.b16 %v1088, %v1086
        %v1313 = vpack.c.b16 %v1091, %v1089
        %v1314 = vpack.c.b16 %v1092, %v1090
        %v1315 = vpack.c.b16 %v1095, %v1093
        %v1316 = vpack.c.b16 %v1096, %v1094
        %v1317 = vpack.c.b16 %v1099, %v1097
        %v1318 = vpack.c.b16 %v1100, %v1098
        %v1319 = vpack.c.b16 %v1103, %v1101
        %v1320 = vpack.c.b16 %v1104, %v1102
        %v1321 = vpack.c.b16 %v1107, %v1105
        %v1322 = vpack.c.b16 %v1108, %v1106
        %v1323 = vpack.c.b16 %v1111, %v1109
        %v1324 = vpack.c.b16 %v1112, %v1110
        %v1325 = vpack.c.b16 %v1115, %v1113
        %v1326 = vpack.c.b16 %v1116, %v1114
        %v1327 = vpack.c.b16 %v1119, %v1117
        %v1328 = vpack.c.b16 %v1120, %v1118
        %v1329 = vpack.c.b16 %v1123, %v1121
        %v1330 = vpack.c.b16 %v1124, %v1122
        %v1331 = vpack.c.b16 %v1127, %v1125
        %v1332 = vpack.c.b16 %v1128, %v1126
        %v1333 = vpack.c.b16 %v1131, %v1129
        %v1334 = vpack.c.b16 %v1132, %v1130
        %v1335 = vpack.c.b16 %v1135, %v1133
        %v1336 = vpack.c.b16 %v1136, %v1134
        %v1337 = vpack.c.b16 %v1139, %v1137
        %v1338 = vpack.c.b16 %v1140, %v1138
        %v1339 = vpack.c.b16 %v1143, %v1141
        %v1340 = vpack.c.b16 %v1144, %v1142
        %v1341 = vpack.c.b16 %v1147, %v1145
        %v1342 = vpack.c.b16 %v1148, %v1146
        %v1343 = vpack.c.b16 %v1151, %v1149
        %v1344 = vpack.c.b16 %v1152, %v1150
        %v1345 = vpack.c.b16 %v1155, %v1153
        %v1346 = vpack.c.b16 %v1156, %v1154
        %v1347 = vpack.c.b16 %v1159, %v1157
        %v1348 = vpack.c.b16 %v1160, %v1158
        %v1349 = vpack.c.b16 %v1163, %v1161
        %v1350 = vpack.c.b16 %v1164, %v1162
        %v1351 = vpack.c.b16 %v1167, %v1165
        %v1352 = vpack.c.b16 %v1168, %v1166
        %v1353 = vpack.c.b16 %v1171, %v1169
        %v1354 = vpack.c.b16 %v1172, %v1170
        %v1355 = vpack.c.b16 %v1175, %v1173
        %v1356 = vpack.c.b16 %v1176, %v1174
        %v1357 = vpack.c.b16 %v1179, %v1177
        %v1358 = vpack.c.b16 %v1180, %v1178
        %v1359 = vpack.c.b16 %v1183, %v1181
        %v1360 = vpack.c.b16 %v1184, %v1182
        %v1361 = vpack.c.b16 %v1187, %v1185
        %v1362 = vpack.c.b16 %v1188, %v1186
        %v1363 = vpack.c.b16 %v1191, %v1189
        %v1364 = vpack.c.b16 %v1192, %v1190
        %v1365 = vpack.c.b16 %v1195, %v1193
        %v1366 = vpack.c.b16 %v1196, %v1194
        %v1367 = vpack.c.b16 %v1199, %v1197
        %v1368 = vpack.c.b16 %v1200, %v1198
        %v1369 = vpack.c.b16 %v1203, %v1201
        %v1370 = vpack.c.b16 %v1204, %v1202
        %v1371 = vpack.c.b16 %v1207, %v1205
        %v1372 = vpack.c.b16 %v1208, %v1206
        %v1373 = vpack.c.b16 %v1211, %v1209
        %v1374 = vpack.c.b16 %v1212, %v1210
        %v1375 = vpack.c.b16 %v1215, %v1213
        %v1376 = vpack.c.b16 %v1216, %v1214
        %v1377 = vpack.c.b16 %v1219, %v1217
        %v1378 = vpack.c.b16 %v1220, %v1218
        %v1379 = vpack.c.b16 %v1223, %v1221
        %v1380 = vpack.c.b16 %v1224, %v1222
        %v1381 = vpack.c.b16 %v1227, %v1225
        %v1382 = vpack.c.b16 %v1228, %v1226
        %v1383 = vpack.c.b16 %v1231, %v1229
        %v1384 = vpack.c.b16 %v1232, %v1230
        %v1385 = vpack.c.b16 %v1235, %v1233
        %v1386 = vpack.c.b16 %v1236, %v1234
        %v1387 = vpack.c.b16 %v1239, %v1237
        %v1388 = vpack.c.b16 %v1240, %v1238
        %v1389 = vpack.c.b16 %v1243, %v1241
        %v1390 = vpack.c.b16 %v1244, %v1242
        %v1391 = vpack.c.b16 %v1247, %v1245
        %v1392 = vpack.c.b16 %v1248, %v1246
        %v1393 = vpack.c.b16 %v1251, %v1249
        %v1394 = vpack.c.b16 %v1252, %v1250
        %v1395 = vpack.c.b16 %v1255, %v1253
        %v1396 = vpack.c.b16 %v1256, %v1254
        %v1397 = vpack.c.b16 %v1259, %v1257
        %v1398 = vpack.c.b16 %v1260, %v1258
        %v1399 = vpack.c.b16 %v1263, %v1261
        %v1400 = vpack.c.b16 %v1264, %v1262
        %v1401 = vpack.c.b16 %v1267, %v1265
        %v1402 = vpack.c.b16 %v1268, %v1266
        %v1403 = vpack.c.b16 %v1271, %v1269
        %v1404 = vpack.c.b16 %v1272, %v1270
        %v1405 = vpack.c.b16 %v1275, %v1273
        %v1406 = vpack.c.b16 %v1276, %v1274
        %v1407 = vpack.c.b16 %v1279, %v1277
        %v1408 = vpack.c.b16 %v1280, %v1278
        %1537 = vmatprep.subr.bf16.mxu0 %v1282
        %1538 = vmatpush1.bf16.msra.mxu0 %v1281
        %1539 = vmatprep.subr.bf16.mxu0 %v1284
        %1540 = vmatpush1.bf16.msra.mxu0 %v1283
        %1541 = vmatprep.subr.bf16.mxu0 %v1286
        %1542 = vmatpush1.bf16.msra.mxu0 %v1285
        %1543 = vmatprep.subr.bf16.mxu0 %v1288
        %1544 = vmatpush1.bf16.msra.mxu0 %v1287
        %1545 = vmatprep.subr.bf16.mxu0 %v1290
        %1546 = vmatpush1.bf16.msra.mxu0 %v1289
        %1547 = vmatprep.subr.bf16.mxu0 %v1292
        %1548 = vmatpush1.bf16.msra.mxu0 %v1291
        %1549 = vmatprep.subr.bf16.mxu0 %v1294
        %1550 = vmatpush1.bf16.msra.mxu0 %v1293
        %1551 = vmatprep.subr.bf16.mxu0 %v1296
        %1552 = vmatpush1.bf16.msra.mxu0 %v1295
        %1553 = vmatprep.subr.bf16.mxu0 %v1298
        %1554 = vmatpush1.bf16.msra.mxu0 %v1297
        %1555 = vmatprep.subr.bf16.mxu0 %v1300
        %1556 = vmatpush1.bf16.msra.mxu0 %v1299
        %1557 = vmatprep.subr.bf16.mxu0 %v1302
        %1558 = vmatpush1.bf16.msra.mxu0 %v1301
        %1559 = vmatprep.subr.bf16.mxu0 %v1304
        %1560 = vmatpush1.bf16.msra.mxu0 %v1303
        %1561 = vmatprep.subr.bf16.mxu0 %v1306
        %1562 = vmatpush1.bf16.msra.mxu0 %v1305
        %1563 = vmatprep.subr.bf16.mxu0 %v1308
        %1564 = vmatpush1.bf16.msra.mxu0 %v1307
        %1565 = vmatprep.subr.bf16.mxu0 %v1310
        %1566 = vmatpush1.bf16.msra.mxu0 %v1309
        %1567 = vmatprep.subr.bf16.mxu0 %v1312
        %1568 = vmatpush1.bf16.msra.mxu0 %v1311
        %1569 = vmatprep.mubr.bf16.mxu0 %v762
        %1570 = vmatmul.mubr.bf16.gmra.mrb[0].mxu0 %v761
        %v1571 = vpop.f32.mrb[0].mxu0
        %v1572 = vadd.f32 0.0, %v1571
        %v1573 = vpop.f32.mrb[0].mxu0
        %v1574 = vadd.f32 0.0, %v1573
        %v1575 = vpop.f32.mrb[0].mxu0
        %v1576 = vpop.f32.mrb[0].mxu0
        %1577 = vdwg.mxu0
        %1578 = vmatprep.subr.bf16.mxu0 %v1314
        %1579 = vmatpush1.bf16.msra.mxu0 %v1313
        %1580 = vmatprep.subr.bf16.mxu0 %v1316
        %1581 = vmatpush1.bf16.msra.mxu0 %v1315
        %1582 = vmatprep.subr.bf16.mxu0 %v1318
        %1583 = vmatpush1.bf16.msra.mxu0 %v1317
        %1584 = vmatprep.subr.bf16.mxu0 %v1320
        %1585 = vmatpush1.bf16.msra.mxu0 %v1319
        %1586 = vmatprep.subr.bf16.mxu0 %v1322
        %1587 = vmatpush1.bf16.msra.mxu0 %v1321
        %1588 = vmatprep.subr.bf16.mxu0 %v1324
        %1589 = vmatpush1.bf16.msra.mxu0 %v1323
        %1590 = vmatprep.subr.bf16.mxu0 %v1326
        %1591 = vmatpush1.bf16.msra.mxu0 %v1325
        %1592 = vmatprep.subr.bf16.mxu0 %v1328
        %1593 = vmatpush1.bf16.msra.mxu0 %v1327
        %1594 = vmatprep.subr.bf16.mxu0 %v1330
        %1595 = vmatpush1.bf16.msra.mxu0 %v1329
        %1596 = vmatprep.subr.bf16.mxu0 %v1332
        %1597 = vmatpush1.bf16.msra.mxu0 %v1331
        %1598 = vmatprep.subr.bf16.mxu0 %v1334
        %1599 = vmatpush1.bf16.msra.mxu0 %v1333
        %1600 = vmatprep.subr.bf16.mxu0 %v1336
        %1601 = vmatpush1.bf16.msra.mxu0 %v1335
        %1602 = vmatprep.subr.bf16.mxu0 %v1338
        %1603 = vmatpush1.bf16.msra.mxu0 %v1337
        %1604 = vmatprep.subr.bf16.mxu0 %v1340
        %1605 = vmatpush1.bf16.msra.mxu0 %v1339
        %1606 = vmatprep.subr.bf16.mxu0 %v1342
        %1607 = vmatpush1.bf16.msra.mxu0 %v1341
        %1608 = vmatprep.subr.bf16.mxu0 %v1344
        %1609 = vmatpush1.bf16.msra.mxu0 %v1343
        %1610 = vmatprep.mubr.bf16.mxu0 %v764
        %1611 = vmatmul.mubr.bf16.gmra.mrb[0].mxu0 %v763
        %v1612 = vpop.f32.mrb[0].mxu0
        %v1613 = vadd.f32 %v1572, %v1612
        %v1614 = vpop.f32.mrb[0].mxu0
        %v1615 = vadd.f32 %v1574, %v1614
        %v1616 = vpop.f32.mrb[0].mxu0
        %v1617 = vpop.f32.mrb[0].mxu0
        %1618 = vdwg.mxu0
        %1619 = vmatprep.subr.bf16.mxu0 %v1346
        %1620 = vmatpush1.bf16.msra.mxu0 %v1345
        %1621 = vmatprep.subr.bf16.mxu0 %v1348
        %1622 = vmatpush1.bf16.msra.mxu0 %v1347
        %1623 = vmatprep.subr.bf16.mxu0 %v1350
        %1624 = vmatpush1.bf16.msra.mxu0 %v1349
        %1625 = vmatprep.subr.bf16.mxu0 %v1352
        %1626 = vmatpush1.bf16.msra.mxu0 %v1351
        %1627 = vmatprep.subr.bf16.mxu0 %v1354
        %1628 = vmatpush1.bf16.msra.mxu0 %v1353
        %1629 = vmatprep.subr.bf16.mxu0 %v1356
        %1630 = vmatpush1.bf16.msra.mxu0 %v1355
        %1631 = vmatprep.subr.bf16.mxu0 %v1358
        %1632 = vmatpush1.bf16.msra.mxu0 %v1357
        %1633 = vmatprep.subr.bf16.mxu0 %v1360
        %1634 = vmatpush1.bf16.msra.mxu0 %v1359
        %1635 = vmatprep.subr.bf16.mxu0 %v1362
        %1636 = vmatpush1.bf16.msra.mxu0 %v1361
        %1637 = vmatprep.subr.bf16.mxu0 %v1364
        %1638 = vmatpush1.bf16.msra.mxu0 %v1363
        %1639 = vmatprep.subr.bf16.mxu0 %v1366
        %1640 = vmatpush1.bf16.msra.mxu0 %v1365
        %1641 = vmatprep.subr.bf16.mxu0 %v1368
        %1642 = vmatpush1.bf16.msra.mxu0 %v1367
        %1643 = vmatprep.subr.bf16.mxu0 %v1370
        %1644 = vmatpush1.bf16.msra.mxu0 %v1369
        %1645 = vmatprep.subr.bf16.mxu0 %v1372
        %1646 = vmatpush1.bf16.msra.mxu0 %v1371
        %1647 = vmatprep.subr.bf16.mxu0 %v1374
        %1648 = vmatpush1.bf16.msra.mxu0 %v1373
        %1649 = vmatprep.subr.bf16.mxu0 %v1376
        %1650 = vmatpush1.bf16.msra.mxu0 %v1375
        %1651 = vmatprep.mubr.bf16.mxu0 %v766
        %1652 = vmatmul.mubr.bf16.gmra.mrb[0].mxu0 %v765
        %v1653 = vpop.f32.mrb[0].mxu0
        %v1654 = vadd.f32 %v1613, %v1653
        %v1655 = vpop.f32.mrb[0].mxu0
        %v1656 = vadd.f32 %v1615, %v1655
        %v1657 = vpop.f32.mrb[0].mxu0
        %v1658 = vpop.f32.mrb[0].mxu0
        %1659 = vdwg.mxu0
        %1660 = vmatprep.subr.bf16.mxu0 %v1378
        %1661 = vmatpush1.bf16.msra.mxu0 %v1377
        %1662 = vmatprep.subr.bf16.mxu0 %v1380
        %1663 = vmatpush1.bf16.msra.mxu0 %v1379
        %1664 = vmatprep.subr.bf16.mxu0 %v1382
        %1665 = vmatpush1.bf16.msra.mxu0 %v1381
        %1666 = vmatprep.subr.bf16.mxu0 %v1384
        %1667 = vmatpush1.bf16.msra.mxu0 %v1383
        %1668 = vmatprep.subr.bf16.mxu0 %v1386
        %1669 = vmatpush1.bf16.msra.mxu0 %v1385
        %1670 = vmatprep.subr.bf16.mxu0 %v1388
        %1671 = vmatpush1.bf16.msra.mxu0 %v1387
        %1672 = vmatprep.subr.bf16.mxu0 %v1390
        %1673 = vmatpush1.bf16.msra.mxu0 %v1389
        %1674 = vmatprep.subr.bf16.mxu0 %v1392
        %1675 = vmatpush1.bf16.msra.mxu0 %v1391
        %1676 = vmatprep.subr.bf16.mxu0 %v1394
        %1677 = vmatpush1.bf16.msra.mxu0 %v1393
        %1678 = vmatprep.subr.bf16.mxu0 %v1396
        %1679 = vmatpush1.bf16.msra.mxu0 %v1395
        %1680 = vmatprep.subr.bf16.mxu0 %v1398
        %1681 = vmatpush1.bf16.msra.mxu0 %v1397
        %1682 = vmatprep.subr.bf16.mxu0 %v1400
        %1683 = vmatpush1.bf16.msra.mxu0 %v1399
        %1684 = vmatprep.subr.bf16.mxu0 %v1402
        %1685 = vmatpush1.bf16.msra.mxu0 %v1401
        %1686 = vmatprep.subr.bf16.mxu0 %v1404
        %1687 = vmatpush1.bf16.msra.mxu0 %v1403
        %1688 = vmatprep.subr.bf16.mxu0 %v1406
        %1689 = vmatpush1.bf16.msra.mxu0 %v1405
        %1690 = vmatprep.subr.bf16.mxu0 %v1408
        %1691 = vmatpush1.bf16.msra.mxu0 %v1407
        %1692 = vmatprep.mubr.bf16.mxu0 %v768
        %1693 = vmatmul.mubr.bf16.gmra.mrb[0].mxu0 %v767
        %v1694 = vpop.f32.mrb[0].mxu0
        %v1695 = vadd.f32 %v1654, %v1694
        %v1696 = vpop.f32.mrb[0].mxu0
        %v1697 = vadd.f32 %v1656, %v1696
        %v1698 = vpop.f32.mrb[0].mxu0
        %v1699 = vpop.f32.mrb[0].mxu0
        %1700 = vdwg.mxu0
        %v1701 = vlaneseq
        %v1702 = vshrl.u32 %v1701, 7
        %v1703 = vsub.s32 0, %v1702
        %v1704 = vrot.slane %v1695, %v1703
        %v1705 = vlaneseq
        %v1706 = vshrl.u32 %v1705, 7
        %v1707 = vsub.s32 0, %v1706
        %v1708 = vrot.slane %v1697, %v1707
        %v1709 = vadd.f32 %v711, %v1704
        %v1710 = vadd.f32 %v713, %v1708
        %v1711 = vadd.f32 %v715, %v1704
        %v1712 = vadd.f32 %v717, %v1708
        %v1713 = vld [vmem:[%s6] sm:$0x3]
        %v1715 = vlaneseq
        %v1716 = vshrl.u32 %v1715, 7
        %v1717 = vsub.s32 0, %v1716
        %v1718 = vrot.slane %v1713, %v1717
        %v1719 = vlaneseq
        %v1720 = vshrl.u32 %v1719, 7
        %v1721 = vsub.s32 1, %v1720
        %v1722 = vrot.slane %v1713, %v1721
        %v1725 = vadd.f32 %v1709, %v1718
        %v1726 = vadd.f32 %v1710, %v1722
        %v1727 = vadd.f32 %v1711, %v1718
        %v1728 = vadd.f32 %v1712, %v1722
        %v1729 = vpack.c.bf16 %v1727, %v1725
        %v1730 = vpack.c.bf16 %v1728, %v1726
        %v1731 = vld [vmem:[%s7] sm:$0xff]
        %v1732 = vld [vmem:[%s7 + $0x8] sm:$0xff]
        %v1733 = vld [vmem:[%s7 + $0x10] sm:$0xff]
        %v1734 = vld [vmem:[%s7 + $0x18] sm:$0xff]
        %v1735 = vld [vmem:[%s7 + $0x20] sm:$0xff]
        %v1736 = vld [vmem:[%s7 + $0x28] sm:$0xff]
        %v1737 = vld [vmem:[%s7 + $0x30] sm:$0xff]
        %v1738 = vld [vmem:[%s7 + $0x38] sm:$0xff]
        %v1739 = vld [vmem:[%s7 + $0x40] sm:$0xff]
        %v1740 = vld [vmem:[%s7 + $0x48] sm:$0xff]
        %v1741 = vld [vmem:[%s7 + $0x50] sm:$0xff]
        %v1742 = vld [vmem:[%s7 + $0x58] sm:$0xff]
        %v1743 = vld [vmem:[%s7 + $0x60] sm:$0xff]
        %v1744 = vld [vmem:[%s7 + $0x68] sm:$0xff]
        %v1745 = vld [vmem:[%s7 + $0x70] sm:$0xff]
        %v1746 = vld [vmem:[%s7 + $0x78] sm:$0xff]
        %v1747 = vld [vmem:[%s7 + $0x80] sm:$0xff]
        %v1748 = vld [vmem:[%s7 + $0x88] sm:$0xff]
        %v1749 = vld [vmem:[%s7 + $0x90] sm:$0xff]
        %v1750 = vld [vmem:[%s7 + $0x98] sm:$0xff]
        %v1751 = vld [vmem:[%s7 + $0xa0] sm:$0xff]
        %v1752 = vld [vmem:[%s7 + $0xa8] sm:$0xff]
        %v1753 = vld [vmem:[%s7 + $0xb0] sm:$0xff]
        %v1754 = vld [vmem:[%s7 + $0xb8] sm:$0xff]
        %v1755 = vld [vmem:[%s7 + $0xc0] sm:$0xff]
        %v1756 = vld [vmem:[%s7 + $0xc8] sm:$0xff]
        %v1757 = vld [vmem:[%s7 + $0xd0] sm:$0xff]
        %v1758 = vld [vmem:[%s7 + $0xd8] sm:$0xff]
        %v1759 = vld [vmem:[%s7 + $0xe0] sm:$0xff]
        %v1760 = vld [vmem:[%s7 + $0xe8] sm:$0xff]
        %v1761 = vld [vmem:[%s7 + $0xf0] sm:$0xff]
        %v1762 = vld [vmem:[%s7 + $0xf8] sm:$0xff]
        %v1763 = vld [vmem:[%s8] sm:$0x3]
        %v1765 = vlaneseq
        %v1766 = vshrl.u32 %v1765, 7
        %v1767 = vsub.s32 0, %v1766
        %v1768 = vrot.slane %v1763, %v1767
        %v1769 = vlaneseq
        %v1770 = vshrl.u32 %v1769, 7
        %v1771 = vsub.s32 1, %v1770
        %v1772 = vrot.slane %v1763, %v1771
        %v1807 = vunpack.c.l.b16 %v1731
        %v1808 = vunpack.c.h.b16 %v1731
        %v1809 = vunpack.c.l.b16 %v1732
        %v1810 = vunpack.c.h.b16 %v1732
        %v1811 = vunpack.c.l.b16 %v1733
        %v1812 = vunpack.c.h.b16 %v1733
        %v1813 = vunpack.c.l.b16 %v1734
        %v1814 = vunpack.c.h.b16 %v1734
        %v1815 = vunpack.c.l.b16 %v1735
        %v1816 = vunpack.c.h.b16 %v1735
        %v1817 = vunpack.c.l.b16 %v1736
        %v1818 = vunpack.c.h.b16 %v1736
        %v1819 = vunpack.c.l.b16 %v1737
        %v1820 = vunpack.c.h.b16 %v1737
        %v1821 = vunpack.c.l.b16 %v1738
        %v1822 = vunpack.c.h.b16 %v1738
        %v1823 = vunpack.c.l.b16 %v1739
        %v1824 = vunpack.c.h.b16 %v1739
        %v1825 = vunpack.c.l.b16 %v1740
        %v1826 = vunpack.c.h.b16 %v1740
        %v1827 = vunpack.c.l.b16 %v1741
        %v1828 = vunpack.c.h.b16 %v1741
        %v1829 = vunpack.c.l.b16 %v1742
        %v1830 = vunpack.c.h.b16 %v1742
        %v1831 = vunpack.c.l.b16 %v1743
        %v1832 = vunpack.c.h.b16 %v1743
        %v1833 = vunpack.c.l.b16 %v1744
        %v1834 = vunpack.c.h.b16 %v1744
        %v1835 = vunpack.c.l.b16 %v1745
        %v1836 = vunpack.c.h.b16 %v1745
        %v1837 = vunpack.c.l.b16 %v1746
        %v1838 = vunpack.c.h.b16 %v1746
        %v1839 = vunpack.c.l.b16 %v1747
        %v1840 = vunpack.c.h.b16 %v1747
        %v1841 = vunpack.c.l.b16 %v1748
        %v1842 = vunpack.c.h.b16 %v1748
        %v1843 = vunpack.c.l.b16 %v1749
        %v1844 = vunpack.c.h.b16 %v1749
        %v1845 = vunpack.c.l.b16 %v1750
        %v1846 = vunpack.c.h.b16 %v1750
        %v1847 = vunpack.c.l.b16 %v1751
        %v1848 = vunpack.c.h.b16 %v1751
        %v1849 = vunpack.c.l.b16 %v1752
        %v1850 = vunpack.c.h.b16 %v1752
        %v1851 = vunpack.c.l.b16 %v1753
        %v1852 = vunpack.c.h.b16 %v1753
        %v1853 = vunpack.c.l.b16 %v1754
        %v1854 = vunpack.c.h.b16 %v1754
        %v1855 = vunpack.c.l.b16 %v1755
        %v1856 = vunpack.c.h.b16 %v1755
        %v1857 = vunpack.c.l.b16 %v1756
        %v1858 = vunpack.c.h.b16 %v1756
        %v1859 = vunpack.c.l.b16 %v1757
        %v1860 = vunpack.c.h.b16 %v1757
        %v1861 = vunpack.c.l.b16 %v1758
        %v1862 = vunpack.c.h.b16 %v1758
        %v1863 = vunpack.c.l.b16 %v1759
        %v1864 = vunpack.c.h.b16 %v1759
        %v1865 = vunpack.c.l.b16 %v1760
        %v1866 = vunpack.c.h.b16 %v1760
        %v1867 = vunpack.c.l.b16 %v1761
        %v1868 = vunpack.c.h.b16 %v1761
        %v1869 = vunpack.c.l.b16 %v1762
        %v1870 = vunpack.c.h.b16 %v1762
        %v1871 = vpack.c.b16 %v1809, %v1807
        %v1872 = vpack.c.b16 %v1810, %v1808
        %v1873 = vpack.c.b16 %v1813, %v1811
        %v1874 = vpack.c.b16 %v1814, %v1812
        %v1875 = vpack.c.b16 %v1817, %v1815
        %v1876 = vpack.c.b16 %v1818, %v1816
        %v1877 = vpack.c.b16 %v1821, %v1819
        %v1878 = vpack.c.b16 %v1822, %v1820
        %v1879 = vpack.c.b16 %v1825, %v1823
        %v1880 = vpack.c.b16 %v1826, %v1824
        %v1881 = vpack.c.b16 %v1829, %v1827
        %v1882 = vpack.c.b16 %v1830, %v1828
        %v1883 = vpack.c.b16 %v1833, %v1831
        %v1884 = vpack.c.b16 %v1834, %v1832
        %v1885 = vpack.c.b16 %v1837, %v1835
        %v1886 = vpack.c.b16 %v1838, %v1836
        %v1887 = vpack.c.b16 %v1841, %v1839
        %v1888 = vpack.c.b16 %v1842, %v1840
        %v1889 = vpack.c.b16 %v1845, %v1843
        %v1890 = vpack.c.b16 %v1846, %v1844
        %v1891 = vpack.c.b16 %v1849, %v1847
        %v1892 = vpack.c.b16 %v1850, %v1848
        %v1893 = vpack.c.b16 %v1853, %v1851
        %v1894 = vpack.c.b16 %v1854, %v1852
        %v1895 = vpack.c.b16 %v1857, %v1855
        %v1896 = vpack.c.b16 %v1858, %v1856
        %v1897 = vpack.c.b16 %v1861, %v1859
        %v1898 = vpack.c.b16 %v1862, %v1860
        %v1899 = vpack.c.b16 %v1865, %v1863
        %v1900 = vpack.c.b16 %v1866, %v1864
        %v1901 = vpack.c.b16 %v1869, %v1867
        %v1902 = vpack.c.b16 %v1870, %v1868
        %1935 = vmatprep.subr.bf16.mxu0 %v1872
        %1936 = vmatpush1.bf16.msra.mxu0 %v1871
        %1937 = vmatprep.subr.bf16.mxu0 %v1874
        %1938 = vmatpush1.bf16.msra.mxu0 %v1873
        %1939 = vmatprep.subr.bf16.mxu0 %v1876
        %1940 = vmatpush1.bf16.msra.mxu0 %v1875
        %1941 = vmatprep.subr.bf16.mxu0 %v1878
        %1942 = vmatpush1.bf16.msra.mxu0 %v1877
        %1943 = vmatprep.subr.bf16.mxu0 %v1880
        %1944 = vmatpush1.bf16.msra.mxu0 %v1879
        %1945 = vmatprep.subr.bf16.mxu0 %v1882
        %1946 = vmatpush1.bf16.msra.mxu0 %v1881
        %1947 = vmatprep.subr.bf16.mxu0 %v1884
        %1948 = vmatpush1.bf16.msra.mxu0 %v1883
        %1949 = vmatprep.subr.bf16.mxu0 %v1886
        %1950 = vmatpush1.bf16.msra.mxu0 %v1885
        %1951 = vmatprep.subr.bf16.mxu0 %v1888
        %1952 = vmatpush1.bf16.msra.mxu0 %v1887
        %1953 = vmatprep.subr.bf16.mxu0 %v1890
        %1954 = vmatpush1.bf16.msra.mxu0 %v1889
        %1955 = vmatprep.subr.bf16.mxu0 %v1892
        %1956 = vmatpush1.bf16.msra.mxu0 %v1891
        %1957 = vmatprep.subr.bf16.mxu0 %v1894
        %1958 = vmatpush1.bf16.msra.mxu0 %v1893
        %1959 = vmatprep.subr.bf16.mxu0 %v1896
        %1960 = vmatpush1.bf16.msra.mxu0 %v1895
        %1961 = vmatprep.subr.bf16.mxu0 %v1898
        %1962 = vmatpush1.bf16.msra.mxu0 %v1897
        %1963 = vmatprep.subr.bf16.mxu0 %v1900
        %1964 = vmatpush1.bf16.msra.mxu0 %v1899
        %1965 = vmatprep.subr.bf16.mxu0 %v1902
        %1966 = vmatpush1.bf16.msra.mxu0 %v1901
        %1967 = vmatprep.mubr.bf16.mxu0 %v1730
        %1968 = vmatmul.mubr.bf16.gmra.mrb[0].mxu0 %v1729
        %v1969 = vpop.f32.mrb[0].mxu0
        %v1970 = vadd.f32 %v1768, %v1969
        %v1971 = vpop.f32.mrb[0].mxu0
        %v1972 = vadd.f32 %v1772, %v1971
        %v1973 = vpop.f32.mrb[0].mxu0
        %v1974 = vadd.f32 %v1768, %v1973
        %v1975 = vpop.f32.mrb[0].mxu0
        %v1976 = vadd.f32 %v1772, %v1975
        %1977 = vdwg.mxu0
        %v1978 = vpack.c.bf16 %v1974, %v1970
        %v1979 = vpack.c.bf16 %v1976, %v1972
        %v1980 = vld [vmem:[%s9] sm:$0xf]
        %v1981 = vld [vmem:[%s9 + $0x4] sm:$0xf]
        %v1982 = vld [vmem:[%s9 + $0x8] sm:$0xf]
        %v1983 = vld [vmem:[%s9 + $0xc] sm:$0xf]
        %v1984 = vld [vmem:[%s9 + $0x10] sm:$0xf]
        %v1985 = vld [vmem:[%s9 + $0x14] sm:$0xf]
        %v1986 = vld [vmem:[%s9 + $0x18] sm:$0xf]
        %v1987 = vld [vmem:[%s9 + $0x1c] sm:$0xf]
        %v1988 = vld [vmem:[%s9 + $0x20] sm:$0xf]
        %v1989 = vld [vmem:[%s9 + $0x24] sm:$0xf]
        %v1990 = vld [vmem:[%s9 + $0x28] sm:$0xf]
        %v1991 = vld [vmem:[%s9 + $0x2c] sm:$0xf]
        %v1992 = vld [vmem:[%s9 + $0x30] sm:$0xf]
        %v1993 = vld [vmem:[%s9 + $0x34] sm:$0xf]
        %v1994 = vld [vmem:[%s9 + $0x38] sm:$0xf]
        %v1995 = vld [vmem:[%s9 + $0x3c] sm:$0xf]
        %v1996 = vld [vmem:[%s9 + $0x40] sm:$0xf]
        %v1997 = vld [vmem:[%s9 + $0x44] sm:$0xf]
        %v1998 = vld [vmem:[%s9 + $0x48] sm:$0xf]
        %v1999 = vld [vmem:[%s9 + $0x4c] sm:$0xf]
        %v2000 = vld [vmem:[%s9 + $0x50] sm:$0xf]
        %v2001 = vld [vmem:[%s9 + $0x54] sm:$0xf]
        %v2002 = vld [vmem:[%s9 + $0x58] sm:$0xf]
        %v2003 = vld [vmem:[%s9 + $0x5c] sm:$0xf]
        %v2004 = vld [vmem:[%s9 + $0x60] sm:$0xf]
        %v2005 = vld [vmem:[%s9 + $0x64] sm:$0xf]
        %v2006 = vld [vmem:[%s9 + $0x68] sm:$0xf]
        %v2007 = vld [vmem:[%s9 + $0x6c] sm:$0xf]
        %v2008 = vld [vmem:[%s9 + $0x70] sm:$0xf]
        %v2009 = vld [vmem:[%s9 + $0x74] sm:$0xf]
        %v2010 = vld [vmem:[%s9 + $0x78] sm:$0xf]
        %v2011 = vld [vmem:[%s9 + $0x7c] sm:$0xf]
        %v2012 = vld [vmem:[%s10] sm:$0x1]
        %v2014 = vlaneseq
        %v2015 = vshrl.u32 %v2014, 7
        %v2016 = vsub.s32 0, %v2015
        %v2017 = vrot.slane %v2012, %v2016
        %v2051 = vunpack.c.l.b16 %v1980
        %v2052 = vunpack.c.l.b16 %v1981
        %v2053 = vunpack.c.l.b16 %v1982
        %v2054 = vunpack.c.l.b16 %v1983
        %v2055 = vunpack.c.l.b16 %v1984
        %v2056 = vunpack.c.l.b16 %v1985
        %v2057 = vunpack.c.l.b16 %v1986
        %v2058 = vunpack.c.l.b16 %v1987
        %v2059 = vunpack.c.l.b16 %v1988
        %v2060 = vunpack.c.l.b16 %v1989
        %v2061 = vunpack.c.l.b16 %v1990
        %v2062 = vunpack.c.l.b16 %v1991
        %v2063 = vunpack.c.l.b16 %v1992
        %v2064 = vunpack.c.l.b16 %v1993
        %v2065 = vunpack.c.l.b16 %v1994
        %v2066 = vunpack.c.l.b16 %v1995
        %v2067 = vunpack.c.l.b16 %v1996
        %v2068 = vunpack.c.l.b16 %v1997
        %v2069 = vunpack.c.l.b16 %v1998
        %v2070 = vunpack.c.l.b16 %v1999
        %v2071 = vunpack.c.l.b16 %v2000
        %v2072 = vunpack.c.l.b16 %v2001
        %v2073 = vunpack.c.l.b16 %v2002
        %v2074 = vunpack.c.l.b16 %v2003
        %v2075 = vunpack.c.l.b16 %v2004
        %v2076 = vunpack.c.l.b16 %v2005
        %v2077 = vunpack.c.l.b16 %v2006
        %v2078 = vunpack.c.l.b16 %v2007
        %v2079 = vunpack.c.l.b16 %v2008
        %v2080 = vunpack.c.l.b16 %v2009
        %v2081 = vunpack.c.l.b16 %v2010
        %v2082 = vunpack.c.l.b16 %v2011
        %v2083 = vpack.c.b16 %v2052, %v2051
        %v2084 = vpack.c.b16 %v2054, %v2053
        %v2085 = vpack.c.b16 %v2056, %v2055
        %v2086 = vpack.c.b16 %v2058, %v2057
        %v2087 = vpack.c.b16 %v2060, %v2059
        %v2088 = vpack.c.b16 %v2062, %v2061
        %v2089 = vpack.c.b16 %v2064, %v2063
        %v2090 = vpack.c.b16 %v2066, %v2065
        %v2091 = vpack.c.b16 %v2068, %v2067
        %v2092 = vpack.c.b16 %v2070, %v2069
        %v2093 = vpack.c.b16 %v2072, %v2071
        %v2094 = vpack.c.b16 %v2074, %v2073
        %v2095 = vpack.c.b16 %v2076, %v2075
        %v2096 = vpack.c.b16 %v2078, %v2077
        %v2097 = vpack.c.b16 %v2080, %v2079
        %v2098 = vpack.c.b16 %v2082, %v2081
        %2115 = vmatprep.subr.bf16.mxu0 0
        %2116 = vmatpush1.bf16.msra.mxu0 %v2083
        %2117 = vmatprep.subr.bf16.mxu0 0
        %2118 = vmatpush1.bf16.msra.mxu0 %v2084
        %2119 = vmatprep.subr.bf16.mxu0 0
        %2120 = vmatpush1.bf16.msra.mxu0 %v2085
        %2121 = vmatprep.subr.bf16.mxu0 0
        %2122 = vmatpush1.bf16.msra.mxu0 %v2086
        %2123 = vmatprep.subr.bf16.mxu0 0
        %2124 = vmatpush1.bf16.msra.mxu0 %v2087
        %2125 = vmatprep.subr.bf16.mxu0 0
        %2126 = vmatpush1.bf16.msra.mxu0 %v2088
        %2127 = vmatprep.subr.bf16.mxu0 0
        %2128 = vmatpush1.bf16.msra.mxu0 %v2089
        %2129 = vmatprep.subr.bf16.mxu0 0
        %2130 = vmatpush1.bf16.msra.mxu0 %v2090
        %2131 = vmatprep.subr.bf16.mxu0 0
        %2132 = vmatpush1.bf16.msra.mxu0 %v2091
        %2133 = vmatprep.subr.bf16.mxu0 0
        %2134 = vmatpush1.bf16.msra.mxu0 %v2092
        %2135 = vmatprep.subr.bf16.mxu0 0
        %2136 = vmatpush1.bf16.msra.mxu0 %v2093
        %2137 = vmatprep.subr.bf16.mxu0 0
        %2138 = vmatpush1.bf16.msra.mxu0 %v2094
        %2139 = vmatprep.subr.bf16.mxu0 0
        %2140 = vmatpush1.bf16.msra.mxu0 %v2095
        %2141 = vmatprep.subr.bf16.mxu0 0
        %2142 = vmatpush1.bf16.msra.mxu0 %v2096
        %2143 = vmatprep.subr.bf16.mxu0 0
        %2144 = vmatpush1.bf16.msra.mxu0 %v2097
        %2145 = vmatprep.subr.bf16.mxu0 0
        %2146 = vmatpush1.bf16.msra.mxu0 %v2098
        %2147 = vmatprep.mubr.bf16.mxu0 %v1979
        %2148 = vmatmul.mubr.bf16.gmra.mrb[0].mxu0 %v1978
        %v2149 = vpop.f32.mrb[0].mxu0
        %v2150 = vadd.f32 %v2017, %v2149
        %v2151 = vpop.f32.mrb[0].mxu0
        %v2152 = vpop.f32.mrb[0].mxu0
        %v2153 = vadd.f32 %v2017, %v2152
        %v2154 = vpop.f32.mrb[0].mxu0
        %2155 = vdwg.mxu0
        %v2156 = vpack.c.bf16 %v2153, %v2150
        %v2157 = vld [vmem:[%s11] sm:$0xf]
        %v2158 = vld [vmem:[%s11 + $0x4] sm:$0xf]
        %v2159 = vld [vmem:[%s11 + $0x8] sm:$0xf]
        %v2160 = vld [vmem:[%s11 + $0xc] sm:$0xf]
        %v2161 = vld [vmem:[%s11 + $0x10] sm:$0xf]
        %v2162 = vld [vmem:[%s11 + $0x14] sm:$0xf]
        %v2163 = vld [vmem:[%s11 + $0x18] sm:$0xf]
        %v2164 = vld [vmem:[%s11 + $0x1c] sm:$0xf]
        %v2165 = vld [vmem:[%s11 + $0x20] sm:$0xf]
        %v2166 = vld [vmem:[%s11 + $0x24] sm:$0xf]
        %v2167 = vld [vmem:[%s11 + $0x28] sm:$0xf]
        %v2168 = vld [vmem:[%s11 + $0x2c] sm:$0xf]
        %v2169 = vld [vmem:[%s11 + $0x30] sm:$0xf]
        %v2170 = vld [vmem:[%s11 + $0x34] sm:$0xf]
        %v2171 = vld [vmem:[%s11 + $0x38] sm:$0xf]
        %v2172 = vld [vmem:[%s11 + $0x3c] sm:$0xf]
        %v2173 = vld [vmem:[%s12] sm:$0x1]
        %v2175 = vlaneseq
        %v2176 = vshrl.u32 %v2175, 7
        %v2177 = vsub.s32 0, %v2176
        %v2178 = vrot.slane %v2173, %v2177
        %v2196 = vunpack.c.l.b16 %v2157
        %v2197 = vunpack.c.l.b16 %v2158
        %v2198 = vunpack.c.l.b16 %v2159
        %v2199 = vunpack.c.l.b16 %v2160
        %v2200 = vunpack.c.l.b16 %v2161
        %v2201 = vunpack.c.l.b16 %v2162
        %v2202 = vunpack.c.l.b16 %v2163
        %v2203 = vunpack.c.l.b16 %v2164
        %v2204 = vunpack.c.l.b16 %v2165
        %v2205 = vunpack.c.l.b16 %v2166
        %v2206 = vunpack.c.l.b16 %v2167
        %v2207 = vunpack.c.l.b16 %v2168
        %v2208 = vunpack.c.l.b16 %v2169
        %v2209 = vunpack.c.l.b16 %v2170
        %v2210 = vunpack.c.l.b16 %v2171
        %v2211 = vunpack.c.l.b16 %v2172
        %v2212 = vpack.c.b16 %v2197, %v2196
        %v2213 = vpack.c.b16 %v2199, %v2198
        %v2214 = vpack.c.b16 %v2201, %v2200
        %v2215 = vpack.c.b16 %v2203, %v2202
        %v2216 = vpack.c.b16 %v2205, %v2204
        %v2217 = vpack.c.b16 %v2207, %v2206
        %v2218 = vpack.c.b16 %v2209, %v2208
        %v2219 = vpack.c.b16 %v2211, %v2210
        %2228 = vmatprep.subr.bf16.mxu0 0
        %2229 = vmatpush1.bf16.msra.mxu0 %v2212
        %2230 = vmatprep.subr.bf16.mxu0 0
        %2231 = vmatpush1.bf16.msra.mxu0 %v2213
        %2232 = vmatprep.subr.bf16.mxu0 0
        %2233 = vmatpush1.bf16.msra.mxu0 %v2214
        %2234 = vmatprep.subr.bf16.mxu0 0
        %2235 = vmatpush1.bf16.msra.mxu0 %v2215
        %2236 = vmatprep.subr.bf16.mxu0 0
        %2237 = vmatpush1.bf16.msra.mxu0 %v2216
        %2238 = vmatprep.subr.bf16.mxu0 0
        %2239 = vmatpush1.bf16.msra.mxu0 %v2217
        %2240 = vmatprep.subr.bf16.mxu0 0
        %2241 = vmatpush1.bf16.msra.mxu0 %v2218
        %2242 = vmatprep.subr.bf16.mxu0 0
        %2243 = vmatpush1.bf16.msra.mxu0 %v2219
        %2244 = vmatprep.subr.bf16.mxu0 0
        %2245 = vmatpush1.bf16.msra.mxu0 0
        %2246 = vmatprep.subr.bf16.mxu0 0
        %2247 = vmatpush1.bf16.msra.mxu0 0
        %2248 = vmatprep.subr.bf16.mxu0 0
        %2249 = vmatpush1.bf16.msra.mxu0 0
        %2250 = vmatprep.subr.bf16.mxu0 0
        %2251 = vmatpush1.bf16.msra.mxu0 0
        %2252 = vmatprep.subr.bf16.mxu0 0
        %2253 = vmatpush1.bf16.msra.mxu0 0
        %2254 = vmatprep.subr.bf16.mxu0 0
        %2255 = vmatpush1.bf16.msra.mxu0 0
        %2256 = vmatprep.subr.bf16.mxu0 0
        %2257 = vmatpush1.bf16.msra.mxu0 0
        %2258 = vmatprep.subr.bf16.mxu0 0
        %2259 = vmatpush1.bf16.msra.mxu0 0
        %2260 = vmatprep.mubr.bf16.mxu0 0
        %2261 = vmatmul.mubr.bf16.gmra.mrb[0].mxu0 %v2156
        %v2262 = vpop.f32.mrb[0].mxu0
        %v2263 = vadd.f32 %v2178, %v2262
        %v2264 = vpop.f32.mrb[0].mxu0
        %v2265 = vpop.f32.mrb[0].mxu0
        %v2266 = vadd.f32 %v2178, %v2265
        %v2267 = vpop.f32.mrb[0].mxu0
        %2268 = vdwg.mxu0
        %2269 = vst.msk [vmem:[%s497] sm:$0xff] %vm586, %v2263
        %2270 = vst.msk [vmem:[%s497 + $0x8] sm:$0xff] %vm586, %v2266
        %s2271 = sand.u32 %s341, 1
        %s2272 = scalar_lea.sflag [#allocation3], %s2271
        %s2273 = sand.u32 %s341, 1
        %s2274 = smul.addr %s2273, 16
        %s2275 = scalar_lea.vmem [#allocation2], %s2274
        // Predicated region
        $region73: #{dgn_forward.9} parent=71 // pred_check
          %p2276 = pneg %p351
        $region74: #{dgn_forward.9} parent=71 // pred_check_branch
          %2278 = sbr.rel (%p2276) target = $region76
        $region75: #{dgn_forward.9} parent=71 // pred_region
          %s2279 = smul.u32 2, %s32
          %s2281 = ssub.s32 256, 256
          %2282 = vsyncadd %s2272, %s2281
          %s2283 = smul.addr %s31, 2
          %s2284 = sadd.s32 %s2279, %s2283
          %s2285 = smul.addr %s2284, 128
          %s2286 = scalar_lea.hbm %s13, %s2285
          %s2287 = sshll.u32 %s2275, 4
          %s2288 = int_to_ptr.vmem [resolvable:$true] %s2287
          %2293 = dma.vmem_to_hbm [thread:$0]  %s2288, 256, %s2286, %s2272, 128, 128, 8
        $region76: #{dgn_forward.9} parent=71 // pred_fallthru
          _
      $region72: #{dgn_forward.9} parent=5 // pred_fallthru
        _
      %p2294 = scmp.le.s32.totalorder 2, %s22
      // Predicated region
      $region77: #{dgn_forward.9} parent=5 // pred_check
        %p2295 = pneg %p2294
      $region78: #{dgn_forward.9} parent=5 // pred_check_branch
        %2297 = sbr.rel (%p2295) target = $region80
      $region79: #{dgn_forward.9} parent=5 // pred_region
        %s2298 = ssub.s32 %s22, 2
        // Predicated region
        $region81: #{dgn_forward.9} parent=79 // pred_check
          %p2299 = pneg %p357
        $region82: #{dgn_forward.9} parent=79 // pred_check_branch
          %2301 = sbr.rel (%p2299) target = $region84
        $region83: #{dgn_forward.9} parent=79 // pred_region
          %s2302 = sand.u32 %s342, 1
          %s2303 = scalar_lea.sflag [#allocation3], %s2302
          %s2304 = sand.u32 %s342, 1
          %s2305 = smul.addr %s2304, 16
          %s2306 = scalar_lea.vmem [#allocation2], %s2305
          %2307 = dma.done %s2303, 256
        $region84: #{dgn_forward.9} parent=79 // pred_fallthru
          _
      $region80: #{dgn_forward.9} parent=5 // pred_fallthru
        _
    $region6: #{dgn_forward.9} parent=1 // loop_footer
      %s26 = sadd.s32 1, %s22
    $region7: #{dgn_forward.9} parent=1 // loop_footer_branch
      %21 = sbr.rel target = $region3
    $region8: #{dgn_forward.9} parent=1 // loop_exit
      _
    %2308 = vsyncpa [#allocation3], 1
    %s2309 = scalar_lea.sflag [#allocation3], 1
    %2310 = vsyncpa %s2309, 1

</llo_original>
